<compile_context>
chip_gen: v7x
topology: tpu7x:2x2x1
jax: 0.10.0
libtpu: 0.0.40
codegen_flags: <defaults>
</compile_context>

<pallas_src>
import jax
import jax.numpy as jnp
from jax.experimental import pallas as pl
from jax.experimental.pallas import tpu as pltpu

NEG_SLOPE = 0.01  # torch.nn.LeakyReLU default negative_slope
C1, C2, C3 = 12, 24, 128
FC1, FC2, FC3 = 84, 24, 4


def _leaky(x):
    return jnp.where(x >= 0, x, NEG_SLOPE * x)


# ---------------------------------------------------------------------------
# Fused forward kernel (one grid step == one image).
# ---------------------------------------------------------------------------
def _make_kernel(H, W):
    Hp, Wp = H // 2, W // 2        # after pool1
    Hq, Wq = Hp // 2, Wp // 2      # after pool2
    f32, bf16 = jnp.float32, jnp.bfloat16

    def kernel(x_ref,
               w1_ref, b1_ref, w2_ref, b2_ref, w3_ref, b3_ref,
               fw1_ref, fb1_ref, fw2_ref, fb2_ref, fw3_ref, fb3_ref,
               o_ref,
               pad1_ref, pad2_ref, pad3_ref):

        def conv3x3(pad_ref, w_ref, b_ref, h, w, cin, cout):
            # sum of 9 (h*w, cin) x (cin, cout) MXU matmuls; bf16 in, f32 accum
            acc = jnp.zeros((h * w, cout), f32)
            for dy in range(3):
                for dx in range(3):
                    patch = pad_ref[dy:dy + h, dx:dx + w, :]            # (h, w, cin)
                    lhs = patch.reshape(h * w, cin).astype(bf16)
                    acc = acc + jnp.dot(lhs, w_ref[dy, dx],
                                        preferred_element_type=f32)
            acc = acc + b_ref[...]                                      # (1, cout)
            return _leaky(acc).reshape(h, w, cout)

        # ---- conv1 + relu1 -------------------------------------------------
        pad1_ref[...] = jnp.zeros((H + 2, W + 2, 3), f32)
        pad1_ref[1:H + 1, 1:W + 1, :] = x_ref[0]
        a1 = conv3x3(pad1_ref, w1_ref, b1_ref, H, W, 3, C1)             # (H, W, 12)

        # ---- conv2 + relu2 -------------------------------------------------
        pad2_ref[...] = jnp.zeros((H + 2, W + 2, C1), f32)
        pad2_ref[1:H + 1, 1:W + 1, :] = a1
        a2 = conv3x3(pad2_ref, w2_ref, b2_ref, H, W, C1, C2)            # (H, W, 24)

        # ---- pool1 (2x2 max), written straight into conv3's padded input ----
        a2r = a2.reshape(Hp, 2, W, C2)                                  # split leading dim
        th = jnp.maximum(a2r[:, 0], a2r[:, 1])                          # (Hp, W, 24)
        pad3_ref[...] = jnp.zeros((Hp + 2, Wp + 2, C2), f32)
        for wp in range(Wp):
            col = jnp.maximum(th[:, 2 * wp:2 * wp + 1, :],
                              th[:, 2 * wp + 1:2 * wp + 2, :])          # (Hp, 1, 24)
            pad3_ref[1:Hp + 1, 1 + wp:2 + wp, :] = col

        # ---- conv3 + relu3 -------------------------------------------------
        a3 = conv3x3(pad3_ref, w3_ref, b3_ref, Hp, Wp, C2, C3)          # (Hp, Wp, 128)

        # ---- pool2 + flatten(HWC) + fc1 + relu5 (fused) ----------------------
        a3r = a3.reshape(Hq, 2, Wp, C3)
        t3 = jnp.maximum(a3r[:, 0], a3r[:, 1])                          # (Hq, Wp, 128)
        acc1 = jnp.zeros((1, FC1), f32)
        for hp in range(Hq):
            rows = t3[hp]                                               # (Wp, 128)
            for wp in range(Wq):
                v = jnp.maximum(rows[2 * wp:2 * wp + 1, :],
                                rows[2 * wp + 1:2 * wp + 2, :])         # (1, 128)
                acc1 = acc1 + jnp.dot(v.astype(bf16), fw1_ref[hp, wp],
                                      preferred_element_type=f32)
        h1 = _leaky(acc1 + fb1_ref[...])                                # (1, 84)

        # ---- fc2 + relu6 -----------------------------------------------------
        h2 = _leaky(jnp.dot(h1.astype(bf16), fw2_ref[...],
                            preferred_element_type=f32) + fb2_ref[...])  # (1, 24)

        # ---- fc3 -------------------------------------------------------------
        y = jnp.dot(h2.astype(bf16), fw3_ref[...],
                    preferred_element_type=f32) + fb3_ref[...]           # (1, 4)
        o_ref[...] = y.reshape(1, 1, FC3)

    return kernel


def _replicated(shape):
    nd = len(shape)
    return pl.BlockSpec(shape, lambda n: (0,) * nd)


def simplenet_forward_pallas(x_nchw, params):
    N, Cin, H, W = x_nchw.shape
    assert Cin == 3 and H % 4 == 0 and W % 4 == 0
    Hp, Wp = H // 2, W // 2
    Hq, Wq = Hp // 2, Wp // 2

    x = jnp.transpose(x_nchw, (0, 2, 3, 1))   # NCHW -> NHWC (channels on lanes)

    out = pl.pallas_call(
        _make_kernel(H, W),
        out_shape=jax.ShapeDtypeStruct((N, 1, FC3), jnp.float32),
        grid=(N,),
        in_specs=[
            pl.BlockSpec((1, H, W, 3), lambda n: (n, 0, 0, 0)),
            _replicated((3, 3, 3, C1)),   _replicated((1, C1)),
            _replicated((3, 3, C1, C2)),  _replicated((1, C2)),
            _replicated((3, 3, C2, C3)),  _replicated((1, C3)),
            _replicated((Hq, Wq, C3, FC1)), _replicated((1, FC1)),
            _replicated((FC1, FC2)),      _replicated((1, FC2)),
            _replicated((FC2, FC3)),      _replicated((1, FC3)),
        ],
        out_specs=pl.BlockSpec((1, 1, FC3), lambda n: (n, 0, 0)),
        scratch_shapes=[
            pltpu.VMEM((H + 2, W + 2, 3), jnp.float32),     # conv1 padded input
            pltpu.VMEM((H + 2, W + 2, C1), jnp.float32),    # conv2 padded input
            pltpu.VMEM((Hp + 2, Wp + 2, C2), jnp.float32),  # conv3 padded input
        ],
        compiler_params=pltpu.CompilerParams(dimension_semantics=("parallel",)),
    )(
        x,
        params["conv1_w"], params["conv1_b"],
        params["conv2_w"], params["conv2_b"],
        params["conv3_w"], params["conv3_b"],
        params["fc1_w"], params["fc1_b"],
        params["fc2_w"], params["fc2_b"],
        params["fc3_w"], params["fc3_b"],
    )
    return out.reshape(N, FC3)


# ---------------------------------------------------------------------------
# Synthetic parameters in PyTorch layout + conversion to kernel layout.
# ---------------------------------------------------------------------------
def init_torch_params(key, h, w):
    hq, wq = h // 4, w // 4
    flat = C3 * hq * wq        # spatial-scaled version of 128*128*128
    keys = jax.random.split(key, 12)

    def t(k, shape):
        return jax.random.normal(k, shape, jnp.float32) * 0.05

    return {
        "conv1.weight": t(keys[0], (C1, 3, 3, 3)),   "conv1.bias": t(keys[1], (C1,)),
        "conv2.weight": t(keys[2], (C2, C1, 3, 3)),  "conv2.bias": t(keys[3], (C2,)),
        "conv3.weight": t(keys[4], (C3, C2, 3, 3)),  "conv3.bias": t(keys[5], (C3,)),
        "fc1.weight":   t(keys[6], (FC1, flat)),     "fc1.bias":   t(keys[7], (FC1,)),
        "fc2.weight":   t(keys[8], (FC2, FC1)),      "fc2.bias":   t(keys[9], (FC2,)),
        "fc3.weight":   t(keys[10], (FC3, FC2)),     "fc3.bias":   t(keys[11], (FC3,)),
    }


def convert_params(tp, h, w):
    hq, wq = h // 4, w // 4
    bf16 = jnp.bfloat16

    def conv_w(x):                                   # OIHW -> HWIO
        return jnp.transpose(x, (2, 3, 1, 0)).astype(bf16)

    # fc1: torch flattens NCHW, i.e. row index = c*(hq*wq) + h*wq + w.
    # Re-order once so the kernel's (h, w, c) contraction matches exactly.
    fc1 = tp["fc1.weight"].reshape(FC1, C3, hq, wq)              # (O, C, H, W)
    fc1 = jnp.transpose(fc1, (2, 3, 1, 0)).astype(bf16)          # (H, W, C, O)

    return {
        "conv1_w": conv_w(tp["conv1.weight"]), "conv1_b": tp["conv1.bias"].reshape(1, -1),
        "conv2_w": conv_w(tp["conv2.weight"]), "conv2_b": tp["conv2.bias"].reshape(1, -1),
        "conv3_w": conv_w(tp["conv3.weight"]), "conv3_b": tp["conv3.bias"].reshape(1, -1),
        "fc1_w": fc1,                          "fc1_b": tp["fc1.bias"].reshape(1, -1),
        "fc2_w": jnp.transpose(tp["fc2.weight"]).astype(bf16),
        "fc2_b": tp["fc2.bias"].reshape(1, -1),
        "fc3_w": jnp.transpose(tp["fc3.weight"]).astype(bf16),
        "fc3_b": tp["fc3.bias"].reshape(1, -1),
    }


# ---------------------------------------------------------------------------
# Pure-JAX f32 reference (mirrors the PyTorch module exactly), for a sanity check.
# ---------------------------------------------------------------------------
def simplenet_reference(x_nchw, tp):
    def conv(x, w, b):
        out = jax.lax.conv_general_dilated(
            x, w, window_strides=(1, 1), padding=((1, 1), (1, 1)),
            dimension_numbers=("NCHW", "OIHW", "NCHW"))
        return out + b.reshape(1, -1, 1, 1)

    def pool(x):
        return jax.lax.reduce_window(x, -jnp.inf, jax.lax.max,
                                     (1, 1, 2, 2), (1, 1, 2, 2), "VALID")

    h = _leaky(conv(x_nchw, tp["conv1.weight"], tp["conv1.bias"]))
    h = _leaky(conv(h, tp["conv2.weight"], tp["conv2.bias"]))
    h = pool(h)
    h = _leaky(conv(h, tp["conv3.weight"], tp["conv3.bias"]))
    h = pool(h)
    f = h.reshape(h.shape[0], -1)                       # torch .view on NCHW
    h = _leaky(f @ tp["fc1.weight"].T + tp["fc1.bias"])
    h = _leaky(h @ tp["fc2.weight"].T + tp["fc2.bias"])
    return h @ tp["fc3.weight"].T + tp["fc3.bias"]


if __name__ == "__main__":
    key = jax.random.PRNGKey(0)
    k_x, k_p = jax.random.split(key)

    N, C, H, W = 2, 3, 16, 16   # small shapes consistent with the module (scaled spatial)
    x = jax.random.normal(k_x, (N, C, H, W), jnp.float32)

    torch_params = init_torch_params(k_p, H, W)
    params = convert_params(torch_params, H, W)

    fwd = jax.jit(simplenet_forward_pallas)
    out = fwd(x, params)
    jax.block_until_ready(out)

    assert out.shape == (N, FC3), out.shape
    ref = simplenet_reference(x, torch_params)
    assert bool(jnp.all(jnp.isfinite(out)))
    # bf16 matmul inputs with f32 accumulation -> generous tolerance vs f32 reference
    assert bool(jnp.allclose(out, ref, rtol=5e-2, atol=2e-2)), (out, ref)

    print("KERNEL_OK")
</pallas_src>

<mosaic_0001>
module attributes {stable_mosaic.version = 11 : i64} {
  func.func @kernel(%arg0: i32, %arg1: memref<1x16x16x3xf32, #tpu.memory_space<vmem>>, %arg2: memref<3x3x3x12xbf16, #tpu.memory_space<vmem>>, %arg3: memref<1x12xf32, #tpu.memory_space<vmem>>, %arg4: memref<3x3x12x24xbf16, #tpu.memory_space<vmem>>, %arg5: memref<1x24xf32, #tpu.memory_space<vmem>>, %arg6: memref<3x3x24x128xbf16, #tpu.memory_space<vmem>>, %arg7: memref<1x128xf32, #tpu.memory_space<vmem>>, %arg8: memref<4x4x128x84xbf16, #tpu.memory_space<vmem>>, %arg9: memref<1x84xf32, #tpu.memory_space<vmem>>, %arg10: memref<84x24xbf16, #tpu.memory_space<vmem>>, %arg11: memref<1x24xf32, #tpu.memory_space<vmem>>, %arg12: memref<24x4xbf16, #tpu.memory_space<vmem>>, %arg13: memref<1x4xf32, #tpu.memory_space<vmem>>, %arg14: memref<1x1x4xf32, #tpu.memory_space<vmem>>, %arg15: memref<18x18x3xf32, #tpu.memory_space<vmem>>, %arg16: memref<18x18x12xf32, #tpu.memory_space<vmem>>, %arg17: memref<10x10x24xf32, #tpu.memory_space<vmem>>) attributes {dimension_semantics = [#tpu.dimension_semantics<parallel>], iteration_bounds = array<i64: 2>, scalar_prefetch = 0 : i64, scratch_operands = 3 : i64, tpu.core_type = #tpu.core_type<tc>, window_params = [{transform_indices = @transform_0, window_bounds = array<i64: 1, 16, 16, 3>}, {pipeline_mode = #tpu.pipeline_mode<synchronous>, transform_indices = @transform_1, window_bounds = array<i64: 3, 3, 3, 12>}, {pipeline_mode = #tpu.pipeline_mode<synchronous>, transform_indices = @transform_2, window_bounds = array<i64: 1, 12>}, {pipeline_mode = #tpu.pipeline_mode<synchronous>, transform_indices = @transform_3, window_bounds = array<i64: 3, 3, 12, 24>}, {pipeline_mode = #tpu.pipeline_mode<synchronous>, transform_indices = @transform_4, window_bounds = array<i64: 1, 24>}, {pipeline_mode = #tpu.pipeline_mode<synchronous>, transform_indices = @transform_5, window_bounds = array<i64: 3, 3, 24, 128>}, {pipeline_mode = #tpu.pipeline_mode<synchronous>, transform_indices = @transform_6, window_bounds = array<i64: 1, 128>}, {pipeline_mode = #tpu.pipeline_mode<synchronous>, transform_indices = @transform_7, window_bounds = array<i64: 4, 4, 128, 84>}, {pipeline_mode = #tpu.pipeline_mode<synchronous>, transform_indices = @transform_8, window_bounds = array<i64: 1, 84>}, {pipeline_mode = #tpu.pipeline_mode<synchronous>, transform_indices = @transform_9, window_bounds = array<i64: 84, 24>}, {pipeline_mode = #tpu.pipeline_mode<synchronous>, transform_indices = @transform_10, window_bounds = array<i64: 1, 24>}, {pipeline_mode = #tpu.pipeline_mode<synchronous>, transform_indices = @transform_11, window_bounds = array<i64: 24, 4>}, {pipeline_mode = #tpu.pipeline_mode<synchronous>, transform_indices = @transform_12, window_bounds = array<i64: 1, 4>}, {transform_indices = @transform_13, window_bounds = array<i64: 1, 1, 4>}]} {
    %cst = arith.constant 0.000000e+00 : f32
    %0 = vector.broadcast %cst : f32 to vector<18x18x3xf32>
    %c0 = arith.constant 0 : index
    %c0_0 = arith.constant 0 : index
    %c0_1 = arith.constant 0 : index
    %1 = vector.load %arg15[%c0, %c0_0, %c0_1] : memref<18x18x3xf32, #tpu.memory_space<vmem>>, vector<18x18x3xf32>
    tpu.vector_store %arg15[%c0, %c0_0, %c0_1], %0 {strides = array<i32>} : memref<18x18x3xf32, #tpu.memory_space<vmem>>, vector<18x18x3xf32>,
    %c0_2 = arith.constant 0 : index
    %c0_3 = arith.constant 0 : index
    %c0_4 = arith.constant 0 : index
    %c0_5 = arith.constant 0 : index
    %2 = vector.load %arg1[%c0_2, %c0_3, %c0_4, %c0_5] : memref<1x16x16x3xf32, #tpu.memory_space<vmem>>, vector<1x16x16x3xf32>
    %3 = vector.shape_cast %2 : vector<1x16x16x3xf32> to vector<16x16x3xf32>
    %c1 = arith.constant 1 : index
    %c1_6 = arith.constant 1 : index
    %c0_7 = arith.constant 0 : index
    %4 = vector.load %arg15[%c1, %c1_6, %c0_7] : memref<18x18x3xf32, #tpu.memory_space<vmem>>, vector<16x16x3xf32>
    tpu.vector_store %arg15[%c1, %c1_6, %c0_7], %3 {strides = array<i32>} : memref<18x18x3xf32, #tpu.memory_space<vmem>>, vector<16x16x3xf32>,
    %cst_8 = arith.constant 0.000000e+00 : f32
    %5 = vector.broadcast %cst_8 : f32 to vector<256x12xf32>
    %c0_9 = arith.constant 0 : index
    %c0_10 = arith.constant 0 : index
    %c0_11 = arith.constant 0 : index
    %6 = vector.load %arg15[%c0_9, %c0_10, %c0_11] : memref<18x18x3xf32, #tpu.memory_space<vmem>>, vector<16x16x3xf32>
    %7 = vector.shape_cast %6 : vector<16x16x3xf32> to vector<256x3xf32>
    %8 = arith.truncf %7 : vector<256x3xf32> to vector<256x3xbf16>
    %c0_12 = arith.constant 0 : index
    %c0_13 = arith.constant 0 : index
    %c0_14 = arith.constant 0 : index
    %c0_15 = arith.constant 0 : index
    %9 = vector.load %arg2[%c0_12, %c0_13, %c0_14, %c0_15] : memref<3x3x3x12xbf16, #tpu.memory_space<vmem>>, vector<1x1x3x12xbf16>
    %10 = vector.shape_cast %9 : vector<1x1x3x12xbf16> to vector<3x12xbf16>
    %cst_16 = arith.constant dense<0.000000e+00> : vector<256x12xf32>
    %11 = tpu.matmul %8, %10, %cst_16 {dimension_numbers = #tpu.dot_dimension_numbers<[1], [0], [0], [1], [0, 0, 1, 1], [], []>} : vector<256x3xbf16>, vector<3x12xbf16>, vector<256x12xf32> -> vector<256x12xf32>
    %12 = arith.addf %5, %11 : vector<256x12xf32>
    %c0_17 = arith.constant 0 : index
    %c1_18 = arith.constant 1 : index
    %c0_19 = arith.constant 0 : index
    %13 = vector.load %arg15[%c0_17, %c1_18, %c0_19] : memref<18x18x3xf32, #tpu.memory_space<vmem>>, vector<16x16x3xf32>
    %14 = vector.shape_cast %13 : vector<16x16x3xf32> to vector<256x3xf32>
    %15 = arith.truncf %14 : vector<256x3xf32> to vector<256x3xbf16>
    %c0_20 = arith.constant 0 : index
    %c1_21 = arith.constant 1 : index
    %c0_22 = arith.constant 0 : index
    %c0_23 = arith.constant 0 : index
    %16 = vector.load %arg2[%c0_20, %c1_21, %c0_22, %c0_23] : memref<3x3x3x12xbf16, #tpu.memory_space<vmem>>, vector<1x1x3x12xbf16>
    %17 = vector.shape_cast %16 : vector<1x1x3x12xbf16> to vector<3x12xbf16>
    %cst_24 = arith.constant dense<0.000000e+00> : vector<256x12xf32>
    %18 = tpu.matmul %15, %17, %cst_24 {dimension_numbers = #tpu.dot_dimension_numbers<[1], [0], [0], [1], [0, 0, 1, 1], [], []>} : vector<256x3xbf16>, vector<3x12xbf16>, vector<256x12xf32> -> vector<256x12xf32>
    %19 = arith.addf %12, %18 : vector<256x12xf32>
    %c0_25 = arith.constant 0 : index
    %c2 = arith.constant 2 : index
    %c0_26 = arith.constant 0 : index
    %20 = vector.load %arg15[%c0_25, %c2, %c0_26] : memref<18x18x3xf32, #tpu.memory_space<vmem>>, vector<16x16x3xf32>
    %21 = vector.shape_cast %20 : vector<16x16x3xf32> to vector<256x3xf32>
    %22 = arith.truncf %21 : vector<256x3xf32> to vector<256x3xbf16>
    %c0_27 = arith.constant 0 : index
    %c2_28 = arith.constant 2 : index
    %c0_29 = arith.constant 0 : index
    %c0_30 = arith.constant 0 : index
    %23 = vector.load %arg2[%c0_27, %c2_28, %c0_29, %c0_30] : memref<3x3x3x12xbf16, #tpu.memory_space<vmem>>, vector<1x1x3x12xbf16>
    %24 = vector.shape_cast %23 : vector<1x1x3x12xbf16> to vector<3x12xbf16>
    %cst_31 = arith.constant dense<0.000000e+00> : vector<256x12xf32>
    %25 = tpu.matmul %22, %24, %cst_31 {dimension_numbers = #tpu.dot_dimension_numbers<[1], [0], [0], [1], [0, 0, 1, 1], [], []>} : vector<256x3xbf16>, vector<3x12xbf16>, vector<256x12xf32> -> vector<256x12xf32>
    %26 = arith.addf %19, %25 : vector<256x12xf32>
    %c1_32 = arith.constant 1 : index
    %c0_33 = arith.constant 0 : index
    %c0_34 = arith.constant 0 : index
    %27 = vector.load %arg15[%c1_32, %c0_33, %c0_34] : memref<18x18x3xf32, #tpu.memory_space<vmem>>, vector<16x16x3xf32>
    %28 = vector.shape_cast %27 : vector<16x16x3xf32> to vector<256x3xf32>
    %29 = arith.truncf %28 : vector<256x3xf32> to vector<256x3xbf16>
    %c1_35 = arith.constant 1 : index
    %c0_36 = arith.constant 0 : index
    %c0_37 = arith.constant 0 : index
    %c0_38 = arith.constant 0 : index
    %30 = vector.load %arg2[%c1_35, %c0_36, %c0_37, %c0_38] : memref<3x3x3x12xbf16, #tpu.memory_space<vmem>>, vector<1x1x3x12xbf16>
    %31 = vector.shape_cast %30 : vector<1x1x3x12xbf16> to vector<3x12xbf16>
    %cst_39 = arith.constant dense<0.000000e+00> : vector<256x12xf32>
    %32 = tpu.matmul %29, %31, %cst_39 {dimension_numbers = #tpu.dot_dimension_numbers<[1], [0], [0], [1], [0, 0, 1, 1], [], []>} : vector<256x3xbf16>, vector<3x12xbf16>, vector<256x12xf32> -> vector<256x12xf32>
    %33 = arith.addf %26, %32 : vector<256x12xf32>
    %c1_40 = arith.constant 1 : index
    %c1_41 = arith.constant 1 : index
    %c0_42 = arith.constant 0 : index
    %34 = vector.load %arg15[%c1_40, %c1_41, %c0_42] : memref<18x18x3xf32, #tpu.memory_space<vmem>>, vector<16x16x3xf32>
    %35 = vector.shape_cast %34 : vector<16x16x3xf32> to vector<256x3xf32>
    %36 = arith.truncf %35 : vector<256x3xf32> to vector<256x3xbf16>
    %c1_43 = arith.constant 1 : index
    %c1_44 = arith.constant 1 : index
    %c0_45 = arith.constant 0 : index
    %c0_46 = arith.constant 0 : index
    %37 = vector.load %arg2[%c1_43, %c1_44, %c0_45, %c0_46] : memref<3x3x3x12xbf16, #tpu.memory_space<vmem>>, vector<1x1x3x12xbf16>
    %38 = vector.shape_cast %37 : vector<1x1x3x12xbf16> to vector<3x12xbf16>
    %cst_47 = arith.constant dense<0.000000e+00> : vector<256x12xf32>
    %39 = tpu.matmul %36, %38, %cst_47 {dimension_numbers = #tpu.dot_dimension_numbers<[1], [0], [0], [1], [0, 0, 1, 1], [], []>} : vector<256x3xbf16>, vector<3x12xbf16>, vector<256x12xf32> -> vector<256x12xf32>
    %40 = arith.addf %33, %39 : vector<256x12xf32>
    %c1_48 = arith.constant 1 : index
    %c2_49 = arith.constant 2 : index
    %c0_50 = arith.constant 0 : index
    %41 = vector.load %arg15[%c1_48, %c2_49, %c0_50] : memref<18x18x3xf32, #tpu.memory_space<vmem>>, vector<16x16x3xf32>
    %42 = vector.shape_cast %41 : vector<16x16x3xf32> to vector<256x3xf32>
    %43 = arith.truncf %42 : vector<256x3xf32> to vector<256x3xbf16>
    %c1_51 = arith.constant 1 : index
    %c2_52 = arith.constant 2 : index
    %c0_53 = arith.constant 0 : index
    %c0_54 = arith.constant 0 : index
    %44 = vector.load %arg2[%c1_51, %c2_52, %c0_53, %c0_54] : memref<3x3x3x12xbf16, #tpu.memory_space<vmem>>, vector<1x1x3x12xbf16>
    %45 = vector.shape_cast %44 : vector<1x1x3x12xbf16> to vector<3x12xbf16>
    %cst_55 = arith.constant dense<0.000000e+00> : vector<256x12xf32>
    %46 = tpu.matmul %43, %45, %cst_55 {dimension_numbers = #tpu.dot_dimension_numbers<[1], [0], [0], [1], [0, 0, 1, 1], [], []>} : vector<256x3xbf16>, vector<3x12xbf16>, vector<256x12xf32> -> vector<256x12xf32>
    %47 = arith.addf %40, %46 : vector<256x12xf32>
    %c2_56 = arith.constant 2 : index
    %c0_57 = arith.constant 0 : index
    %c0_58 = arith.constant 0 : index
    %48 = vector.load %arg15[%c2_56, %c0_57, %c0_58] : memref<18x18x3xf32, #tpu.memory_space<vmem>>, vector<16x16x3xf32>
    %49 = vector.shape_cast %48 : vector<16x16x3xf32> to vector<256x3xf32>
    %50 = arith.truncf %49 : vector<256x3xf32> to vector<256x3xbf16>
    %c2_59 = arith.constant 2 : index
    %c0_60 = arith.constant 0 : index
    %c0_61 = arith.constant 0 : index
    %c0_62 = arith.constant 0 : index
    %51 = vector.load %arg2[%c2_59, %c0_60, %c0_61, %c0_62] : memref<3x3x3x12xbf16, #tpu.memory_space<vmem>>, vector<1x1x3x12xbf16>
    %52 = vector.shape_cast %51 : vector<1x1x3x12xbf16> to vector<3x12xbf16>
    %cst_63 = arith.constant dense<0.000000e+00> : vector<256x12xf32>
    %53 = tpu.matmul %50, %52, %cst_63 {dimension_numbers = #tpu.dot_dimension_numbers<[1], [0], [0], [1], [0, 0, 1, 1], [], []>} : vector<256x3xbf16>, vector<3x12xbf16>, vector<256x12xf32> -> vector<256x12xf32>
    %54 = arith.addf %47, %53 : vector<256x12xf32>
    %c2_64 = arith.constant 2 : index
    %c1_65 = arith.constant 1 : index
    %c0_66 = arith.constant 0 : index
    %55 = vector.load %arg15[%c2_64, %c1_65, %c0_66] : memref<18x18x3xf32, #tpu.memory_space<vmem>>, vector<16x16x3xf32>
    %56 = vector.shape_cast %55 : vector<16x16x3xf32> to vector<256x3xf32>
    %57 = arith.truncf %56 : vector<256x3xf32> to vector<256x3xbf16>
    %c2_67 = arith.constant 2 : index
    %c1_68 = arith.constant 1 : index
    %c0_69 = arith.constant 0 : index
    %c0_70 = arith.constant 0 : index
    %58 = vector.load %arg2[%c2_67, %c1_68, %c0_69, %c0_70] : memref<3x3x3x12xbf16, #tpu.memory_space<vmem>>, vector<1x1x3x12xbf16>
    %59 = vector.shape_cast %58 : vector<1x1x3x12xbf16> to vector<3x12xbf16>
    %cst_71 = arith.constant dense<0.000000e+00> : vector<256x12xf32>
    %60 = tpu.matmul %57, %59, %cst_71 {dimension_numbers = #tpu.dot_dimension_numbers<[1], [0], [0], [1], [0, 0, 1, 1], [], []>} : vector<256x3xbf16>, vector<3x12xbf16>, vector<256x12xf32> -> vector<256x12xf32>
    %61 = arith.addf %54, %60 : vector<256x12xf32>
    %c2_72 = arith.constant 2 : index
    %c2_73 = arith.constant 2 : index
    %c0_74 = arith.constant 0 : index
    %62 = vector.load %arg15[%c2_72, %c2_73, %c0_74] : memref<18x18x3xf32, #tpu.memory_space<vmem>>, vector<16x16x3xf32>
    %63 = vector.shape_cast %62 : vector<16x16x3xf32> to vector<256x3xf32>
    %64 = arith.truncf %63 : vector<256x3xf32> to vector<256x3xbf16>
    %c2_75 = arith.constant 2 : index
    %c2_76 = arith.constant 2 : index
    %c0_77 = arith.constant 0 : index
    %c0_78 = arith.constant 0 : index
    %65 = vector.load %arg2[%c2_75, %c2_76, %c0_77, %c0_78] : memref<3x3x3x12xbf16, #tpu.memory_space<vmem>>, vector<1x1x3x12xbf16>
    %66 = vector.shape_cast %65 : vector<1x1x3x12xbf16> to vector<3x12xbf16>
    %cst_79 = arith.constant dense<0.000000e+00> : vector<256x12xf32>
    %67 = tpu.matmul %64, %66, %cst_79 {dimension_numbers = #tpu.dot_dimension_numbers<[1], [0], [0], [1], [0, 0, 1, 1], [], []>} : vector<256x3xbf16>, vector<3x12xbf16>, vector<256x12xf32> -> vector<256x12xf32>
    %68 = arith.addf %61, %67 : vector<256x12xf32>
    %c0_80 = arith.constant 0 : index
    %c0_81 = arith.constant 0 : index
    %69 = vector.load %arg3[%c0_80, %c0_81] : memref<1x12xf32, #tpu.memory_space<vmem>>, vector<1x12xf32>
    %70 = vector.broadcast %69 : vector<1x12xf32> to vector<256x12xf32>
    %71 = arith.addf %68, %70 : vector<256x12xf32>
    %cst_82 = arith.constant 0.000000e+00 : f32
    %72 = vector.broadcast %cst_82 : f32 to vector<256x12xf32>
    %73 = arith.cmpf oge, %71, %72 : vector<256x12xf32>
    %cst_83 = arith.constant 0.00999999977 : f32
    %74 = vector.broadcast %cst_83 : f32 to vector<256x12xf32>
    %75 = arith.mulf %74, %71 : vector<256x12xf32>
    %76 = arith.select %73, %71, %75 : vector<256x12xi1>, vector<256x12xf32>
    %77 = vector.shape_cast %76 : vector<256x12xf32> to vector<16x16x12xf32>
    %cst_84 = arith.constant 0.000000e+00 : f32
    %78 = vector.broadcast %cst_84 : f32 to vector<18x18x12xf32>
    %c0_85 = arith.constant 0 : index
    %c0_86 = arith.constant 0 : index
    %c0_87 = arith.constant 0 : index
    %79 = vector.load %arg16[%c0_85, %c0_86, %c0_87] : memref<18x18x12xf32, #tpu.memory_space<vmem>>, vector<18x18x12xf32>
    tpu.vector_store %arg16[%c0_85, %c0_86, %c0_87], %78 {strides = array<i32>} : memref<18x18x12xf32, #tpu.memory_space<vmem>>, vector<18x18x12xf32>,
    %c1_88 = arith.constant 1 : index
    %c1_89 = arith.constant 1 : index
    %c0_90 = arith.constant 0 : index
    %80 = vector.load %arg16[%c1_88, %c1_89, %c0_90] : memref<18x18x12xf32, #tpu.memory_space<vmem>>, vector<16x16x12xf32>
    tpu.vector_store %arg16[%c1_88, %c1_89, %c0_90], %77 {strides = array<i32>} : memref<18x18x12xf32, #tpu.memory_space<vmem>>, vector<16x16x12xf32>,
    %cst_91 = arith.constant 0.000000e+00 : f32
    %81 = vector.broadcast %cst_91 : f32 to vector<256x24xf32>
    %c0_92 = arith.constant 0 : index
    %c0_93 = arith.constant 0 : index
    %c0_94 = arith.constant 0 : index
    %82 = vector.load %arg16[%c0_92, %c0_93, %c0_94] : memref<18x18x12xf32, #tpu.memory_space<vmem>>, vector<16x16x12xf32>
    %83 = vector.shape_cast %82 : vector<16x16x12xf32> to vector<256x12xf32>
    %84 = arith.truncf %83 : vector<256x12xf32> to vector<256x12xbf16>
    %c0_95 = arith.constant 0 : index
    %c0_96 = arith.constant 0 : index
    %c0_97 = arith.constant 0 : index
    %c0_98 = arith.constant 0 : index
    %85 = vector.load %arg4[%c0_95, %c0_96, %c0_97, %c0_98] : memref<3x3x12x24xbf16, #tpu.memory_space<vmem>>, vector<1x1x12x24xbf16>
    %86 = vector.shape_cast %85 : vector<1x1x12x24xbf16> to vector<12x24xbf16>
    %cst_99 = arith.constant dense<0.000000e+00> : vector<256x24xf32>
    %87 = tpu.matmul %84, %86, %cst_99 {dimension_numbers = #tpu.dot_dimension_numbers<[1], [0], [0], [1], [0, 0, 1, 1], [], []>} : vector<256x12xbf16>, vector<12x24xbf16>, vector<256x24xf32> -> vector<256x24xf32>
    %88 = arith.addf %81, %87 : vector<256x24xf32>
    %c0_100 = arith.constant 0 : index
    %c1_101 = arith.constant 1 : index
    %c0_102 = arith.constant 0 : index
    %89 = vector.load %arg16[%c0_100, %c1_101, %c0_102] : memref<18x18x12xf32, #tpu.memory_space<vmem>>, vector<16x16x12xf32>
    %90 = vector.shape_cast %89 : vector<16x16x12xf32> to vector<256x12xf32>
    %91 = arith.truncf %90 : vector<256x12xf32> to vector<256x12xbf16>
    %c0_103 = arith.constant 0 : index
    %c1_104 = arith.constant 1 : index
    %c0_105 = arith.constant 0 : index
    %c0_106 = arith.constant 0 : index
    %92 = vector.load %arg4[%c0_103, %c1_104, %c0_105, %c0_106] : memref<3x3x12x24xbf16, #tpu.memory_space<vmem>>, vector<1x1x12x24xbf16>
    %93 = vector.shape_cast %92 : vector<1x1x12x24xbf16> to vector<12x24xbf16>
    %cst_107 = arith.constant dense<0.000000e+00> : vector<256x24xf32>
    %94 = tpu.matmul %91, %93, %cst_107 {dimension_numbers = #tpu.dot_dimension_numbers<[1], [0], [0], [1], [0, 0, 1, 1], [], []>} : vector<256x12xbf16>, vector<12x24xbf16>, vector<256x24xf32> -> vector<256x24xf32>
    %95 = arith.addf %88, %94 : vector<256x24xf32>
    %c0_108 = arith.constant 0 : index
    %c2_109 = arith.constant 2 : index
    %c0_110 = arith.constant 0 : index
    %96 = vector.load %arg16[%c0_108, %c2_109, %c0_110] : memref<18x18x12xf32, #tpu.memory_space<vmem>>, vector<16x16x12xf32>
    %97 = vector.shape_cast %96 : vector<16x16x12xf32> to vector<256x12xf32>
    %98 = arith.truncf %97 : vector<256x12xf32> to vector<256x12xbf16>
    %c0_111 = arith.constant 0 : index
    %c2_112 = arith.constant 2 : index
    %c0_113 = arith.constant 0 : index
    %c0_114 = arith.constant 0 : index
    %99 = vector.load %arg4[%c0_111, %c2_112, %c0_113, %c0_114] : memref<3x3x12x24xbf16, #tpu.memory_space<vmem>>, vector<1x1x12x24xbf16>
    %100 = vector.shape_cast %99 : vector<1x1x12x24xbf16> to vector<12x24xbf16>
    %cst_115 = arith.constant dense<0.000000e+00> : vector<256x24xf32>
    %101 = tpu.matmul %98, %100, %cst_115 {dimension_numbers = #tpu.dot_dimension_numbers<[1], [0], [0], [1], [0, 0, 1, 1], [], []>} : vector<256x12xbf16>, vector<12x24xbf16>, vector<256x24xf32> -> vector<256x24xf32>
    %102 = arith.addf %95, %101 : vector<256x24xf32>
    %c1_116 = arith.constant 1 : index
    %c0_117 = arith.constant 0 : index
    %c0_118 = arith.constant 0 : index
    %103 = vector.load %arg16[%c1_116, %c0_117, %c0_118] : memref<18x18x12xf32, #tpu.memory_space<vmem>>, vector<16x16x12xf32>
    %104 = vector.shape_cast %103 : vector<16x16x12xf32> to vector<256x12xf32>
    %105 = arith.truncf %104 : vector<256x12xf32> to vector<256x12xbf16>
    %c1_119 = arith.constant 1 : index
    %c0_120 = arith.constant 0 : index
    %c0_121 = arith.constant 0 : index
    %c0_122 = arith.constant 0 : index
    %106 = vector.load %arg4[%c1_119, %c0_120, %c0_121, %c0_122] : memref<3x3x12x24xbf16, #tpu.memory_space<vmem>>, vector<1x1x12x24xbf16>
    %107 = vector.shape_cast %106 : vector<1x1x12x24xbf16> to vector<12x24xbf16>
    %cst_123 = arith.constant dense<0.000000e+00> : vector<256x24xf32>
    %108 = tpu.matmul %105, %107, %cst_123 {dimension_numbers = #tpu.dot_dimension_numbers<[1], [0], [0], [1], [0, 0, 1, 1], [], []>} : vector<256x12xbf16>, vector<12x24xbf16>, vector<256x24xf32> -> vector<256x24xf32>
    %109 = arith.addf %102, %108 : vector<256x24xf32>
    %c1_124 = arith.constant 1 : index
    %c1_125 = arith.constant 1 : index
    %c0_126 = arith.constant 0 : index
    %110 = vector.load %arg16[%c1_124, %c1_125, %c0_126] : memref<18x18x12xf32, #tpu.memory_space<vmem>>, vector<16x16x12xf32>
    %111 = vector.shape_cast %110 : vector<16x16x12xf32> to vector<256x12xf32>
    %112 = arith.truncf %111 : vector<256x12xf32> to vector<256x12xbf16>
    %c1_127 = arith.constant 1 : index
    %c1_128 = arith.constant 1 : index
    %c0_129 = arith.constant 0 : index
    %c0_130 = arith.constant 0 : index
    %113 = vector.load %arg4[%c1_127, %c1_128, %c0_129, %c0_130] : memref<3x3x12x24xbf16, #tpu.memory_space<vmem>>, vector<1x1x12x24xbf16>
    %114 = vector.shape_cast %113 : vector<1x1x12x24xbf16> to vector<12x24xbf16>
    %cst_131 = arith.constant dense<0.000000e+00> : vector<256x24xf32>
    %115 = tpu.matmul %112, %114, %cst_131 {dimension_numbers = #tpu.dot_dimension_numbers<[1], [0], [0], [1], [0, 0, 1, 1], [], []>} : vector<256x12xbf16>, vector<12x24xbf16>, vector<256x24xf32> -> vector<256x24xf32>
    %116 = arith.addf %109, %115 : vector<256x24xf32>
    %c1_132 = arith.constant 1 : index
    %c2_133 = arith.constant 2 : index
    %c0_134 = arith.constant 0 : index
    %117 = vector.load %arg16[%c1_132, %c2_133, %c0_134] : memref<18x18x12xf32, #tpu.memory_space<vmem>>, vector<16x16x12xf32>
    %118 = vector.shape_cast %117 : vector<16x16x12xf32> to vector<256x12xf32>
    %119 = arith.truncf %118 : vector<256x12xf32> to vector<256x12xbf16>
    %c1_135 = arith.constant 1 : index
    %c2_136 = arith.constant 2 : index
    %c0_137 = arith.constant 0 : index
    %c0_138 = arith.constant 0 : index
    %120 = vector.load %arg4[%c1_135, %c2_136, %c0_137, %c0_138] : memref<3x3x12x24xbf16, #tpu.memory_space<vmem>>, vector<1x1x12x24xbf16>
    %121 = vector.shape_cast %120 : vector<1x1x12x24xbf16> to vector<12x24xbf16>
    %cst_139 = arith.constant dense<0.000000e+00> : vector<256x24xf32>
    %122 = tpu.matmul %119, %121, %cst_139 {dimension_numbers = #tpu.dot_dimension_numbers<[1], [0], [0], [1], [0, 0, 1, 1], [], []>} : vector<256x12xbf16>, vector<12x24xbf16>, vector<256x24xf32> -> vector<256x24xf32>
    %123 = arith.addf %116, %122 : vector<256x24xf32>
    %c2_140 = arith.constant 2 : index
    %c0_141 = arith.constant 0 : index
    %c0_142 = arith.constant 0 : index
    %124 = vector.load %arg16[%c2_140, %c0_141, %c0_142] : memref<18x18x12xf32, #tpu.memory_space<vmem>>, vector<16x16x12xf32>
    %125 = vector.shape_cast %124 : vector<16x16x12xf32> to vector<256x12xf32>
    %126 = arith.truncf %125 : vector<256x12xf32> to vector<256x12xbf16>
    %c2_143 = arith.constant 2 : index
    %c0_144 = arith.constant 0 : index
    %c0_145 = arith.constant 0 : index
    %c0_146 = arith.constant 0 : index
    %127 = vector.load %arg4[%c2_143, %c0_144, %c0_145, %c0_146] : memref<3x3x12x24xbf16, #tpu.memory_space<vmem>>, vector<1x1x12x24xbf16>
    %128 = vector.shape_cast %127 : vector<1x1x12x24xbf16> to vector<12x24xbf16>
    %cst_147 = arith.constant dense<0.000000e+00> : vector<256x24xf32>
    %129 = tpu.matmul %126, %128, %cst_147 {dimension_numbers = #tpu.dot_dimension_numbers<[1], [0], [0], [1], [0, 0, 1, 1], [], []>} : vector<256x12xbf16>, vector<12x24xbf16>, vector<256x24xf32> -> vector<256x24xf32>
    %130 = arith.addf %123, %129 : vector<256x24xf32>
    %c2_148 = arith.constant 2 : index
    %c1_149 = arith.constant 1 : index
    %c0_150 = arith.constant 0 : index
    %131 = vector.load %arg16[%c2_148, %c1_149, %c0_150] : memref<18x18x12xf32, #tpu.memory_space<vmem>>, vector<16x16x12xf32>
    %132 = vector.shape_cast %131 : vector<16x16x12xf32> to vector<256x12xf32>
    %133 = arith.truncf %132 : vector<256x12xf32> to vector<256x12xbf16>
    %c2_151 = arith.constant 2 : index
    %c1_152 = arith.constant 1 : index
    %c0_153 = arith.constant 0 : index
    %c0_154 = arith.constant 0 : index
    %134 = vector.load %arg4[%c2_151, %c1_152, %c0_153, %c0_154] : memref<3x3x12x24xbf16, #tpu.memory_space<vmem>>, vector<1x1x12x24xbf16>
    %135 = vector.shape_cast %134 : vector<1x1x12x24xbf16> to vector<12x24xbf16>
    %cst_155 = arith.constant dense<0.000000e+00> : vector<256x24xf32>
    %136 = tpu.matmul %133, %135, %cst_155 {dimension_numbers = #tpu.dot_dimension_numbers<[1], [0], [0], [1], [0, 0, 1, 1], [], []>} : vector<256x12xbf16>, vector<12x24xbf16>, vector<256x24xf32> -> vector<256x24xf32>
    %137 = arith.addf %130, %136 : vector<256x24xf32>
    %c2_156 = arith.constant 2 : index
    %c2_157 = arith.constant 2 : index
    %c0_158 = arith.constant 0 : index
    %138 = vector.load %arg16[%c2_156, %c2_157, %c0_158] : memref<18x18x12xf32, #tpu.memory_space<vmem>>, vector<16x16x12xf32>
    %139 = vector.shape_cast %138 : vector<16x16x12xf32> to vector<256x12xf32>
    %140 = arith.truncf %139 : vector<256x12xf32> to vector<256x12xbf16>
    %c2_159 = arith.constant 2 : index
    %c2_160 = arith.constant 2 : index
    %c0_161 = arith.constant 0 : index
    %c0_162 = arith.constant 0 : index
    %141 = vector.load %arg4[%c2_159, %c2_160, %c0_161, %c0_162] : memref<3x3x12x24xbf16, #tpu.memory_space<vmem>>, vector<1x1x12x24xbf16>
    %142 = vector.shape_cast %141 : vector<1x1x12x24xbf16> to vector<12x24xbf16>
    %cst_163 = arith.constant dense<0.000000e+00> : vector<256x24xf32>
    %143 = tpu.matmul %140, %142, %cst_163 {dimension_numbers = #tpu.dot_dimension_numbers<[1], [0], [0], [1], [0, 0, 1, 1], [], []>} : vector<256x12xbf16>, vector<12x24xbf16>, vector<256x24xf32> -> vector<256x24xf32>
    %144 = arith.addf %137, %143 : vector<256x24xf32>
    %c0_164 = arith.constant 0 : index
    %c0_165 = arith.constant 0 : index
    %145 = vector.load %arg5[%c0_164, %c0_165] : memref<1x24xf32, #tpu.memory_space<vmem>>, vector<1x24xf32>
    %146 = vector.broadcast %145 : vector<1x24xf32> to vector<256x24xf32>
    %147 = arith.addf %144, %146 : vector<256x24xf32>
    %cst_166 = arith.constant 0.000000e+00 : f32
    %148 = vector.broadcast %cst_166 : f32 to vector<256x24xf32>
    %149 = arith.cmpf oge, %147, %148 : vector<256x24xf32>
    %cst_167 = arith.constant 0.00999999977 : f32
    %150 = vector.broadcast %cst_167 : f32 to vector<256x24xf32>
    %151 = arith.mulf %150, %147 : vector<256x24xf32>
    %152 = arith.select %149, %147, %151 : vector<256x24xi1>, vector<256x24xf32>
    %153 = vector.shape_cast %152 : vector<256x24xf32> to vector<16x16x24xf32>
    %154 = vector.shape_cast %153 : vector<16x16x24xf32> to vector<8x2x16x24xf32>
    %155 = vector.extract_strided_slice %154 {offsets = [0, 0, 0, 0], sizes = [8, 1, 16, 24], strides = [1, 1, 1, 1]} : vector<8x2x16x24xf32> to vector<8x1x16x24xf32>
    %156 = vector.shape_cast %155 : vector<8x1x16x24xf32> to vector<8x16x24xf32>
    %157 = vector.extract_strided_slice %154 {offsets = [0, 1, 0, 0], sizes = [8, 1, 16, 24], strides = [1, 1, 1, 1]} : vector<8x2x16x24xf32> to vector<8x1x16x24xf32>
    %158 = vector.shape_cast %157 : vector<8x1x16x24xf32> to vector<8x16x24xf32>
    %159 = arith.maximumf %156, %158 : vector<8x16x24xf32>
    %cst_168 = arith.constant 0.000000e+00 : f32
    %160 = vector.broadcast %cst_168 : f32 to vector<10x10x24xf32>
    %c0_169 = arith.constant 0 : index
    %c0_170 = arith.constant 0 : index
    %c0_171 = arith.constant 0 : index
    %161 = vector.load %arg17[%c0_169, %c0_170, %c0_171] : memref<10x10x24xf32, #tpu.memory_space<vmem>>, vector<10x10x24xf32>
    tpu.vector_store %arg17[%c0_169, %c0_170, %c0_171], %160 {strides = array<i32>} : memref<10x10x24xf32, #tpu.memory_space<vmem>>, vector<10x10x24xf32>,
    %162 = vector.extract_strided_slice %159 {offsets = [0, 0, 0], sizes = [8, 1, 24], strides = [1, 1, 1]} : vector<8x16x24xf32> to vector<8x1x24xf32>
    %163 = vector.extract_strided_slice %159 {offsets = [0, 1, 0], sizes = [8, 1, 24], strides = [1, 1, 1]} : vector<8x16x24xf32> to vector<8x1x24xf32>
    %164 = arith.maximumf %162, %163 : vector<8x1x24xf32>
    %c1_172 = arith.constant 1 : index
    %c1_173 = arith.constant 1 : index
    %c0_174 = arith.constant 0 : index
    %165 = vector.load %arg17[%c1_172, %c1_173, %c0_174] : memref<10x10x24xf32, #tpu.memory_space<vmem>>, vector<8x1x24xf32>
    tpu.vector_store %arg17[%c1_172, %c1_173, %c0_174], %164 {strides = array<i32>} : memref<10x10x24xf32, #tpu.memory_space<vmem>>, vector<8x1x24xf32>,
    %166 = vector.extract_strided_slice %159 {offsets = [0, 2, 0], sizes = [8, 1, 24], strides = [1, 1, 1]} : vector<8x16x24xf32> to vector<8x1x24xf32>
    %167 = vector.extract_strided_slice %159 {offsets = [0, 3, 0], sizes = [8, 1, 24], strides = [1, 1, 1]} : vector<8x16x24xf32> to vector<8x1x24xf32>
    %168 = arith.maximumf %166, %167 : vector<8x1x24xf32>
    %c1_175 = arith.constant 1 : index
    %c2_176 = arith.constant 2 : index
    %c0_177 = arith.constant 0 : index
    %169 = vector.load %arg17[%c1_175, %c2_176, %c0_177] : memref<10x10x24xf32, #tpu.memory_space<vmem>>, vector<8x1x24xf32>
    tpu.vector_store %arg17[%c1_175, %c2_176, %c0_177], %168 {strides = array<i32>} : memref<10x10x24xf32, #tpu.memory_space<vmem>>, vector<8x1x24xf32>,
    %170 = vector.extract_strided_slice %159 {offsets = [0, 4, 0], sizes = [8, 1, 24], strides = [1, 1, 1]} : vector<8x16x24xf32> to vector<8x1x24xf32>
    %171 = vector.extract_strided_slice %159 {offsets = [0, 5, 0], sizes = [8, 1, 24], strides = [1, 1, 1]} : vector<8x16x24xf32> to vector<8x1x24xf32>
    %172 = arith.maximumf %170, %171 : vector<8x1x24xf32>
    %c1_178 = arith.constant 1 : index
    %c3 = arith.constant 3 : index
    %c0_179 = arith.constant 0 : index
    %173 = vector.load %arg17[%c1_178, %c3, %c0_179] : memref<10x10x24xf32, #tpu.memory_space<vmem>>, vector<8x1x24xf32>
    tpu.vector_store %arg17[%c1_178, %c3, %c0_179], %172 {strides = array<i32>} : memref<10x10x24xf32, #tpu.memory_space<vmem>>, vector<8x1x24xf32>,
    %174 = vector.extract_strided_slice %159 {offsets = [0, 6, 0], sizes = [8, 1, 24], strides = [1, 1, 1]} : vector<8x16x24xf32> to vector<8x1x24xf32>
    %175 = vector.extract_strided_slice %159 {offsets = [0, 7, 0], sizes = [8, 1, 24], strides = [1, 1, 1]} : vector<8x16x24xf32> to vector<8x1x24xf32>
    %176 = arith.maximumf %174, %175 : vector<8x1x24xf32>
    %c1_180 = arith.constant 1 : index
    %c4 = arith.constant 4 : index
    %c0_181 = arith.constant 0 : index
    %177 = vector.load %arg17[%c1_180, %c4, %c0_181] : memref<10x10x24xf32, #tpu.memory_space<vmem>>, vector<8x1x24xf32>
    tpu.vector_store %arg17[%c1_180, %c4, %c0_181], %176 {strides = array<i32>} : memref<10x10x24xf32, #tpu.memory_space<vmem>>, vector<8x1x24xf32>,
    %178 = vector.extract_strided_slice %159 {offsets = [0, 8, 0], sizes = [8, 1, 24], strides = [1, 1, 1]} : vector<8x16x24xf32> to vector<8x1x24xf32>
    %179 = vector.extract_strided_slice %159 {offsets = [0, 9, 0], sizes = [8, 1, 24], strides = [1, 1, 1]} : vector<8x16x24xf32> to vector<8x1x24xf32>
    %180 = arith.maximumf %178, %179 : vector<8x1x24xf32>
    %c1_182 = arith.constant 1 : index
    %c5 = arith.constant 5 : index
    %c0_183 = arith.constant 0 : index
    %181 = vector.load %arg17[%c1_182, %c5, %c0_183] : memref<10x10x24xf32, #tpu.memory_space<vmem>>, vector<8x1x24xf32>
    tpu.vector_store %arg17[%c1_182, %c5, %c0_183], %180 {strides = array<i32>} : memref<10x10x24xf32, #tpu.memory_space<vmem>>, vector<8x1x24xf32>,
    %182 = vector.extract_strided_slice %159 {offsets = [0, 10, 0], sizes = [8, 1, 24], strides = [1, 1, 1]} : vector<8x16x24xf32> to vector<8x1x24xf32>
    %183 = vector.extract_strided_slice %159 {offsets = [0, 11, 0], sizes = [8, 1, 24], strides = [1, 1, 1]} : vector<8x16x24xf32> to vector<8x1x24xf32>
    %184 = arith.maximumf %182, %183 : vector<8x1x24xf32>
    %c1_184 = arith.constant 1 : index
    %c6 = arith.constant 6 : index
    %c0_185 = arith.constant 0 : index
    %185 = vector.load %arg17[%c1_184, %c6, %c0_185] : memref<10x10x24xf32, #tpu.memory_space<vmem>>, vector<8x1x24xf32>
    tpu.vector_store %arg17[%c1_184, %c6, %c0_185], %184 {strides = array<i32>} : memref<10x10x24xf32, #tpu.memory_space<vmem>>, vector<8x1x24xf32>,
    %186 = vector.extract_strided_slice %159 {offsets = [0, 12, 0], sizes = [8, 1, 24], strides = [1, 1, 1]} : vector<8x16x24xf32> to vector<8x1x24xf32>
    %187 = vector.extract_strided_slice %159 {offsets = [0, 13, 0], sizes = [8, 1, 24], strides = [1, 1, 1]} : vector<8x16x24xf32> to vector<8x1x24xf32>
    %188 = arith.maximumf %186, %187 : vector<8x1x24xf32>
    %c1_186 = arith.constant 1 : index
    %c7 = arith.constant 7 : index
    %c0_187 = arith.constant 0 : index
    %189 = vector.load %arg17[%c1_186, %c7, %c0_187] : memref<10x10x24xf32, #tpu.memory_space<vmem>>, vector<8x1x24xf32>
    tpu.vector_store %arg17[%c1_186, %c7, %c0_187], %188 {strides = array<i32>} : memref<10x10x24xf32, #tpu.memory_space<vmem>>, vector<8x1x24xf32>,
    %190 = vector.extract_strided_slice %159 {offsets = [0, 14, 0], sizes = [8, 1, 24], strides = [1, 1, 1]} : vector<8x16x24xf32> to vector<8x1x24xf32>
    %191 = vector.extract_strided_slice %159 {offsets = [0, 15, 0], sizes = [8, 1, 24], strides = [1, 1, 1]} : vector<8x16x24xf32> to vector<8x1x24xf32>
    %192 = arith.maximumf %190, %191 : vector<8x1x24xf32>
    %c1_188 = arith.constant 1 : index
    %c8 = arith.constant 8 : index
    %c0_189 = arith.constant 0 : index
    %193 = vector.load %arg17[%c1_188, %c8, %c0_189] : memref<10x10x24xf32, #tpu.memory_space<vmem>>, vector<8x1x24xf32>
    tpu.vector_store %arg17[%c1_188, %c8, %c0_189], %192 {strides = array<i32>} : memref<10x10x24xf32, #tpu.memory_space<vmem>>, vector<8x1x24xf32>,
    %cst_190 = arith.constant 0.000000e+00 : f32
    %194 = vector.broadcast %cst_190 : f32 to vector<64x128xf32>
    %c0_191 = arith.constant 0 : index
    %c0_192 = arith.constant 0 : index
    %c0_193 = arith.constant 0 : index
    %195 = vector.load %arg17[%c0_191, %c0_192, %c0_193] : memref<10x10x24xf32, #tpu.memory_space<vmem>>, vector<8x8x24xf32>
    %196 = vector.shape_cast %195 : vector<8x8x24xf32> to vector<64x24xf32>
    %197 = arith.truncf %196 : vector<64x24xf32> to vector<64x24xbf16>
    %c0_194 = arith.constant 0 : index
    %c0_195 = arith.constant 0 : index
    %c0_196 = arith.constant 0 : index
    %c0_197 = arith.constant 0 : index
    %198 = vector.load %arg6[%c0_194, %c0_195, %c0_196, %c0_197] : memref<3x3x24x128xbf16, #tpu.memory_space<vmem>>, vector<1x1x24x128xbf16>
    %199 = vector.shape_cast %198 : vector<1x1x24x128xbf16> to vector<24x128xbf16>
    %cst_198 = arith.constant dense<0.000000e+00> : vector<64x128xf32>
    %200 = tpu.matmul %197, %199, %cst_198 {dimension_numbers = #tpu.dot_dimension_numbers<[1], [0], [0], [1], [0, 0, 1, 1], [], []>} : vector<64x24xbf16>, vector<24x128xbf16>, vector<64x128xf32> -> vector<64x128xf32>
    %201 = arith.addf %194, %200 : vector<64x128xf32>
    %c0_199 = arith.constant 0 : index
    %c1_200 = arith.constant 1 : index
    %c0_201 = arith.constant 0 : index
    %202 = vector.load %arg17[%c0_199, %c1_200, %c0_201] : memref<10x10x24xf32, #tpu.memory_space<vmem>>, vector<8x8x24xf32>
    %203 = vector.shape_cast %202 : vector<8x8x24xf32> to vector<64x24xf32>
    %204 = arith.truncf %203 : vector<64x24xf32> to vector<64x24xbf16>
    %c0_202 = arith.constant 0 : index
    %c1_203 = arith.constant 1 : index
    %c0_204 = arith.constant 0 : index
    %c0_205 = arith.constant 0 : index
    %205 = vector.load %arg6[%c0_202, %c1_203, %c0_204, %c0_205] : memref<3x3x24x128xbf16, #tpu.memory_space<vmem>>, vector<1x1x24x128xbf16>
    %206 = vector.shape_cast %205 : vector<1x1x24x128xbf16> to vector<24x128xbf16>
    %cst_206 = arith.constant dense<0.000000e+00> : vector<64x128xf32>
    %207 = tpu.matmul %204, %206, %cst_206 {dimension_numbers = #tpu.dot_dimension_numbers<[1], [0], [0], [1], [0, 0, 1, 1], [], []>} : vector<64x24xbf16>, vector<24x128xbf16>, vector<64x128xf32> -> vector<64x128xf32>
    %208 = arith.addf %201, %207 : vector<64x128xf32>
    %c0_207 = arith.constant 0 : index
    %c2_208 = arith.constant 2 : index
    %c0_209 = arith.constant 0 : index
    %209 = vector.load %arg17[%c0_207, %c2_208, %c0_209] : memref<10x10x24xf32, #tpu.memory_space<vmem>>, vector<8x8x24xf32>
    %210 = vector.shape_cast %209 : vector<8x8x24xf32> to vector<64x24xf32>
    %211 = arith.truncf %210 : vector<64x24xf32> to vector<64x24xbf16>
    %c0_210 = arith.constant 0 : index
    %c2_211 = arith.constant 2 : index
    %c0_212 = arith.constant 0 : index
    %c0_213 = arith.constant 0 : index
    %212 = vector.load %arg6[%c0_210, %c2_211, %c0_212, %c0_213] : memref<3x3x24x128xbf16, #tpu.memory_space<vmem>>, vector<1x1x24x128xbf16>
    %213 = vector.shape_cast %212 : vector<1x1x24x128xbf16> to vector<24x128xbf16>
    %cst_214 = arith.constant dense<0.000000e+00> : vector<64x128xf32>
    %214 = tpu.matmul %211, %213, %cst_214 {dimension_numbers = #tpu.dot_dimension_numbers<[1], [0], [0], [1], [0, 0, 1, 1], [], []>} : vector<64x24xbf16>, vector<24x128xbf16>, vector<64x128xf32> -> vector<64x128xf32>
    %215 = arith.addf %208, %214 : vector<64x128xf32>
    %c1_215 = arith.constant 1 : index
    %c0_216 = arith.constant 0 : index
    %c0_217 = arith.constant 0 : index
    %216 = vector.load %arg17[%c1_215, %c0_216, %c0_217] : memref<10x10x24xf32, #tpu.memory_space<vmem>>, vector<8x8x24xf32>
    %217 = vector.shape_cast %216 : vector<8x8x24xf32> to vector<64x24xf32>
    %218 = arith.truncf %217 : vector<64x24xf32> to vector<64x24xbf16>
    %c1_218 = arith.constant 1 : index
    %c0_219 = arith.constant 0 : index
    %c0_220 = arith.constant 0 : index
    %c0_221 = arith.constant 0 : index
    %219 = vector.load %arg6[%c1_218, %c0_219, %c0_220, %c0_221] : memref<3x3x24x128xbf16, #tpu.memory_space<vmem>>, vector<1x1x24x128xbf16>
    %220 = vector.shape_cast %219 : vector<1x1x24x128xbf16> to vector<24x128xbf16>
    %cst_222 = arith.constant dense<0.000000e+00> : vector<64x128xf32>
    %221 = tpu.matmul %218, %220, %cst_222 {dimension_numbers = #tpu.dot_dimension_numbers<[1], [0], [0], [1], [0, 0, 1, 1], [], []>} : vector<64x24xbf16>, vector<24x128xbf16>, vector<64x128xf32> -> vector<64x128xf32>
    %222 = arith.addf %215, %221 : vector<64x128xf32>
    %c1_223 = arith.constant 1 : index
    %c1_224 = arith.constant 1 : index
    %c0_225 = arith.constant 0 : index
    %223 = vector.load %arg17[%c1_223, %c1_224, %c0_225] : memref<10x10x24xf32, #tpu.memory_space<vmem>>, vector<8x8x24xf32>
    %224 = vector.shape_cast %223 : vector<8x8x24xf32> to vector<64x24xf32>
    %225 = arith.truncf %224 : vector<64x24xf32> to vector<64x24xbf16>
    %c1_226 = arith.constant 1 : index
    %c1_227 = arith.constant 1 : index
    %c0_228 = arith.constant 0 : index
    %c0_229 = arith.constant 0 : index
    %226 = vector.load %arg6[%c1_226, %c1_227, %c0_228, %c0_229] : memref<3x3x24x128xbf16, #tpu.memory_space<vmem>>, vector<1x1x24x128xbf16>
    %227 = vector.shape_cast %226 : vector<1x1x24x128xbf16> to vector<24x128xbf16>
    %cst_230 = arith.constant dense<0.000000e+00> : vector<64x128xf32>
    %228 = tpu.matmul %225, %227, %cst_230 {dimension_numbers = #tpu.dot_dimension_numbers<[1], [0], [0], [1], [0, 0, 1, 1], [], []>} : vector<64x24xbf16>, vector<24x128xbf16>, vector<64x128xf32> -> vector<64x128xf32>
    %229 = arith.addf %222, %228 : vector<64x128xf32>
    %c1_231 = arith.constant 1 : index
    %c2_232 = arith.constant 2 : index
    %c0_233 = arith.constant 0 : index
    %230 = vector.load %arg17[%c1_231, %c2_232, %c0_233] : memref<10x10x24xf32, #tpu.memory_space<vmem>>, vector<8x8x24xf32>
    %231 = vector.shape_cast %230 : vector<8x8x24xf32> to vector<64x24xf32>
    %232 = arith.truncf %231 : vector<64x24xf32> to vector<64x24xbf16>
    %c1_234 = arith.constant 1 : index
    %c2_235 = arith.constant 2 : index
    %c0_236 = arith.constant 0 : index
    %c0_237 = arith.constant 0 : index
    %233 = vector.load %arg6[%c1_234, %c2_235, %c0_236, %c0_237] : memref<3x3x24x128xbf16, #tpu.memory_space<vmem>>, vector<1x1x24x128xbf16>
    %234 = vector.shape_cast %233 : vector<1x1x24x128xbf16> to vector<24x128xbf16>
    %cst_238 = arith.constant dense<0.000000e+00> : vector<64x128xf32>
    %235 = tpu.matmul %232, %234, %cst_238 {dimension_numbers = #tpu.dot_dimension_numbers<[1], [0], [0], [1], [0, 0, 1, 1], [], []>} : vector<64x24xbf16>, vector<24x128xbf16>, vector<64x128xf32> -> vector<64x128xf32>
    %236 = arith.addf %229, %235 : vector<64x128xf32>
    %c2_239 = arith.constant 2 : index
    %c0_240 = arith.constant 0 : index
    %c0_241 = arith.constant 0 : index
    %237 = vector.load %arg17[%c2_239, %c0_240, %c0_241] : memref<10x10x24xf32, #tpu.memory_space<vmem>>, vector<8x8x24xf32>
    %238 = vector.shape_cast %237 : vector<8x8x24xf32> to vector<64x24xf32>
    %239 = arith.truncf %238 : vector<64x24xf32> to vector<64x24xbf16>
    %c2_242 = arith.constant 2 : index
    %c0_243 = arith.constant 0 : index
    %c0_244 = arith.constant 0 : index
    %c0_245 = arith.constant 0 : index
    %240 = vector.load %arg6[%c2_242, %c0_243, %c0_244, %c0_245] : memref<3x3x24x128xbf16, #tpu.memory_space<vmem>>, vector<1x1x24x128xbf16>
    %241 = vector.shape_cast %240 : vector<1x1x24x128xbf16> to vector<24x128xbf16>
    %cst_246 = arith.constant dense<0.000000e+00> : vector<64x128xf32>
    %242 = tpu.matmul %239, %241, %cst_246 {dimension_numbers = #tpu.dot_dimension_numbers<[1], [0], [0], [1], [0, 0, 1, 1], [], []>} : vector<64x24xbf16>, vector<24x128xbf16>, vector<64x128xf32> -> vector<64x128xf32>
    %243 = arith.addf %236, %242 : vector<64x128xf32>
    %c2_247 = arith.constant 2 : index
    %c1_248 = arith.constant 1 : index
    %c0_249 = arith.constant 0 : index
    %244 = vector.load %arg17[%c2_247, %c1_248, %c0_249] : memref<10x10x24xf32, #tpu.memory_space<vmem>>, vector<8x8x24xf32>
    %245 = vector.shape_cast %244 : vector<8x8x24xf32> to vector<64x24xf32>
    %246 = arith.truncf %245 : vector<64x24xf32> to vector<64x24xbf16>
    %c2_250 = arith.constant 2 : index
    %c1_251 = arith.constant 1 : index
    %c0_252 = arith.constant 0 : index
    %c0_253 = arith.constant 0 : index
    %247 = vector.load %arg6[%c2_250, %c1_251, %c0_252, %c0_253] : memref<3x3x24x128xbf16, #tpu.memory_space<vmem>>, vector<1x1x24x128xbf16>
    %248 = vector.shape_cast %247 : vector<1x1x24x128xbf16> to vector<24x128xbf16>
    %cst_254 = arith.constant dense<0.000000e+00> : vector<64x128xf32>
    %249 = tpu.matmul %246, %248, %cst_254 {dimension_numbers = #tpu.dot_dimension_numbers<[1], [0], [0], [1], [0, 0, 1, 1], [], []>} : vector<64x24xbf16>, vector<24x128xbf16>, vector<64x128xf32> -> vector<64x128xf32>
    %250 = arith.addf %243, %249 : vector<64x128xf32>
    %c2_255 = arith.constant 2 : index
    %c2_256 = arith.constant 2 : index
    %c0_257 = arith.constant 0 : index
    %251 = vector.load %arg17[%c2_255, %c2_256, %c0_257] : memref<10x10x24xf32, #tpu.memory_space<vmem>>, vector<8x8x24xf32>
    %252 = vector.shape_cast %251 : vector<8x8x24xf32> to vector<64x24xf32>
    %253 = arith.truncf %252 : vector<64x24xf32> to vector<64x24xbf16>
    %c2_258 = arith.constant 2 : index
    %c2_259 = arith.constant 2 : index
    %c0_260 = arith.constant 0 : index
    %c0_261 = arith.constant 0 : index
    %254 = vector.load %arg6[%c2_258, %c2_259, %c0_260, %c0_261] : memref<3x3x24x128xbf16, #tpu.memory_space<vmem>>, vector<1x1x24x128xbf16>
    %255 = vector.shape_cast %254 : vector<1x1x24x128xbf16> to vector<24x128xbf16>
    %cst_262 = arith.constant dense<0.000000e+00> : vector<64x128xf32>
    %256 = tpu.matmul %253, %255, %cst_262 {dimension_numbers = #tpu.dot_dimension_numbers<[1], [0], [0], [1], [0, 0, 1, 1], [], []>} : vector<64x24xbf16>, vector<24x128xbf16>, vector<64x128xf32> -> vector<64x128xf32>
    %257 = arith.addf %250, %256 : vector<64x128xf32>
    %c0_263 = arith.constant 0 : index
    %c0_264 = arith.constant 0 : index
    %258 = vector.load %arg7[%c0_263, %c0_264] : memref<1x128xf32, #tpu.memory_space<vmem>>, vector<1x128xf32>
    %259 = vector.broadcast %258 : vector<1x128xf32> to vector<64x128xf32>
    %260 = arith.addf %257, %259 : vector<64x128xf32>
    %cst_265 = arith.constant 0.000000e+00 : f32
    %261 = vector.broadcast %cst_265 : f32 to vector<64x128xf32>
    %262 = arith.cmpf oge, %260, %261 : vector<64x128xf32>
    %cst_266 = arith.constant 0.00999999977 : f32
    %263 = vector.broadcast %cst_266 : f32 to vector<64x128xf32>
    %264 = arith.mulf %263, %260 : vector<64x128xf32>
    %265 = arith.select %262, %260, %264 : vector<64x128xi1>, vector<64x128xf32>
    %266 = vector.shape_cast %265 : vector<64x128xf32> to vector<8x8x128xf32>
    %267 = vector.shape_cast %266 : vector<8x8x128xf32> to vector<4x2x8x128xf32>
    %268 = vector.extract_strided_slice %267 {offsets = [0, 0, 0, 0], sizes = [4, 1, 8, 128], strides = [1, 1, 1, 1]} : vector<4x2x8x128xf32> to vector<4x1x8x128xf32>
    %269 = vector.shape_cast %268 : vector<4x1x8x128xf32> to vector<4x8x128xf32>
    %270 = vector.extract_strided_slice %267 {offsets = [0, 1, 0, 0], sizes = [4, 1, 8, 128], strides = [1, 1, 1, 1]} : vector<4x2x8x128xf32> to vector<4x1x8x128xf32>
    %271 = vector.shape_cast %270 : vector<4x1x8x128xf32> to vector<4x8x128xf32>
    %272 = arith.maximumf %269, %271 : vector<4x8x128xf32>
    %cst_267 = arith.constant 0.000000e+00 : f32
    %273 = vector.broadcast %cst_267 : f32 to vector<1x84xf32>
    %274 = vector.extract_strided_slice %272 {offsets = [0, 0, 0], sizes = [1, 8, 128], strides = [1, 1, 1]} : vector<4x8x128xf32> to vector<1x8x128xf32>
    %275 = vector.shape_cast %274 : vector<1x8x128xf32> to vector<8x128xf32>
    %276 = vector.extract_strided_slice %275 {offsets = [0, 0], sizes = [1, 128], strides = [1, 1]} : vector<8x128xf32> to vector<1x128xf32>
    %277 = vector.extract_strided_slice %275 {offsets = [1, 0], sizes = [1, 128], strides = [1, 1]} : vector<8x128xf32> to vector<1x128xf32>
    %278 = arith.maximumf %276, %277 : vector<1x128xf32>
    %279 = arith.truncf %278 : vector<1x128xf32> to vector<1x128xbf16>
    %c0_268 = arith.constant 0 : index
    %c0_269 = arith.constant 0 : index
    %c0_270 = arith.constant 0 : index
    %c0_271 = arith.constant 0 : index
    %280 = vector.load %arg8[%c0_268, %c0_269, %c0_270, %c0_271] : memref<4x4x128x84xbf16, #tpu.memory_space<vmem>>, vector<1x1x128x84xbf16>
    %281 = vector.shape_cast %280 : vector<1x1x128x84xbf16> to vector<128x84xbf16>
    %cst_272 = arith.constant dense<0.000000e+00> : vector<1x84xf32>
    %282 = tpu.matmul %279, %281, %cst_272 {dimension_numbers = #tpu.dot_dimension_numbers<[1], [0], [0], [1], [0, 0, 1, 1], [], []>} : vector<1x128xbf16>, vector<128x84xbf16>, vector<1x84xf32> -> vector<1x84xf32>
    %283 = arith.addf %273, %282 : vector<1x84xf32>
    %284 = vector.extract_strided_slice %275 {offsets = [2, 0], sizes = [1, 128], strides = [1, 1]} : vector<8x128xf32> to vector<1x128xf32>
    %285 = vector.extract_strided_slice %275 {offsets = [3, 0], sizes = [1, 128], strides = [1, 1]} : vector<8x128xf32> to vector<1x128xf32>
    %286 = arith.maximumf %284, %285 : vector<1x128xf32>
    %287 = arith.truncf %286 : vector<1x128xf32> to vector<1x128xbf16>
    %c0_273 = arith.constant 0 : index
    %c1_274 = arith.constant 1 : index
    %c0_275 = arith.constant 0 : index
    %c0_276 = arith.constant 0 : index
    %288 = vector.load %arg8[%c0_273, %c1_274, %c0_275, %c0_276] : memref<4x4x128x84xbf16, #tpu.memory_space<vmem>>, vector<1x1x128x84xbf16>
    %289 = vector.shape_cast %288 : vector<1x1x128x84xbf16> to vector<128x84xbf16>
    %cst_277 = arith.constant dense<0.000000e+00> : vector<1x84xf32>
    %290 = tpu.matmul %287, %289, %cst_277 {dimension_numbers = #tpu.dot_dimension_numbers<[1], [0], [0], [1], [0, 0, 1, 1], [], []>} : vector<1x128xbf16>, vector<128x84xbf16>, vector<1x84xf32> -> vector<1x84xf32>
    %291 = arith.addf %283, %290 : vector<1x84xf32>
    %292 = vector.extract_strided_slice %275 {offsets = [4, 0], sizes = [1, 128], strides = [1, 1]} : vector<8x128xf32> to vector<1x128xf32>
    %293 = vector.extract_strided_slice %275 {offsets = [5, 0], sizes = [1, 128], strides = [1, 1]} : vector<8x128xf32> to vector<1x128xf32>
    %294 = arith.maximumf %292, %293 : vector<1x128xf32>
    %295 = arith.truncf %294 : vector<1x128xf32> to vector<1x128xbf16>
    %c0_278 = arith.constant 0 : index
    %c2_279 = arith.constant 2 : index
    %c0_280 = arith.constant 0 : index
    %c0_281 = arith.constant 0 : index
    %296 = vector.load %arg8[%c0_278, %c2_279, %c0_280, %c0_281] : memref<4x4x128x84xbf16, #tpu.memory_space<vmem>>, vector<1x1x128x84xbf16>
    %297 = vector.shape_cast %296 : vector<1x1x128x84xbf16> to vector<128x84xbf16>
    %cst_282 = arith.constant dense<0.000000e+00> : vector<1x84xf32>
    %298 = tpu.matmul %295, %297, %cst_282 {dimension_numbers = #tpu.dot_dimension_numbers<[1], [0], [0], [1], [0, 0, 1, 1], [], []>} : vector<1x128xbf16>, vector<128x84xbf16>, vector<1x84xf32> -> vector<1x84xf32>
    %299 = arith.addf %291, %298 : vector<1x84xf32>
    %300 = vector.extract_strided_slice %275 {offsets = [6, 0], sizes = [1, 128], strides = [1, 1]} : vector<8x128xf32> to vector<1x128xf32>
    %301 = vector.extract_strided_slice %275 {offsets = [7, 0], sizes = [1, 128], strides = [1, 1]} : vector<8x128xf32> to vector<1x128xf32>
    %302 = arith.maximumf %300, %301 : vector<1x128xf32>
    %303 = arith.truncf %302 : vector<1x128xf32> to vector<1x128xbf16>
    %c0_283 = arith.constant 0 : index
    %c3_284 = arith.constant 3 : index
    %c0_285 = arith.constant 0 : index
    %c0_286 = arith.constant 0 : index
    %304 = vector.load %arg8[%c0_283, %c3_284, %c0_285, %c0_286] : memref<4x4x128x84xbf16, #tpu.memory_space<vmem>>, vector<1x1x128x84xbf16>
    %305 = vector.shape_cast %304 : vector<1x1x128x84xbf16> to vector<128x84xbf16>
    %cst_287 = arith.constant dense<0.000000e+00> : vector<1x84xf32>
    %306 = tpu.matmul %303, %305, %cst_287 {dimension_numbers = #tpu.dot_dimension_numbers<[1], [0], [0], [1], [0, 0, 1, 1], [], []>} : vector<1x128xbf16>, vector<128x84xbf16>, vector<1x84xf32> -> vector<1x84xf32>
    %307 = arith.addf %299, %306 : vector<1x84xf32>
    %308 = vector.extract_strided_slice %272 {offsets = [1, 0, 0], sizes = [1, 8, 128], strides = [1, 1, 1]} : vector<4x8x128xf32> to vector<1x8x128xf32>
    %309 = vector.shape_cast %308 : vector<1x8x128xf32> to vector<8x128xf32>
    %310 = vector.extract_strided_slice %309 {offsets = [0, 0], sizes = [1, 128], strides = [1, 1]} : vector<8x128xf32> to vector<1x128xf32>
    %311 = vector.extract_strided_slice %309 {offsets = [1, 0], sizes = [1, 128], strides = [1, 1]} : vector<8x128xf32> to vector<1x128xf32>
    %312 = arith.maximumf %310, %311 : vector<1x128xf32>
    %313 = arith.truncf %312 : vector<1x128xf32> to vector<1x128xbf16>
    %c1_288 = arith.constant 1 : index
    %c0_289 = arith.constant 0 : index
    %c0_290 = arith.constant 0 : index
    %c0_291 = arith.constant 0 : index
    %314 = vector.load %arg8[%c1_288, %c0_289, %c0_290, %c0_291] : memref<4x4x128x84xbf16, #tpu.memory_space<vmem>>, vector<1x1x128x84xbf16>
    %315 = vector.shape_cast %314 : vector<1x1x128x84xbf16> to vector<128x84xbf16>
    %cst_292 = arith.constant dense<0.000000e+00> : vector<1x84xf32>
    %316 = tpu.matmul %313, %315, %cst_292 {dimension_numbers = #tpu.dot_dimension_numbers<[1], [0], [0], [1], [0, 0, 1, 1], [], []>} : vector<1x128xbf16>, vector<128x84xbf16>, vector<1x84xf32> -> vector<1x84xf32>
    %317 = arith.addf %307, %316 : vector<1x84xf32>
    %318 = vector.extract_strided_slice %309 {offsets = [2, 0], sizes = [1, 128], strides = [1, 1]} : vector<8x128xf32> to vector<1x128xf32>
    %319 = vector.extract_strided_slice %309 {offsets = [3, 0], sizes = [1, 128], strides = [1, 1]} : vector<8x128xf32> to vector<1x128xf32>
    %320 = arith.maximumf %318, %319 : vector<1x128xf32>
    %321 = arith.truncf %320 : vector<1x128xf32> to vector<1x128xbf16>
    %c1_293 = arith.constant 1 : index
    %c1_294 = arith.constant 1 : index
    %c0_295 = arith.constant 0 : index
    %c0_296 = arith.constant 0 : index
    %322 = vector.load %arg8[%c1_293, %c1_294, %c0_295, %c0_296] : memref<4x4x128x84xbf16, #tpu.memory_space<vmem>>, vector<1x1x128x84xbf16>
    %323 = vector.shape_cast %322 : vector<1x1x128x84xbf16> to vector<128x84xbf16>
    %cst_297 = arith.constant dense<0.000000e+00> : vector<1x84xf32>
    %324 = tpu.matmul %321, %323, %cst_297 {dimension_numbers = #tpu.dot_dimension_numbers<[1], [0], [0], [1], [0, 0, 1, 1], [], []>} : vector<1x128xbf16>, vector<128x84xbf16>, vector<1x84xf32> -> vector<1x84xf32>
    %325 = arith.addf %317, %324 : vector<1x84xf32>
    %326 = vector.extract_strided_slice %309 {offsets = [4, 0], sizes = [1, 128], strides = [1, 1]} : vector<8x128xf32> to vector<1x128xf32>
    %327 = vector.extract_strided_slice %309 {offsets = [5, 0], sizes = [1, 128], strides = [1, 1]} : vector<8x128xf32> to vector<1x128xf32>
    %328 = arith.maximumf %326, %327 : vector<1x128xf32>
    %329 = arith.truncf %328 : vector<1x128xf32> to vector<1x128xbf16>
    %c1_298 = arith.constant 1 : index
    %c2_299 = arith.constant 2 : index
    %c0_300 = arith.constant 0 : index
    %c0_301 = arith.constant 0 : index
    %330 = vector.load %arg8[%c1_298, %c2_299, %c0_300, %c0_301] : memref<4x4x128x84xbf16, #tpu.memory_space<vmem>>, vector<1x1x128x84xbf16>
    %331 = vector.shape_cast %330 : vector<1x1x128x84xbf16> to vector<128x84xbf16>
    %cst_302 = arith.constant dense<0.000000e+00> : vector<1x84xf32>
    %332 = tpu.matmul %329, %331, %cst_302 {dimension_numbers = #tpu.dot_dimension_numbers<[1], [0], [0], [1], [0, 0, 1, 1], [], []>} : vector<1x128xbf16>, vector<128x84xbf16>, vector<1x84xf32> -> vector<1x84xf32>
    %333 = arith.addf %325, %332 : vector<1x84xf32>
    %334 = vector.extract_strided_slice %309 {offsets = [6, 0], sizes = [1, 128], strides = [1, 1]} : vector<8x128xf32> to vector<1x128xf32>
    %335 = vector.extract_strided_slice %309 {offsets = [7, 0], sizes = [1, 128], strides = [1, 1]} : vector<8x128xf32> to vector<1x128xf32>
    %336 = arith.maximumf %334, %335 : vector<1x128xf32>
    %337 = arith.truncf %336 : vector<1x128xf32> to vector<1x128xbf16>
    %c1_303 = arith.constant 1 : index
    %c3_304 = arith.constant 3 : index
    %c0_305 = arith.constant 0 : index
    %c0_306 = arith.constant 0 : index
    %338 = vector.load %arg8[%c1_303, %c3_304, %c0_305, %c0_306] : memref<4x4x128x84xbf16, #tpu.memory_space<vmem>>, vector<1x1x128x84xbf16>
    %339 = vector.shape_cast %338 : vector<1x1x128x84xbf16> to vector<128x84xbf16>
    %cst_307 = arith.constant dense<0.000000e+00> : vector<1x84xf32>
    %340 = tpu.matmul %337, %339, %cst_307 {dimension_numbers = #tpu.dot_dimension_numbers<[1], [0], [0], [1], [0, 0, 1, 1], [], []>} : vector<1x128xbf16>, vector<128x84xbf16>, vector<1x84xf32> -> vector<1x84xf32>
    %341 = arith.addf %333, %340 : vector<1x84xf32>
    %342 = vector.extract_strided_slice %272 {offsets = [2, 0, 0], sizes = [1, 8, 128], strides = [1, 1, 1]} : vector<4x8x128xf32> to vector<1x8x128xf32>
    %343 = vector.shape_cast %342 : vector<1x8x128xf32> to vector<8x128xf32>
    %344 = vector.extract_strided_slice %343 {offsets = [0, 0], sizes = [1, 128], strides = [1, 1]} : vector<8x128xf32> to vector<1x128xf32>
    %345 = vector.extract_strided_slice %343 {offsets = [1, 0], sizes = [1, 128], strides = [1, 1]} : vector<8x128xf32> to vector<1x128xf32>
    %346 = arith.maximumf %344, %345 : vector<1x128xf32>
    %347 = arith.truncf %346 : vector<1x128xf32> to vector<1x128xbf16>
    %c2_308 = arith.constant 2 : index
    %c0_309 = arith.constant 0 : index
    %c0_310 = arith.constant 0 : index
    %c0_311 = arith.constant 0 : index
    %348 = vector.load %arg8[%c2_308, %c0_309, %c0_310, %c0_311] : memref<4x4x128x84xbf16, #tpu.memory_space<vmem>>, vector<1x1x128x84xbf16>
    %349 = vector.shape_cast %348 : vector<1x1x128x84xbf16> to vector<128x84xbf16>
    %cst_312 = arith.constant dense<0.000000e+00> : vector<1x84xf32>
    %350 = tpu.matmul %347, %349, %cst_312 {dimension_numbers = #tpu.dot_dimension_numbers<[1], [0], [0], [1], [0, 0, 1, 1], [], []>} : vector<1x128xbf16>, vector<128x84xbf16>, vector<1x84xf32> -> vector<1x84xf32>
    %351 = arith.addf %341, %350 : vector<1x84xf32>
    %352 = vector.extract_strided_slice %343 {offsets = [2, 0], sizes = [1, 128], strides = [1, 1]} : vector<8x128xf32> to vector<1x128xf32>
    %353 = vector.extract_strided_slice %343 {offsets = [3, 0], sizes = [1, 128], strides = [1, 1]} : vector<8x128xf32> to vector<1x128xf32>
    %354 = arith.maximumf %352, %353 : vector<1x128xf32>
    %355 = arith.truncf %354 : vector<1x128xf32> to vector<1x128xbf16>
    %c2_313 = arith.constant 2 : index
    %c1_314 = arith.constant 1 : index
    %c0_315 = arith.constant 0 : index
    %c0_316 = arith.constant 0 : index
    %356 = vector.load %arg8[%c2_313, %c1_314, %c0_315, %c0_316] : memref<4x4x128x84xbf16, #tpu.memory_space<vmem>>, vector<1x1x128x84xbf16>
    %357 = vector.shape_cast %356 : vector<1x1x128x84xbf16> to vector<128x84xbf16>
    %cst_317 = arith.constant dense<0.000000e+00> : vector<1x84xf32>
    %358 = tpu.matmul %355, %357, %cst_317 {dimension_numbers = #tpu.dot_dimension_numbers<[1], [0], [0], [1], [0, 0, 1, 1], [], []>} : vector<1x128xbf16>, vector<128x84xbf16>, vector<1x84xf32> -> vector<1x84xf32>
    %359 = arith.addf %351, %358 : vector<1x84xf32>
    %360 = vector.extract_strided_slice %343 {offsets = [4, 0], sizes = [1, 128], strides = [1, 1]} : vector<8x128xf32> to vector<1x128xf32>
    %361 = vector.extract_strided_slice %343 {offsets = [5, 0], sizes = [1, 128], strides = [1, 1]} : vector<8x128xf32> to vector<1x128xf32>
    %362 = arith.maximumf %360, %361 : vector<1x128xf32>
    %363 = arith.truncf %362 : vector<1x128xf32> to vector<1x128xbf16>
    %c2_318 = arith.constant 2 : index
    %c2_319 = arith.constant 2 : index
    %c0_320 = arith.constant 0 : index
    %c0_321 = arith.constant 0 : index
    %364 = vector.load %arg8[%c2_318, %c2_319, %c0_320, %c0_321] : memref<4x4x128x84xbf16, #tpu.memory_space<vmem>>, vector<1x1x128x84xbf16>
    %365 = vector.shape_cast %364 : vector<1x1x128x84xbf16> to vector<128x84xbf16>
    %cst_322 = arith.constant dense<0.000000e+00> : vector<1x84xf32>
    %366 = tpu.matmul %363, %365, %cst_322 {dimension_numbers = #tpu.dot_dimension_numbers<[1], [0], [0], [1], [0, 0, 1, 1], [], []>} : vector<1x128xbf16>, vector<128x84xbf16>, vector<1x84xf32> -> vector<1x84xf32>
    %367 = arith.addf %359, %366 : vector<1x84xf32>
    %368 = vector.extract_strided_slice %343 {offsets = [6, 0], sizes = [1, 128], strides = [1, 1]} : vector<8x128xf32> to vector<1x128xf32>
    %369 = vector.extract_strided_slice %343 {offsets = [7, 0], sizes = [1, 128], strides = [1, 1]} : vector<8x128xf32> to vector<1x128xf32>
    %370 = arith.maximumf %368, %369 : vector<1x128xf32>
    %371 = arith.truncf %370 : vector<1x128xf32> to vector<1x128xbf16>
    %c2_323 = arith.constant 2 : index
    %c3_324 = arith.constant 3 : index
    %c0_325 = arith.constant 0 : index
    %c0_326 = arith.constant 0 : index
    %372 = vector.load %arg8[%c2_323, %c3_324, %c0_325, %c0_326] : memref<4x4x128x84xbf16, #tpu.memory_space<vmem>>, vector<1x1x128x84xbf16>
    %373 = vector.shape_cast %372 : vector<1x1x128x84xbf16> to vector<128x84xbf16>
    %cst_327 = arith.constant dense<0.000000e+00> : vector<1x84xf32>
    %374 = tpu.matmul %371, %373, %cst_327 {dimension_numbers = #tpu.dot_dimension_numbers<[1], [0], [0], [1], [0, 0, 1, 1], [], []>} : vector<1x128xbf16>, vector<128x84xbf16>, vector<1x84xf32> -> vector<1x84xf32>
    %375 = arith.addf %367, %374 : vector<1x84xf32>
    %376 = vector.extract_strided_slice %272 {offsets = [3, 0, 0], sizes = [1, 8, 128], strides = [1, 1, 1]} : vector<4x8x128xf32> to vector<1x8x128xf32>
    %377 = vector.shape_cast %376 : vector<1x8x128xf32> to vector<8x128xf32>
    %378 = vector.extract_strided_slice %377 {offsets = [0, 0], sizes = [1, 128], strides = [1, 1]} : vector<8x128xf32> to vector<1x128xf32>
    %379 = vector.extract_strided_slice %377 {offsets = [1, 0], sizes = [1, 128], strides = [1, 1]} : vector<8x128xf32> to vector<1x128xf32>
    %380 = arith.maximumf %378, %379 : vector<1x128xf32>
    %381 = arith.truncf %380 : vector<1x128xf32> to vector<1x128xbf16>
    %c3_328 = arith.constant 3 : index
    %c0_329 = arith.constant 0 : index
    %c0_330 = arith.constant 0 : index
    %c0_331 = arith.constant 0 : index
    %382 = vector.load %arg8[%c3_328, %c0_329, %c0_330, %c0_331] : memref<4x4x128x84xbf16, #tpu.memory_space<vmem>>, vector<1x1x128x84xbf16>
    %383 = vector.shape_cast %382 : vector<1x1x128x84xbf16> to vector<128x84xbf16>
    %cst_332 = arith.constant dense<0.000000e+00> : vector<1x84xf32>
    %384 = tpu.matmul %381, %383, %cst_332 {dimension_numbers = #tpu.dot_dimension_numbers<[1], [0], [0], [1], [0, 0, 1, 1], [], []>} : vector<1x128xbf16>, vector<128x84xbf16>, vector<1x84xf32> -> vector<1x84xf32>
    %385 = arith.addf %375, %384 : vector<1x84xf32>
    %386 = vector.extract_strided_slice %377 {offsets = [2, 0], sizes = [1, 128], strides = [1, 1]} : vector<8x128xf32> to vector<1x128xf32>
    %387 = vector.extract_strided_slice %377 {offsets = [3, 0], sizes = [1, 128], strides = [1, 1]} : vector<8x128xf32> to vector<1x128xf32>
    %388 = arith.maximumf %386, %387 : vector<1x128xf32>
    %389 = arith.truncf %388 : vector<1x128xf32> to vector<1x128xbf16>
    %c3_333 = arith.constant 3 : index
    %c1_334 = arith.constant 1 : index
    %c0_335 = arith.constant 0 : index
    %c0_336 = arith.constant 0 : index
    %390 = vector.load %arg8[%c3_333, %c1_334, %c0_335, %c0_336] : memref<4x4x128x84xbf16, #tpu.memory_space<vmem>>, vector<1x1x128x84xbf16>
    %391 = vector.shape_cast %390 : vector<1x1x128x84xbf16> to vector<128x84xbf16>
    %cst_337 = arith.constant dense<0.000000e+00> : vector<1x84xf32>
    %392 = tpu.matmul %389, %391, %cst_337 {dimension_numbers = #tpu.dot_dimension_numbers<[1], [0], [0], [1], [0, 0, 1, 1], [], []>} : vector<1x128xbf16>, vector<128x84xbf16>, vector<1x84xf32> -> vector<1x84xf32>
    %393 = arith.addf %385, %392 : vector<1x84xf32>
    %394 = vector.extract_strided_slice %377 {offsets = [4, 0], sizes = [1, 128], strides = [1, 1]} : vector<8x128xf32> to vector<1x128xf32>
    %395 = vector.extract_strided_slice %377 {offsets = [5, 0], sizes = [1, 128], strides = [1, 1]} : vector<8x128xf32> to vector<1x128xf32>
    %396 = arith.maximumf %394, %395 : vector<1x128xf32>
    %397 = arith.truncf %396 : vector<1x128xf32> to vector<1x128xbf16>
    %c3_338 = arith.constant 3 : index
    %c2_339 = arith.constant 2 : index
    %c0_340 = arith.constant 0 : index
    %c0_341 = arith.constant 0 : index
    %398 = vector.load %arg8[%c3_338, %c2_339, %c0_340, %c0_341] : memref<4x4x128x84xbf16, #tpu.memory_space<vmem>>, vector<1x1x128x84xbf16>
    %399 = vector.shape_cast %398 : vector<1x1x128x84xbf16> to vector<128x84xbf16>
    %cst_342 = arith.constant dense<0.000000e+00> : vector<1x84xf32>
    %400 = tpu.matmul %397, %399, %cst_342 {dimension_numbers = #tpu.dot_dimension_numbers<[1], [0], [0], [1], [0, 0, 1, 1], [], []>} : vector<1x128xbf16>, vector<128x84xbf16>, vector<1x84xf32> -> vector<1x84xf32>
    %401 = arith.addf %393, %400 : vector<1x84xf32>
    %402 = vector.extract_strided_slice %377 {offsets = [6, 0], sizes = [1, 128], strides = [1, 1]} : vector<8x128xf32> to vector<1x128xf32>
    %403 = vector.extract_strided_slice %377 {offsets = [7, 0], sizes = [1, 128], strides = [1, 1]} : vector<8x128xf32> to vector<1x128xf32>
    %404 = arith.maximumf %402, %403 : vector<1x128xf32>
    %405 = arith.truncf %404 : vector<1x128xf32> to vector<1x128xbf16>
    %c3_343 = arith.constant 3 : index
    %c3_344 = arith.constant 3 : index
    %c0_345 = arith.constant 0 : index
    %c0_346 = arith.constant 0 : index
    %406 = vector.load %arg8[%c3_343, %c3_344, %c0_345, %c0_346] : memref<4x4x128x84xbf16, #tpu.memory_space<vmem>>, vector<1x1x128x84xbf16>
    %407 = vector.shape_cast %406 : vector<1x1x128x84xbf16> to vector<128x84xbf16>
    %cst_347 = arith.constant dense<0.000000e+00> : vector<1x84xf32>
    %408 = tpu.matmul %405, %407, %cst_347 {dimension_numbers = #tpu.dot_dimension_numbers<[1], [0], [0], [1], [0, 0, 1, 1], [], []>} : vector<1x128xbf16>, vector<128x84xbf16>, vector<1x84xf32> -> vector<1x84xf32>
    %409 = arith.addf %401, %408 : vector<1x84xf32>
    %c0_348 = arith.constant 0 : index
    %c0_349 = arith.constant 0 : index
    %410 = vector.load %arg9[%c0_348, %c0_349] : memref<1x84xf32, #tpu.memory_space<vmem>>, vector<1x84xf32>
    %411 = arith.addf %409, %410 : vector<1x84xf32>
    %cst_350 = arith.constant 0.000000e+00 : f32
    %412 = vector.broadcast %cst_350 : f32 to vector<1x84xf32>
    %413 = arith.cmpf oge, %411, %412 : vector<1x84xf32>
    %cst_351 = arith.constant 0.00999999977 : f32
    %414 = vector.broadcast %cst_351 : f32 to vector<1x84xf32>
    %415 = arith.mulf %414, %411 : vector<1x84xf32>
    %416 = arith.select %413, %411, %415 : vector<1x84xi1>, vector<1x84xf32>
    %417 = arith.truncf %416 : vector<1x84xf32> to vector<1x84xbf16>
    %c0_352 = arith.constant 0 : index
    %c0_353 = arith.constant 0 : index
    %418 = vector.load %arg10[%c0_352, %c0_353] : memref<84x24xbf16, #tpu.memory_space<vmem>>, vector<84x24xbf16>
    %cst_354 = arith.constant dense<0.000000e+00> : vector<1x24xf32>
    %419 = tpu.matmul %417, %418, %cst_354 {dimension_numbers = #tpu.dot_dimension_numbers<[1], [0], [0], [1], [0, 0, 1, 1], [], []>} : vector<1x84xbf16>, vector<84x24xbf16>, vector<1x24xf32> -> vector<1x24xf32>
    %c0_355 = arith.constant 0 : index
    %c0_356 = arith.constant 0 : index
    %420 = vector.load %arg11[%c0_355, %c0_356] : memref<1x24xf32, #tpu.memory_space<vmem>>, vector<1x24xf32>
    %421 = arith.addf %419, %420 : vector<1x24xf32>
    %cst_357 = arith.constant 0.000000e+00 : f32
    %422 = vector.broadcast %cst_357 : f32 to vector<1x24xf32>
    %423 = arith.cmpf oge, %421, %422 : vector<1x24xf32>
    %cst_358 = arith.constant 0.00999999977 : f32
    %424 = vector.broadcast %cst_358 : f32 to vector<1x24xf32>
    %425 = arith.mulf %424, %421 : vector<1x24xf32>
    %426 = arith.select %423, %421, %425 : vector<1x24xi1>, vector<1x24xf32>
    %427 = arith.truncf %426 : vector<1x24xf32> to vector<1x24xbf16>
    %c0_359 = arith.constant 0 : index
    %c0_360 = arith.constant 0 : index
    %428 = vector.load %arg12[%c0_359, %c0_360] : memref<24x4xbf16, #tpu.memory_space<vmem>>, vector<24x4xbf16>
    %cst_361 = arith.constant dense<0.000000e+00> : vector<1x4xf32>
    %429 = tpu.matmul %427, %428, %cst_361 {dimension_numbers = #tpu.dot_dimension_numbers<[1], [0], [0], [1], [0, 0, 1, 1], [], []>} : vector<1x24xbf16>, vector<24x4xbf16>, vector<1x4xf32> -> vector<1x4xf32>
    %c0_362 = arith.constant 0 : index
    %c0_363 = arith.constant 0 : index
    %430 = vector.load %arg13[%c0_362, %c0_363] : memref<1x4xf32, #tpu.memory_space<vmem>>, vector<1x4xf32>
    %431 = arith.addf %429, %430 : vector<1x4xf32>
    %432 = vector.shape_cast %431 : vector<1x4xf32> to vector<1x1x4xf32>
    %c0_364 = arith.constant 0 : index
    %c0_365 = arith.constant 0 : index
    %c0_366 = arith.constant 0 : index
    %433 = vector.load %arg14[%c0_364, %c0_365, %c0_366] : memref<1x1x4xf32, #tpu.memory_space<vmem>>, vector<1x1x4xf32>
    tpu.vector_store %arg14[%c0_364, %c0_365, %c0_366], %432 {strides = array<i32>} : memref<1x1x4xf32, #tpu.memory_space<vmem>>, vector<1x1x4xf32>,
    return
  }
  func.func @transform_0(%arg0: i32) -> (i32, i32, i32, i32) {
    %c0_i32 = arith.constant 0 : i32
    %c0_i32_0 = arith.constant 0 : i32
    %c0_i32_1 = arith.constant 0 : i32
    %c0_i32_2 = arith.constant 0 : i32
    return %arg0, %c0_i32, %c0_i32_0, %c0_i32_1 : i32, i32, i32, i32
  }
  func.func @transform_1(%arg0: i32) -> (i32, i32, i32, i32) {
    %c0_i32 = arith.constant 0 : i32
    %c0_i32_0 = arith.constant 0 : i32
    %c0_i32_1 = arith.constant 0 : i32
    %c0_i32_2 = arith.constant 0 : i32
    %c0_i32_3 = arith.constant 0 : i32
    return %c0_i32, %c0_i32_0, %c0_i32_1, %c0_i32_2 : i32, i32, i32, i32
  }
  func.func @transform_2(%arg0: i32) -> (i32, i32) {
    %c0_i32 = arith.constant 0 : i32
    %c0_i32_0 = arith.constant 0 : i32
    %c0_i32_1 = arith.constant 0 : i32
    return %c0_i32, %c0_i32_0 : i32, i32
  }
  func.func @transform_3(%arg0: i32) -> (i32, i32, i32, i32) {
    %c0_i32 = arith.constant 0 : i32
    %c0_i32_0 = arith.constant 0 : i32
    %c0_i32_1 = arith.constant 0 : i32
    %c0_i32_2 = arith.constant 0 : i32
    %c0_i32_3 = arith.constant 0 : i32
    return %c0_i32, %c0_i32_0, %c0_i32_1, %c0_i32_2 : i32, i32, i32, i32
  }
  func.func @transform_4(%arg0: i32) -> (i32, i32) {
    %c0_i32 = arith.constant 0 : i32
    %c0_i32_0 = arith.constant 0 : i32
    %c0_i32_1 = arith.constant 0 : i32
    return %c0_i32, %c0_i32_0 : i32, i32
  }
  func.func @transform_5(%arg0: i32) -> (i32, i32, i32, i32) {
    %c0_i32 = arith.constant 0 : i32
    %c0_i32_0 = arith.constant 0 : i32
    %c0_i32_1 = arith.constant 0 : i32
    %c0_i32_2 = arith.constant 0 : i32
    %c0_i32_3 = arith.constant 0 : i32
    return %c0_i32, %c0_i32_0, %c0_i32_1, %c0_i32_2 : i32, i32, i32, i32
  }
  func.func @transform_6(%arg0: i32) -> (i32, i32) {
    %c0_i32 = arith.constant 0 : i32
    %c0_i32_0 = arith.constant 0 : i32
    %c0_i32_1 = arith.constant 0 : i32
    return %c0_i32, %c0_i32_0 : i32, i32
  }
  func.func @transform_7(%arg0: i32) -> (i32, i32, i32, i32) {
    %c0_i32 = arith.constant 0 : i32
    %c0_i32_0 = arith.constant 0 : i32
    %c0_i32_1 = arith.constant 0 : i32
    %c0_i32_2 = arith.constant 0 : i32
    %c0_i32_3 = arith.constant 0 : i32
    return %c0_i32, %c0_i32_0, %c0_i32_1, %c0_i32_2 : i32, i32, i32, i32
  }
  func.func @transform_8(%arg0: i32) -> (i32, i32) {
    %c0_i32 = arith.constant 0 : i32
    %c0_i32_0 = arith.constant 0 : i32
    %c0_i32_1 = arith.constant 0 : i32
    return %c0_i32, %c0_i32_0 : i32, i32
  }
  func.func @transform_9(%arg0: i32) -> (i32, i32) {
    %c0_i32 = arith.constant 0 : i32
    %c0_i32_0 = arith.constant 0 : i32
    %c0_i32_1 = arith.constant 0 : i32
    return %c0_i32, %c0_i32_0 : i32, i32
  }
  func.func @transform_10(%arg0: i32) -> (i32, i32) {
    %c0_i32 = arith.constant 0 : i32
    %c0_i32_0 = arith.constant 0 : i32
    %c0_i32_1 = arith.constant 0 : i32
    return %c0_i32, %c0_i32_0 : i32, i32
  }
  func.func @transform_11(%arg0: i32) -> (i32, i32) {
    %c0_i32 = arith.constant 0 : i32
    %c0_i32_0 = arith.constant 0 : i32
    %c0_i32_1 = arith.constant 0 : i32
    return %c0_i32, %c0_i32_0 : i32, i32
  }
  func.func @transform_12(%arg0: i32) -> (i32, i32) {
    %c0_i32 = arith.constant 0 : i32
    %c0_i32_0 = arith.constant 0 : i32
    %c0_i32_1 = arith.constant 0 : i32
    return %c0_i32, %c0_i32_0 : i32, i32
  }
  func.func @transform_13(%arg0: i32) -> (i32, i32, i32) {
    %c0_i32 = arith.constant 0 : i32
    %c0_i32_0 = arith.constant 0 : i32
    %c0_i32_1 = arith.constant 0 : i32
    return %arg0, %c0_i32, %c0_i32_0 : i32, i32, i32
  }
}

</mosaic_0001>

<llo_original>
// kernel: simplenet_forward_pallas.1
$region0: #{simplenet_forward_pallas.1}
  #allocation0 [shape = 'u32[]', space=smem, size = 0x4, offset = 0x4, fixed_abs, tag = 'smem constant byte address 0x4 - core index']
  #allocation1 [shape = 'u32[144,128]{1,0:T(1,128)}', space=vmem, size = 0x12000, scoped, tag = 'internal scratch']
  #allocation2 [shape = 'f32[18,18,3]{2,1,0:T(8,128)}', space=vmem, size = 0x36000, scoped, tag = 'scratch operand']
  #allocation3 [shape = 'f32[18,18,12]{2,1,0:T(8,128)}', space=vmem, size = 0x36000, scoped, tag = 'scratch operand']
  #allocation4 [shape = 'f32[10,10,24]{2,1,0:T(8,128)}', space=vmem, size = 0x14000, scoped, tag = 'scratch operand']
  %s0 = inlined_call_operand.vmem [shape: f32[2,16,16,3], index: 0, kind: input, shape index: {}]
  %s1 = inlined_call_operand.vmem [shape: bf16[3,3,3,12], index: 1, kind: input, shape index: {}]
  %s2 = inlined_call_operand.vmem [shape: f32[1,12], index: 2, kind: input, shape index: {}]
  %s3 = inlined_call_operand.vmem [shape: bf16[3,3,12,24], index: 3, kind: input, shape index: {}]
  %s4 = inlined_call_operand.vmem [shape: f32[1,24], index: 4, kind: input, shape index: {}]
  %s5 = inlined_call_operand.vmem [shape: bf16[3,3,24,128], index: 5, kind: input, shape index: {}]
  %s6 = inlined_call_operand.vmem [shape: f32[1,128], index: 6, kind: input, shape index: {}]
  %s7 = inlined_call_operand.vmem [shape: bf16[4,4,128,84], index: 7, kind: input, shape index: {}]
  %s8 = inlined_call_operand.vmem [shape: f32[1,84], index: 8, kind: input, shape index: {}]
  %s9 = inlined_call_operand.vmem [shape: bf16[84,24], index: 9, kind: input, shape index: {}]
  %s10 = inlined_call_operand.vmem [shape: f32[1,24], index: 10, kind: input, shape index: {}]
  %s11 = inlined_call_operand.vmem [shape: bf16[24,4], index: 11, kind: input, shape index: {}]
  %s12 = inlined_call_operand.vmem [shape: f32[1,4], index: 12, kind: input, shape index: {}]
  %s13 = inlined_call_operand.hbm [shape: f32[2,1,4], index: 13, kind: output, shape index: {}]
  %s14 = sld [smem:[#allocation0]]
  $region85: #{simplenet_forward_pallas.1} parent=0
    _
  %s16 = ssub.s32 1, %s14
  %s17 = scalar_select 0, %s16, %s14
  $region1: #{simplenet_forward_pallas.1} parent=0
    #allocation5 [shape = 'u8[1024]{0}', space=vmem, size = 0x400, scoped, tag = 'output window, operand 0']
    #allocation6 [shape = 's32[2]{0}', space=sflag, size = 0x8, scoped, tag = 'scoped memory for simplenet_forward_pallas.1']
    %18 = vsyncpa [#allocation6], 0
    %s19 = scalar_lea.sflag [#allocation6], 1
    %20 = vsyncpa %s19, 0
    loop: start=0, step=1, limit=4
    $region2: #{simplenet_forward_pallas.1} parent=1 // loop_pre_header
      _
    $region3: #{simplenet_forward_pallas.1} parent=1 // loop_header
      %s22 = sphi 0, %s26
      %p23 = scmp.ge.s32.totalorder %s22, 4
      %s32 = sphi 0, %s34
      %s35 = sphi 0, %s32
      %s36 = sphi 0, %s35
      %s52 = sphi 0, %s36
      %s56 = sphi 0, %s56
      %s58 = sphi 0, %s56
      %s59 = sphi 0, %s58
      %s73 = sphi 0, %s59
      %s77 = sphi 0, %s77
      %s79 = sphi 0, %s77
      %s80 = sphi 0, %s79
      %s94 = sphi 0, %s80
      %s98 = sphi 0, %s98
      %s100 = sphi 0, %s98
      %s101 = sphi 0, %s100
      %s115 = sphi 0, %s101
      %s119 = sphi 0, %s119
      %s121 = sphi 0, %s119
      %s122 = sphi 0, %s121
      %s136 = sphi 0, %s122
      %s140 = sphi 0, %s140
      %s142 = sphi 0, %s140
      %s143 = sphi 0, %s142
      %s157 = sphi 0, %s143
      %s161 = sphi 0, %s161
      %s163 = sphi 0, %s161
      %s164 = sphi 0, %s163
      %s178 = sphi 0, %s164
      %s182 = sphi 0, %s182
      %s184 = sphi 0, %s182
      %s185 = sphi 0, %s184
      %s199 = sphi 0, %s185
      %s203 = sphi 0, %s203
      %s205 = sphi 0, %s203
      %s206 = sphi 0, %s205
      %s220 = sphi 0, %s206
      %s224 = sphi 0, %s224
      %s226 = sphi 0, %s224
      %s227 = sphi 0, %s226
      %s241 = sphi 0, %s227
      %s245 = sphi 0, %s245
      %s247 = sphi 0, %s245
      %s248 = sphi 0, %s247
      %s262 = sphi 0, %s248
      %s266 = sphi 0, %s266
      %s268 = sphi 0, %s266
      %s269 = sphi 0, %s268
      %s283 = sphi 0, %s269
      %s287 = sphi 0, %s287
      %s289 = sphi 0, %s287
      %s290 = sphi 0, %s289
      %s304 = sphi 0, %s290
      %s310 = sphi 0, %s312
      %s313 = sphi 0, %s310
      %s314 = sphi 0, %s313
      %s330 = sphi 0, %s314
    $region4: #{simplenet_forward_pallas.1} parent=1 // loop_header_branch
      %25 = sbr.rel (%p23) target = $region8
    $region5: #{simplenet_forward_pallas.1} parent=1 // loop_body
      %s27 = ssub.s32 %s22, 1
      %s28 = ssub.s32 %s22, 2
      %s29 = sadd.s32 %s22, 1
      %s30 = ssub.s32 %s22, %s29
      %p31 = scmp.eq.s32.totalorder %s30, 0
      %s33 = sadd.s32 %s32, 1
      %s34 = scalar_select %p31, %s32, %s33
      %p37 = pneg %p31
      %p38 = scmp.eq.s32.totalorder %s22, 1
      %p39 = por %p37, %p38
      %p40 = scmp.ne.s32.totalorder %s32, %s35
      %p41 = scmp.eq.s32.totalorder %s22, 0
      %p42 = por %p40, %p41
      %p43 = scmp.ne.s32.totalorder %s32, %s35
      %p44 = scmp.eq.s32.totalorder %s27, 1
      %p45 = por %p43, %p44
      %p46 = scmp.ne.s32.totalorder %s35, %s36
      %p47 = scmp.eq.s32.totalorder %s27, 0
      %p48 = por %p46, %p47
      %p49 = scmp.ne.s32.totalorder %s35, %s36
      %p50 = scmp.eq.s32.totalorder %s28, 1
      %p51 = por %p49, %p50
      %p53 = scmp.ne.s32.totalorder %s36, %s52
      %p54 = scmp.eq.s32.totalorder %s28, 0
      %p55 = por %p53, %p54
      %s57 = sadd.s32 %s56, 1
      %p60 = scmp.eq.s32.totalorder %s22, 1
      %p61 = scmp.ne.s32.totalorder %s56, %s58
      %p62 = scmp.eq.s32.totalorder %s22, 0
      %p63 = por %p61, %p62
      %p64 = scmp.ne.s32.totalorder %s56, %s58
      %p65 = scmp.eq.s32.totalorder %s27, 1
      %p66 = por %p64, %p65
      %p67 = scmp.ne.s32.totalorder %s58, %s59
      %p68 = scmp.eq.s32.totalorder %s27, 0
      %p69 = por %p67, %p68
      %p70 = scmp.ne.s32.totalorder %s58, %s59
      %p71 = scmp.eq.s32.totalorder %s28, 1
      %p72 = por %p70, %p71
      %p74 = scmp.ne.s32.totalorder %s59, %s73
      %p75 = scmp.eq.s32.totalorder %s28, 0
      %p76 = por %p74, %p75
      %s78 = sadd.s32 %s77, 1
      %p81 = scmp.eq.s32.totalorder %s22, 1
      %p82 = scmp.ne.s32.totalorder %s77, %s79
      %p83 = scmp.eq.s32.totalorder %s22, 0
      %p84 = por %p82, %p83
      %p85 = scmp.ne.s32.totalorder %s77, %s79
      %p86 = scmp.eq.s32.totalorder %s27, 1
      %p87 = por %p85, %p86
      %p88 = scmp.ne.s32.totalorder %s79, %s80
      %p89 = scmp.eq.s32.totalorder %s27, 0
      %p90 = por %p88, %p89
      %p91 = scmp.ne.s32.totalorder %s79, %s80
      %p92 = scmp.eq.s32.totalorder %s28, 1
      %p93 = por %p91, %p92
      %p95 = scmp.ne.s32.totalorder %s80, %s94
      %p96 = scmp.eq.s32.totalorder %s28, 0
      %p97 = por %p95, %p96
      %s99 = sadd.s32 %s98, 1
      %p102 = scmp.eq.s32.totalorder %s22, 1
      %p103 = scmp.ne.s32.totalorder %s98, %s100
      %p104 = scmp.eq.s32.totalorder %s22, 0
      %p105 = por %p103, %p104
      %p106 = scmp.ne.s32.totalorder %s98, %s100
      %p107 = scmp.eq.s32.totalorder %s27, 1
      %p108 = por %p106, %p107
      %p109 = scmp.ne.s32.totalorder %s100, %s101
      %p110 = scmp.eq.s32.totalorder %s27, 0
      %p111 = por %p109, %p110
      %p112 = scmp.ne.s32.totalorder %s100, %s101
      %p113 = scmp.eq.s32.totalorder %s28, 1
      %p114 = por %p112, %p113
      %p116 = scmp.ne.s32.totalorder %s101, %s115
      %p117 = scmp.eq.s32.totalorder %s28, 0
      %p118 = por %p116, %p117
      %s120 = sadd.s32 %s119, 1
      %p123 = scmp.eq.s32.totalorder %s22, 1
      %p124 = scmp.ne.s32.totalorder %s119, %s121
      %p125 = scmp.eq.s32.totalorder %s22, 0
      %p126 = por %p124, %p125
      %p127 = scmp.ne.s32.totalorder %s119, %s121
      %p128 = scmp.eq.s32.totalorder %s27, 1
      %p129 = por %p127, %p128
      %p130 = scmp.ne.s32.totalorder %s121, %s122
      %p131 = scmp.eq.s32.totalorder %s27, 0
      %p132 = por %p130, %p131
      %p133 = scmp.ne.s32.totalorder %s121, %s122
      %p134 = scmp.eq.s32.totalorder %s28, 1
      %p135 = por %p133, %p134
      %p137 = scmp.ne.s32.totalorder %s122, %s136
      %p138 = scmp.eq.s32.totalorder %s28, 0
      %p139 = por %p137, %p138
      %s141 = sadd.s32 %s140, 1
      %p144 = scmp.eq.s32.totalorder %s22, 1
      %p145 = scmp.ne.s32.totalorder %s140, %s142
      %p146 = scmp.eq.s32.totalorder %s22, 0
      %p147 = por %p145, %p146
      %p148 = scmp.ne.s32.totalorder %s140, %s142
      %p149 = scmp.eq.s32.totalorder %s27, 1
      %p150 = por %p148, %p149
      %p151 = scmp.ne.s32.totalorder %s142, %s143
      %p152 = scmp.eq.s32.totalorder %s27, 0
      %p153 = por %p151, %p152
      %p154 = scmp.ne.s32.totalorder %s142, %s143
      %p155 = scmp.eq.s32.totalorder %s28, 1
      %p156 = por %p154, %p155
      %p158 = scmp.ne.s32.totalorder %s143, %s157
      %p159 = scmp.eq.s32.totalorder %s28, 0
      %p160 = por %p158, %p159
      %s162 = sadd.s32 %s161, 1
      %p165 = scmp.eq.s32.totalorder %s22, 1
      %p166 = scmp.ne.s32.totalorder %s161, %s163
      %p167 = scmp.eq.s32.totalorder %s22, 0
      %p168 = por %p166, %p167
      %p169 = scmp.ne.s32.totalorder %s161, %s163
      %p170 = scmp.eq.s32.totalorder %s27, 1
      %p171 = por %p169, %p170
      %p172 = scmp.ne.s32.totalorder %s163, %s164
      %p173 = scmp.eq.s32.totalorder %s27, 0
      %p174 = por %p172, %p173
      %p175 = scmp.ne.s32.totalorder %s163, %s164
      %p176 = scmp.eq.s32.totalorder %s28, 1
      %p177 = por %p175, %p176
      %p179 = scmp.ne.s32.totalorder %s164, %s178
      %p180 = scmp.eq.s32.totalorder %s28, 0
      %p181 = por %p179, %p180
      %s183 = sadd.s32 %s182, 1
      %p186 = scmp.eq.s32.totalorder %s22, 1
      %p187 = scmp.ne.s32.totalorder %s182, %s184
      %p188 = scmp.eq.s32.totalorder %s22, 0
      %p189 = por %p187, %p188
      %p190 = scmp.ne.s32.totalorder %s182, %s184
      %p191 = scmp.eq.s32.totalorder %s27, 1
      %p192 = por %p190, %p191
      %p193 = scmp.ne.s32.totalorder %s184, %s185
      %p194 = scmp.eq.s32.totalorder %s27, 0
      %p195 = por %p193, %p194
      %p196 = scmp.ne.s32.totalorder %s184, %s185
      %p197 = scmp.eq.s32.totalorder %s28, 1
      %p198 = por %p196, %p197
      %p200 = scmp.ne.s32.totalorder %s185, %s199
      %p201 = scmp.eq.s32.totalorder %s28, 0
      %p202 = por %p200, %p201
      %s204 = sadd.s32 %s203, 1
      %p207 = scmp.eq.s32.totalorder %s22, 1
      %p208 = scmp.ne.s32.totalorder %s203, %s205
      %p209 = scmp.eq.s32.totalorder %s22, 0
      %p210 = por %p208, %p209
      %p211 = scmp.ne.s32.totalorder %s203, %s205
      %p212 = scmp.eq.s32.totalorder %s27, 1
      %p213 = por %p211, %p212
      %p214 = scmp.ne.s32.totalorder %s205, %s206
      %p215 = scmp.eq.s32.totalorder %s27, 0
      %p216 = por %p214, %p215
      %p217 = scmp.ne.s32.totalorder %s205, %s206
      %p218 = scmp.eq.s32.totalorder %s28, 1
      %p219 = por %p217, %p218
      %p221 = scmp.ne.s32.totalorder %s206, %s220
      %p222 = scmp.eq.s32.totalorder %s28, 0
      %p223 = por %p221, %p222
      %s225 = sadd.s32 %s224, 1
      %p228 = scmp.eq.s32.totalorder %s22, 1
      %p229 = scmp.ne.s32.totalorder %s224, %s226
      %p230 = scmp.eq.s32.totalorder %s22, 0
      %p231 = por %p229, %p230
      %p232 = scmp.ne.s32.totalorder %s224, %s226
      %p233 = scmp.eq.s32.totalorder %s27, 1
      %p234 = por %p232, %p233
      %p235 = scmp.ne.s32.totalorder %s226, %s227
      %p236 = scmp.eq.s32.totalorder %s27, 0
      %p237 = por %p235, %p236
      %p238 = scmp.ne.s32.totalorder %s226, %s227
      %p239 = scmp.eq.s32.totalorder %s28, 1
      %p240 = por %p238, %p239
      %p242 = scmp.ne.s32.totalorder %s227, %s241
      %p243 = scmp.eq.s32.totalorder %s28, 0
      %p244 = por %p242, %p243
      %s246 = sadd.s32 %s245, 1
      %p249 = scmp.eq.s32.totalorder %s22, 1
      %p250 = scmp.ne.s32.totalorder %s245, %s247
      %p251 = scmp.eq.s32.totalorder %s22, 0
      %p252 = por %p250, %p251
      %p253 = scmp.ne.s32.totalorder %s245, %s247
      %p254 = scmp.eq.s32.totalorder %s27, 1
      %p255 = por %p253, %p254
      %p256 = scmp.ne.s32.totalorder %s247, %s248
      %p257 = scmp.eq.s32.totalorder %s27, 0
      %p258 = por %p256, %p257
      %p259 = scmp.ne.s32.totalorder %s247, %s248
      %p260 = scmp.eq.s32.totalorder %s28, 1
      %p261 = por %p259, %p260
      %p263 = scmp.ne.s32.totalorder %s248, %s262
      %p264 = scmp.eq.s32.totalorder %s28, 0
      %p265 = por %p263, %p264
      %s267 = sadd.s32 %s266, 1
      %p270 = scmp.eq.s32.totalorder %s22, 1
      %p271 = scmp.ne.s32.totalorder %s266, %s268
      %p272 = scmp.eq.s32.totalorder %s22, 0
      %p273 = por %p271, %p272
      %p274 = scmp.ne.s32.totalorder %s266, %s268
      %p275 = scmp.eq.s32.totalorder %s27, 1
      %p276 = por %p274, %p275
      %p277 = scmp.ne.s32.totalorder %s268, %s269
      %p278 = scmp.eq.s32.totalorder %s27, 0
      %p279 = por %p277, %p278
      %p280 = scmp.ne.s32.totalorder %s268, %s269
      %p281 = scmp.eq.s32.totalorder %s28, 1
      %p282 = por %p280, %p281
      %p284 = scmp.ne.s32.totalorder %s269, %s283
      %p285 = scmp.eq.s32.totalorder %s28, 0
      %p286 = por %p284, %p285
      %s288 = sadd.s32 %s287, 1
      %p291 = scmp.eq.s32.totalorder %s22, 1
      %p292 = scmp.ne.s32.totalorder %s287, %s289
      %p293 = scmp.eq.s32.totalorder %s22, 0
      %p294 = por %p292, %p293
      %p295 = scmp.ne.s32.totalorder %s287, %s289
      %p296 = scmp.eq.s32.totalorder %s27, 1
      %p297 = por %p295, %p296
      %p298 = scmp.ne.s32.totalorder %s289, %s290
      %p299 = scmp.eq.s32.totalorder %s27, 0
      %p300 = por %p298, %p299
      %p301 = scmp.ne.s32.totalorder %s289, %s290
      %p302 = scmp.eq.s32.totalorder %s28, 1
      %p303 = por %p301, %p302
      %p305 = scmp.ne.s32.totalorder %s290, %s304
      %p306 = scmp.eq.s32.totalorder %s28, 0
      %p307 = por %p305, %p306
      %s308 = ssub.s32 %s22, %s29
      %p309 = scmp.eq.s32.totalorder %s308, 0
      %s311 = sadd.s32 %s310, 1
      %s312 = scalar_select %p309, %s310, %s311
      %p315 = pneg %p309
      %p316 = scmp.eq.s32.totalorder %s22, 1
      %p317 = por %p315, %p316
      %p318 = scmp.ne.s32.totalorder %s310, %s313
      %p319 = scmp.eq.s32.totalorder %s22, 0
      %p320 = por %p318, %p319
      %p321 = scmp.ne.s32.totalorder %s310, %s313
      %p322 = scmp.eq.s32.totalorder %s27, 1
      %p323 = por %p321, %p322
      %p324 = scmp.ne.s32.totalorder %s313, %s314
      %p325 = scmp.eq.s32.totalorder %s27, 0
      %p326 = por %p324, %p325
      %p327 = scmp.ne.s32.totalorder %s313, %s314
      %p328 = scmp.eq.s32.totalorder %s28, 1
      %p329 = por %p327, %p328
      %p331 = scmp.ne.s32.totalorder %s314, %s330
      %p332 = scmp.eq.s32.totalorder %s28, 0
      %p333 = por %p331, %p332
      %p334 = scmp.le.s32.totalorder 1, %s22
      %p335 = scmp.lt.s32.totalorder %s22, 3
      %p336 = pnand %p334, %p335
      %p337 = pneg %p336
      // Predicated region
      $region9: #{simplenet_forward_pallas.1} parent=5 // pred_check
        _
      $region10: #{simplenet_forward_pallas.1} parent=5 // pred_check_branch
        %339 = sbr.rel (%p336) target = $region12
      $region11: #{simplenet_forward_pallas.1} parent=5 // pred_region
        %s340 = ssub.s32 %s22, 1
        // Predicated region
        $region13: #{simplenet_forward_pallas.1} parent=11 // pred_check
          %p341 = pneg %p69
        $region14: #{simplenet_forward_pallas.1} parent=11 // pred_check_branch
          %343 = sbr.rel (%p341) target = $region16
        $region15: #{simplenet_forward_pallas.1} parent=11 // pred_region
          _
        $region16: #{simplenet_forward_pallas.1} parent=11 // pred_fallthru
          _
        // Predicated region
        $region17: #{simplenet_forward_pallas.1} parent=11 // pred_check
          %p344 = pneg %p90
        $region18: #{simplenet_forward_pallas.1} parent=11 // pred_check_branch
          %346 = sbr.rel (%p344) target = $region20
        $region19: #{simplenet_forward_pallas.1} parent=11 // pred_region
          _
        $region20: #{simplenet_forward_pallas.1} parent=11 // pred_fallthru
          _
        // Predicated region
        $region21: #{simplenet_forward_pallas.1} parent=11 // pred_check
          %p347 = pneg %p111
        $region22: #{simplenet_forward_pallas.1} parent=11 // pred_check_branch
          %349 = sbr.rel (%p347) target = $region24
        $region23: #{simplenet_forward_pallas.1} parent=11 // pred_region
          _
        $region24: #{simplenet_forward_pallas.1} parent=11 // pred_fallthru
          _
        // Predicated region
        $region25: #{simplenet_forward_pallas.1} parent=11 // pred_check
          %p350 = pneg %p132
        $region26: #{simplenet_forward_pallas.1} parent=11 // pred_check_branch
          %352 = sbr.rel (%p350) target = $region28
        $region27: #{simplenet_forward_pallas.1} parent=11 // pred_region
          _
        $region28: #{simplenet_forward_pallas.1} parent=11 // pred_fallthru
          _
        // Predicated region
        $region29: #{simplenet_forward_pallas.1} parent=11 // pred_check
          %p353 = pneg %p153
        $region30: #{simplenet_forward_pallas.1} parent=11 // pred_check_branch
          %355 = sbr.rel (%p353) target = $region32
        $region31: #{simplenet_forward_pallas.1} parent=11 // pred_region
          _
        $region32: #{simplenet_forward_pallas.1} parent=11 // pred_fallthru
          _
        // Predicated region
        $region33: #{simplenet_forward_pallas.1} parent=11 // pred_check
          %p356 = pneg %p174
        $region34: #{simplenet_forward_pallas.1} parent=11 // pred_check_branch
          %358 = sbr.rel (%p356) target = $region36
        $region35: #{simplenet_forward_pallas.1} parent=11 // pred_region
          _
        $region36: #{simplenet_forward_pallas.1} parent=11 // pred_fallthru
          _
        // Predicated region
        $region37: #{simplenet_forward_pallas.1} parent=11 // pred_check
          %p359 = pneg %p195
        $region38: #{simplenet_forward_pallas.1} parent=11 // pred_check_branch
          %361 = sbr.rel (%p359) target = $region40
        $region39: #{simplenet_forward_pallas.1} parent=11 // pred_region
          _
        $region40: #{simplenet_forward_pallas.1} parent=11 // pred_fallthru
          _
        // Predicated region
        $region41: #{simplenet_forward_pallas.1} parent=11 // pred_check
          %p362 = pneg %p216
        $region42: #{simplenet_forward_pallas.1} parent=11 // pred_check_branch
          %364 = sbr.rel (%p362) target = $region44
        $region43: #{simplenet_forward_pallas.1} parent=11 // pred_region
          _
        $region44: #{simplenet_forward_pallas.1} parent=11 // pred_fallthru
          _
        // Predicated region
        $region45: #{simplenet_forward_pallas.1} parent=11 // pred_check
          %p365 = pneg %p237
        $region46: #{simplenet_forward_pallas.1} parent=11 // pred_check_branch
          %367 = sbr.rel (%p365) target = $region48
        $region47: #{simplenet_forward_pallas.1} parent=11 // pred_region
          _
        $region48: #{simplenet_forward_pallas.1} parent=11 // pred_fallthru
          _
        // Predicated region
        $region49: #{simplenet_forward_pallas.1} parent=11 // pred_check
          %p368 = pneg %p258
        $region50: #{simplenet_forward_pallas.1} parent=11 // pred_check_branch
          %370 = sbr.rel (%p368) target = $region52
        $region51: #{simplenet_forward_pallas.1} parent=11 // pred_region
          _
        $region52: #{simplenet_forward_pallas.1} parent=11 // pred_fallthru
          _
        // Predicated region
        $region53: #{simplenet_forward_pallas.1} parent=11 // pred_check
          %p371 = pneg %p279
        $region54: #{simplenet_forward_pallas.1} parent=11 // pred_check_branch
          %373 = sbr.rel (%p371) target = $region56
        $region55: #{simplenet_forward_pallas.1} parent=11 // pred_region
          _
        $region56: #{simplenet_forward_pallas.1} parent=11 // pred_fallthru
          _
        // Predicated region
        $region57: #{simplenet_forward_pallas.1} parent=11 // pred_check
          %p374 = pneg %p300
        $region58: #{simplenet_forward_pallas.1} parent=11 // pred_check_branch
          %376 = sbr.rel (%p374) target = $region60
        $region59: #{simplenet_forward_pallas.1} parent=11 // pred_region
          _
        $region60: #{simplenet_forward_pallas.1} parent=11 // pred_fallthru
          _
      $region12: #{simplenet_forward_pallas.1} parent=5 // pred_fallthru
        _
      %p377 = scmp.lt.s32.totalorder %s22, 2
      // Predicated region
      $region61: #{simplenet_forward_pallas.1} parent=5 // pred_check
        %p378 = pneg %p377
      $region62: #{simplenet_forward_pallas.1} parent=5 // pred_check_branch
        %380 = sbr.rel (%p378) target = $region64
      $region63: #{simplenet_forward_pallas.1} parent=5 // pred_region
        // Predicated region
        $region65: #{simplenet_forward_pallas.1} parent=63 // pred_check
          %p381 = pneg %p42
        $region66: #{simplenet_forward_pallas.1} parent=63 // pred_check_branch
          %383 = sbr.rel (%p381) target = $region68
        $region67: #{simplenet_forward_pallas.1} parent=63 // pred_region
          %p384 = scmp.lt.s32.totalorder %s22, 1
          %s385 = scalar_select %p384, %s22, 1
          %s386 = smul.addr %s385, 32
          %s387 = smul.addr %s386, 8
          %s388 = scalar_lea.vmem %s0, %s387
        $region68: #{simplenet_forward_pallas.1} parent=63 // pred_fallthru
          _
      $region64: #{simplenet_forward_pallas.1} parent=5 // pred_fallthru
        _
      %p389 = scmp.le.s32.totalorder 1, %s22
      %p390 = scmp.lt.s32.totalorder %s22, 3
      %p391 = pnand %p389, %p390
      %p392 = pneg %p391
      // Predicated region
      $region69: #{simplenet_forward_pallas.1} parent=5 // pred_check
        _
      $region70: #{simplenet_forward_pallas.1} parent=5 // pred_check_branch
        %394 = sbr.rel (%p391) target = $region72
      $region71: #{simplenet_forward_pallas.1} parent=5 // pred_region
        %s395 = ssub.s32 %s22, 1
        %p396 = scmp.lt.s32.totalorder %s27, 1
        %s397 = scalar_select %p396, %s27, 1
        %s398 = smul.addr %s397, 32
        %s399 = smul.addr %s398, 8
        %s400 = scalar_lea.vmem %s0, %s399
        %p401 = pneg %p48
        %p402 = pneg %p45
        %p403 = pneg %p69
        %p404 = pneg %p66
        %p405 = pneg %p90
        %p406 = pneg %p87
        %p407 = pneg %p111
        %p408 = pneg %p108
        %p409 = pneg %p132
        %p410 = pneg %p129
        %p411 = pneg %p153
        %p412 = pneg %p150
        %p413 = pneg %p174
        %p414 = pneg %p171
        %p415 = pneg %p195
        %p416 = pneg %p192
        %p417 = pneg %p216
        %p418 = pneg %p213
        %p419 = pneg %p237
        %p420 = pneg %p234
        %p421 = pneg %p258
        %p422 = pneg %p255
        %p423 = pneg %p279
        %p424 = pneg %p276
        %p425 = pneg %p300
        %p426 = pneg %p297
        %p427 = pneg %p326
        %p428 = pneg %p323
        %s429 = sand.u32 %s313, 1
        %s430 = scalar_lea.sflag [#allocation6], %s429
        %s431 = sand.u32 %s313, 1
        %s432 = scalar_lea.vmem [#allocation5], %s431
        %p433 = scmp.lt.s32.totalorder %s27, 1
        %s434 = scalar_select %p433, %s27, 1
        %s435 = smul.addr %s434, 32
        %s436 = smul.addr %s435, 8
        %s437 = scalar_lea.vmem %s0, %s436
        %vm439 = vcmask 23552
        %440 = vst.msk [vmem:[#allocation2] sm:$0xff] %vm439, 0.0
        %441 = vst.msk [vmem:[#allocation2 + $0x8] sm:$0xff] %vm439, 0.0
        %vm442 = vcmask 17408
        %443 = vst.msk [vmem:[#allocation2 + $0x10] sm:$0x3] %vm442, 0.0
        %444 = vst.msk [vmem:[#allocation2 + $0x18] sm:$0xff] %vm439, 0.0
        %445 = vst.msk [vmem:[#allocation2 + $0x20] sm:$0xff] %vm439, 0.0
        %446 = vst.msk [vmem:[#allocation2 + $0x28] sm:$0x3] %vm442, 0.0
        %447 = vst.msk [vmem:[#allocation2 + $0x30] sm:$0xff] %vm439, 0.0
        %448 = vst.msk [vmem:[#allocation2 + $0x38] sm:$0xff] %vm439, 0.0
        %449 = vst.msk [vmem:[#allocation2 + $0x40] sm:$0x3] %vm442, 0.0
        %450 = vst.msk [vmem:[#allocation2 + $0x48] sm:$0xff] %vm439, 0.0
        %451 = vst.msk [vmem:[#allocation2 + $0x50] sm:$0xff] %vm439, 0.0
        %452 = vst.msk [vmem:[#allocation2 + $0x58] sm:$0x3] %vm442, 0.0
        %453 = vst.msk [vmem:[#allocation2 + $0x60] sm:$0xff] %vm439, 0.0
        %454 = vst.msk [vmem:[#allocation2 + $0x68] sm:$0xff] %vm439, 0.0
        %455 = vst.msk [vmem:[#allocation2 + $0x70] sm:$0x3] %vm442, 0.0
        %456 = vst.msk [vmem:[#allocation2 + $0x78] sm:$0xff] %vm439, 0.0
        %457 = vst.msk [vmem:[#allocation2 + $0x80] sm:$0xff] %vm439, 0.0
        %458 = vst.msk [vmem:[#allocation2 + $0x88] sm:$0x3] %vm442, 0.0
        %459 = vst.msk [vmem:[#allocation2 + $0x90] sm:$0xff] %vm439, 0.0
        %460 = vst.msk [vmem:[#allocation2 + $0x98] sm:$0xff] %vm439, 0.0
        %461 = vst.msk [vmem:[#allocation2 + $0xa0] sm:$0x3] %vm442, 0.0
        %462 = vst.msk [vmem:[#allocation2 + $0xa8] sm:$0xff] %vm439, 0.0
        %463 = vst.msk [vmem:[#allocation2 + $0xb0] sm:$0xff] %vm439, 0.0
        %464 = vst.msk [vmem:[#allocation2 + $0xb8] sm:$0x3] %vm442, 0.0
        %465 = vst.msk [vmem:[#allocation2 + $0xc0] sm:$0xff] %vm439, 0.0
        %466 = vst.msk [vmem:[#allocation2 + $0xc8] sm:$0xff] %vm439, 0.0
        %467 = vst.msk [vmem:[#allocation2 + $0xd0] sm:$0x3] %vm442, 0.0
        %468 = vst.msk [vmem:[#allocation2 + $0xd8] sm:$0xff] %vm439, 0.0
        %469 = vst.msk [vmem:[#allocation2 + $0xe0] sm:$0xff] %vm439, 0.0
        %470 = vst.msk [vmem:[#allocation2 + $0xe8] sm:$0x3] %vm442, 0.0
        %471 = vst.msk [vmem:[#allocation2 + $0xf0] sm:$0xff] %vm439, 0.0
        %472 = vst.msk [vmem:[#allocation2 + $0xf8] sm:$0xff] %vm439, 0.0
        %473 = vst.msk [vmem:[#allocation2 + $0x100] sm:$0x3] %vm442, 0.0
        %474 = vst.msk [vmem:[#allocation2 + $0x108] sm:$0xff] %vm439, 0.0
        %475 = vst.msk [vmem:[#allocation2 + $0x110] sm:$0xff] %vm439, 0.0
        %476 = vst.msk [vmem:[#allocation2 + $0x118] sm:$0x3] %vm442, 0.0
        %477 = vst.msk [vmem:[#allocation2 + $0x120] sm:$0xff] %vm439, 0.0
        %478 = vst.msk [vmem:[#allocation2 + $0x128] sm:$0xff] %vm439, 0.0
        %479 = vst.msk [vmem:[#allocation2 + $0x130] sm:$0x3] %vm442, 0.0
        %480 = vst.msk [vmem:[#allocation2 + $0x138] sm:$0xff] %vm439, 0.0
        %481 = vst.msk [vmem:[#allocation2 + $0x140] sm:$0xff] %vm439, 0.0
        %482 = vst.msk [vmem:[#allocation2 + $0x148] sm:$0x3] %vm442, 0.0
        %483 = vst.msk [vmem:[#allocation2 + $0x150] sm:$0xff] %vm439, 0.0
        %484 = vst.msk [vmem:[#allocation2 + $0x158] sm:$0xff] %vm439, 0.0
        %485 = vst.msk [vmem:[#allocation2 + $0x160] sm:$0x3] %vm442, 0.0
        %486 = vst.msk [vmem:[#allocation2 + $0x168] sm:$0xff] %vm439, 0.0
        %487 = vst.msk [vmem:[#allocation2 + $0x170] sm:$0xff] %vm439, 0.0
        %488 = vst.msk [vmem:[#allocation2 + $0x178] sm:$0x3] %vm442, 0.0
        %489 = vst.msk [vmem:[#allocation2 + $0x180] sm:$0xff] %vm439, 0.0
        %490 = vst.msk [vmem:[#allocation2 + $0x188] sm:$0xff] %vm439, 0.0
        %491 = vst.msk [vmem:[#allocation2 + $0x190] sm:$0x3] %vm442, 0.0
        %492 = vst.msk [vmem:[#allocation2 + $0x198] sm:$0xff] %vm439, 0.0
        %493 = vst.msk [vmem:[#allocation2 + $0x1a0] sm:$0xff] %vm439, 0.0
        %494 = vst.msk [vmem:[#allocation2 + $0x1a8] sm:$0x3] %vm442, 0.0
        %v495 = vld [vmem:[%s437] sm:$0xff]
        %v496 = vld [vmem:[%s437 + $0x8] sm:$0xff]
        %v497 = vld [vmem:[%s437 + $0x10] sm:$0xff]
        %v498 = vld [vmem:[%s437 + $0x18] sm:$0xff]
        %v499 = vld [vmem:[%s437 + $0x20] sm:$0xff]
        %v500 = vld [vmem:[%s437 + $0x28] sm:$0xff]
        %v501 = vld [vmem:[%s437 + $0x30] sm:$0xff]
        %v502 = vld [vmem:[%s437 + $0x38] sm:$0xff]
        %v503 = vld [vmem:[%s437 + $0x40] sm:$0xff]
        %v504 = vld [vmem:[%s437 + $0x48] sm:$0xff]
        %v505 = vld [vmem:[%s437 + $0x50] sm:$0xff]
        %v506 = vld [vmem:[%s437 + $0x58] sm:$0xff]
        %v507 = vld [vmem:[%s437 + $0x60] sm:$0xff]
        %v508 = vld [vmem:[%s437 + $0x68] sm:$0xff]
        %v509 = vld [vmem:[%s437 + $0x70] sm:$0xff]
        %v510 = vld [vmem:[%s437 + $0x78] sm:$0xff]
        %v511 = vld [vmem:[%s437 + $0x80] sm:$0xff]
        %v512 = vld [vmem:[%s437 + $0x88] sm:$0xff]
        %v513 = vld [vmem:[%s437 + $0x90] sm:$0xff]
        %v514 = vld [vmem:[%s437 + $0x98] sm:$0xff]
        %v515 = vld [vmem:[%s437 + $0xa0] sm:$0xff]
        %v516 = vld [vmem:[%s437 + $0xa8] sm:$0xff]
        %v517 = vld [vmem:[%s437 + $0xb0] sm:$0xff]
        %v518 = vld [vmem:[%s437 + $0xb8] sm:$0xff]
        %v519 = vld [vmem:[%s437 + $0xc0] sm:$0xff]
        %v520 = vld [vmem:[%s437 + $0xc8] sm:$0xff]
        %v521 = vld [vmem:[%s437 + $0xd0] sm:$0xff]
        %v522 = vld [vmem:[%s437 + $0xd8] sm:$0xff]
        %v523 = vld [vmem:[%s437 + $0xe0] sm:$0xff]
        %v524 = vld [vmem:[%s437 + $0xe8] sm:$0xff]
        %v525 = vld [vmem:[%s437 + $0xf0] sm:$0xff]
        %v526 = vld [vmem:[%s437 + $0xf8] sm:$0xff]
        %s527 = scalar_lea.vmem [#allocation2], 24
        %528 = vst.msk [vmem:[%s527 + $0x1] sm:$0xff] %vm439, %v495
        %529 = vst.msk [vmem:[%s527 + $0x9] sm:$0xff] %vm439, %v496
        %530 = vst.msk [vmem:[%s527 + $0x19] sm:$0xff] %vm439, %v497
        %531 = vst.msk [vmem:[%s527 + $0x21] sm:$0xff] %vm439, %v498
        %532 = vst.msk [vmem:[%s527 + $0x31] sm:$0xff] %vm439, %v499
        %533 = vst.msk [vmem:[%s527 + $0x39] sm:$0xff] %vm439, %v500
        %534 = vst.msk [vmem:[%s527 + $0x49] sm:$0xff] %vm439, %v501
        %535 = vst.msk [vmem:[%s527 + $0x51] sm:$0xff] %vm439, %v502
        %536 = vst.msk [vmem:[%s527 + $0x61] sm:$0xff] %vm439, %v503
        %537 = vst.msk [vmem:[%s527 + $0x69] sm:$0xff] %vm439, %v504
        %538 = vst.msk [vmem:[%s527 + $0x79] sm:$0xff] %vm439, %v505
        %539 = vst.msk [vmem:[%s527 + $0x81] sm:$0xff] %vm439, %v506
        %540 = vst.msk [vmem:[%s527 + $0x91] sm:$0xff] %vm439, %v507
        %541 = vst.msk [vmem:[%s527 + $0x99] sm:$0xff] %vm439, %v508
        %542 = vst.msk [vmem:[%s527 + $0xa9] sm:$0xff] %vm439, %v509
        %543 = vst.msk [vmem:[%s527 + $0xb1] sm:$0xff] %vm439, %v510
        %544 = vst.msk [vmem:[%s527 + $0xc1] sm:$0xff] %vm439, %v511
        %545 = vst.msk [vmem:[%s527 + $0xc9] sm:$0xff] %vm439, %v512
        %546 = vst.msk [vmem:[%s527 + $0xd9] sm:$0xff] %vm439, %v513
        %547 = vst.msk [vmem:[%s527 + $0xe1] sm:$0xff] %vm439, %v514
        %548 = vst.msk [vmem:[%s527 + $0xf1] sm:$0xff] %vm439, %v515
        %549 = vst.msk [vmem:[%s527 + $0xf9] sm:$0xff] %vm439, %v516
        %550 = vst.msk [vmem:[%s527 + $0x109] sm:$0xff] %vm439, %v517
        %551 = vst.msk [vmem:[%s527 + $0x111] sm:$0xff] %vm439, %v518
        %552 = vst.msk [vmem:[%s527 + $0x121] sm:$0xff] %vm439, %v519
        %553 = vst.msk [vmem:[%s527 + $0x129] sm:$0xff] %vm439, %v520
        %554 = vst.msk [vmem:[%s527 + $0x139] sm:$0xff] %vm439, %v521
        %555 = vst.msk [vmem:[%s527 + $0x141] sm:$0xff] %vm439, %v522
        %556 = vst.msk [vmem:[%s527 + $0x151] sm:$0xff] %vm439, %v523
        %557 = vst.msk [vmem:[%s527 + $0x159] sm:$0xff] %vm439, %v524
        %558 = vst.msk [vmem:[%s527 + $0x169] sm:$0xff] %vm439, %v525
        %559 = vst.msk [vmem:[%s527 + $0x171] sm:$0xff] %vm439, %v526
        %v560 = vld [vmem:[#allocation2] sm:$0xff]
        %v561 = vld [vmem:[#allocation2 + $0x8] sm:$0xff]
        %v562 = vld [vmem:[#allocation2 + $0x18] sm:$0xff]
        %v563 = vld [vmem:[#allocation2 + $0x20] sm:$0xff]
        %v564 = vld [vmem:[#allocation2 + $0x30] sm:$0xff]
        %v565 = vld [vmem:[#allocation2 + $0x38] sm:$0xff]
        %v566 = vld [vmem:[#allocation2 + $0x48] sm:$0xff]
        %v567 = vld [vmem:[#allocation2 + $0x50] sm:$0xff]
        %v568 = vld [vmem:[#allocation2 + $0x60] sm:$0xff]
        %v569 = vld [vmem:[#allocation2 + $0x68] sm:$0xff]
        %v570 = vld [vmem:[#allocation2 + $0x78] sm:$0xff]
        %v571 = vld [vmem:[#allocation2 + $0x80] sm:$0xff]
        %v572 = vld [vmem:[#allocation2 + $0x90] sm:$0xff]
        %v573 = vld [vmem:[#allocation2 + $0x98] sm:$0xff]
        %v574 = vld [vmem:[#allocation2 + $0xa8] sm:$0xff]
        %v575 = vld [vmem:[#allocation2 + $0xb0] sm:$0xff]
        %v576 = vld [vmem:[#allocation2 + $0xc0] sm:$0xff]
        %v577 = vld [vmem:[#allocation2 + $0xc8] sm:$0xff]
        %v578 = vld [vmem:[#allocation2 + $0xd8] sm:$0xff]
        %v579 = vld [vmem:[#allocation2 + $0xe0] sm:$0xff]
        %v580 = vld [vmem:[#allocation2 + $0xf0] sm:$0xff]
        %v581 = vld [vmem:[#allocation2 + $0xf8] sm:$0xff]
        %v582 = vld [vmem:[#allocation2 + $0x108] sm:$0xff]
        %v583 = vld [vmem:[#allocation2 + $0x110] sm:$0xff]
        %v584 = vld [vmem:[#allocation2 + $0x120] sm:$0xff]
        %v585 = vld [vmem:[#allocation2 + $0x128] sm:$0xff]
        %v586 = vld [vmem:[#allocation2 + $0x138] sm:$0xff]
        %v587 = vld [vmem:[#allocation2 + $0x140] sm:$0xff]
        %v588 = vld [vmem:[#allocation2 + $0x150] sm:$0xff]
        %v589 = vld [vmem:[#allocation2 + $0x158] sm:$0xff]
        %v590 = vld [vmem:[#allocation2 + $0x168] sm:$0xff]
        %v591 = vld [vmem:[#allocation2 + $0x170] sm:$0xff]
        %v592 = vpack.c.bf16 %v561, %v560
        %v593 = vpack.c.bf16 %v563, %v562
        %v594 = vpack.c.bf16 %v565, %v564
        %v595 = vpack.c.bf16 %v567, %v566
        %v596 = vpack.c.bf16 %v569, %v568
        %v597 = vpack.c.bf16 %v571, %v570
        %v598 = vpack.c.bf16 %v573, %v572
        %v599 = vpack.c.bf16 %v575, %v574
        %v600 = vpack.c.bf16 %v577, %v576
        %v601 = vpack.c.bf16 %v579, %v578
        %v602 = vpack.c.bf16 %v581, %v580
        %v603 = vpack.c.bf16 %v583, %v582
        %v604 = vpack.c.bf16 %v585, %v584
        %v605 = vpack.c.bf16 %v587, %v586
        %v606 = vpack.c.bf16 %v589, %v588
        %v607 = vpack.c.bf16 %v591, %v590
        %v608 = vld [vmem:[%s1] sm:$0x3]
        %v609 = vld [vmem:[#allocation2 + $0x1] sm:$0xff]
        %v610 = vld [vmem:[#allocation2 + $0x9] sm:$0xff]
        %v611 = vld [vmem:[#allocation2 + $0x19] sm:$0xff]
        %v612 = vld [vmem:[#allocation2 + $0x21] sm:$0xff]
        %v613 = vld [vmem:[#allocation2 + $0x31] sm:$0xff]
        %v614 = vld [vmem:[#allocation2 + $0x39] sm:$0xff]
        %v615 = vld [vmem:[#allocation2 + $0x49] sm:$0xff]
        %v616 = vld [vmem:[#allocation2 + $0x51] sm:$0xff]
        %v617 = vld [vmem:[#allocation2 + $0x61] sm:$0xff]
        %v618 = vld [vmem:[#allocation2 + $0x69] sm:$0xff]
        %v619 = vld [vmem:[#allocation2 + $0x79] sm:$0xff]
        %v620 = vld [vmem:[#allocation2 + $0x81] sm:$0xff]
        %v621 = vld [vmem:[#allocation2 + $0x91] sm:$0xff]
        %v622 = vld [vmem:[#allocation2 + $0x99] sm:$0xff]
        %v623 = vld [vmem:[#allocation2 + $0xa9] sm:$0xff]
        %v624 = vld [vmem:[#allocation2 + $0xb1] sm:$0xff]
        %v625 = vld [vmem:[#allocation2 + $0xc1] sm:$0xff]
        %v626 = vld [vmem:[#allocation2 + $0xc9] sm:$0xff]
        %v627 = vld [vmem:[#allocation2 + $0xd9] sm:$0xff]
        %v628 = vld [vmem:[#allocation2 + $0xe1] sm:$0xff]
        %v629 = vld [vmem:[#allocation2 + $0xf1] sm:$0xff]
        %v630 = vld [vmem:[#allocation2 + $0xf9] sm:$0xff]
        %v631 = vld [vmem:[#allocation2 + $0x109] sm:$0xff]
        %v632 = vld [vmem:[#allocation2 + $0x111] sm:$0xff]
        %v633 = vld [vmem:[#allocation2 + $0x121] sm:$0xff]
        %v634 = vld [vmem:[#allocation2 + $0x129] sm:$0xff]
        %v635 = vld [vmem:[#allocation2 + $0x139] sm:$0xff]
        %v636 = vld [vmem:[#allocation2 + $0x141] sm:$0xff]
        %v637 = vld [vmem:[#allocation2 + $0x151] sm:$0xff]
        %v638 = vld [vmem:[#allocation2 + $0x159] sm:$0xff]
        %v639 = vld [vmem:[#allocation2 + $0x169] sm:$0xff]
        %v640 = vld [vmem:[#allocation2 + $0x171] sm:$0xff]
        %v641 = vpack.c.bf16 %v610, %v609
        %v642 = vpack.c.bf16 %v612, %v611
        %v643 = vpack.c.bf16 %v614, %v613
        %v644 = vpack.c.bf16 %v616, %v615
        %v645 = vpack.c.bf16 %v618, %v617
        %v646 = vpack.c.bf16 %v620, %v619
        %v647 = vpack.c.bf16 %v622, %v621
        %v648 = vpack.c.bf16 %v624, %v623
        %v649 = vpack.c.bf16 %v626, %v625
        %v650 = vpack.c.bf16 %v628, %v627
        %v651 = vpack.c.bf16 %v630, %v629
        %v652 = vpack.c.bf16 %v632, %v631
        %v653 = vpack.c.bf16 %v634, %v633
        %v654 = vpack.c.bf16 %v636, %v635
        %v655 = vpack.c.bf16 %v638, %v637
        %v656 = vpack.c.bf16 %v640, %v639
        %s657 = scalar_lea.vmem %s1, 2
        %v658 = vld [vmem:[%s657] sm:$0x3]
        %v660 = vsel %vm439, %v641, 0
        %v663 = vsel %vm439, %v642, 0
        %v666 = vsel %vm439, %v643, 0
        %v669 = vsel %vm439, %v644, 0
        %v672 = vsel %vm439, %v645, 0
        %v675 = vsel %vm439, %v646, 0
        %v678 = vsel %vm439, %v647, 0
        %v681 = vsel %vm439, %v648, 0
        %v684 = vsel %vm439, %v649, 0
        %v687 = vsel %vm439, %v650, 0
        %v690 = vsel %vm439, %v651, 0
        %v693 = vsel %vm439, %v652, 0
        %v696 = vsel %vm439, %v653, 0
        %v699 = vsel %vm439, %v654, 0
        %v702 = vsel %vm439, %v655, 0
        %v705 = vsel %vm439, %v656, 0
        %vm707 = vcmask 1040384
        %vm708 = vcmask 1041408
        %v709 = vsel %vm707, 4294967295, 65535
        %v710 = vsel %vm708, %v709, 0
        %v712 = vand.u32 %v658, %v710
        %714 = vmatprep.subr.bf16.mxu0 0
        %715 = vmatpush1.bf16.msra.mxu0 %v712
        %716 = vmatprep.subr.bf16.mxu0 0
        %717 = vmatpush1.bf16.msra.mxu0 0
        %718 = vmatprep.subr.bf16.mxu0 0
        %719 = vmatpush1.bf16.msra.mxu0 0
        %720 = vmatprep.subr.bf16.mxu0 0
        %721 = vmatpush1.bf16.msra.mxu0 0
        %722 = vmatprep.subr.bf16.mxu0 0
        %723 = vmatpush1.bf16.msra.mxu0 0
        %724 = vmatprep.subr.bf16.mxu0 0
        %725 = vmatpush1.bf16.msra.mxu0 0
        %726 = vmatprep.subr.bf16.mxu0 0
        %727 = vmatpush1.bf16.msra.mxu0 0
        %728 = vmatprep.subr.bf16.mxu0 0
        %729 = vmatpush1.bf16.msra.mxu0 0
        %730 = vmatprep.subr.bf16.mxu0 0
        %731 = vmatpush1.bf16.msra.mxu0 0
        %732 = vmatprep.subr.bf16.mxu0 0
        %733 = vmatpush1.bf16.msra.mxu0 0
        %734 = vmatprep.subr.bf16.mxu0 0
        %735 = vmatpush1.bf16.msra.mxu0 0
        %736 = vmatprep.subr.bf16.mxu0 0
        %737 = vmatpush1.bf16.msra.mxu0 0
        %738 = vmatprep.subr.bf16.mxu0 0
        %739 = vmatpush1.bf16.msra.mxu0 0
        %740 = vmatprep.subr.bf16.mxu0 0
        %741 = vmatpush1.bf16.msra.mxu0 0
        %742 = vmatprep.subr.bf16.mxu0 0
        %743 = vmatpush1.bf16.msra.mxu0 0
        %744 = vmatprep.subr.bf16.mxu0 0
        %745 = vmatpush1.bf16.msra.mxu0 0
        %746 = vmatprep.mubr.bf16.mxu0 0
        %747 = vmatmul.mubr.bf16.gmra.mrb[0].mxu0 %v660
        %v748 = vpop.f32.mrb[0].mxu0
        %v749 = vadd.f32 0.0, %v748
        %v750 = vpop.f32.mrb[0].mxu0
        %v751 = vpop.f32.mrb[0].mxu0
        %v752 = vadd.f32 0.0, %v751
        %v753 = vpop.f32.mrb[0].mxu0
        %754 = vmatprep.mubr.bf16.mxu0 0
        %755 = vmatmul.mubr.bf16.gmra.mrb[0].mxu0 %v663
        %v756 = vpop.f32.mrb[0].mxu0
        %v757 = vadd.f32 0.0, %v756
        %v758 = vpop.f32.mrb[0].mxu0
        %v759 = vpop.f32.mrb[0].mxu0
        %v760 = vadd.f32 0.0, %v759
        %v761 = vpop.f32.mrb[0].mxu0
        %762 = vmatprep.mubr.bf16.mxu0 0
        %763 = vmatmul.mubr.bf16.gmra.mrb[0].mxu0 %v666
        %v764 = vpop.f32.mrb[0].mxu0
        %v765 = vadd.f32 0.0, %v764
        %v766 = vpop.f32.mrb[0].mxu0
        %v767 = vpop.f32.mrb[0].mxu0
        %v768 = vadd.f32 0.0, %v767
        %v769 = vpop.f32.mrb[0].mxu0
        %770 = vmatprep.mubr.bf16.mxu0 0
        %771 = vmatmul.mubr.bf16.gmra.mrb[0].mxu0 %v669
        %v772 = vpop.f32.mrb[0].mxu0
        %v773 = vadd.f32 0.0, %v772
        %v774 = vpop.f32.mrb[0].mxu0
        %v775 = vpop.f32.mrb[0].mxu0
        %v776 = vadd.f32 0.0, %v775
        %v777 = vpop.f32.mrb[0].mxu0
        %778 = vmatprep.mubr.bf16.mxu0 0
        %779 = vmatmul.mubr.bf16.gmra.mrb[0].mxu0 %v672
        %v780 = vpop.f32.mrb[0].mxu0
        %v781 = vadd.f32 0.0, %v780
        %v782 = vpop.f32.mrb[0].mxu0
        %v783 = vpop.f32.mrb[0].mxu0
        %v784 = vadd.f32 0.0, %v783
        %v785 = vpop.f32.mrb[0].mxu0
        %786 = vmatprep.mubr.bf16.mxu0 0
        %787 = vmatmul.mubr.bf16.gmra.mrb[0].mxu0 %v675
        %v788 = vpop.f32.mrb[0].mxu0
        %v789 = vadd.f32 0.0, %v788
        %v790 = vpop.f32.mrb[0].mxu0
        %v791 = vpop.f32.mrb[0].mxu0
        %v792 = vadd.f32 0.0, %v791
        %v793 = vpop.f32.mrb[0].mxu0
        %794 = vmatprep.mubr.bf16.mxu0 0
        %795 = vmatmul.mubr.bf16.gmra.mrb[0].mxu0 %v678
        %v796 = vpop.f32.mrb[0].mxu0
        %v797 = vadd.f32 0.0, %v796
        %v798 = vpop.f32.mrb[0].mxu0
        %v799 = vpop.f32.mrb[0].mxu0
        %v800 = vadd.f32 0.0, %v799
        %v801 = vpop.f32.mrb[0].mxu0
        %802 = vmatprep.mubr.bf16.mxu0 0
        %803 = vmatmul.mubr.bf16.gmra.mrb[0].mxu0 %v681
        %v804 = vpop.f32.mrb[0].mxu0
        %v805 = vadd.f32 0.0, %v804
        %v806 = vpop.f32.mrb[0].mxu0
        %v807 = vpop.f32.mrb[0].mxu0
        %v808 = vadd.f32 0.0, %v807
        %v809 = vpop.f32.mrb[0].mxu0
        %810 = vmatprep.mubr.bf16.mxu0 0
        %811 = vmatmul.mubr.bf16.gmra.mrb[0].mxu0 %v684
        %v812 = vpop.f32.mrb[0].mxu0
        %v813 = vadd.f32 0.0, %v812
        %v814 = vpop.f32.mrb[0].mxu0
        %v815 = vpop.f32.mrb[0].mxu0
        %v816 = vadd.f32 0.0, %v815
        %v817 = vpop.f32.mrb[0].mxu0
        %818 = vmatprep.mubr.bf16.mxu0 0
        %819 = vmatmul.mubr.bf16.gmra.mrb[0].mxu0 %v687
        %v820 = vpop.f32.mrb[0].mxu0
        %v821 = vadd.f32 0.0, %v820
        %v822 = vpop.f32.mrb[0].mxu0
        %v823 = vpop.f32.mrb[0].mxu0
        %v824 = vadd.f32 0.0, %v823
        %v825 = vpop.f32.mrb[0].mxu0
        %826 = vmatprep.mubr.bf16.mxu0 0
        %827 = vmatmul.mubr.bf16.gmra.mrb[0].mxu0 %v690
        %v828 = vpop.f32.mrb[0].mxu0
        %v829 = vadd.f32 0.0, %v828
        %v830 = vpop.f32.mrb[0].mxu0
        %v831 = vpop.f32.mrb[0].mxu0
        %v832 = vadd.f32 0.0, %v831
        %v833 = vpop.f32.mrb[0].mxu0
        %834 = vmatprep.mubr.bf16.mxu0 0
        %835 = vmatmul.mubr.bf16.gmra.mrb[0].mxu0 %v693
        %v836 = vpop.f32.mrb[0].mxu0
        %v837 = vadd.f32 0.0, %v836
        %v838 = vpop.f32.mrb[0].mxu0
        %v839 = vpop.f32.mrb[0].mxu0
        %v840 = vadd.f32 0.0, %v839
        %v841 = vpop.f32.mrb[0].mxu0
        %842 = vmatprep.mubr.bf16.mxu0 0
        %843 = vmatmul.mubr.bf16.gmra.mrb[0].mxu0 %v696
        %v844 = vpop.f32.mrb[0].mxu0
        %v845 = vadd.f32 0.0, %v844
        %v846 = vpop.f32.mrb[0].mxu0
        %v847 = vpop.f32.mrb[0].mxu0
        %v848 = vadd.f32 0.0, %v847
        %v849 = vpop.f32.mrb[0].mxu0
        %850 = vmatprep.mubr.bf16.mxu0 0
        %851 = vmatmul.mubr.bf16.gmra.mrb[0].mxu0 %v699
        %v852 = vpop.f32.mrb[0].mxu0
        %v853 = vadd.f32 0.0, %v852
        %v854 = vpop.f32.mrb[0].mxu0
        %v855 = vpop.f32.mrb[0].mxu0
        %v856 = vadd.f32 0.0, %v855
        %v857 = vpop.f32.mrb[0].mxu0
        %858 = vmatprep.mubr.bf16.mxu0 0
        %859 = vmatmul.mubr.bf16.gmra.mrb[0].mxu0 %v702
        %v860 = vpop.f32.mrb[0].mxu0
        %v861 = vadd.f32 0.0, %v860
        %v862 = vpop.f32.mrb[0].mxu0
        %v863 = vpop.f32.mrb[0].mxu0
        %v864 = vadd.f32 0.0, %v863
        %v865 = vpop.f32.mrb[0].mxu0
        %866 = vmatprep.mubr.bf16.mxu0 0
        %867 = vmatmul.mubr.bf16.gmra.mrb[0].mxu0 %v705
        %v868 = vpop.f32.mrb[0].mxu0
        %v869 = vadd.f32 0.0, %v868
        %v870 = vpop.f32.mrb[0].mxu0
        %v871 = vpop.f32.mrb[0].mxu0
        %v872 = vadd.f32 0.0, %v871
        %v873 = vpop.f32.mrb[0].mxu0
        %874 = vdwg.mxu0
        %v876 = vsel %vm439, %v592, 0
        %v879 = vsel %vm439, %v593, 0
        %v882 = vsel %vm439, %v594, 0
        %v885 = vsel %vm439, %v595, 0
        %v888 = vsel %vm439, %v596, 0
        %v891 = vsel %vm439, %v597, 0
        %v894 = vsel %vm439, %v598, 0
        %v897 = vsel %vm439, %v599, 0
        %v900 = vsel %vm439, %v600, 0
        %v903 = vsel %vm439, %v601, 0
        %v906 = vsel %vm439, %v602, 0
        %v909 = vsel %vm439, %v603, 0
        %v912 = vsel %vm439, %v604, 0
        %v915 = vsel %vm439, %v605, 0
        %v918 = vsel %vm439, %v606, 0
        %v921 = vsel %vm439, %v607, 0
        %v924 = vand.u32 %v608, %v710
        %926 = vmatprep.subr.bf16.mxu0 0
        %927 = vmatpush1.bf16.msra.mxu0 %v924
        %928 = vmatprep.subr.bf16.mxu0 0
        %929 = vmatpush1.bf16.msra.mxu0 0
        %930 = vmatprep.subr.bf16.mxu0 0
        %931 = vmatpush1.bf16.msra.mxu0 0
        %932 = vmatprep.subr.bf16.mxu0 0
        %933 = vmatpush1.bf16.msra.mxu0 0
        %934 = vmatprep.subr.bf16.mxu0 0
        %935 = vmatpush1.bf16.msra.mxu0 0
        %936 = vmatprep.subr.bf16.mxu0 0
        %937 = vmatpush1.bf16.msra.mxu0 0
        %938 = vmatprep.subr.bf16.mxu0 0
        %939 = vmatpush1.bf16.msra.mxu0 0
        %940 = vmatprep.subr.bf16.mxu0 0
        %941 = vmatpush1.bf16.msra.mxu0 0
        %942 = vmatprep.subr.bf16.mxu0 0
        %943 = vmatpush1.bf16.msra.mxu0 0
        %944 = vmatprep.subr.bf16.mxu0 0
        %945 = vmatpush1.bf16.msra.mxu0 0
        %946 = vmatprep.subr.bf16.mxu0 0
        %947 = vmatpush1.bf16.msra.mxu0 0
        %948 = vmatprep.subr.bf16.mxu0 0
        %949 = vmatpush1.bf16.msra.mxu0 0
        %950 = vmatprep.subr.bf16.mxu0 0
        %951 = vmatpush1.bf16.msra.mxu0 0
        %952 = vmatprep.subr.bf16.mxu0 0
        %953 = vmatpush1.bf16.msra.mxu0 0
        %954 = vmatprep.subr.bf16.mxu0 0
        %955 = vmatpush1.bf16.msra.mxu0 0
        %956 = vmatprep.subr.bf16.mxu0 0
        %957 = vmatpush1.bf16.msra.mxu0 0
        %958 = vmatprep.mubr.bf16.mxu0 0
        %959 = vmatmul.mubr.bf16.gmra.mrb[0].mxu0 %v876
        %v960 = vpop.f32.mrb[0].mxu0
        %v961 = vadd.f32 %v749, %v960
        %v962 = vpop.f32.mrb[0].mxu0
        %v963 = vpop.f32.mrb[0].mxu0
        %v964 = vadd.f32 %v752, %v963
        %v965 = vpop.f32.mrb[0].mxu0
        %966 = vmatprep.mubr.bf16.mxu0 0
        %967 = vmatmul.mubr.bf16.gmra.mrb[0].mxu0 %v879
        %v968 = vpop.f32.mrb[0].mxu0
        %v969 = vadd.f32 %v757, %v968
        %v970 = vpop.f32.mrb[0].mxu0
        %v971 = vpop.f32.mrb[0].mxu0
        %v972 = vadd.f32 %v760, %v971
        %v973 = vpop.f32.mrb[0].mxu0
        %974 = vmatprep.mubr.bf16.mxu0 0
        %975 = vmatmul.mubr.bf16.gmra.mrb[0].mxu0 %v882
        %v976 = vpop.f32.mrb[0].mxu0
        %v977 = vadd.f32 %v765, %v976
        %v978 = vpop.f32.mrb[0].mxu0
        %v979 = vpop.f32.mrb[0].mxu0
        %v980 = vadd.f32 %v768, %v979
        %v981 = vpop.f32.mrb[0].mxu0
        %982 = vmatprep.mubr.bf16.mxu0 0
        %983 = vmatmul.mubr.bf16.gmra.mrb[0].mxu0 %v885
        %v984 = vpop.f32.mrb[0].mxu0
        %v985 = vadd.f32 %v773, %v984
        %v986 = vpop.f32.mrb[0].mxu0
        %v987 = vpop.f32.mrb[0].mxu0
        %v988 = vadd.f32 %v776, %v987
        %v989 = vpop.f32.mrb[0].mxu0
        %990 = vmatprep.mubr.bf16.mxu0 0
        %991 = vmatmul.mubr.bf16.gmra.mrb[0].mxu0 %v888
        %v992 = vpop.f32.mrb[0].mxu0
        %v993 = vadd.f32 %v781, %v992
        %v994 = vpop.f32.mrb[0].mxu0
        %v995 = vpop.f32.mrb[0].mxu0
        %v996 = vadd.f32 %v784, %v995
        %v997 = vpop.f32.mrb[0].mxu0
        %998 = vmatprep.mubr.bf16.mxu0 0
        %999 = vmatmul.mubr.bf16.gmra.mrb[0].mxu0 %v891
        %v1000 = vpop.f32.mrb[0].mxu0
        %v1001 = vadd.f32 %v789, %v1000
        %v1002 = vpop.f32.mrb[0].mxu0
        %v1003 = vpop.f32.mrb[0].mxu0
        %v1004 = vadd.f32 %v792, %v1003
        %v1005 = vpop.f32.mrb[0].mxu0
        %1006 = vmatprep.mubr.bf16.mxu0 0
        %1007 = vmatmul.mubr.bf16.gmra.mrb[0].mxu0 %v894
        %v1008 = vpop.f32.mrb[0].mxu0
        %v1009 = vadd.f32 %v797, %v1008
        %v1010 = vpop.f32.mrb[0].mxu0
        %v1011 = vpop.f32.mrb[0].mxu0
        %v1012 = vadd.f32 %v800, %v1011
        %v1013 = vpop.f32.mrb[0].mxu0
        %1014 = vmatprep.mubr.bf16.mxu0 0
        %1015 = vmatmul.mubr.bf16.gmra.mrb[0].mxu0 %v897
        %v1016 = vpop.f32.mrb[0].mxu0
        %v1017 = vadd.f32 %v805, %v1016
        %v1018 = vpop.f32.mrb[0].mxu0
        %v1019 = vpop.f32.mrb[0].mxu0
        %v1020 = vadd.f32 %v808, %v1019
        %v1021 = vpop.f32.mrb[0].mxu0
        %1022 = vmatprep.mubr.bf16.mxu0 0
        %1023 = vmatmul.mubr.bf16.gmra.mrb[0].mxu0 %v900
        %v1024 = vpop.f32.mrb[0].mxu0
        %v1025 = vadd.f32 %v813, %v1024
        %v1026 = vpop.f32.mrb[0].mxu0
        %v1027 = vpop.f32.mrb[0].mxu0
        %v1028 = vadd.f32 %v816, %v1027
        %v1029 = vpop.f32.mrb[0].mxu0
        %1030 = vmatprep.mubr.bf16.mxu0 0
        %1031 = vmatmul.mubr.bf16.gmra.mrb[0].mxu0 %v903
        %v1032 = vpop.f32.mrb[0].mxu0
        %v1033 = vadd.f32 %v821, %v1032
        %v1034 = vpop.f32.mrb[0].mxu0
        %v1035 = vpop.f32.mrb[0].mxu0
        %v1036 = vadd.f32 %v824, %v1035
        %v1037 = vpop.f32.mrb[0].mxu0
        %1038 = vmatprep.mubr.bf16.mxu0 0
        %1039 = vmatmul.mubr.bf16.gmra.mrb[0].mxu0 %v906
        %v1040 = vpop.f32.mrb[0].mxu0
        %v1041 = vadd.f32 %v829, %v1040
        %v1042 = vpop.f32.mrb[0].mxu0
        %v1043 = vpop.f32.mrb[0].mxu0
        %v1044 = vadd.f32 %v832, %v1043
        %v1045 = vpop.f32.mrb[0].mxu0
        %1046 = vmatprep.mubr.bf16.mxu0 0
        %1047 = vmatmul.mubr.bf16.gmra.mrb[0].mxu0 %v909
        %v1048 = vpop.f32.mrb[0].mxu0
        %v1049 = vadd.f32 %v837, %v1048
        %v1050 = vpop.f32.mrb[0].mxu0
        %v1051 = vpop.f32.mrb[0].mxu0
        %v1052 = vadd.f32 %v840, %v1051
        %v1053 = vpop.f32.mrb[0].mxu0
        %1054 = vmatprep.mubr.bf16.mxu0 0
        %1055 = vmatmul.mubr.bf16.gmra.mrb[0].mxu0 %v912
        %v1056 = vpop.f32.mrb[0].mxu0
        %v1057 = vadd.f32 %v845, %v1056
        %v1058 = vpop.f32.mrb[0].mxu0
        %v1059 = vpop.f32.mrb[0].mxu0
        %v1060 = vadd.f32 %v848, %v1059
        %v1061 = vpop.f32.mrb[0].mxu0
        %1062 = vmatprep.mubr.bf16.mxu0 0
        %1063 = vmatmul.mubr.bf16.gmra.mrb[0].mxu0 %v915
        %v1064 = vpop.f32.mrb[0].mxu0
        %v1065 = vadd.f32 %v853, %v1064
        %v1066 = vpop.f32.mrb[0].mxu0
        %v1067 = vpop.f32.mrb[0].mxu0
        %v1068 = vadd.f32 %v856, %v1067
        %v1069 = vpop.f32.mrb[0].mxu0
        %1070 = vmatprep.mubr.bf16.mxu0 0
        %1071 = vmatmul.mubr.bf16.gmra.mrb[0].mxu0 %v918
        %v1072 = vpop.f32.mrb[0].mxu0
        %v1073 = vadd.f32 %v861, %v1072
        %v1074 = vpop.f32.mrb[0].mxu0
        %v1075 = vpop.f32.mrb[0].mxu0
        %v1076 = vadd.f32 %v864, %v1075
        %v1077 = vpop.f32.mrb[0].mxu0
        %1078 = vmatprep.mubr.bf16.mxu0 0
        %1079 = vmatmul.mubr.bf16.gmra.mrb[0].mxu0 %v921
        %v1080 = vpop.f32.mrb[0].mxu0
        %v1081 = vadd.f32 %v869, %v1080
        %v1082 = vpop.f32.mrb[0].mxu0
        %v1083 = vpop.f32.mrb[0].mxu0
        %v1084 = vadd.f32 %v872, %v1083
        %v1085 = vpop.f32.mrb[0].mxu0
        %1086 = vdwg.mxu0
        %v1087 = vld [vmem:[#allocation2 + $0x2] sm:$0xff]
        %v1088 = vld [vmem:[#allocation2 + $0xa] sm:$0xff]
        %v1089 = vld [vmem:[#allocation2 + $0x1a] sm:$0xff]
        %v1090 = vld [vmem:[#allocation2 + $0x22] sm:$0xff]
        %v1091 = vld [vmem:[#allocation2 + $0x32] sm:$0xff]
        %v1092 = vld [vmem:[#allocation2 + $0x3a] sm:$0xff]
        %v1093 = vld [vmem:[#allocation2 + $0x4a] sm:$0xff]
        %v1094 = vld [vmem:[#allocation2 + $0x52] sm:$0xff]
        %v1095 = vld [vmem:[#allocation2 + $0x62] sm:$0xff]
        %v1096 = vld [vmem:[#allocation2 + $0x6a] sm:$0xff]
        %v1097 = vld [vmem:[#allocation2 + $0x7a] sm:$0xff]
        %v1098 = vld [vmem:[#allocation2 + $0x82] sm:$0xff]
        %v1099 = vld [vmem:[#allocation2 + $0x92] sm:$0xff]
        %v1100 = vld [vmem:[#allocation2 + $0x9a] sm:$0xff]
        %v1101 = vld [vmem:[#allocation2 + $0xaa] sm:$0xff]
        %v1102 = vld [vmem:[#allocation2 + $0xb2] sm:$0xff]
        %v1103 = vld [vmem:[#allocation2 + $0xc2] sm:$0xff]
        %v1104 = vld [vmem:[#allocation2 + $0xca] sm:$0xff]
        %v1105 = vld [vmem:[#allocation2 + $0xda] sm:$0xff]
        %v1106 = vld [vmem:[#allocation2 + $0xe2] sm:$0xff]
        %v1107 = vld [vmem:[#allocation2 + $0xf2] sm:$0xff]
        %v1108 = vld [vmem:[#allocation2 + $0xfa] sm:$0xff]
        %v1109 = vld [vmem:[#allocation2 + $0x10a] sm:$0xff]
        %v1110 = vld [vmem:[#allocation2 + $0x112] sm:$0xff]
        %v1111 = vld [vmem:[#allocation2 + $0x122] sm:$0xff]
        %v1112 = vld [vmem:[#allocation2 + $0x12a] sm:$0xff]
        %v1113 = vld [vmem:[#allocation2 + $0x13a] sm:$0xff]
        %v1114 = vld [vmem:[#allocation2 + $0x142] sm:$0xff]
        %v1115 = vld [vmem:[#allocation2 + $0x152] sm:$0xff]
        %v1116 = vld [vmem:[#allocation2 + $0x15a] sm:$0xff]
        %v1117 = vld [vmem:[#allocation2 + $0x16a] sm:$0xff]
        %v1118 = vld [vmem:[#allocation2 + $0x172] sm:$0xff]
        %v1119 = vpack.c.bf16 %v1088, %v1087
        %v1120 = vpack.c.bf16 %v1090, %v1089
        %v1121 = vpack.c.bf16 %v1092, %v1091
        %v1122 = vpack.c.bf16 %v1094, %v1093
        %v1123 = vpack.c.bf16 %v1096, %v1095
        %v1124 = vpack.c.bf16 %v1098, %v1097
        %v1125 = vpack.c.bf16 %v1100, %v1099
        %v1126 = vpack.c.bf16 %v1102, %v1101
        %v1127 = vpack.c.bf16 %v1104, %v1103
        %v1128 = vpack.c.bf16 %v1106, %v1105
        %v1129 = vpack.c.bf16 %v1108, %v1107
        %v1130 = vpack.c.bf16 %v1110, %v1109
        %v1131 = vpack.c.bf16 %v1112, %v1111
        %v1132 = vpack.c.bf16 %v1114, %v1113
        %v1133 = vpack.c.bf16 %v1116, %v1115
        %v1134 = vpack.c.bf16 %v1118, %v1117
        %s1135 = scalar_lea.vmem %s1, 4
        %v1136 = vld [vmem:[%s1135] sm:$0x3]
        %v1138 = vsel %vm439, %v1119, 0
        %v1141 = vsel %vm439, %v1120, 0
        %v1144 = vsel %vm439, %v1121, 0
        %v1147 = vsel %vm439, %v1122, 0
        %v1150 = vsel %vm439, %v1123, 0
        %v1153 = vsel %vm439, %v1124, 0
        %v1156 = vsel %vm439, %v1125, 0
        %v1159 = vsel %vm439, %v1126, 0
        %v1162 = vsel %vm439, %v1127, 0
        %v1165 = vsel %vm439, %v1128, 0
        %v1168 = vsel %vm439, %v1129, 0
        %v1171 = vsel %vm439, %v1130, 0
        %v1174 = vsel %vm439, %v1131, 0
        %v1177 = vsel %vm439, %v1132, 0
        %v1180 = vsel %vm439, %v1133, 0
        %v1183 = vsel %vm439, %v1134, 0
        %v1186 = vand.u32 %v1136, %v710
        %1188 = vmatprep.subr.bf16.mxu0 0
        %1189 = vmatpush1.bf16.msra.mxu0 %v1186
        %1190 = vmatprep.subr.bf16.mxu0 0
        %1191 = vmatpush1.bf16.msra.mxu0 0
        %1192 = vmatprep.subr.bf16.mxu0 0
        %1193 = vmatpush1.bf16.msra.mxu0 0
        %1194 = vmatprep.subr.bf16.mxu0 0
        %1195 = vmatpush1.bf16.msra.mxu0 0
        %1196 = vmatprep.subr.bf16.mxu0 0
        %1197 = vmatpush1.bf16.msra.mxu0 0
        %1198 = vmatprep.subr.bf16.mxu0 0
        %1199 = vmatpush1.bf16.msra.mxu0 0
        %1200 = vmatprep.subr.bf16.mxu0 0
        %1201 = vmatpush1.bf16.msra.mxu0 0
        %1202 = vmatprep.subr.bf16.mxu0 0
        %1203 = vmatpush1.bf16.msra.mxu0 0
        %1204 = vmatprep.subr.bf16.mxu0 0
        %1205 = vmatpush1.bf16.msra.mxu0 0
        %1206 = vmatprep.subr.bf16.mxu0 0
        %1207 = vmatpush1.bf16.msra.mxu0 0
        %1208 = vmatprep.subr.bf16.mxu0 0
        %1209 = vmatpush1.bf16.msra.mxu0 0
        %1210 = vmatprep.subr.bf16.mxu0 0
        %1211 = vmatpush1.bf16.msra.mxu0 0
        %1212 = vmatprep.subr.bf16.mxu0 0
        %1213 = vmatpush1.bf16.msra.mxu0 0
        %1214 = vmatprep.subr.bf16.mxu0 0
        %1215 = vmatpush1.bf16.msra.mxu0 0
        %1216 = vmatprep.subr.bf16.mxu0 0
        %1217 = vmatpush1.bf16.msra.mxu0 0
        %1218 = vmatprep.subr.bf16.mxu0 0
        %1219 = vmatpush1.bf16.msra.mxu0 0
        %1220 = vmatprep.mubr.bf16.mxu0 0
        %1221 = vmatmul.mubr.bf16.gmra.mrb[0].mxu0 %v1138
        %v1222 = vpop.f32.mrb[0].mxu0
        %v1223 = vadd.f32 0.0, %v1222
        %v1224 = vpop.f32.mrb[0].mxu0
        %v1225 = vpop.f32.mrb[0].mxu0
        %v1226 = vadd.f32 0.0, %v1225
        %v1227 = vpop.f32.mrb[0].mxu0
        %1228 = vmatprep.mubr.bf16.mxu0 0
        %1229 = vmatmul.mubr.bf16.gmra.mrb[0].mxu0 %v1141
        %v1230 = vpop.f32.mrb[0].mxu0
        %v1231 = vadd.f32 0.0, %v1230
        %v1232 = vpop.f32.mrb[0].mxu0
        %v1233 = vpop.f32.mrb[0].mxu0
        %v1234 = vadd.f32 0.0, %v1233
        %v1235 = vpop.f32.mrb[0].mxu0
        %1236 = vmatprep.mubr.bf16.mxu0 0
        %1237 = vmatmul.mubr.bf16.gmra.mrb[0].mxu0 %v1144
        %v1238 = vpop.f32.mrb[0].mxu0
        %v1239 = vadd.f32 0.0, %v1238
        %v1240 = vpop.f32.mrb[0].mxu0
        %v1241 = vpop.f32.mrb[0].mxu0
        %v1242 = vadd.f32 0.0, %v1241
        %v1243 = vpop.f32.mrb[0].mxu0
        %1244 = vmatprep.mubr.bf16.mxu0 0
        %1245 = vmatmul.mubr.bf16.gmra.mrb[0].mxu0 %v1147
        %v1246 = vpop.f32.mrb[0].mxu0
        %v1247 = vadd.f32 0.0, %v1246
        %v1248 = vpop.f32.mrb[0].mxu0
        %v1249 = vpop.f32.mrb[0].mxu0
        %v1250 = vadd.f32 0.0, %v1249
        %v1251 = vpop.f32.mrb[0].mxu0
        %1252 = vmatprep.mubr.bf16.mxu0 0
        %1253 = vmatmul.mubr.bf16.gmra.mrb[0].mxu0 %v1150
        %v1254 = vpop.f32.mrb[0].mxu0
        %v1255 = vadd.f32 0.0, %v1254
        %v1256 = vpop.f32.mrb[0].mxu0
        %v1257 = vpop.f32.mrb[0].mxu0
        %v1258 = vadd.f32 0.0, %v1257
        %v1259 = vpop.f32.mrb[0].mxu0
        %1260 = vmatprep.mubr.bf16.mxu0 0
        %1261 = vmatmul.mubr.bf16.gmra.mrb[0].mxu0 %v1153
        %v1262 = vpop.f32.mrb[0].mxu0
        %v1263 = vadd.f32 0.0, %v1262
        %v1264 = vpop.f32.mrb[0].mxu0
        %v1265 = vpop.f32.mrb[0].mxu0
        %v1266 = vadd.f32 0.0, %v1265
        %v1267 = vpop.f32.mrb[0].mxu0
        %1268 = vmatprep.mubr.bf16.mxu0 0
        %1269 = vmatmul.mubr.bf16.gmra.mrb[0].mxu0 %v1156
        %v1270 = vpop.f32.mrb[0].mxu0
        %v1271 = vadd.f32 0.0, %v1270
        %v1272 = vpop.f32.mrb[0].mxu0
        %v1273 = vpop.f32.mrb[0].mxu0
        %v1274 = vadd.f32 0.0, %v1273
        %v1275 = vpop.f32.mrb[0].mxu0
        %1276 = vmatprep.mubr.bf16.mxu0 0
        %1277 = vmatmul.mubr.bf16.gmra.mrb[0].mxu0 %v1159
        %v1278 = vpop.f32.mrb[0].mxu0
        %v1279 = vadd.f32 0.0, %v1278
        %v1280 = vpop.f32.mrb[0].mxu0
        %v1281 = vpop.f32.mrb[0].mxu0
        %v1282 = vadd.f32 0.0, %v1281
        %v1283 = vpop.f32.mrb[0].mxu0
        %1284 = vmatprep.mubr.bf16.mxu0 0
        %1285 = vmatmul.mubr.bf16.gmra.mrb[0].mxu0 %v1162
        %v1286 = vpop.f32.mrb[0].mxu0
        %v1287 = vadd.f32 0.0, %v1286
        %v1288 = vpop.f32.mrb[0].mxu0
        %v1289 = vpop.f32.mrb[0].mxu0
        %v1290 = vadd.f32 0.0, %v1289
        %v1291 = vpop.f32.mrb[0].mxu0
        %1292 = vmatprep.mubr.bf16.mxu0 0
        %1293 = vmatmul.mubr.bf16.gmra.mrb[0].mxu0 %v1165
        %v1294 = vpop.f32.mrb[0].mxu0
        %v1295 = vadd.f32 0.0, %v1294
        %v1296 = vpop.f32.mrb[0].mxu0
        %v1297 = vpop.f32.mrb[0].mxu0
        %v1298 = vadd.f32 0.0, %v1297
        %v1299 = vpop.f32.mrb[0].mxu0
        %1300 = vmatprep.mubr.bf16.mxu0 0
        %1301 = vmatmul.mubr.bf16.gmra.mrb[0].mxu0 %v1168
        %v1302 = vpop.f32.mrb[0].mxu0
        %v1303 = vadd.f32 0.0, %v1302
        %v1304 = vpop.f32.mrb[0].mxu0
        %v1305 = vpop.f32.mrb[0].mxu0
        %v1306 = vadd.f32 0.0, %v1305
        %v1307 = vpop.f32.mrb[0].mxu0
        %1308 = vmatprep.mubr.bf16.mxu0 0
        %1309 = vmatmul.mubr.bf16.gmra.mrb[0].mxu0 %v1171
        %v1310 = vpop.f32.mrb[0].mxu0
        %v1311 = vadd.f32 0.0, %v1310
        %v1312 = vpop.f32.mrb[0].mxu0
        %v1313 = vpop.f32.mrb[0].mxu0
        %v1314 = vadd.f32 0.0, %v1313
        %v1315 = vpop.f32.mrb[0].mxu0
        %1316 = vmatprep.mubr.bf16.mxu0 0
        %1317 = vmatmul.mubr.bf16.gmra.mrb[0].mxu0 %v1174
        %v1318 = vpop.f32.mrb[0].mxu0
        %v1319 = vadd.f32 0.0, %v1318
        %v1320 = vpop.f32.mrb[0].mxu0
        %v1321 = vpop.f32.mrb[0].mxu0
        %v1322 = vadd.f32 0.0, %v1321
        %v1323 = vpop.f32.mrb[0].mxu0
        %1324 = vmatprep.mubr.bf16.mxu0 0
        %1325 = vmatmul.mubr.bf16.gmra.mrb[0].mxu0 %v1177
        %v1326 = vpop.f32.mrb[0].mxu0
        %v1327 = vadd.f32 0.0, %v1326
        %v1328 = vpop.f32.mrb[0].mxu0
        %v1329 = vpop.f32.mrb[0].mxu0
        %v1330 = vadd.f32 0.0, %v1329
        %v1331 = vpop.f32.mrb[0].mxu0
        %1332 = vmatprep.mubr.bf16.mxu0 0
        %1333 = vmatmul.mubr.bf16.gmra.mrb[0].mxu0 %v1180
        %v1334 = vpop.f32.mrb[0].mxu0
        %v1335 = vadd.f32 0.0, %v1334
        %v1336 = vpop.f32.mrb[0].mxu0
        %v1337 = vpop.f32.mrb[0].mxu0
        %v1338 = vadd.f32 0.0, %v1337
        %v1339 = vpop.f32.mrb[0].mxu0
        %1340 = vmatprep.mubr.bf16.mxu0 0
        %1341 = vmatmul.mubr.bf16.gmra.mrb[0].mxu0 %v1183
        %v1342 = vpop.f32.mrb[0].mxu0
        %v1343 = vadd.f32 0.0, %v1342
        %v1344 = vpop.f32.mrb[0].mxu0
        %v1345 = vpop.f32.mrb[0].mxu0
        %v1346 = vadd.f32 0.0, %v1345
        %v1347 = vpop.f32.mrb[0].mxu0
        %1348 = vdwg.mxu0
        %v1349 = vadd.f32 %v961, %v1223
        %v1350 = vadd.f32 %v964, %v1226
        %v1351 = vadd.f32 %v969, %v1231
        %v1352 = vadd.f32 %v972, %v1234
        %v1353 = vadd.f32 %v977, %v1239
        %v1354 = vadd.f32 %v980, %v1242
        %v1355 = vadd.f32 %v985, %v1247
        %v1356 = vadd.f32 %v988, %v1250
        %v1357 = vadd.f32 %v993, %v1255
        %v1358 = vadd.f32 %v996, %v1258
        %v1359 = vadd.f32 %v1001, %v1263
        %v1360 = vadd.f32 %v1004, %v1266
        %v1361 = vadd.f32 %v1009, %v1271
        %v1362 = vadd.f32 %v1012, %v1274
        %v1363 = vadd.f32 %v1017, %v1279
        %v1364 = vadd.f32 %v1020, %v1282
        %v1365 = vadd.f32 %v1025, %v1287
        %v1366 = vadd.f32 %v1028, %v1290
        %v1367 = vadd.f32 %v1033, %v1295
        %v1368 = vadd.f32 %v1036, %v1298
        %v1369 = vadd.f32 %v1041, %v1303
        %v1370 = vadd.f32 %v1044, %v1306
        %v1371 = vadd.f32 %v1049, %v1311
        %v1372 = vadd.f32 %v1052, %v1314
        %v1373 = vadd.f32 %v1057, %v1319
        %v1374 = vadd.f32 %v1060, %v1322
        %v1375 = vadd.f32 %v1065, %v1327
        %v1376 = vadd.f32 %v1068, %v1330
        %v1377 = vadd.f32 %v1073, %v1335
        %v1378 = vadd.f32 %v1076, %v1338
        %v1379 = vadd.f32 %v1081, %v1343
        %v1380 = vadd.f32 %v1084, %v1346
        %v1381 = vld [vmem:[%s527] sm:$0xff]
        %v1382 = vld [vmem:[%s527 + $0x8] sm:$0xff]
        %v1383 = vld [vmem:[%s527 + $0x18] sm:$0xff]
        %v1384 = vld [vmem:[%s527 + $0x20] sm:$0xff]
        %v1385 = vld [vmem:[%s527 + $0x30] sm:$0xff]
        %v1386 = vld [vmem:[%s527 + $0x38] sm:$0xff]
        %v1387 = vld [vmem:[%s527 + $0x48] sm:$0xff]
        %v1388 = vld [vmem:[%s527 + $0x50] sm:$0xff]
        %v1389 = vld [vmem:[%s527 + $0x60] sm:$0xff]
        %v1390 = vld [vmem:[%s527 + $0x68] sm:$0xff]
        %v1391 = vld [vmem:[%s527 + $0x78] sm:$0xff]
        %v1392 = vld [vmem:[%s527 + $0x80] sm:$0xff]
        %v1393 = vld [vmem:[%s527 + $0x90] sm:$0xff]
        %v1394 = vld [vmem:[%s527 + $0x98] sm:$0xff]
        %v1395 = vld [vmem:[%s527 + $0xa8] sm:$0xff]
        %v1396 = vld [vmem:[%s527 + $0xb0] sm:$0xff]
        %v1397 = vld [vmem:[%s527 + $0xc0] sm:$0xff]
        %v1398 = vld [vmem:[%s527 + $0xc8] sm:$0xff]
        %v1399 = vld [vmem:[%s527 + $0xd8] sm:$0xff]
        %v1400 = vld [vmem:[%s527 + $0xe0] sm:$0xff]
        %v1401 = vld [vmem:[%s527 + $0xf0] sm:$0xff]
        %v1402 = vld [vmem:[%s527 + $0xf8] sm:$0xff]
        %v1403 = vld [vmem:[%s527 + $0x108] sm:$0xff]
        %v1404 = vld [vmem:[%s527 + $0x110] sm:$0xff]
        %v1405 = vld [vmem:[%s527 + $0x120] sm:$0xff]
        %v1406 = vld [vmem:[%s527 + $0x128] sm:$0xff]
        %v1407 = vld [vmem:[%s527 + $0x138] sm:$0xff]
        %v1408 = vld [vmem:[%s527 + $0x140] sm:$0xff]
        %v1409 = vld [vmem:[%s527 + $0x150] sm:$0xff]
        %v1410 = vld [vmem:[%s527 + $0x158] sm:$0xff]
        %v1411 = vld [vmem:[%s527 + $0x168] sm:$0xff]
        %v1412 = vld [vmem:[%s527 + $0x170] sm:$0xff]
        %v1413 = vpack.c.bf16 %v1382, %v1381
        %v1414 = vpack.c.bf16 %v1384, %v1383
        %v1415 = vpack.c.bf16 %v1386, %v1385
        %v1416 = vpack.c.bf16 %v1388, %v1387
        %v1417 = vpack.c.bf16 %v1390, %v1389
        %v1418 = vpack.c.bf16 %v1392, %v1391
        %v1419 = vpack.c.bf16 %v1394, %v1393
        %v1420 = vpack.c.bf16 %v1396, %v1395
        %v1421 = vpack.c.bf16 %v1398, %v1397
        %v1422 = vpack.c.bf16 %v1400, %v1399
        %v1423 = vpack.c.bf16 %v1402, %v1401
        %v1424 = vpack.c.bf16 %v1404, %v1403
        %v1425 = vpack.c.bf16 %v1406, %v1405
        %v1426 = vpack.c.bf16 %v1408, %v1407
        %v1427 = vpack.c.bf16 %v1410, %v1409
        %v1428 = vpack.c.bf16 %v1412, %v1411
        %s1429 = scalar_lea.vmem %s1, 6
        %v1430 = vld [vmem:[%s1429] sm:$0x3]
        %v1432 = vsel %vm439, %v1413, 0
        %v1435 = vsel %vm439, %v1414, 0
        %v1438 = vsel %vm439, %v1415, 0
        %v1441 = vsel %vm439, %v1416, 0
        %v1444 = vsel %vm439, %v1417, 0
        %v1447 = vsel %vm439, %v1418, 0
        %v1450 = vsel %vm439, %v1419, 0
        %v1453 = vsel %vm439, %v1420, 0
        %v1456 = vsel %vm439, %v1421, 0
        %v1459 = vsel %vm439, %v1422, 0
        %v1462 = vsel %vm439, %v1423, 0
        %v1465 = vsel %vm439, %v1424, 0
        %v1468 = vsel %vm439, %v1425, 0
        %v1471 = vsel %vm439, %v1426, 0
        %v1474 = vsel %vm439, %v1427, 0
        %v1477 = vsel %vm439, %v1428, 0
        %v1480 = vand.u32 %v1430, %v710
        %1482 = vmatprep.subr.bf16.mxu0 0
        %1483 = vmatpush1.bf16.msra.mxu0 %v1480
        %1484 = vmatprep.subr.bf16.mxu0 0
        %1485 = vmatpush1.bf16.msra.mxu0 0
        %1486 = vmatprep.subr.bf16.mxu0 0
        %1487 = vmatpush1.bf16.msra.mxu0 0
        %1488 = vmatprep.subr.bf16.mxu0 0
        %1489 = vmatpush1.bf16.msra.mxu0 0
        %1490 = vmatprep.subr.bf16.mxu0 0
        %1491 = vmatpush1.bf16.msra.mxu0 0
        %1492 = vmatprep.subr.bf16.mxu0 0
        %1493 = vmatpush1.bf16.msra.mxu0 0
        %1494 = vmatprep.subr.bf16.mxu0 0
        %1495 = vmatpush1.bf16.msra.mxu0 0
        %1496 = vmatprep.subr.bf16.mxu0 0
        %1497 = vmatpush1.bf16.msra.mxu0 0
        %1498 = vmatprep.subr.bf16.mxu0 0
        %1499 = vmatpush1.bf16.msra.mxu0 0
        %1500 = vmatprep.subr.bf16.mxu0 0
        %1501 = vmatpush1.bf16.msra.mxu0 0
        %1502 = vmatprep.subr.bf16.mxu0 0
        %1503 = vmatpush1.bf16.msra.mxu0 0
        %1504 = vmatprep.subr.bf16.mxu0 0
        %1505 = vmatpush1.bf16.msra.mxu0 0
        %1506 = vmatprep.subr.bf16.mxu0 0
        %1507 = vmatpush1.bf16.msra.mxu0 0
        %1508 = vmatprep.subr.bf16.mxu0 0
        %1509 = vmatpush1.bf16.msra.mxu0 0
        %1510 = vmatprep.subr.bf16.mxu0 0
        %1511 = vmatpush1.bf16.msra.mxu0 0
        %1512 = vmatprep.subr.bf16.mxu0 0
        %1513 = vmatpush1.bf16.msra.mxu0 0
        %1514 = vmatprep.mubr.bf16.mxu0 0
        %1515 = vmatmul.mubr.bf16.gmra.mrb[0].mxu0 %v1432
        %v1516 = vpop.f32.mrb[0].mxu0
        %v1517 = vadd.f32 0.0, %v1516
        %v1518 = vpop.f32.mrb[0].mxu0
        %v1519 = vpop.f32.mrb[0].mxu0
        %v1520 = vadd.f32 0.0, %v1519
        %v1521 = vpop.f32.mrb[0].mxu0
        %1522 = vmatprep.mubr.bf16.mxu0 0
        %1523 = vmatmul.mubr.bf16.gmra.mrb[0].mxu0 %v1435
        %v1524 = vpop.f32.mrb[0].mxu0
        %v1525 = vadd.f32 0.0, %v1524
        %v1526 = vpop.f32.mrb[0].mxu0
        %v1527 = vpop.f32.mrb[0].mxu0
        %v1528 = vadd.f32 0.0, %v1527
        %v1529 = vpop.f32.mrb[0].mxu0
        %1530 = vmatprep.mubr.bf16.mxu0 0
        %1531 = vmatmul.mubr.bf16.gmra.mrb[0].mxu0 %v1438
        %v1532 = vpop.f32.mrb[0].mxu0
        %v1533 = vadd.f32 0.0, %v1532
        %v1534 = vpop.f32.mrb[0].mxu0
        %v1535 = vpop.f32.mrb[0].mxu0
        %v1536 = vadd.f32 0.0, %v1535
        %v1537 = vpop.f32.mrb[0].mxu0
        %1538 = vmatprep.mubr.bf16.mxu0 0
        %1539 = vmatmul.mubr.bf16.gmra.mrb[0].mxu0 %v1441
        %v1540 = vpop.f32.mrb[0].mxu0
        %v1541 = vadd.f32 0.0, %v1540
        %v1542 = vpop.f32.mrb[0].mxu0
        %v1543 = vpop.f32.mrb[0].mxu0
        %v1544 = vadd.f32 0.0, %v1543
        %v1545 = vpop.f32.mrb[0].mxu0
        %1546 = vmatprep.mubr.bf16.mxu0 0
        %1547 = vmatmul.mubr.bf16.gmra.mrb[0].mxu0 %v1444
        %v1548 = vpop.f32.mrb[0].mxu0
        %v1549 = vadd.f32 0.0, %v1548
        %v1550 = vpop.f32.mrb[0].mxu0
        %v1551 = vpop.f32.mrb[0].mxu0
        %v1552 = vadd.f32 0.0, %v1551
        %v1553 = vpop.f32.mrb[0].mxu0
        %1554 = vmatprep.mubr.bf16.mxu0 0
        %1555 = vmatmul.mubr.bf16.gmra.mrb[0].mxu0 %v1447
        %v1556 = vpop.f32.mrb[0].mxu0
        %v1557 = vadd.f32 0.0, %v1556
        %v1558 = vpop.f32.mrb[0].mxu0
        %v1559 = vpop.f32.mrb[0].mxu0
        %v1560 = vadd.f32 0.0, %v1559
        %v1561 = vpop.f32.mrb[0].mxu0
        %1562 = vmatprep.mubr.bf16.mxu0 0
        %1563 = vmatmul.mubr.bf16.gmra.mrb[0].mxu0 %v1450
        %v1564 = vpop.f32.mrb[0].mxu0
        %v1565 = vadd.f32 0.0, %v1564
        %v1566 = vpop.f32.mrb[0].mxu0
        %v1567 = vpop.f32.mrb[0].mxu0
        %v1568 = vadd.f32 0.0, %v1567
        %v1569 = vpop.f32.mrb[0].mxu0
        %1570 = vmatprep.mubr.bf16.mxu0 0
        %1571 = vmatmul.mubr.bf16.gmra.mrb[0].mxu0 %v1453
        %v1572 = vpop.f32.mrb[0].mxu0
        %v1573 = vadd.f32 0.0, %v1572
        %v1574 = vpop.f32.mrb[0].mxu0
        %v1575 = vpop.f32.mrb[0].mxu0
        %v1576 = vadd.f32 0.0, %v1575
        %v1577 = vpop.f32.mrb[0].mxu0
        %1578 = vmatprep.mubr.bf16.mxu0 0
        %1579 = vmatmul.mubr.bf16.gmra.mrb[0].mxu0 %v1456
        %v1580 = vpop.f32.mrb[0].mxu0
        %v1581 = vadd.f32 0.0, %v1580
        %v1582 = vpop.f32.mrb[0].mxu0
        %v1583 = vpop.f32.mrb[0].mxu0
        %v1584 = vadd.f32 0.0, %v1583
        %v1585 = vpop.f32.mrb[0].mxu0
        %1586 = vmatprep.mubr.bf16.mxu0 0
        %1587 = vmatmul.mubr.bf16.gmra.mrb[0].mxu0 %v1459
        %v1588 = vpop.f32.mrb[0].mxu0
        %v1589 = vadd.f32 0.0, %v1588
        %v1590 = vpop.f32.mrb[0].mxu0
        %v1591 = vpop.f32.mrb[0].mxu0
        %v1592 = vadd.f32 0.0, %v1591
        %v1593 = vpop.f32.mrb[0].mxu0
        %1594 = vmatprep.mubr.bf16.mxu0 0
        %1595 = vmatmul.mubr.bf16.gmra.mrb[0].mxu0 %v1462
        %v1596 = vpop.f32.mrb[0].mxu0
        %v1597 = vadd.f32 0.0, %v1596
        %v1598 = vpop.f32.mrb[0].mxu0
        %v1599 = vpop.f32.mrb[0].mxu0
        %v1600 = vadd.f32 0.0, %v1599
        %v1601 = vpop.f32.mrb[0].mxu0
        %1602 = vmatprep.mubr.bf16.mxu0 0
        %1603 = vmatmul.mubr.bf16.gmra.mrb[0].mxu0 %v1465
        %v1604 = vpop.f32.mrb[0].mxu0
        %v1605 = vadd.f32 0.0, %v1604
        %v1606 = vpop.f32.mrb[0].mxu0
        %v1607 = vpop.f32.mrb[0].mxu0
        %v1608 = vadd.f32 0.0, %v1607
        %v1609 = vpop.f32.mrb[0].mxu0
        %1610 = vmatprep.mubr.bf16.mxu0 0
        %1611 = vmatmul.mubr.bf16.gmra.mrb[0].mxu0 %v1468
        %v1612 = vpop.f32.mrb[0].mxu0
        %v1613 = vadd.f32 0.0, %v1612
        %v1614 = vpop.f32.mrb[0].mxu0
        %v1615 = vpop.f32.mrb[0].mxu0
        %v1616 = vadd.f32 0.0, %v1615
        %v1617 = vpop.f32.mrb[0].mxu0
        %1618 = vmatprep.mubr.bf16.mxu0 0
        %1619 = vmatmul.mubr.bf16.gmra.mrb[0].mxu0 %v1471
        %v1620 = vpop.f32.mrb[0].mxu0
        %v1621 = vadd.f32 0.0, %v1620
        %v1622 = vpop.f32.mrb[0].mxu0
        %v1623 = vpop.f32.mrb[0].mxu0
        %v1624 = vadd.f32 0.0, %v1623
        %v1625 = vpop.f32.mrb[0].mxu0
        %1626 = vmatprep.mubr.bf16.mxu0 0
        %1627 = vmatmul.mubr.bf16.gmra.mrb[0].mxu0 %v1474
        %v1628 = vpop.f32.mrb[0].mxu0
        %v1629 = vadd.f32 0.0, %v1628
        %v1630 = vpop.f32.mrb[0].mxu0
        %v1631 = vpop.f32.mrb[0].mxu0
        %v1632 = vadd.f32 0.0, %v1631
        %v1633 = vpop.f32.mrb[0].mxu0
        %1634 = vmatprep.mubr.bf16.mxu0 0
        %1635 = vmatmul.mubr.bf16.gmra.mrb[0].mxu0 %v1477
        %v1636 = vpop.f32.mrb[0].mxu0
        %v1637 = vadd.f32 0.0, %v1636
        %v1638 = vpop.f32.mrb[0].mxu0
        %v1639 = vpop.f32.mrb[0].mxu0
        %v1640 = vadd.f32 0.0, %v1639
        %v1641 = vpop.f32.mrb[0].mxu0
        %1642 = vdwg.mxu0
        %v1643 = vadd.f32 %v1349, %v1517
        %v1644 = vadd.f32 %v1350, %v1520
        %v1645 = vadd.f32 %v1351, %v1525
        %v1646 = vadd.f32 %v1352, %v1528
        %v1647 = vadd.f32 %v1353, %v1533
        %v1648 = vadd.f32 %v1354, %v1536
        %v1649 = vadd.f32 %v1355, %v1541
        %v1650 = vadd.f32 %v1356, %v1544
        %v1651 = vadd.f32 %v1357, %v1549
        %v1652 = vadd.f32 %v1358, %v1552
        %v1653 = vadd.f32 %v1359, %v1557
        %v1654 = vadd.f32 %v1360, %v1560
        %v1655 = vadd.f32 %v1361, %v1565
        %v1656 = vadd.f32 %v1362, %v1568
        %v1657 = vadd.f32 %v1363, %v1573
        %v1658 = vadd.f32 %v1364, %v1576
        %v1659 = vadd.f32 %v1365, %v1581
        %v1660 = vadd.f32 %v1366, %v1584
        %v1661 = vadd.f32 %v1367, %v1589
        %v1662 = vadd.f32 %v1368, %v1592
        %v1663 = vadd.f32 %v1369, %v1597
        %v1664 = vadd.f32 %v1370, %v1600
        %v1665 = vadd.f32 %v1371, %v1605
        %v1666 = vadd.f32 %v1372, %v1608
        %v1667 = vadd.f32 %v1373, %v1613
        %v1668 = vadd.f32 %v1374, %v1616
        %v1669 = vadd.f32 %v1375, %v1621
        %v1670 = vadd.f32 %v1376, %v1624
        %v1671 = vadd.f32 %v1377, %v1629
        %v1672 = vadd.f32 %v1378, %v1632
        %v1673 = vadd.f32 %v1379, %v1637
        %v1674 = vadd.f32 %v1380, %v1640
        %v1675 = vld [vmem:[%s527 + $0x1] sm:$0xff]
        %v1676 = vld [vmem:[%s527 + $0x9] sm:$0xff]
        %v1677 = vld [vmem:[%s527 + $0x19] sm:$0xff]
        %v1678 = vld [vmem:[%s527 + $0x21] sm:$0xff]
        %v1679 = vld [vmem:[%s527 + $0x31] sm:$0xff]
        %v1680 = vld [vmem:[%s527 + $0x39] sm:$0xff]
        %v1681 = vld [vmem:[%s527 + $0x49] sm:$0xff]
        %v1682 = vld [vmem:[%s527 + $0x51] sm:$0xff]
        %v1683 = vld [vmem:[%s527 + $0x61] sm:$0xff]
        %v1684 = vld [vmem:[%s527 + $0x69] sm:$0xff]
        %v1685 = vld [vmem:[%s527 + $0x79] sm:$0xff]
        %v1686 = vld [vmem:[%s527 + $0x81] sm:$0xff]
        %v1687 = vld [vmem:[%s527 + $0x91] sm:$0xff]
        %v1688 = vld [vmem:[%s527 + $0x99] sm:$0xff]
        %v1689 = vld [vmem:[%s527 + $0xa9] sm:$0xff]
        %v1690 = vld [vmem:[%s527 + $0xb1] sm:$0xff]
        %v1691 = vld [vmem:[%s527 + $0xc1] sm:$0xff]
        %v1692 = vld [vmem:[%s527 + $0xc9] sm:$0xff]
        %v1693 = vld [vmem:[%s527 + $0xd9] sm:$0xff]
        %v1694 = vld [vmem:[%s527 + $0xe1] sm:$0xff]
        %v1695 = vld [vmem:[%s527 + $0xf1] sm:$0xff]
        %v1696 = vld [vmem:[%s527 + $0xf9] sm:$0xff]
        %v1697 = vld [vmem:[%s527 + $0x109] sm:$0xff]
        %v1698 = vld [vmem:[%s527 + $0x111] sm:$0xff]
        %v1699 = vld [vmem:[%s527 + $0x121] sm:$0xff]
        %v1700 = vld [vmem:[%s527 + $0x129] sm:$0xff]
        %v1701 = vld [vmem:[%s527 + $0x139] sm:$0xff]
        %v1702 = vld [vmem:[%s527 + $0x141] sm:$0xff]
        %v1703 = vld [vmem:[%s527 + $0x151] sm:$0xff]
        %v1704 = vld [vmem:[%s527 + $0x159] sm:$0xff]
        %v1705 = vld [vmem:[%s527 + $0x169] sm:$0xff]
        %v1706 = vld [vmem:[%s527 + $0x171] sm:$0xff]
        %v1707 = vpack.c.bf16 %v1676, %v1675
        %v1708 = vpack.c.bf16 %v1678, %v1677
        %v1709 = vpack.c.bf16 %v1680, %v1679
        %v1710 = vpack.c.bf16 %v1682, %v1681
        %v1711 = vpack.c.bf16 %v1684, %v1683
        %v1712 = vpack.c.bf16 %v1686, %v1685
        %v1713 = vpack.c.bf16 %v1688, %v1687
        %v1714 = vpack.c.bf16 %v1690, %v1689
        %v1715 = vpack.c.bf16 %v1692, %v1691
        %v1716 = vpack.c.bf16 %v1694, %v1693
        %v1717 = vpack.c.bf16 %v1696, %v1695
        %v1718 = vpack.c.bf16 %v1698, %v1697
        %v1719 = vpack.c.bf16 %v1700, %v1699
        %v1720 = vpack.c.bf16 %v1702, %v1701
        %v1721 = vpack.c.bf16 %v1704, %v1703
        %v1722 = vpack.c.bf16 %v1706, %v1705
        %s1723 = scalar_lea.vmem %s1, 8
        %v1724 = vld [vmem:[%s1723] sm:$0x3]
        %v1726 = vsel %vm439, %v1707, 0
        %v1729 = vsel %vm439, %v1708, 0
        %v1732 = vsel %vm439, %v1709, 0
        %v1735 = vsel %vm439, %v1710, 0
        %v1738 = vsel %vm439, %v1711, 0
        %v1741 = vsel %vm439, %v1712, 0
        %v1744 = vsel %vm439, %v1713, 0
        %v1747 = vsel %vm439, %v1714, 0
        %v1750 = vsel %vm439, %v1715, 0
        %v1753 = vsel %vm439, %v1716, 0
        %v1756 = vsel %vm439, %v1717, 0
        %v1759 = vsel %vm439, %v1718, 0
        %v1762 = vsel %vm439, %v1719, 0
        %v1765 = vsel %vm439, %v1720, 0
        %v1768 = vsel %vm439, %v1721, 0
        %v1771 = vsel %vm439, %v1722, 0
        %v1774 = vand.u32 %v1724, %v710
        %1776 = vmatprep.subr.bf16.mxu0 0
        %1777 = vmatpush1.bf16.msra.mxu0 %v1774
        %1778 = vmatprep.subr.bf16.mxu0 0
        %1779 = vmatpush1.bf16.msra.mxu0 0
        %1780 = vmatprep.subr.bf16.mxu0 0
        %1781 = vmatpush1.bf16.msra.mxu0 0
        %1782 = vmatprep.subr.bf16.mxu0 0
        %1783 = vmatpush1.bf16.msra.mxu0 0
        %1784 = vmatprep.subr.bf16.mxu0 0
        %1785 = vmatpush1.bf16.msra.mxu0 0
        %1786 = vmatprep.subr.bf16.mxu0 0
        %1787 = vmatpush1.bf16.msra.mxu0 0
        %1788 = vmatprep.subr.bf16.mxu0 0
        %1789 = vmatpush1.bf16.msra.mxu0 0
        %1790 = vmatprep.subr.bf16.mxu0 0
        %1791 = vmatpush1.bf16.msra.mxu0 0
        %1792 = vmatprep.subr.bf16.mxu0 0
        %1793 = vmatpush1.bf16.msra.mxu0 0
        %1794 = vmatprep.subr.bf16.mxu0 0
        %1795 = vmatpush1.bf16.msra.mxu0 0
        %1796 = vmatprep.subr.bf16.mxu0 0
        %1797 = vmatpush1.bf16.msra.mxu0 0
        %1798 = vmatprep.subr.bf16.mxu0 0
        %1799 = vmatpush1.bf16.msra.mxu0 0
        %1800 = vmatprep.subr.bf16.mxu0 0
        %1801 = vmatpush1.bf16.msra.mxu0 0
        %1802 = vmatprep.subr.bf16.mxu0 0
        %1803 = vmatpush1.bf16.msra.mxu0 0
        %1804 = vmatprep.subr.bf16.mxu0 0
        %1805 = vmatpush1.bf16.msra.mxu0 0
        %1806 = vmatprep.subr.bf16.mxu0 0
        %1807 = vmatpush1.bf16.msra.mxu0 0
        %1808 = vmatprep.mubr.bf16.mxu0 0
        %1809 = vmatmul.mubr.bf16.gmra.mrb[0].mxu0 %v1726
        %v1810 = vpop.f32.mrb[0].mxu0
        %v1811 = vadd.f32 0.0, %v1810
        %v1812 = vpop.f32.mrb[0].mxu0
        %v1813 = vpop.f32.mrb[0].mxu0
        %v1814 = vadd.f32 0.0, %v1813
        %v1815 = vpop.f32.mrb[0].mxu0
        %1816 = vmatprep.mubr.bf16.mxu0 0
        %1817 = vmatmul.mubr.bf16.gmra.mrb[0].mxu0 %v1729
        %v1818 = vpop.f32.mrb[0].mxu0
        %v1819 = vadd.f32 0.0, %v1818
        %v1820 = vpop.f32.mrb[0].mxu0
        %v1821 = vpop.f32.mrb[0].mxu0
        %v1822 = vadd.f32 0.0, %v1821
        %v1823 = vpop.f32.mrb[0].mxu0
        %1824 = vmatprep.mubr.bf16.mxu0 0
        %1825 = vmatmul.mubr.bf16.gmra.mrb[0].mxu0 %v1732
        %v1826 = vpop.f32.mrb[0].mxu0
        %v1827 = vadd.f32 0.0, %v1826
        %v1828 = vpop.f32.mrb[0].mxu0
        %v1829 = vpop.f32.mrb[0].mxu0
        %v1830 = vadd.f32 0.0, %v1829
        %v1831 = vpop.f32.mrb[0].mxu0
        %1832 = vmatprep.mubr.bf16.mxu0 0
        %1833 = vmatmul.mubr.bf16.gmra.mrb[0].mxu0 %v1735
        %v1834 = vpop.f32.mrb[0].mxu0
        %v1835 = vadd.f32 0.0, %v1834
        %v1836 = vpop.f32.mrb[0].mxu0
        %v1837 = vpop.f32.mrb[0].mxu0
        %v1838 = vadd.f32 0.0, %v1837
        %v1839 = vpop.f32.mrb[0].mxu0
        %1840 = vmatprep.mubr.bf16.mxu0 0
        %1841 = vmatmul.mubr.bf16.gmra.mrb[0].mxu0 %v1738
        %v1842 = vpop.f32.mrb[0].mxu0
        %v1843 = vadd.f32 0.0, %v1842
        %v1844 = vpop.f32.mrb[0].mxu0
        %v1845 = vpop.f32.mrb[0].mxu0
        %v1846 = vadd.f32 0.0, %v1845
        %v1847 = vpop.f32.mrb[0].mxu0
        %1848 = vmatprep.mubr.bf16.mxu0 0
        %1849 = vmatmul.mubr.bf16.gmra.mrb[0].mxu0 %v1741
        %v1850 = vpop.f32.mrb[0].mxu0
        %v1851 = vadd.f32 0.0, %v1850
        %v1852 = vpop.f32.mrb[0].mxu0
        %v1853 = vpop.f32.mrb[0].mxu0
        %v1854 = vadd.f32 0.0, %v1853
        %v1855 = vpop.f32.mrb[0].mxu0
        %1856 = vmatprep.mubr.bf16.mxu0 0
        %1857 = vmatmul.mubr.bf16.gmra.mrb[0].mxu0 %v1744
        %v1858 = vpop.f32.mrb[0].mxu0
        %v1859 = vadd.f32 0.0, %v1858
        %v1860 = vpop.f32.mrb[0].mxu0
        %v1861 = vpop.f32.mrb[0].mxu0
        %v1862 = vadd.f32 0.0, %v1861
        %v1863 = vpop.f32.mrb[0].mxu0
        %1864 = vmatprep.mubr.bf16.mxu0 0
        %1865 = vmatmul.mubr.bf16.gmra.mrb[0].mxu0 %v1747
        %v1866 = vpop.f32.mrb[0].mxu0
        %v1867 = vadd.f32 0.0, %v1866
        %v1868 = vpop.f32.mrb[0].mxu0
        %v1869 = vpop.f32.mrb[0].mxu0
        %v1870 = vadd.f32 0.0, %v1869
        %v1871 = vpop.f32.mrb[0].mxu0
        %1872 = vmatprep.mubr.bf16.mxu0 0
        %1873 = vmatmul.mubr.bf16.gmra.mrb[0].mxu0 %v1750
        %v1874 = vpop.f32.mrb[0].mxu0
        %v1875 = vadd.f32 0.0, %v1874
        %v1876 = vpop.f32.mrb[0].mxu0
        %v1877 = vpop.f32.mrb[0].mxu0
        %v1878 = vadd.f32 0.0, %v1877
        %v1879 = vpop.f32.mrb[0].mxu0
        %1880 = vmatprep.mubr.bf16.mxu0 0
        %1881 = vmatmul.mubr.bf16.gmra.mrb[0].mxu0 %v1753
        %v1882 = vpop.f32.mrb[0].mxu0
        %v1883 = vadd.f32 0.0, %v1882
        %v1884 = vpop.f32.mrb[0].mxu0
        %v1885 = vpop.f32.mrb[0].mxu0
        %v1886 = vadd.f32 0.0, %v1885
        %v1887 = vpop.f32.mrb[0].mxu0
        %1888 = vmatprep.mubr.bf16.mxu0 0
        %1889 = vmatmul.mubr.bf16.gmra.mrb[0].mxu0 %v1756
        %v1890 = vpop.f32.mrb[0].mxu0
        %v1891 = vadd.f32 0.0, %v1890
        %v1892 = vpop.f32.mrb[0].mxu0
        %v1893 = vpop.f32.mrb[0].mxu0
        %v1894 = vadd.f32 0.0, %v1893
        %v1895 = vpop.f32.mrb[0].mxu0
        %1896 = vmatprep.mubr.bf16.mxu0 0
        %1897 = vmatmul.mubr.bf16.gmra.mrb[0].mxu0 %v1759
        %v1898 = vpop.f32.mrb[0].mxu0
        %v1899 = vadd.f32 0.0, %v1898
        %v1900 = vpop.f32.mrb[0].mxu0
        %v1901 = vpop.f32.mrb[0].mxu0
        %v1902 = vadd.f32 0.0, %v1901
        %v1903 = vpop.f32.mrb[0].mxu0
        %1904 = vmatprep.mubr.bf16.mxu0 0
        %1905 = vmatmul.mubr.bf16.gmra.mrb[0].mxu0 %v1762
        %v1906 = vpop.f32.mrb[0].mxu0
        %v1907 = vadd.f32 0.0, %v1906
        %v1908 = vpop.f32.mrb[0].mxu0
        %v1909 = vpop.f32.mrb[0].mxu0
        %v1910 = vadd.f32 0.0, %v1909
        %v1911 = vpop.f32.mrb[0].mxu0
        %1912 = vmatprep.mubr.bf16.mxu0 0
        %1913 = vmatmul.mubr.bf16.gmra.mrb[0].mxu0 %v1765
        %v1914 = vpop.f32.mrb[0].mxu0
        %v1915 = vadd.f32 0.0, %v1914
        %v1916 = vpop.f32.mrb[0].mxu0
        %v1917 = vpop.f32.mrb[0].mxu0
        %v1918 = vadd.f32 0.0, %v1917
        %v1919 = vpop.f32.mrb[0].mxu0
        %1920 = vmatprep.mubr.bf16.mxu0 0
        %1921 = vmatmul.mubr.bf16.gmra.mrb[0].mxu0 %v1768
        %v1922 = vpop.f32.mrb[0].mxu0
        %v1923 = vadd.f32 0.0, %v1922
        %v1924 = vpop.f32.mrb[0].mxu0
        %v1925 = vpop.f32.mrb[0].mxu0
        %v1926 = vadd.f32 0.0, %v1925
        %v1927 = vpop.f32.mrb[0].mxu0
        %1928 = vmatprep.mubr.bf16.mxu0 0
        %1929 = vmatmul.mubr.bf16.gmra.mrb[0].mxu0 %v1771
        %v1930 = vpop.f32.mrb[0].mxu0
        %v1931 = vadd.f32 0.0, %v1930
        %v1932 = vpop.f32.mrb[0].mxu0
        %v1933 = vpop.f32.mrb[0].mxu0
        %v1934 = vadd.f32 0.0, %v1933
        %v1935 = vpop.f32.mrb[0].mxu0
        %1936 = vdwg.mxu0
        %v1937 = vadd.f32 %v1643, %v1811
        %v1938 = vadd.f32 %v1644, %v1814
        %v1939 = vadd.f32 %v1645, %v1819
        %v1940 = vadd.f32 %v1646, %v1822
        %v1941 = vadd.f32 %v1647, %v1827
        %v1942 = vadd.f32 %v1648, %v1830
        %v1943 = vadd.f32 %v1649, %v1835
        %v1944 = vadd.f32 %v1650, %v1838
        %v1945 = vadd.f32 %v1651, %v1843
        %v1946 = vadd.f32 %v1652, %v1846
        %v1947 = vadd.f32 %v1653, %v1851
        %v1948 = vadd.f32 %v1654, %v1854
        %v1949 = vadd.f32 %v1655, %v1859
        %v1950 = vadd.f32 %v1656, %v1862
        %v1951 = vadd.f32 %v1657, %v1867
        %v1952 = vadd.f32 %v1658, %v1870
        %v1953 = vadd.f32 %v1659, %v1875
        %v1954 = vadd.f32 %v1660, %v1878
        %v1955 = vadd.f32 %v1661, %v1883
        %v1956 = vadd.f32 %v1662, %v1886
        %v1957 = vadd.f32 %v1663, %v1891
        %v1958 = vadd.f32 %v1664, %v1894
        %v1959 = vadd.f32 %v1665, %v1899
        %v1960 = vadd.f32 %v1666, %v1902
        %v1961 = vadd.f32 %v1667, %v1907
        %v1962 = vadd.f32 %v1668, %v1910
        %v1963 = vadd.f32 %v1669, %v1915
        %v1964 = vadd.f32 %v1670, %v1918
        %v1965 = vadd.f32 %v1671, %v1923
        %v1966 = vadd.f32 %v1672, %v1926
        %v1967 = vadd.f32 %v1673, %v1931
        %v1968 = vadd.f32 %v1674, %v1934
        %v1969 = vld [vmem:[%s527 + $0x2] sm:$0xff]
        %v1970 = vld [vmem:[%s527 + $0xa] sm:$0xff]
        %v1971 = vld [vmem:[%s527 + $0x1a] sm:$0xff]
        %v1972 = vld [vmem:[%s527 + $0x22] sm:$0xff]
        %v1973 = vld [vmem:[%s527 + $0x32] sm:$0xff]
        %v1974 = vld [vmem:[%s527 + $0x3a] sm:$0xff]
        %v1975 = vld [vmem:[%s527 + $0x4a] sm:$0xff]
        %v1976 = vld [vmem:[%s527 + $0x52] sm:$0xff]
        %v1977 = vld [vmem:[%s527 + $0x62] sm:$0xff]
        %v1978 = vld [vmem:[%s527 + $0x6a] sm:$0xff]
        %v1979 = vld [vmem:[%s527 + $0x7a] sm:$0xff]
        %v1980 = vld [vmem:[%s527 + $0x82] sm:$0xff]
        %v1981 = vld [vmem:[%s527 + $0x92] sm:$0xff]
        %v1982 = vld [vmem:[%s527 + $0x9a] sm:$0xff]
        %v1983 = vld [vmem:[%s527 + $0xaa] sm:$0xff]
        %v1984 = vld [vmem:[%s527 + $0xb2] sm:$0xff]
        %v1985 = vld [vmem:[%s527 + $0xc2] sm:$0xff]
        %v1986 = vld [vmem:[%s527 + $0xca] sm:$0xff]
        %v1987 = vld [vmem:[%s527 + $0xda] sm:$0xff]
        %v1988 = vld [vmem:[%s527 + $0xe2] sm:$0xff]
        %v1989 = vld [vmem:[%s527 + $0xf2] sm:$0xff]
        %v1990 = vld [vmem:[%s527 + $0xfa] sm:$0xff]
        %v1991 = vld [vmem:[%s527 + $0x10a] sm:$0xff]
        %v1992 = vld [vmem:[%s527 + $0x112] sm:$0xff]
        %v1993 = vld [vmem:[%s527 + $0x122] sm:$0xff]
        %v1994 = vld [vmem:[%s527 + $0x12a] sm:$0xff]
        %v1995 = vld [vmem:[%s527 + $0x13a] sm:$0xff]
        %v1996 = vld [vmem:[%s527 + $0x142] sm:$0xff]
        %v1997 = vld [vmem:[%s527 + $0x152] sm:$0xff]
        %v1998 = vld [vmem:[%s527 + $0x15a] sm:$0xff]
        %v1999 = vld [vmem:[%s527 + $0x16a] sm:$0xff]
        %v2000 = vld [vmem:[%s527 + $0x172] sm:$0xff]
        %v2001 = vpack.c.bf16 %v1970, %v1969
        %v2002 = vpack.c.bf16 %v1972, %v1971
        %v2003 = vpack.c.bf16 %v1974, %v1973
        %v2004 = vpack.c.bf16 %v1976, %v1975
        %v2005 = vpack.c.bf16 %v1978, %v1977
        %v2006 = vpack.c.bf16 %v1980, %v1979
        %v2007 = vpack.c.bf16 %v1982, %v1981
        %v2008 = vpack.c.bf16 %v1984, %v1983
        %v2009 = vpack.c.bf16 %v1986, %v1985
        %v2010 = vpack.c.bf16 %v1988, %v1987
        %v2011 = vpack.c.bf16 %v1990, %v1989
        %v2012 = vpack.c.bf16 %v1992, %v1991
        %v2013 = vpack.c.bf16 %v1994, %v1993
        %v2014 = vpack.c.bf16 %v1996, %v1995
        %v2015 = vpack.c.bf16 %v1998, %v1997
        %v2016 = vpack.c.bf16 %v2000, %v1999
        %s2017 = scalar_lea.vmem %s1, 10
        %v2018 = vld [vmem:[%s2017] sm:$0x3]
        %v2020 = vsel %vm439, %v2001, 0
        %v2023 = vsel %vm439, %v2002, 0
        %v2026 = vsel %vm439, %v2003, 0
        %v2029 = vsel %vm439, %v2004, 0
        %v2032 = vsel %vm439, %v2005, 0
        %v2035 = vsel %vm439, %v2006, 0
        %v2038 = vsel %vm439, %v2007, 0
        %v2041 = vsel %vm439, %v2008, 0
        %v2044 = vsel %vm439, %v2009, 0
        %v2047 = vsel %vm439, %v2010, 0
        %v2050 = vsel %vm439, %v2011, 0
        %v2053 = vsel %vm439, %v2012, 0
        %v2056 = vsel %vm439, %v2013, 0
        %v2059 = vsel %vm439, %v2014, 0
        %v2062 = vsel %vm439, %v2015, 0
        %v2065 = vsel %vm439, %v2016, 0
        %v2068 = vand.u32 %v2018, %v710
        %2070 = vmatprep.subr.bf16.mxu0 0
        %2071 = vmatpush1.bf16.msra.mxu0 %v2068
        %2072 = vmatprep.subr.bf16.mxu0 0
        %2073 = vmatpush1.bf16.msra.mxu0 0
        %2074 = vmatprep.subr.bf16.mxu0 0
        %2075 = vmatpush1.bf16.msra.mxu0 0
        %2076 = vmatprep.subr.bf16.mxu0 0
        %2077 = vmatpush1.bf16.msra.mxu0 0
        %2078 = vmatprep.subr.bf16.mxu0 0
        %2079 = vmatpush1.bf16.msra.mxu0 0
        %2080 = vmatprep.subr.bf16.mxu0 0
        %2081 = vmatpush1.bf16.msra.mxu0 0
        %2082 = vmatprep.subr.bf16.mxu0 0
        %2083 = vmatpush1.bf16.msra.mxu0 0
        %2084 = vmatprep.subr.bf16.mxu0 0
        %2085 = vmatpush1.bf16.msra.mxu0 0
        %2086 = vmatprep.subr.bf16.mxu0 0
        %2087 = vmatpush1.bf16.msra.mxu0 0
        %2088 = vmatprep.subr.bf16.mxu0 0
        %2089 = vmatpush1.bf16.msra.mxu0 0
        %2090 = vmatprep.subr.bf16.mxu0 0
        %2091 = vmatpush1.bf16.msra.mxu0 0
        %2092 = vmatprep.subr.bf16.mxu0 0
        %2093 = vmatpush1.bf16.msra.mxu0 0
        %2094 = vmatprep.subr.bf16.mxu0 0
        %2095 = vmatpush1.bf16.msra.mxu0 0
        %2096 = vmatprep.subr.bf16.mxu0 0
        %2097 = vmatpush1.bf16.msra.mxu0 0
        %2098 = vmatprep.subr.bf16.mxu0 0
        %2099 = vmatpush1.bf16.msra.mxu0 0
        %2100 = vmatprep.subr.bf16.mxu0 0
        %2101 = vmatpush1.bf16.msra.mxu0 0
        %2102 = vmatprep.mubr.bf16.mxu0 0
        %2103 = vmatmul.mubr.bf16.gmra.mrb[0].mxu0 %v2020
        %v2104 = vpop.f32.mrb[0].mxu0
        %v2105 = vadd.f32 0.0, %v2104
        %v2106 = vpop.f32.mrb[0].mxu0
        %v2107 = vpop.f32.mrb[0].mxu0
        %v2108 = vadd.f32 0.0, %v2107
        %v2109 = vpop.f32.mrb[0].mxu0
        %2110 = vmatprep.mubr.bf16.mxu0 0
        %2111 = vmatmul.mubr.bf16.gmra.mrb[0].mxu0 %v2023
        %v2112 = vpop.f32.mrb[0].mxu0
        %v2113 = vadd.f32 0.0, %v2112
        %v2114 = vpop.f32.mrb[0].mxu0
        %v2115 = vpop.f32.mrb[0].mxu0
        %v2116 = vadd.f32 0.0, %v2115
        %v2117 = vpop.f32.mrb[0].mxu0
        %2118 = vmatprep.mubr.bf16.mxu0 0
        %2119 = vmatmul.mubr.bf16.gmra.mrb[0].mxu0 %v2026
        %v2120 = vpop.f32.mrb[0].mxu0
        %v2121 = vadd.f32 0.0, %v2120
        %v2122 = vpop.f32.mrb[0].mxu0
        %v2123 = vpop.f32.mrb[0].mxu0
        %v2124 = vadd.f32 0.0, %v2123
        %v2125 = vpop.f32.mrb[0].mxu0
        %2126 = vmatprep.mubr.bf16.mxu0 0
        %2127 = vmatmul.mubr.bf16.gmra.mrb[0].mxu0 %v2029
        %v2128 = vpop.f32.mrb[0].mxu0
        %v2129 = vadd.f32 0.0, %v2128
        %v2130 = vpop.f32.mrb[0].mxu0
        %v2131 = vpop.f32.mrb[0].mxu0
        %v2132 = vadd.f32 0.0, %v2131
        %v2133 = vpop.f32.mrb[0].mxu0
        %2134 = vmatprep.mubr.bf16.mxu0 0
        %2135 = vmatmul.mubr.bf16.gmra.mrb[0].mxu0 %v2032
        %v2136 = vpop.f32.mrb[0].mxu0
        %v2137 = vadd.f32 0.0, %v2136
        %v2138 = vpop.f32.mrb[0].mxu0
        %v2139 = vpop.f32.mrb[0].mxu0
        %v2140 = vadd.f32 0.0, %v2139
        %v2141 = vpop.f32.mrb[0].mxu0
        %2142 = vmatprep.mubr.bf16.mxu0 0
        %2143 = vmatmul.mubr.bf16.gmra.mrb[0].mxu0 %v2035
        %v2144 = vpop.f32.mrb[0].mxu0
        %v2145 = vadd.f32 0.0, %v2144
        %v2146 = vpop.f32.mrb[0].mxu0
        %v2147 = vpop.f32.mrb[0].mxu0
        %v2148 = vadd.f32 0.0, %v2147
        %v2149 = vpop.f32.mrb[0].mxu0
        %2150 = vmatprep.mubr.bf16.mxu0 0
        %2151 = vmatmul.mubr.bf16.gmra.mrb[0].mxu0 %v2038
        %v2152 = vpop.f32.mrb[0].mxu0
        %v2153 = vadd.f32 0.0, %v2152
        %v2154 = vpop.f32.mrb[0].mxu0
        %v2155 = vpop.f32.mrb[0].mxu0
        %v2156 = vadd.f32 0.0, %v2155
        %v2157 = vpop.f32.mrb[0].mxu0
        %2158 = vmatprep.mubr.bf16.mxu0 0
        %2159 = vmatmul.mubr.bf16.gmra.mrb[0].mxu0 %v2041
        %v2160 = vpop.f32.mrb[0].mxu0
        %v2161 = vadd.f32 0.0, %v2160
        %v2162 = vpop.f32.mrb[0].mxu0
        %v2163 = vpop.f32.mrb[0].mxu0
        %v2164 = vadd.f32 0.0, %v2163
        %v2165 = vpop.f32.mrb[0].mxu0
        %2166 = vmatprep.mubr.bf16.mxu0 0
        %2167 = vmatmul.mubr.bf16.gmra.mrb[0].mxu0 %v2044
        %v2168 = vpop.f32.mrb[0].mxu0
        %v2169 = vadd.f32 0.0, %v2168
        %v2170 = vpop.f32.mrb[0].mxu0
        %v2171 = vpop.f32.mrb[0].mxu0
        %v2172 = vadd.f32 0.0, %v2171
        %v2173 = vpop.f32.mrb[0].mxu0
        %2174 = vmatprep.mubr.bf16.mxu0 0
        %2175 = vmatmul.mubr.bf16.gmra.mrb[0].mxu0 %v2047
        %v2176 = vpop.f32.mrb[0].mxu0
        %v2177 = vadd.f32 0.0, %v2176
        %v2178 = vpop.f32.mrb[0].mxu0
        %v2179 = vpop.f32.mrb[0].mxu0
        %v2180 = vadd.f32 0.0, %v2179
        %v2181 = vpop.f32.mrb[0].mxu0
        %2182 = vmatprep.mubr.bf16.mxu0 0
        %2183 = vmatmul.mubr.bf16.gmra.mrb[0].mxu0 %v2050
        %v2184 = vpop.f32.mrb[0].mxu0
        %v2185 = vadd.f32 0.0, %v2184
        %v2186 = vpop.f32.mrb[0].mxu0
        %v2187 = vpop.f32.mrb[0].mxu0
        %v2188 = vadd.f32 0.0, %v2187
        %v2189 = vpop.f32.mrb[0].mxu0
        %2190 = vmatprep.mubr.bf16.mxu0 0
        %2191 = vmatmul.mubr.bf16.gmra.mrb[0].mxu0 %v2053
        %v2192 = vpop.f32.mrb[0].mxu0
        %v2193 = vadd.f32 0.0, %v2192
        %v2194 = vpop.f32.mrb[0].mxu0
        %v2195 = vpop.f32.mrb[0].mxu0
        %v2196 = vadd.f32 0.0, %v2195
        %v2197 = vpop.f32.mrb[0].mxu0
        %2198 = vmatprep.mubr.bf16.mxu0 0
        %2199 = vmatmul.mubr.bf16.gmra.mrb[0].mxu0 %v2056
        %v2200 = vpop.f32.mrb[0].mxu0
        %v2201 = vadd.f32 0.0, %v2200
        %v2202 = vpop.f32.mrb[0].mxu0
        %v2203 = vpop.f32.mrb[0].mxu0
        %v2204 = vadd.f32 0.0, %v2203
        %v2205 = vpop.f32.mrb[0].mxu0
        %2206 = vmatprep.mubr.bf16.mxu0 0
        %2207 = vmatmul.mubr.bf16.gmra.mrb[0].mxu0 %v2059
        %v2208 = vpop.f32.mrb[0].mxu0
        %v2209 = vadd.f32 0.0, %v2208
        %v2210 = vpop.f32.mrb[0].mxu0
        %v2211 = vpop.f32.mrb[0].mxu0
        %v2212 = vadd.f32 0.0, %v2211
        %v2213 = vpop.f32.mrb[0].mxu0
        %2214 = vmatprep.mubr.bf16.mxu0 0
        %2215 = vmatmul.mubr.bf16.gmra.mrb[0].mxu0 %v2062
        %v2216 = vpop.f32.mrb[0].mxu0
        %v2217 = vadd.f32 0.0, %v2216
        %v2218 = vpop.f32.mrb[0].mxu0
        %v2219 = vpop.f32.mrb[0].mxu0
        %v2220 = vadd.f32 0.0, %v2219
        %v2221 = vpop.f32.mrb[0].mxu0
        %2222 = vmatprep.mubr.bf16.mxu0 0
        %2223 = vmatmul.mubr.bf16.gmra.mrb[0].mxu0 %v2065
        %v2224 = vpop.f32.mrb[0].mxu0
        %v2225 = vadd.f32 0.0, %v2224
        %v2226 = vpop.f32.mrb[0].mxu0
        %v2227 = vpop.f32.mrb[0].mxu0
        %v2228 = vadd.f32 0.0, %v2227
        %v2229 = vpop.f32.mrb[0].mxu0
        %2230 = vdwg.mxu0
        %v2231 = vadd.f32 %v1937, %v2105
        %v2232 = vadd.f32 %v1938, %v2108
        %v2233 = vadd.f32 %v1939, %v2113
        %v2234 = vadd.f32 %v1940, %v2116
        %v2235 = vadd.f32 %v1941, %v2121
        %v2236 = vadd.f32 %v1942, %v2124
        %v2237 = vadd.f32 %v1943, %v2129
        %v2238 = vadd.f32 %v1944, %v2132
        %v2239 = vadd.f32 %v1945, %v2137
        %v2240 = vadd.f32 %v1946, %v2140
        %v2241 = vadd.f32 %v1947, %v2145
        %v2242 = vadd.f32 %v1948, %v2148
        %v2243 = vadd.f32 %v1949, %v2153
        %v2244 = vadd.f32 %v1950, %v2156
        %v2245 = vadd.f32 %v1951, %v2161
        %v2246 = vadd.f32 %v1952, %v2164
        %v2247 = vadd.f32 %v1953, %v2169
        %v2248 = vadd.f32 %v1954, %v2172
        %v2249 = vadd.f32 %v1955, %v2177
        %v2250 = vadd.f32 %v1956, %v2180
        %v2251 = vadd.f32 %v1957, %v2185
        %v2252 = vadd.f32 %v1958, %v2188
        %v2253 = vadd.f32 %v1959, %v2193
        %v2254 = vadd.f32 %v1960, %v2196
        %v2255 = vadd.f32 %v1961, %v2201
        %v2256 = vadd.f32 %v1962, %v2204
        %v2257 = vadd.f32 %v1963, %v2209
        %v2258 = vadd.f32 %v1964, %v2212
        %v2259 = vadd.f32 %v1965, %v2217
        %v2260 = vadd.f32 %v1966, %v2220
        %v2261 = vadd.f32 %v1967, %v2225
        %v2262 = vadd.f32 %v1968, %v2228
        %s2263 = scalar_lea.vmem [#allocation2], 48
        %v2264 = vld [vmem:[%s2263] sm:$0xff]
        %v2265 = vld [vmem:[%s2263 + $0x8] sm:$0xff]
        %v2266 = vld [vmem:[%s2263 + $0x18] sm:$0xff]
        %v2267 = vld [vmem:[%s2263 + $0x20] sm:$0xff]
        %v2268 = vld [vmem:[%s2263 + $0x30] sm:$0xff]
        %v2269 = vld [vmem:[%s2263 + $0x38] sm:$0xff]
        %v2270 = vld [vmem:[%s2263 + $0x48] sm:$0xff]
        %v2271 = vld [vmem:[%s2263 + $0x50] sm:$0xff]
        %v2272 = vld [vmem:[%s2263 + $0x60] sm:$0xff]
        %v2273 = vld [vmem:[%s2263 + $0x68] sm:$0xff]
        %v2274 = vld [vmem:[%s2263 + $0x78] sm:$0xff]
        %v2275 = vld [vmem:[%s2263 + $0x80] sm:$0xff]
        %v2276 = vld [vmem:[%s2263 + $0x90] sm:$0xff]
        %v2277 = vld [vmem:[%s2263 + $0x98] sm:$0xff]
        %v2278 = vld [vmem:[%s2263 + $0xa8] sm:$0xff]
        %v2279 = vld [vmem:[%s2263 + $0xb0] sm:$0xff]
        %v2280 = vld [vmem:[%s2263 + $0xc0] sm:$0xff]
        %v2281 = vld [vmem:[%s2263 + $0xc8] sm:$0xff]
        %v2282 = vld [vmem:[%s2263 + $0xd8] sm:$0xff]
        %v2283 = vld [vmem:[%s2263 + $0xe0] sm:$0xff]
        %v2284 = vld [vmem:[%s2263 + $0xf0] sm:$0xff]
        %v2285 = vld [vmem:[%s2263 + $0xf8] sm:$0xff]
        %v2286 = vld [vmem:[%s2263 + $0x108] sm:$0xff]
        %v2287 = vld [vmem:[%s2263 + $0x110] sm:$0xff]
        %v2288 = vld [vmem:[%s2263 + $0x120] sm:$0xff]
        %v2289 = vld [vmem:[%s2263 + $0x128] sm:$0xff]
        %v2290 = vld [vmem:[%s2263 + $0x138] sm:$0xff]
        %v2291 = vld [vmem:[%s2263 + $0x140] sm:$0xff]
        %v2292 = vld [vmem:[%s2263 + $0x150] sm:$0xff]
        %v2293 = vld [vmem:[%s2263 + $0x158] sm:$0xff]
        %v2294 = vld [vmem:[%s2263 + $0x168] sm:$0xff]
        %v2295 = vld [vmem:[%s2263 + $0x170] sm:$0xff]
        %v2296 = vpack.c.bf16 %v2265, %v2264
        %v2297 = vpack.c.bf16 %v2267, %v2266
        %v2298 = vpack.c.bf16 %v2269, %v2268
        %v2299 = vpack.c.bf16 %v2271, %v2270
        %v2300 = vpack.c.bf16 %v2273, %v2272
        %v2301 = vpack.c.bf16 %v2275, %v2274
        %v2302 = vpack.c.bf16 %v2277, %v2276
        %v2303 = vpack.c.bf16 %v2279, %v2278
        %v2304 = vpack.c.bf16 %v2281, %v2280
        %v2305 = vpack.c.bf16 %v2283, %v2282
        %v2306 = vpack.c.bf16 %v2285, %v2284
        %v2307 = vpack.c.bf16 %v2287, %v2286
        %v2308 = vpack.c.bf16 %v2289, %v2288
        %v2309 = vpack.c.bf16 %v2291, %v2290
        %v2310 = vpack.c.bf16 %v2293, %v2292
        %v2311 = vpack.c.bf16 %v2295, %v2294
        %s2312 = scalar_lea.vmem %s1, 12
        %v2313 = vld [vmem:[%s2312] sm:$0x3]
        %v2315 = vsel %vm439, %v2296, 0
        %v2318 = vsel %vm439, %v2297, 0
        %v2321 = vsel %vm439, %v2298, 0
        %v2324 = vsel %vm439, %v2299, 0
        %v2327 = vsel %vm439, %v2300, 0
        %v2330 = vsel %vm439, %v2301, 0
        %v2333 = vsel %vm439, %v2302, 0
        %v2336 = vsel %vm439, %v2303, 0
        %v2339 = vsel %vm439, %v2304, 0
        %v2342 = vsel %vm439, %v2305, 0
        %v2345 = vsel %vm439, %v2306, 0
        %v2348 = vsel %vm439, %v2307, 0
        %v2351 = vsel %vm439, %v2308, 0
        %v2354 = vsel %vm439, %v2309, 0
        %v2357 = vsel %vm439, %v2310, 0
        %v2360 = vsel %vm439, %v2311, 0
        %v2363 = vand.u32 %v2313, %v710
        %2365 = vmatprep.subr.bf16.mxu0 0
        %2366 = vmatpush1.bf16.msra.mxu0 %v2363
        %2367 = vmatprep.subr.bf16.mxu0 0
        %2368 = vmatpush1.bf16.msra.mxu0 0
        %2369 = vmatprep.subr.bf16.mxu0 0
        %2370 = vmatpush1.bf16.msra.mxu0 0
        %2371 = vmatprep.subr.bf16.mxu0 0
        %2372 = vmatpush1.bf16.msra.mxu0 0
        %2373 = vmatprep.subr.bf16.mxu0 0
        %2374 = vmatpush1.bf16.msra.mxu0 0
        %2375 = vmatprep.subr.bf16.mxu0 0
        %2376 = vmatpush1.bf16.msra.mxu0 0
        %2377 = vmatprep.subr.bf16.mxu0 0
        %2378 = vmatpush1.bf16.msra.mxu0 0
        %2379 = vmatprep.subr.bf16.mxu0 0
        %2380 = vmatpush1.bf16.msra.mxu0 0
        %2381 = vmatprep.subr.bf16.mxu0 0
        %2382 = vmatpush1.bf16.msra.mxu0 0
        %2383 = vmatprep.subr.bf16.mxu0 0
        %2384 = vmatpush1.bf16.msra.mxu0 0
        %2385 = vmatprep.subr.bf16.mxu0 0
        %2386 = vmatpush1.bf16.msra.mxu0 0
        %2387 = vmatprep.subr.bf16.mxu0 0
        %2388 = vmatpush1.bf16.msra.mxu0 0
        %2389 = vmatprep.subr.bf16.mxu0 0
        %2390 = vmatpush1.bf16.msra.mxu0 0
        %2391 = vmatprep.subr.bf16.mxu0 0
        %2392 = vmatpush1.bf16.msra.mxu0 0
        %2393 = vmatprep.subr.bf16.mxu0 0
        %2394 = vmatpush1.bf16.msra.mxu0 0
        %2395 = vmatprep.subr.bf16.mxu0 0
        %2396 = vmatpush1.bf16.msra.mxu0 0
        %2397 = vmatprep.mubr.bf16.mxu0 0
        %2398 = vmatmul.mubr.bf16.gmra.mrb[0].mxu0 %v2315
        %v2399 = vpop.f32.mrb[0].mxu0
        %v2400 = vadd.f32 0.0, %v2399
        %v2401 = vpop.f32.mrb[0].mxu0
        %v2402 = vpop.f32.mrb[0].mxu0
        %v2403 = vadd.f32 0.0, %v2402
        %v2404 = vpop.f32.mrb[0].mxu0
        %2405 = vmatprep.mubr.bf16.mxu0 0
        %2406 = vmatmul.mubr.bf16.gmra.mrb[0].mxu0 %v2318
        %v2407 = vpop.f32.mrb[0].mxu0
        %v2408 = vadd.f32 0.0, %v2407
        %v2409 = vpop.f32.mrb[0].mxu0
        %v2410 = vpop.f32.mrb[0].mxu0
        %v2411 = vadd.f32 0.0, %v2410
        %v2412 = vpop.f32.mrb[0].mxu0
        %2413 = vmatprep.mubr.bf16.mxu0 0
        %2414 = vmatmul.mubr.bf16.gmra.mrb[0].mxu0 %v2321
        %v2415 = vpop.f32.mrb[0].mxu0
        %v2416 = vadd.f32 0.0, %v2415
        %v2417 = vpop.f32.mrb[0].mxu0
        %v2418 = vpop.f32.mrb[0].mxu0
        %v2419 = vadd.f32 0.0, %v2418
        %v2420 = vpop.f32.mrb[0].mxu0
        %2421 = vmatprep.mubr.bf16.mxu0 0
        %2422 = vmatmul.mubr.bf16.gmra.mrb[0].mxu0 %v2324
        %v2423 = vpop.f32.mrb[0].mxu0
        %v2424 = vadd.f32 0.0, %v2423
        %v2425 = vpop.f32.mrb[0].mxu0
        %v2426 = vpop.f32.mrb[0].mxu0
        %v2427 = vadd.f32 0.0, %v2426
        %v2428 = vpop.f32.mrb[0].mxu0
        %2429 = vmatprep.mubr.bf16.mxu0 0
        %2430 = vmatmul.mubr.bf16.gmra.mrb[0].mxu0 %v2327
        %v2431 = vpop.f32.mrb[0].mxu0
        %v2432 = vadd.f32 0.0, %v2431
        %v2433 = vpop.f32.mrb[0].mxu0
        %v2434 = vpop.f32.mrb[0].mxu0
        %v2435 = vadd.f32 0.0, %v2434
        %v2436 = vpop.f32.mrb[0].mxu0
        %2437 = vmatprep.mubr.bf16.mxu0 0
        %2438 = vmatmul.mubr.bf16.gmra.mrb[0].mxu0 %v2330
        %v2439 = vpop.f32.mrb[0].mxu0
        %v2440 = vadd.f32 0.0, %v2439
        %v2441 = vpop.f32.mrb[0].mxu0
        %v2442 = vpop.f32.mrb[0].mxu0
        %v2443 = vadd.f32 0.0, %v2442
        %v2444 = vpop.f32.mrb[0].mxu0
        %2445 = vmatprep.mubr.bf16.mxu0 0
        %2446 = vmatmul.mubr.bf16.gmra.mrb[0].mxu0 %v2333
        %v2447 = vpop.f32.mrb[0].mxu0
        %v2448 = vadd.f32 0.0, %v2447
        %v2449 = vpop.f32.mrb[0].mxu0
        %v2450 = vpop.f32.mrb[0].mxu0
        %v2451 = vadd.f32 0.0, %v2450
        %v2452 = vpop.f32.mrb[0].mxu0
        %2453 = vmatprep.mubr.bf16.mxu0 0
        %2454 = vmatmul.mubr.bf16.gmra.mrb[0].mxu0 %v2336
        %v2455 = vpop.f32.mrb[0].mxu0
        %v2456 = vadd.f32 0.0, %v2455
        %v2457 = vpop.f32.mrb[0].mxu0
        %v2458 = vpop.f32.mrb[0].mxu0
        %v2459 = vadd.f32 0.0, %v2458
        %v2460 = vpop.f32.mrb[0].mxu0
        %2461 = vmatprep.mubr.bf16.mxu0 0
        %2462 = vmatmul.mubr.bf16.gmra.mrb[0].mxu0 %v2339
        %v2463 = vpop.f32.mrb[0].mxu0
        %v2464 = vadd.f32 0.0, %v2463
        %v2465 = vpop.f32.mrb[0].mxu0
        %v2466 = vpop.f32.mrb[0].mxu0
        %v2467 = vadd.f32 0.0, %v2466
        %v2468 = vpop.f32.mrb[0].mxu0
        %2469 = vmatprep.mubr.bf16.mxu0 0
        %2470 = vmatmul.mubr.bf16.gmra.mrb[0].mxu0 %v2342
        %v2471 = vpop.f32.mrb[0].mxu0
        %v2472 = vadd.f32 0.0, %v2471
        %v2473 = vpop.f32.mrb[0].mxu0
        %v2474 = vpop.f32.mrb[0].mxu0
        %v2475 = vadd.f32 0.0, %v2474
        %v2476 = vpop.f32.mrb[0].mxu0
        %2477 = vmatprep.mubr.bf16.mxu0 0
        %2478 = vmatmul.mubr.bf16.gmra.mrb[0].mxu0 %v2345
        %v2479 = vpop.f32.mrb[0].mxu0
        %v2480 = vadd.f32 0.0, %v2479
        %v2481 = vpop.f32.mrb[0].mxu0
        %v2482 = vpop.f32.mrb[0].mxu0
        %v2483 = vadd.f32 0.0, %v2482
        %v2484 = vpop.f32.mrb[0].mxu0
        %2485 = vmatprep.mubr.bf16.mxu0 0
        %2486 = vmatmul.mubr.bf16.gmra.mrb[0].mxu0 %v2348
        %v2487 = vpop.f32.mrb[0].mxu0
        %v2488 = vadd.f32 0.0, %v2487
        %v2489 = vpop.f32.mrb[0].mxu0
        %v2490 = vpop.f32.mrb[0].mxu0
        %v2491 = vadd.f32 0.0, %v2490
        %v2492 = vpop.f32.mrb[0].mxu0
        %2493 = vmatprep.mubr.bf16.mxu0 0
        %2494 = vmatmul.mubr.bf16.gmra.mrb[0].mxu0 %v2351
        %v2495 = vpop.f32.mrb[0].mxu0
        %v2496 = vadd.f32 0.0, %v2495
        %v2497 = vpop.f32.mrb[0].mxu0
        %v2498 = vpop.f32.mrb[0].mxu0
        %v2499 = vadd.f32 0.0, %v2498
        %v2500 = vpop.f32.mrb[0].mxu0
        %2501 = vmatprep.mubr.bf16.mxu0 0
        %2502 = vmatmul.mubr.bf16.gmra.mrb[0].mxu0 %v2354
        %v2503 = vpop.f32.mrb[0].mxu0
        %v2504 = vadd.f32 0.0, %v2503
        %v2505 = vpop.f32.mrb[0].mxu0
        %v2506 = vpop.f32.mrb[0].mxu0
        %v2507 = vadd.f32 0.0, %v2506
        %v2508 = vpop.f32.mrb[0].mxu0
        %2509 = vmatprep.mubr.bf16.mxu0 0
        %2510 = vmatmul.mubr.bf16.gmra.mrb[0].mxu0 %v2357
        %v2511 = vpop.f32.mrb[0].mxu0
        %v2512 = vadd.f32 0.0, %v2511
        %v2513 = vpop.f32.mrb[0].mxu0
        %v2514 = vpop.f32.mrb[0].mxu0
        %v2515 = vadd.f32 0.0, %v2514
        %v2516 = vpop.f32.mrb[0].mxu0
        %2517 = vmatprep.mubr.bf16.mxu0 0
        %2518 = vmatmul.mubr.bf16.gmra.mrb[0].mxu0 %v2360
        %v2519 = vpop.f32.mrb[0].mxu0
        %v2520 = vadd.f32 0.0, %v2519
        %v2521 = vpop.f32.mrb[0].mxu0
        %v2522 = vpop.f32.mrb[0].mxu0
        %v2523 = vadd.f32 0.0, %v2522
        %v2524 = vpop.f32.mrb[0].mxu0
        %2525 = vdwg.mxu0
        %v2526 = vadd.f32 %v2231, %v2400
        %v2527 = vadd.f32 %v2232, %v2403
        %v2528 = vadd.f32 %v2233, %v2408
        %v2529 = vadd.f32 %v2234, %v2411
        %v2530 = vadd.f32 %v2235, %v2416
        %v2531 = vadd.f32 %v2236, %v2419
        %v2532 = vadd.f32 %v2237, %v2424
        %v2533 = vadd.f32 %v2238, %v2427
        %v2534 = vadd.f32 %v2239, %v2432
        %v2535 = vadd.f32 %v2240, %v2435
        %v2536 = vadd.f32 %v2241, %v2440
        %v2537 = vadd.f32 %v2242, %v2443
        %v2538 = vadd.f32 %v2243, %v2448
        %v2539 = vadd.f32 %v2244, %v2451
        %v2540 = vadd.f32 %v2245, %v2456
        %v2541 = vadd.f32 %v2246, %v2459
        %v2542 = vadd.f32 %v2247, %v2464
        %v2543 = vadd.f32 %v2248, %v2467
        %v2544 = vadd.f32 %v2249, %v2472
        %v2545 = vadd.f32 %v2250, %v2475
        %v2546 = vadd.f32 %v2251, %v2480
        %v2547 = vadd.f32 %v2252, %v2483
        %v2548 = vadd.f32 %v2253, %v2488
        %v2549 = vadd.f32 %v2254, %v2491
        %v2550 = vadd.f32 %v2255, %v2496
        %v2551 = vadd.f32 %v2256, %v2499
        %v2552 = vadd.f32 %v2257, %v2504
        %v2553 = vadd.f32 %v2258, %v2507
        %v2554 = vadd.f32 %v2259, %v2512
        %v2555 = vadd.f32 %v2260, %v2515
        %v2556 = vadd.f32 %v2261, %v2520
        %v2557 = vadd.f32 %v2262, %v2523
        %v2558 = vld [vmem:[%s2263 + $0x1] sm:$0xff]
        %v2559 = vld [vmem:[%s2263 + $0x9] sm:$0xff]
        %v2560 = vld [vmem:[%s2263 + $0x19] sm:$0xff]
        %v2561 = vld [vmem:[%s2263 + $0x21] sm:$0xff]
        %v2562 = vld [vmem:[%s2263 + $0x31] sm:$0xff]
        %v2563 = vld [vmem:[%s2263 + $0x39] sm:$0xff]
        %v2564 = vld [vmem:[%s2263 + $0x49] sm:$0xff]
        %v2565 = vld [vmem:[%s2263 + $0x51] sm:$0xff]
        %v2566 = vld [vmem:[%s2263 + $0x61] sm:$0xff]
        %v2567 = vld [vmem:[%s2263 + $0x69] sm:$0xff]
        %v2568 = vld [vmem:[%s2263 + $0x79] sm:$0xff]
        %v2569 = vld [vmem:[%s2263 + $0x81] sm:$0xff]
        %v2570 = vld [vmem:[%s2263 + $0x91] sm:$0xff]
        %v2571 = vld [vmem:[%s2263 + $0x99] sm:$0xff]
        %v2572 = vld [vmem:[%s2263 + $0xa9] sm:$0xff]
        %v2573 = vld [vmem:[%s2263 + $0xb1] sm:$0xff]
        %v2574 = vld [vmem:[%s2263 + $0xc1] sm:$0xff]
        %v2575 = vld [vmem:[%s2263 + $0xc9] sm:$0xff]
        %v2576 = vld [vmem:[%s2263 + $0xd9] sm:$0xff]
        %v2577 = vld [vmem:[%s2263 + $0xe1] sm:$0xff]
        %v2578 = vld [vmem:[%s2263 + $0xf1] sm:$0xff]
        %v2579 = vld [vmem:[%s2263 + $0xf9] sm:$0xff]
        %v2580 = vld [vmem:[%s2263 + $0x109] sm:$0xff]
        %v2581 = vld [vmem:[%s2263 + $0x111] sm:$0xff]
        %v2582 = vld [vmem:[%s2263 + $0x121] sm:$0xff]
        %v2583 = vld [vmem:[%s2263 + $0x129] sm:$0xff]
        %v2584 = vld [vmem:[%s2263 + $0x139] sm:$0xff]
        %v2585 = vld [vmem:[%s2263 + $0x141] sm:$0xff]
        %v2586 = vld [vmem:[%s2263 + $0x151] sm:$0xff]
        %v2587 = vld [vmem:[%s2263 + $0x159] sm:$0xff]
        %v2588 = vld [vmem:[%s2263 + $0x169] sm:$0xff]
        %v2589 = vld [vmem:[%s2263 + $0x171] sm:$0xff]
        %v2590 = vpack.c.bf16 %v2559, %v2558
        %v2591 = vpack.c.bf16 %v2561, %v2560
        %v2592 = vpack.c.bf16 %v2563, %v2562
        %v2593 = vpack.c.bf16 %v2565, %v2564
        %v2594 = vpack.c.bf16 %v2567, %v2566
        %v2595 = vpack.c.bf16 %v2569, %v2568
        %v2596 = vpack.c.bf16 %v2571, %v2570
        %v2597 = vpack.c.bf16 %v2573, %v2572
        %v2598 = vpack.c.bf16 %v2575, %v2574
        %v2599 = vpack.c.bf16 %v2577, %v2576
        %v2600 = vpack.c.bf16 %v2579, %v2578
        %v2601 = vpack.c.bf16 %v2581, %v2580
        %v2602 = vpack.c.bf16 %v2583, %v2582
        %v2603 = vpack.c.bf16 %v2585, %v2584
        %v2604 = vpack.c.bf16 %v2587, %v2586
        %v2605 = vpack.c.bf16 %v2589, %v2588
        %s2606 = scalar_lea.vmem %s1, 14
        %v2607 = vld [vmem:[%s2606] sm:$0x3]
        %v2609 = vsel %vm439, %v2590, 0
        %v2612 = vsel %vm439, %v2591, 0
        %v2615 = vsel %vm439, %v2592, 0
        %v2618 = vsel %vm439, %v2593, 0
        %v2621 = vsel %vm439, %v2594, 0
        %v2624 = vsel %vm439, %v2595, 0
        %v2627 = vsel %vm439, %v2596, 0
        %v2630 = vsel %vm439, %v2597, 0
        %v2633 = vsel %vm439, %v2598, 0
        %v2636 = vsel %vm439, %v2599, 0
        %v2639 = vsel %vm439, %v2600, 0
        %v2642 = vsel %vm439, %v2601, 0
        %v2645 = vsel %vm439, %v2602, 0
        %v2648 = vsel %vm439, %v2603, 0
        %v2651 = vsel %vm439, %v2604, 0
        %v2654 = vsel %vm439, %v2605, 0
        %v2657 = vand.u32 %v2607, %v710
        %2659 = vmatprep.subr.bf16.mxu0 0
        %2660 = vmatpush1.bf16.msra.mxu0 %v2657
        %2661 = vmatprep.subr.bf16.mxu0 0
        %2662 = vmatpush1.bf16.msra.mxu0 0
        %2663 = vmatprep.subr.bf16.mxu0 0
        %2664 = vmatpush1.bf16.msra.mxu0 0
        %2665 = vmatprep.subr.bf16.mxu0 0
        %2666 = vmatpush1.bf16.msra.mxu0 0
        %2667 = vmatprep.subr.bf16.mxu0 0
        %2668 = vmatpush1.bf16.msra.mxu0 0
        %2669 = vmatprep.subr.bf16.mxu0 0
        %2670 = vmatpush1.bf16.msra.mxu0 0
        %2671 = vmatprep.subr.bf16.mxu0 0
        %2672 = vmatpush1.bf16.msra.mxu0 0
        %2673 = vmatprep.subr.bf16.mxu0 0
        %2674 = vmatpush1.bf16.msra.mxu0 0
        %2675 = vmatprep.subr.bf16.mxu0 0
        %2676 = vmatpush1.bf16.msra.mxu0 0
        %2677 = vmatprep.subr.bf16.mxu0 0
        %2678 = vmatpush1.bf16.msra.mxu0 0
        %2679 = vmatprep.subr.bf16.mxu0 0
        %2680 = vmatpush1.bf16.msra.mxu0 0
        %2681 = vmatprep.subr.bf16.mxu0 0
        %2682 = vmatpush1.bf16.msra.mxu0 0
        %2683 = vmatprep.subr.bf16.mxu0 0
        %2684 = vmatpush1.bf16.msra.mxu0 0
        %2685 = vmatprep.subr.bf16.mxu0 0
        %2686 = vmatpush1.bf16.msra.mxu0 0
        %2687 = vmatprep.subr.bf16.mxu0 0
        %2688 = vmatpush1.bf16.msra.mxu0 0
        %2689 = vmatprep.subr.bf16.mxu0 0
        %2690 = vmatpush1.bf16.msra.mxu0 0
        %2691 = vmatprep.mubr.bf16.mxu0 0
        %2692 = vmatmul.mubr.bf16.gmra.mrb[0].mxu0 %v2609
        %v2693 = vpop.f32.mrb[0].mxu0
        %v2694 = vadd.f32 0.0, %v2693
        %v2695 = vpop.f32.mrb[0].mxu0
        %v2696 = vpop.f32.mrb[0].mxu0
        %v2697 = vadd.f32 0.0, %v2696
        %v2698 = vpop.f32.mrb[0].mxu0
        %2699 = vmatprep.mubr.bf16.mxu0 0
        %2700 = vmatmul.mubr.bf16.gmra.mrb[0].mxu0 %v2612
        %v2701 = vpop.f32.mrb[0].mxu0
        %v2702 = vadd.f32 0.0, %v2701
        %v2703 = vpop.f32.mrb[0].mxu0
        %v2704 = vpop.f32.mrb[0].mxu0
        %v2705 = vadd.f32 0.0, %v2704
        %v2706 = vpop.f32.mrb[0].mxu0
        %2707 = vmatprep.mubr.bf16.mxu0 0
        %2708 = vmatmul.mubr.bf16.gmra.mrb[0].mxu0 %v2615
        %v2709 = vpop.f32.mrb[0].mxu0
        %v2710 = vadd.f32 0.0, %v2709
        %v2711 = vpop.f32.mrb[0].mxu0
        %v2712 = vpop.f32.mrb[0].mxu0
        %v2713 = vadd.f32 0.0, %v2712
        %v2714 = vpop.f32.mrb[0].mxu0
        %2715 = vmatprep.mubr.bf16.mxu0 0
        %2716 = vmatmul.mubr.bf16.gmra.mrb[0].mxu0 %v2618
        %v2717 = vpop.f32.mrb[0].mxu0
        %v2718 = vadd.f32 0.0, %v2717
        %v2719 = vpop.f32.mrb[0].mxu0
        %v2720 = vpop.f32.mrb[0].mxu0
        %v2721 = vadd.f32 0.0, %v2720
        %v2722 = vpop.f32.mrb[0].mxu0
        %2723 = vmatprep.mubr.bf16.mxu0 0
        %2724 = vmatmul.mubr.bf16.gmra.mrb[0].mxu0 %v2621
        %v2725 = vpop.f32.mrb[0].mxu0
        %v2726 = vadd.f32 0.0, %v2725
        %v2727 = vpop.f32.mrb[0].mxu0
        %v2728 = vpop.f32.mrb[0].mxu0
        %v2729 = vadd.f32 0.0, %v2728
        %v2730 = vpop.f32.mrb[0].mxu0
        %2731 = vmatprep.mubr.bf16.mxu0 0
        %2732 = vmatmul.mubr.bf16.gmra.mrb[0].mxu0 %v2624
        %v2733 = vpop.f32.mrb[0].mxu0
        %v2734 = vadd.f32 0.0, %v2733
        %v2735 = vpop.f32.mrb[0].mxu0
        %v2736 = vpop.f32.mrb[0].mxu0
        %v2737 = vadd.f32 0.0, %v2736
        %v2738 = vpop.f32.mrb[0].mxu0
        %2739 = vmatprep.mubr.bf16.mxu0 0
        %2740 = vmatmul.mubr.bf16.gmra.mrb[0].mxu0 %v2627
        %v2741 = vpop.f32.mrb[0].mxu0
        %v2742 = vadd.f32 0.0, %v2741
        %v2743 = vpop.f32.mrb[0].mxu0
        %v2744 = vpop.f32.mrb[0].mxu0
        %v2745 = vadd.f32 0.0, %v2744
        %v2746 = vpop.f32.mrb[0].mxu0
        %2747 = vmatprep.mubr.bf16.mxu0 0
        %2748 = vmatmul.mubr.bf16.gmra.mrb[0].mxu0 %v2630
        %v2749 = vpop.f32.mrb[0].mxu0
        %v2750 = vadd.f32 0.0, %v2749
        %v2751 = vpop.f32.mrb[0].mxu0
        %v2752 = vpop.f32.mrb[0].mxu0
        %v2753 = vadd.f32 0.0, %v2752
        %v2754 = vpop.f32.mrb[0].mxu0
        %2755 = vmatprep.mubr.bf16.mxu0 0
        %2756 = vmatmul.mubr.bf16.gmra.mrb[0].mxu0 %v2633
        %v2757 = vpop.f32.mrb[0].mxu0
        %v2758 = vadd.f32 0.0, %v2757
        %v2759 = vpop.f32.mrb[0].mxu0
        %v2760 = vpop.f32.mrb[0].mxu0
        %v2761 = vadd.f32 0.0, %v2760
        %v2762 = vpop.f32.mrb[0].mxu0
        %2763 = vmatprep.mubr.bf16.mxu0 0
        %2764 = vmatmul.mubr.bf16.gmra.mrb[0].mxu0 %v2636
        %v2765 = vpop.f32.mrb[0].mxu0
        %v2766 = vadd.f32 0.0, %v2765
        %v2767 = vpop.f32.mrb[0].mxu0
        %v2768 = vpop.f32.mrb[0].mxu0
        %v2769 = vadd.f32 0.0, %v2768
        %v2770 = vpop.f32.mrb[0].mxu0
        %2771 = vmatprep.mubr.bf16.mxu0 0
        %2772 = vmatmul.mubr.bf16.gmra.mrb[0].mxu0 %v2639
        %v2773 = vpop.f32.mrb[0].mxu0
        %v2774 = vadd.f32 0.0, %v2773
        %v2775 = vpop.f32.mrb[0].mxu0
        %v2776 = vpop.f32.mrb[0].mxu0
        %v2777 = vadd.f32 0.0, %v2776
        %v2778 = vpop.f32.mrb[0].mxu0
        %2779 = vmatprep.mubr.bf16.mxu0 0
        %2780 = vmatmul.mubr.bf16.gmra.mrb[0].mxu0 %v2642
        %v2781 = vpop.f32.mrb[0].mxu0
        %v2782 = vadd.f32 0.0, %v2781
        %v2783 = vpop.f32.mrb[0].mxu0
        %v2784 = vpop.f32.mrb[0].mxu0
        %v2785 = vadd.f32 0.0, %v2784
        %v2786 = vpop.f32.mrb[0].mxu0
        %2787 = vmatprep.mubr.bf16.mxu0 0
        %2788 = vmatmul.mubr.bf16.gmra.mrb[0].mxu0 %v2645
        %v2789 = vpop.f32.mrb[0].mxu0
        %v2790 = vadd.f32 0.0, %v2789
        %v2791 = vpop.f32.mrb[0].mxu0
        %v2792 = vpop.f32.mrb[0].mxu0
        %v2793 = vadd.f32 0.0, %v2792
        %v2794 = vpop.f32.mrb[0].mxu0
        %2795 = vmatprep.mubr.bf16.mxu0 0
        %2796 = vmatmul.mubr.bf16.gmra.mrb[0].mxu0 %v2648
        %v2797 = vpop.f32.mrb[0].mxu0
        %v2798 = vadd.f32 0.0, %v2797
        %v2799 = vpop.f32.mrb[0].mxu0
        %v2800 = vpop.f32.mrb[0].mxu0
        %v2801 = vadd.f32 0.0, %v2800
        %v2802 = vpop.f32.mrb[0].mxu0
        %2803 = vmatprep.mubr.bf16.mxu0 0
        %2804 = vmatmul.mubr.bf16.gmra.mrb[0].mxu0 %v2651
        %v2805 = vpop.f32.mrb[0].mxu0
        %v2806 = vadd.f32 0.0, %v2805
        %v2807 = vpop.f32.mrb[0].mxu0
        %v2808 = vpop.f32.mrb[0].mxu0
        %v2809 = vadd.f32 0.0, %v2808
        %v2810 = vpop.f32.mrb[0].mxu0
        %2811 = vmatprep.mubr.bf16.mxu0 0
        %2812 = vmatmul.mubr.bf16.gmra.mrb[0].mxu0 %v2654
        %v2813 = vpop.f32.mrb[0].mxu0
        %v2814 = vadd.f32 0.0, %v2813
        %v2815 = vpop.f32.mrb[0].mxu0
        %v2816 = vpop.f32.mrb[0].mxu0
        %v2817 = vadd.f32 0.0, %v2816
        %v2818 = vpop.f32.mrb[0].mxu0
        %2819 = vdwg.mxu0
        %v2820 = vadd.f32 %v2526, %v2694
        %v2821 = vadd.f32 %v2527, %v2697
        %v2822 = vadd.f32 %v2528, %v2702
        %v2823 = vadd.f32 %v2529, %v2705
        %v2824 = vadd.f32 %v2530, %v2710
        %v2825 = vadd.f32 %v2531, %v2713
        %v2826 = vadd.f32 %v2532, %v2718
        %v2827 = vadd.f32 %v2533, %v2721
        %v2828 = vadd.f32 %v2534, %v2726
        %v2829 = vadd.f32 %v2535, %v2729
        %v2830 = vadd.f32 %v2536, %v2734
        %v2831 = vadd.f32 %v2537, %v2737
        %v2832 = vadd.f32 %v2538, %v2742
        %v2833 = vadd.f32 %v2539, %v2745
        %v2834 = vadd.f32 %v2540, %v2750
        %v2835 = vadd.f32 %v2541, %v2753
        %v2836 = vadd.f32 %v2542, %v2758
        %v2837 = vadd.f32 %v2543, %v2761
        %v2838 = vadd.f32 %v2544, %v2766
        %v2839 = vadd.f32 %v2545, %v2769
        %v2840 = vadd.f32 %v2546, %v2774
        %v2841 = vadd.f32 %v2547, %v2777
        %v2842 = vadd.f32 %v2548, %v2782
        %v2843 = vadd.f32 %v2549, %v2785
        %v2844 = vadd.f32 %v2550, %v2790
        %v2845 = vadd.f32 %v2551, %v2793
        %v2846 = vadd.f32 %v2552, %v2798
        %v2847 = vadd.f32 %v2553, %v2801
        %v2848 = vadd.f32 %v2554, %v2806
        %v2849 = vadd.f32 %v2555, %v2809
        %v2850 = vadd.f32 %v2556, %v2814
        %v2851 = vadd.f32 %v2557, %v2817
        %v2852 = vld [vmem:[%s2263 + $0x2] sm:$0xff]
        %v2853 = vld [vmem:[%s2263 + $0xa] sm:$0xff]
        %v2854 = vld [vmem:[%s2263 + $0x1a] sm:$0xff]
        %v2855 = vld [vmem:[%s2263 + $0x22] sm:$0xff]
        %v2856 = vld [vmem:[%s2263 + $0x32] sm:$0xff]
        %v2857 = vld [vmem:[%s2263 + $0x3a] sm:$0xff]
        %v2858 = vld [vmem:[%s2263 + $0x4a] sm:$0xff]
        %v2859 = vld [vmem:[%s2263 + $0x52] sm:$0xff]
        %v2860 = vld [vmem:[%s2263 + $0x62] sm:$0xff]
        %v2861 = vld [vmem:[%s2263 + $0x6a] sm:$0xff]
        %v2862 = vld [vmem:[%s2263 + $0x7a] sm:$0xff]
        %v2863 = vld [vmem:[%s2263 + $0x82] sm:$0xff]
        %v2864 = vld [vmem:[%s2263 + $0x92] sm:$0xff]
        %v2865 = vld [vmem:[%s2263 + $0x9a] sm:$0xff]
        %v2866 = vld [vmem:[%s2263 + $0xaa] sm:$0xff]
        %v2867 = vld [vmem:[%s2263 + $0xb2] sm:$0xff]
        %v2868 = vld [vmem:[%s2263 + $0xc2] sm:$0xff]
        %v2869 = vld [vmem:[%s2263 + $0xca] sm:$0xff]
        %v2870 = vld [vmem:[%s2263 + $0xda] sm:$0xff]
        %v2871 = vld [vmem:[%s2263 + $0xe2] sm:$0xff]
        %v2872 = vld [vmem:[%s2263 + $0xf2] sm:$0xff]
        %v2873 = vld [vmem:[%s2263 + $0xfa] sm:$0xff]
        %v2874 = vld [vmem:[%s2263 + $0x10a] sm:$0xff]
        %v2875 = vld [vmem:[%s2263 + $0x112] sm:$0xff]
        %v2876 = vld [vmem:[%s2263 + $0x122] sm:$0xff]
        %v2877 = vld [vmem:[%s2263 + $0x12a] sm:$0xff]
        %v2878 = vld [vmem:[%s2263 + $0x13a] sm:$0xff]
        %v2879 = vld [vmem:[%s2263 + $0x142] sm:$0xff]
        %v2880 = vld [vmem:[%s2263 + $0x152] sm:$0xff]
        %v2881 = vld [vmem:[%s2263 + $0x15a] sm:$0xff]
        %v2882 = vld [vmem:[%s2263 + $0x16a] sm:$0xff]
        %v2883 = vld [vmem:[%s2263 + $0x172] sm:$0xff]
        %v2884 = vpack.c.bf16 %v2853, %v2852
        %v2885 = vpack.c.bf16 %v2855, %v2854
        %v2886 = vpack.c.bf16 %v2857, %v2856
        %v2887 = vpack.c.bf16 %v2859, %v2858
        %v2888 = vpack.c.bf16 %v2861, %v2860
        %v2889 = vpack.c.bf16 %v2863, %v2862
        %v2890 = vpack.c.bf16 %v2865, %v2864
        %v2891 = vpack.c.bf16 %v2867, %v2866
        %v2892 = vpack.c.bf16 %v2869, %v2868
        %v2893 = vpack.c.bf16 %v2871, %v2870
        %v2894 = vpack.c.bf16 %v2873, %v2872
        %v2895 = vpack.c.bf16 %v2875, %v2874
        %v2896 = vpack.c.bf16 %v2877, %v2876
        %v2897 = vpack.c.bf16 %v2879, %v2878
        %v2898 = vpack.c.bf16 %v2881, %v2880
        %v2899 = vpack.c.bf16 %v2883, %v2882
        %s2900 = scalar_lea.vmem %s1, 16
        %v2901 = vld [vmem:[%s2900] sm:$0x3]
        %v2903 = vsel %vm439, %v2884, 0
        %v2906 = vsel %vm439, %v2885, 0
        %v2909 = vsel %vm439, %v2886, 0
        %v2912 = vsel %vm439, %v2887, 0
        %v2915 = vsel %vm439, %v2888, 0
        %v2918 = vsel %vm439, %v2889, 0
        %v2921 = vsel %vm439, %v2890, 0
        %v2924 = vsel %vm439, %v2891, 0
        %v2927 = vsel %vm439, %v2892, 0
        %v2930 = vsel %vm439, %v2893, 0
        %v2933 = vsel %vm439, %v2894, 0
        %v2936 = vsel %vm439, %v2895, 0
        %v2939 = vsel %vm439, %v2896, 0
        %v2942 = vsel %vm439, %v2897, 0
        %v2945 = vsel %vm439, %v2898, 0
        %v2948 = vsel %vm439, %v2899, 0
        %v2951 = vand.u32 %v2901, %v710
        %2953 = vmatprep.subr.bf16.mxu0 0
        %2954 = vmatpush1.bf16.msra.mxu0 %v2951
        %2955 = vmatprep.subr.bf16.mxu0 0
        %2956 = vmatpush1.bf16.msra.mxu0 0
        %2957 = vmatprep.subr.bf16.mxu0 0
        %2958 = vmatpush1.bf16.msra.mxu0 0
        %2959 = vmatprep.subr.bf16.mxu0 0
        %2960 = vmatpush1.bf16.msra.mxu0 0
        %2961 = vmatprep.subr.bf16.mxu0 0
        %2962 = vmatpush1.bf16.msra.mxu0 0
        %2963 = vmatprep.subr.bf16.mxu0 0
        %2964 = vmatpush1.bf16.msra.mxu0 0
        %2965 = vmatprep.subr.bf16.mxu0 0
        %2966 = vmatpush1.bf16.msra.mxu0 0
        %2967 = vmatprep.subr.bf16.mxu0 0
        %2968 = vmatpush1.bf16.msra.mxu0 0
        %2969 = vmatprep.subr.bf16.mxu0 0
        %2970 = vmatpush1.bf16.msra.mxu0 0
        %2971 = vmatprep.subr.bf16.mxu0 0
        %2972 = vmatpush1.bf16.msra.mxu0 0
        %2973 = vmatprep.subr.bf16.mxu0 0
        %2974 = vmatpush1.bf16.msra.mxu0 0
        %2975 = vmatprep.subr.bf16.mxu0 0
        %2976 = vmatpush1.bf16.msra.mxu0 0
        %2977 = vmatprep.subr.bf16.mxu0 0
        %2978 = vmatpush1.bf16.msra.mxu0 0
        %2979 = vmatprep.subr.bf16.mxu0 0
        %2980 = vmatpush1.bf16.msra.mxu0 0
        %2981 = vmatprep.subr.bf16.mxu0 0
        %2982 = vmatpush1.bf16.msra.mxu0 0
        %2983 = vmatprep.subr.bf16.mxu0 0
        %2984 = vmatpush1.bf16.msra.mxu0 0
        %2985 = vmatprep.mubr.bf16.mxu0 0
        %2986 = vmatmul.mubr.bf16.gmra.mrb[0].mxu0 %v2903
        %v2987 = vpop.f32.mrb[0].mxu0
        %v2988 = vadd.f32 0.0, %v2987
        %v2989 = vpop.f32.mrb[0].mxu0
        %v2990 = vpop.f32.mrb[0].mxu0
        %v2991 = vadd.f32 0.0, %v2990
        %v2992 = vpop.f32.mrb[0].mxu0
        %2993 = vmatprep.mubr.bf16.mxu0 0
        %2994 = vmatmul.mubr.bf16.gmra.mrb[0].mxu0 %v2906
        %v2995 = vpop.f32.mrb[0].mxu0
        %v2996 = vadd.f32 0.0, %v2995
        %v2997 = vpop.f32.mrb[0].mxu0
        %v2998 = vpop.f32.mrb[0].mxu0
        %v2999 = vadd.f32 0.0, %v2998
        %v3000 = vpop.f32.mrb[0].mxu0
        %3001 = vmatprep.mubr.bf16.mxu0 0
        %3002 = vmatmul.mubr.bf16.gmra.mrb[0].mxu0 %v2909
        %v3003 = vpop.f32.mrb[0].mxu0
        %v3004 = vadd.f32 0.0, %v3003
        %v3005 = vpop.f32.mrb[0].mxu0
        %v3006 = vpop.f32.mrb[0].mxu0
        %v3007 = vadd.f32 0.0, %v3006
        %v3008 = vpop.f32.mrb[0].mxu0
        %3009 = vmatprep.mubr.bf16.mxu0 0
        %3010 = vmatmul.mubr.bf16.gmra.mrb[0].mxu0 %v2912
        %v3011 = vpop.f32.mrb[0].mxu0
        %v3012 = vadd.f32 0.0, %v3011
        %v3013 = vpop.f32.mrb[0].mxu0
        %v3014 = vpop.f32.mrb[0].mxu0
        %v3015 = vadd.f32 0.0, %v3014
        %v3016 = vpop.f32.mrb[0].mxu0
        %3017 = vmatprep.mubr.bf16.mxu0 0
        %3018 = vmatmul.mubr.bf16.gmra.mrb[0].mxu0 %v2915
        %v3019 = vpop.f32.mrb[0].mxu0
        %v3020 = vadd.f32 0.0, %v3019
        %v3021 = vpop.f32.mrb[0].mxu0
        %v3022 = vpop.f32.mrb[0].mxu0
        %v3023 = vadd.f32 0.0, %v3022
        %v3024 = vpop.f32.mrb[0].mxu0
        %3025 = vmatprep.mubr.bf16.mxu0 0
        %3026 = vmatmul.mubr.bf16.gmra.mrb[0].mxu0 %v2918
        %v3027 = vpop.f32.mrb[0].mxu0
        %v3028 = vadd.f32 0.0, %v3027
        %v3029 = vpop.f32.mrb[0].mxu0
        %v3030 = vpop.f32.mrb[0].mxu0
        %v3031 = vadd.f32 0.0, %v3030
        %v3032 = vpop.f32.mrb[0].mxu0
        %3033 = vmatprep.mubr.bf16.mxu0 0
        %3034 = vmatmul.mubr.bf16.gmra.mrb[0].mxu0 %v2921
        %v3035 = vpop.f32.mrb[0].mxu0
        %v3036 = vadd.f32 0.0, %v3035
        %v3037 = vpop.f32.mrb[0].mxu0
        %v3038 = vpop.f32.mrb[0].mxu0
        %v3039 = vadd.f32 0.0, %v3038
        %v3040 = vpop.f32.mrb[0].mxu0
        %3041 = vmatprep.mubr.bf16.mxu0 0
        %3042 = vmatmul.mubr.bf16.gmra.mrb[0].mxu0 %v2924
        %v3043 = vpop.f32.mrb[0].mxu0
        %v3044 = vadd.f32 0.0, %v3043
        %v3045 = vpop.f32.mrb[0].mxu0
        %v3046 = vpop.f32.mrb[0].mxu0
        %v3047 = vadd.f32 0.0, %v3046
        %v3048 = vpop.f32.mrb[0].mxu0
        %3049 = vmatprep.mubr.bf16.mxu0 0
        %3050 = vmatmul.mubr.bf16.gmra.mrb[0].mxu0 %v2927
        %v3051 = vpop.f32.mrb[0].mxu0
        %v3052 = vadd.f32 0.0, %v3051
        %v3053 = vpop.f32.mrb[0].mxu0
        %v3054 = vpop.f32.mrb[0].mxu0
        %v3055 = vadd.f32 0.0, %v3054
        %v3056 = vpop.f32.mrb[0].mxu0
        %3057 = vmatprep.mubr.bf16.mxu0 0
        %3058 = vmatmul.mubr.bf16.gmra.mrb[0].mxu0 %v2930
        %v3059 = vpop.f32.mrb[0].mxu0
        %v3060 = vadd.f32 0.0, %v3059
        %v3061 = vpop.f32.mrb[0].mxu0
        %v3062 = vpop.f32.mrb[0].mxu0
        %v3063 = vadd.f32 0.0, %v3062
        %v3064 = vpop.f32.mrb[0].mxu0
        %3065 = vmatprep.mubr.bf16.mxu0 0
        %3066 = vmatmul.mubr.bf16.gmra.mrb[0].mxu0 %v2933
        %v3067 = vpop.f32.mrb[0].mxu0
        %v3068 = vadd.f32 0.0, %v3067
        %v3069 = vpop.f32.mrb[0].mxu0
        %v3070 = vpop.f32.mrb[0].mxu0
        %v3071 = vadd.f32 0.0, %v3070
        %v3072 = vpop.f32.mrb[0].mxu0
        %3073 = vmatprep.mubr.bf16.mxu0 0
        %3074 = vmatmul.mubr.bf16.gmra.mrb[0].mxu0 %v2936
        %v3075 = vpop.f32.mrb[0].mxu0
        %v3076 = vadd.f32 0.0, %v3075
        %v3077 = vpop.f32.mrb[0].mxu0
        %v3078 = vpop.f32.mrb[0].mxu0
        %v3079 = vadd.f32 0.0, %v3078
        %v3080 = vpop.f32.mrb[0].mxu0
        %3081 = vmatprep.mubr.bf16.mxu0 0
        %3082 = vmatmul.mubr.bf16.gmra.mrb[0].mxu0 %v2939
        %v3083 = vpop.f32.mrb[0].mxu0
        %v3084 = vadd.f32 0.0, %v3083
        %v3085 = vpop.f32.mrb[0].mxu0
        %v3086 = vpop.f32.mrb[0].mxu0
        %v3087 = vadd.f32 0.0, %v3086
        %v3088 = vpop.f32.mrb[0].mxu0
        %3089 = vmatprep.mubr.bf16.mxu0 0
        %3090 = vmatmul.mubr.bf16.gmra.mrb[0].mxu0 %v2942
        %v3091 = vpop.f32.mrb[0].mxu0
        %v3092 = vadd.f32 0.0, %v3091
        %v3093 = vpop.f32.mrb[0].mxu0
        %v3094 = vpop.f32.mrb[0].mxu0
        %v3095 = vadd.f32 0.0, %v3094
        %v3096 = vpop.f32.mrb[0].mxu0
        %3097 = vmatprep.mubr.bf16.mxu0 0
        %3098 = vmatmul.mubr.bf16.gmra.mrb[0].mxu0 %v2945
        %v3099 = vpop.f32.mrb[0].mxu0
        %v3100 = vadd.f32 0.0, %v3099
        %v3101 = vpop.f32.mrb[0].mxu0
        %v3102 = vpop.f32.mrb[0].mxu0
        %v3103 = vadd.f32 0.0, %v3102
        %v3104 = vpop.f32.mrb[0].mxu0
        %3105 = vmatprep.mubr.bf16.mxu0 0
        %3106 = vmatmul.mubr.bf16.gmra.mrb[0].mxu0 %v2948
        %v3107 = vpop.f32.mrb[0].mxu0
        %v3108 = vadd.f32 0.0, %v3107
        %v3109 = vpop.f32.mrb[0].mxu0
        %v3110 = vpop.f32.mrb[0].mxu0
        %v3111 = vadd.f32 0.0, %v3110
        %v3112 = vpop.f32.mrb[0].mxu0
        %3113 = vdwg.mxu0
        %v3114 = vadd.f32 %v2820, %v2988
        %v3115 = vadd.f32 %v2821, %v2991
        %v3116 = vadd.f32 %v2822, %v2996
        %v3117 = vadd.f32 %v2823, %v2999
        %v3118 = vadd.f32 %v2824, %v3004
        %v3119 = vadd.f32 %v2825, %v3007
        %v3120 = vadd.f32 %v2826, %v3012
        %v3121 = vadd.f32 %v2827, %v3015
        %v3122 = vadd.f32 %v2828, %v3020
        %v3123 = vadd.f32 %v2829, %v3023
        %v3124 = vadd.f32 %v2830, %v3028
        %v3125 = vadd.f32 %v2831, %v3031
        %v3126 = vadd.f32 %v2832, %v3036
        %v3127 = vadd.f32 %v2833, %v3039
        %v3128 = vadd.f32 %v2834, %v3044
        %v3129 = vadd.f32 %v2835, %v3047
        %v3130 = vadd.f32 %v2836, %v3052
        %v3131 = vadd.f32 %v2837, %v3055
        %v3132 = vadd.f32 %v2838, %v3060
        %v3133 = vadd.f32 %v2839, %v3063
        %v3134 = vadd.f32 %v2840, %v3068
        %v3135 = vadd.f32 %v2841, %v3071
        %v3136 = vadd.f32 %v2842, %v3076
        %v3137 = vadd.f32 %v2843, %v3079
        %v3138 = vadd.f32 %v2844, %v3084
        %v3139 = vadd.f32 %v2845, %v3087
        %v3140 = vadd.f32 %v2846, %v3092
        %v3141 = vadd.f32 %v2847, %v3095
        %v3142 = vadd.f32 %v2848, %v3100
        %v3143 = vadd.f32 %v2849, %v3103
        %v3144 = vadd.f32 %v2850, %v3108
        %v3145 = vadd.f32 %v2851, %v3111
        %v3146 = vld [vmem:[%s2] sm:$0x1]
        %v3148 = vlaneseq
        %v3149 = vshrl.u32 %v3148, 7
        %v3150 = vsub.s32 0, %v3149
        %v3151 = vrot.slane %v3146, %v3150
        %v3153 = vadd.f32 %v3114, %v3151
        %v3154 = vadd.f32 %v3115, %v3151
        %v3155 = vadd.f32 %v3116, %v3151
        %v3156 = vadd.f32 %v3117, %v3151
        %v3157 = vadd.f32 %v3118, %v3151
        %v3158 = vadd.f32 %v3119, %v3151
        %v3159 = vadd.f32 %v3120, %v3151
        %v3160 = vadd.f32 %v3121, %v3151
        %v3161 = vadd.f32 %v3122, %v3151
        %v3162 = vadd.f32 %v3123, %v3151
        %v3163 = vadd.f32 %v3124, %v3151
        %v3164 = vadd.f32 %v3125, %v3151
        %v3165 = vadd.f32 %v3126, %v3151
        %v3166 = vadd.f32 %v3127, %v3151
        %v3167 = vadd.f32 %v3128, %v3151
        %v3168 = vadd.f32 %v3129, %v3151
        %v3169 = vadd.f32 %v3130, %v3151
        %v3170 = vadd.f32 %v3131, %v3151
        %v3171 = vadd.f32 %v3132, %v3151
        %v3172 = vadd.f32 %v3133, %v3151
        %v3173 = vadd.f32 %v3134, %v3151
        %v3174 = vadd.f32 %v3135, %v3151
        %v3175 = vadd.f32 %v3136, %v3151
        %v3176 = vadd.f32 %v3137, %v3151
        %v3177 = vadd.f32 %v3138, %v3151
        %v3178 = vadd.f32 %v3139, %v3151
        %v3179 = vadd.f32 %v3140, %v3151
        %v3180 = vadd.f32 %v3141, %v3151
        %v3181 = vadd.f32 %v3142, %v3151
        %v3182 = vadd.f32 %v3143, %v3151
        %v3183 = vadd.f32 %v3144, %v3151
        %v3184 = vadd.f32 %v3145, %v3151
        %vm3185 = vcmp.ge.f32.partialorder %v3153, 0.0
        %vm3186 = vcmp.ge.f32.partialorder %v3154, 0.0
        %vm3187 = vcmp.ge.f32.partialorder %v3155, 0.0
        %vm3188 = vcmp.ge.f32.partialorder %v3156, 0.0
        %vm3189 = vcmp.ge.f32.partialorder %v3157, 0.0
        %vm3190 = vcmp.ge.f32.partialorder %v3158, 0.0
        %vm3191 = vcmp.ge.f32.partialorder %v3159, 0.0
        %vm3192 = vcmp.ge.f32.partialorder %v3160, 0.0
        %vm3193 = vcmp.ge.f32.partialorder %v3161, 0.0
        %vm3194 = vcmp.ge.f32.partialorder %v3162, 0.0
        %vm3195 = vcmp.ge.f32.partialorder %v3163, 0.0
        %vm3196 = vcmp.ge.f32.partialorder %v3164, 0.0
        %vm3197 = vcmp.ge.f32.partialorder %v3165, 0.0
        %vm3198 = vcmp.ge.f32.partialorder %v3166, 0.0
        %vm3199 = vcmp.ge.f32.partialorder %v3167, 0.0
        %vm3200 = vcmp.ge.f32.partialorder %v3168, 0.0
        %vm3201 = vcmp.ge.f32.partialorder %v3169, 0.0
        %vm3202 = vcmp.ge.f32.partialorder %v3170, 0.0
        %vm3203 = vcmp.ge.f32.partialorder %v3171, 0.0
        %vm3204 = vcmp.ge.f32.partialorder %v3172, 0.0
        %vm3205 = vcmp.ge.f32.partialorder %v3173, 0.0
        %vm3206 = vcmp.ge.f32.partialorder %v3174, 0.0
        %vm3207 = vcmp.ge.f32.partialorder %v3175, 0.0
        %vm3208 = vcmp.ge.f32.partialorder %v3176, 0.0
        %vm3209 = vcmp.ge.f32.partialorder %v3177, 0.0
        %vm3210 = vcmp.ge.f32.partialorder %v3178, 0.0
        %vm3211 = vcmp.ge.f32.partialorder %v3179, 0.0
        %vm3212 = vcmp.ge.f32.partialorder %v3180, 0.0
        %vm3213 = vcmp.ge.f32.partialorder %v3181, 0.0
        %vm3214 = vcmp.ge.f32.partialorder %v3182, 0.0
        %vm3215 = vcmp.ge.f32.partialorder %v3183, 0.0
        %vm3216 = vcmp.ge.f32.partialorder %v3184, 0.0
        %v3217 = vmul.f32 %v3153, 0.01
        %v3218 = vmul.f32 %v3154, 0.01
        %v3219 = vmul.f32 %v3155, 0.01
        %v3220 = vmul.f32 %v3156, 0.01
        %v3221 = vmul.f32 %v3157, 0.01
        %v3222 = vmul.f32 %v3158, 0.01
        %v3223 = vmul.f32 %v3159, 0.01
        %v3224 = vmul.f32 %v3160, 0.01
        %v3225 = vmul.f32 %v3161, 0.01
        %v3226 = vmul.f32 %v3162, 0.01
        %v3227 = vmul.f32 %v3163, 0.01
        %v3228 = vmul.f32 %v3164, 0.01
        %v3229 = vmul.f32 %v3165, 0.01
        %v3230 = vmul.f32 %v3166, 0.01
        %v3231 = vmul.f32 %v3167, 0.01
        %v3232 = vmul.f32 %v3168, 0.01
        %v3233 = vmul.f32 %v3169, 0.01
        %v3234 = vmul.f32 %v3170, 0.01
        %v3235 = vmul.f32 %v3171, 0.01
        %v3236 = vmul.f32 %v3172, 0.01
        %v3237 = vmul.f32 %v3173, 0.01
        %v3238 = vmul.f32 %v3174, 0.01
        %v3239 = vmul.f32 %v3175, 0.01
        %v3240 = vmul.f32 %v3176, 0.01
        %v3241 = vmul.f32 %v3177, 0.01
        %v3242 = vmul.f32 %v3178, 0.01
        %v3243 = vmul.f32 %v3179, 0.01
        %v3244 = vmul.f32 %v3180, 0.01
        %v3245 = vmul.f32 %v3181, 0.01
        %v3246 = vmul.f32 %v3182, 0.01
        %v3247 = vmul.f32 %v3183, 0.01
        %v3248 = vmul.f32 %v3184, 0.01
        %v3249 = vsel %vm3185, %v3153, %v3217
        %v3250 = vsel %vm3186, %v3154, %v3218
        %v3251 = vsel %vm3187, %v3155, %v3219
        %v3252 = vsel %vm3188, %v3156, %v3220
        %v3253 = vsel %vm3189, %v3157, %v3221
        %v3254 = vsel %vm3190, %v3158, %v3222
        %v3255 = vsel %vm3191, %v3159, %v3223
        %v3256 = vsel %vm3192, %v3160, %v3224
        %v3257 = vsel %vm3193, %v3161, %v3225
        %v3258 = vsel %vm3194, %v3162, %v3226
        %v3259 = vsel %vm3195, %v3163, %v3227
        %v3260 = vsel %vm3196, %v3164, %v3228
        %v3261 = vsel %vm3197, %v3165, %v3229
        %v3262 = vsel %vm3198, %v3166, %v3230
        %v3263 = vsel %vm3199, %v3167, %v3231
        %v3264 = vsel %vm3200, %v3168, %v3232
        %v3265 = vsel %vm3201, %v3169, %v3233
        %v3266 = vsel %vm3202, %v3170, %v3234
        %v3267 = vsel %vm3203, %v3171, %v3235
        %v3268 = vsel %vm3204, %v3172, %v3236
        %v3269 = vsel %vm3205, %v3173, %v3237
        %v3270 = vsel %vm3206, %v3174, %v3238
        %v3271 = vsel %vm3207, %v3175, %v3239
        %v3272 = vsel %vm3208, %v3176, %v3240
        %v3273 = vsel %vm3209, %v3177, %v3241
        %v3274 = vsel %vm3210, %v3178, %v3242
        %v3275 = vsel %vm3211, %v3179, %v3243
        %v3276 = vsel %vm3212, %v3180, %v3244
        %v3277 = vsel %vm3213, %v3181, %v3245
        %v3278 = vsel %vm3214, %v3182, %v3246
        %v3279 = vsel %vm3215, %v3183, %v3247
        %v3280 = vsel %vm3216, %v3184, %v3248
        %vm3281 = vcmask 97280
        %3282 = vst.msk [vmem:[#allocation3] sm:$0xff] %vm3281, 0.0
        %3283 = vst.msk [vmem:[#allocation3 + $0x8] sm:$0xff] %vm3281, 0.0
        %vm3284 = vcmask 91136
        %3285 = vst.msk [vmem:[#allocation3 + $0x10] sm:$0x3] %vm3284, 0.0
        %3286 = vst.msk [vmem:[#allocation3 + $0x18] sm:$0xff] %vm3281, 0.0
        %3287 = vst.msk [vmem:[#allocation3 + $0x20] sm:$0xff] %vm3281, 0.0
        %3288 = vst.msk [vmem:[#allocation3 + $0x28] sm:$0x3] %vm3284, 0.0
        %3289 = vst.msk [vmem:[#allocation3 + $0x30] sm:$0xff] %vm3281, 0.0
        %3290 = vst.msk [vmem:[#allocation3 + $0x38] sm:$0xff] %vm3281, 0.0
        %3291 = vst.msk [vmem:[#allocation3 + $0x40] sm:$0x3] %vm3284, 0.0
        %3292 = vst.msk [vmem:[#allocation3 + $0x48] sm:$0xff] %vm3281, 0.0
        %3293 = vst.msk [vmem:[#allocation3 + $0x50] sm:$0xff] %vm3281, 0.0
        %3294 = vst.msk [vmem:[#allocation3 + $0x58] sm:$0x3] %vm3284, 0.0
        %3295 = vst.msk [vmem:[#allocation3 + $0x60] sm:$0xff] %vm3281, 0.0
        %3296 = vst.msk [vmem:[#allocation3 + $0x68] sm:$0xff] %vm3281, 0.0
        %3297 = vst.msk [vmem:[#allocation3 + $0x70] sm:$0x3] %vm3284, 0.0
        %3298 = vst.msk [vmem:[#allocation3 + $0x78] sm:$0xff] %vm3281, 0.0
        %3299 = vst.msk [vmem:[#allocation3 + $0x80] sm:$0xff] %vm3281, 0.0
        %3300 = vst.msk [vmem:[#allocation3 + $0x88] sm:$0x3] %vm3284, 0.0
        %3301 = vst.msk [vmem:[#allocation3 + $0x90] sm:$0xff] %vm3281, 0.0
        %3302 = vst.msk [vmem:[#allocation3 + $0x98] sm:$0xff] %vm3281, 0.0
        %3303 = vst.msk [vmem:[#allocation3 + $0xa0] sm:$0x3] %vm3284, 0.0
        %3304 = vst.msk [vmem:[#allocation3 + $0xa8] sm:$0xff] %vm3281, 0.0
        %3305 = vst.msk [vmem:[#allocation3 + $0xb0] sm:$0xff] %vm3281, 0.0
        %3306 = vst.msk [vmem:[#allocation3 + $0xb8] sm:$0x3] %vm3284, 0.0
        %3307 = vst.msk [vmem:[#allocation3 + $0xc0] sm:$0xff] %vm3281, 0.0
        %3308 = vst.msk [vmem:[#allocation3 + $0xc8] sm:$0xff] %vm3281, 0.0
        %3309 = vst.msk [vmem:[#allocation3 + $0xd0] sm:$0x3] %vm3284, 0.0
        %3310 = vst.msk [vmem:[#allocation3 + $0xd8] sm:$0xff] %vm3281, 0.0
        %3311 = vst.msk [vmem:[#allocation3 + $0xe0] sm:$0xff] %vm3281, 0.0
        %3312 = vst.msk [vmem:[#allocation3 + $0xe8] sm:$0x3] %vm3284, 0.0
        %3313 = vst.msk [vmem:[#allocation3 + $0xf0] sm:$0xff] %vm3281, 0.0
        %3314 = vst.msk [vmem:[#allocation3 + $0xf8] sm:$0xff] %vm3281, 0.0
        %3315 = vst.msk [vmem:[#allocation3 + $0x100] sm:$0x3] %vm3284, 0.0
        %3316 = vst.msk [vmem:[#allocation3 + $0x108] sm:$0xff] %vm3281, 0.0
        %3317 = vst.msk [vmem:[#allocation3 + $0x110] sm:$0xff] %vm3281, 0.0
        %3318 = vst.msk [vmem:[#allocation3 + $0x118] sm:$0x3] %vm3284, 0.0
        %3319 = vst.msk [vmem:[#allocation3 + $0x120] sm:$0xff] %vm3281, 0.0
        %3320 = vst.msk [vmem:[#allocation3 + $0x128] sm:$0xff] %vm3281, 0.0
        %3321 = vst.msk [vmem:[#allocation3 + $0x130] sm:$0x3] %vm3284, 0.0
        %3322 = vst.msk [vmem:[#allocation3 + $0x138] sm:$0xff] %vm3281, 0.0
        %3323 = vst.msk [vmem:[#allocation3 + $0x140] sm:$0xff] %vm3281, 0.0
        %3324 = vst.msk [vmem:[#allocation3 + $0x148] sm:$0x3] %vm3284, 0.0
        %3325 = vst.msk [vmem:[#allocation3 + $0x150] sm:$0xff] %vm3281, 0.0
        %3326 = vst.msk [vmem:[#allocation3 + $0x158] sm:$0xff] %vm3281, 0.0
        %3327 = vst.msk [vmem:[#allocation3 + $0x160] sm:$0x3] %vm3284, 0.0
        %3328 = vst.msk [vmem:[#allocation3 + $0x168] sm:$0xff] %vm3281, 0.0
        %3329 = vst.msk [vmem:[#allocation3 + $0x170] sm:$0xff] %vm3281, 0.0
        %3330 = vst.msk [vmem:[#allocation3 + $0x178] sm:$0x3] %vm3284, 0.0
        %3331 = vst.msk [vmem:[#allocation3 + $0x180] sm:$0xff] %vm3281, 0.0
        %3332 = vst.msk [vmem:[#allocation3 + $0x188] sm:$0xff] %vm3281, 0.0
        %3333 = vst.msk [vmem:[#allocation3 + $0x190] sm:$0x3] %vm3284, 0.0
        %3334 = vst.msk [vmem:[#allocation3 + $0x198] sm:$0xff] %vm3281, 0.0
        %3335 = vst.msk [vmem:[#allocation3 + $0x1a0] sm:$0xff] %vm3281, 0.0
        %3336 = vst.msk [vmem:[#allocation3 + $0x1a8] sm:$0x3] %vm3284, 0.0
        %s3337 = scalar_lea.vmem [#allocation3], 24
        %3338 = vst.msk [vmem:[%s3337 + $0x1] sm:$0xff] %vm3281, %v3249
        %3339 = vst.msk [vmem:[%s3337 + $0x9] sm:$0xff] %vm3281, %v3250
        %3340 = vst.msk [vmem:[%s3337 + $0x19] sm:$0xff] %vm3281, %v3251
        %3341 = vst.msk [vmem:[%s3337 + $0x21] sm:$0xff] %vm3281, %v3252
        %3342 = vst.msk [vmem:[%s3337 + $0x31] sm:$0xff] %vm3281, %v3253
        %3343 = vst.msk [vmem:[%s3337 + $0x39] sm:$0xff] %vm3281, %v3254
        %3344 = vst.msk [vmem:[%s3337 + $0x49] sm:$0xff] %vm3281, %v3255
        %3345 = vst.msk [vmem:[%s3337 + $0x51] sm:$0xff] %vm3281, %v3256
        %3346 = vst.msk [vmem:[%s3337 + $0x61] sm:$0xff] %vm3281, %v3257
        %3347 = vst.msk [vmem:[%s3337 + $0x69] sm:$0xff] %vm3281, %v3258
        %3348 = vst.msk [vmem:[%s3337 + $0x79] sm:$0xff] %vm3281, %v3259
        %3349 = vst.msk [vmem:[%s3337 + $0x81] sm:$0xff] %vm3281, %v3260
        %3350 = vst.msk [vmem:[%s3337 + $0x91] sm:$0xff] %vm3281, %v3261
        %3351 = vst.msk [vmem:[%s3337 + $0x99] sm:$0xff] %vm3281, %v3262
        %3352 = vst.msk [vmem:[%s3337 + $0xa9] sm:$0xff] %vm3281, %v3263
        %3353 = vst.msk [vmem:[%s3337 + $0xb1] sm:$0xff] %vm3281, %v3264
        %3354 = vst.msk [vmem:[%s3337 + $0xc1] sm:$0xff] %vm3281, %v3265
        %3355 = vst.msk [vmem:[%s3337 + $0xc9] sm:$0xff] %vm3281, %v3266
        %3356 = vst.msk [vmem:[%s3337 + $0xd9] sm:$0xff] %vm3281, %v3267
        %3357 = vst.msk [vmem:[%s3337 + $0xe1] sm:$0xff] %vm3281, %v3268
        %3358 = vst.msk [vmem:[%s3337 + $0xf1] sm:$0xff] %vm3281, %v3269
        %3359 = vst.msk [vmem:[%s3337 + $0xf9] sm:$0xff] %vm3281, %v3270
        %3360 = vst.msk [vmem:[%s3337 + $0x109] sm:$0xff] %vm3281, %v3271
        %3361 = vst.msk [vmem:[%s3337 + $0x111] sm:$0xff] %vm3281, %v3272
        %3362 = vst.msk [vmem:[%s3337 + $0x121] sm:$0xff] %vm3281, %v3273
        %3363 = vst.msk [vmem:[%s3337 + $0x129] sm:$0xff] %vm3281, %v3274
        %3364 = vst.msk [vmem:[%s3337 + $0x139] sm:$0xff] %vm3281, %v3275
        %3365 = vst.msk [vmem:[%s3337 + $0x141] sm:$0xff] %vm3281, %v3276
        %3366 = vst.msk [vmem:[%s3337 + $0x151] sm:$0xff] %vm3281, %v3277
        %3367 = vst.msk [vmem:[%s3337 + $0x159] sm:$0xff] %vm3281, %v3278
        %3368 = vst.msk [vmem:[%s3337 + $0x169] sm:$0xff] %vm3281, %v3279
        %3369 = vst.msk [vmem:[%s3337 + $0x171] sm:$0xff] %vm3281, %v3280
        %v3370 = vld [vmem:[#allocation3] sm:$0xff]
        %v3371 = vld [vmem:[#allocation3 + $0x8] sm:$0xff]
        %v3372 = vld [vmem:[#allocation3 + $0x18] sm:$0xff]
        %v3373 = vld [vmem:[#allocation3 + $0x20] sm:$0xff]
        %v3374 = vld [vmem:[#allocation3 + $0x30] sm:$0xff]
        %v3375 = vld [vmem:[#allocation3 + $0x38] sm:$0xff]
        %v3376 = vld [vmem:[#allocation3 + $0x48] sm:$0xff]
        %v3377 = vld [vmem:[#allocation3 + $0x50] sm:$0xff]
        %v3378 = vld [vmem:[#allocation3 + $0x60] sm:$0xff]
        %v3379 = vld [vmem:[#allocation3 + $0x68] sm:$0xff]
        %v3380 = vld [vmem:[#allocation3 + $0x78] sm:$0xff]
        %v3381 = vld [vmem:[#allocation3 + $0x80] sm:$0xff]
        %v3382 = vld [vmem:[#allocation3 + $0x90] sm:$0xff]
        %v3383 = vld [vmem:[#allocation3 + $0x98] sm:$0xff]
        %v3384 = vld [vmem:[#allocation3 + $0xa8] sm:$0xff]
        %v3385 = vld [vmem:[#allocation3 + $0xb0] sm:$0xff]
        %v3386 = vld [vmem:[#allocation3 + $0xc0] sm:$0xff]
        %v3387 = vld [vmem:[#allocation3 + $0xc8] sm:$0xff]
        %v3388 = vld [vmem:[#allocation3 + $0xd8] sm:$0xff]
        %v3389 = vld [vmem:[#allocation3 + $0xe0] sm:$0xff]
        %v3390 = vld [vmem:[#allocation3 + $0xf0] sm:$0xff]
        %v3391 = vld [vmem:[#allocation3 + $0xf8] sm:$0xff]
        %v3392 = vld [vmem:[#allocation3 + $0x108] sm:$0xff]
        %v3393 = vld [vmem:[#allocation3 + $0x110] sm:$0xff]
        %v3394 = vld [vmem:[#allocation3 + $0x120] sm:$0xff]
        %v3395 = vld [vmem:[#allocation3 + $0x128] sm:$0xff]
        %v3396 = vld [vmem:[#allocation3 + $0x138] sm:$0xff]
        %v3397 = vld [vmem:[#allocation3 + $0x140] sm:$0xff]
        %v3398 = vld [vmem:[#allocation3 + $0x150] sm:$0xff]
        %v3399 = vld [vmem:[#allocation3 + $0x158] sm:$0xff]
        %v3400 = vld [vmem:[#allocation3 + $0x168] sm:$0xff]
        %v3401 = vld [vmem:[#allocation3 + $0x170] sm:$0xff]
        %v3402 = vpack.c.bf16 %v3371, %v3370
        %v3403 = vpack.c.bf16 %v3373, %v3372
        %v3404 = vpack.c.bf16 %v3375, %v3374
        %v3405 = vpack.c.bf16 %v3377, %v3376
        %v3406 = vpack.c.bf16 %v3379, %v3378
        %v3407 = vpack.c.bf16 %v3381, %v3380
        %v3408 = vpack.c.bf16 %v3383, %v3382
        %v3409 = vpack.c.bf16 %v3385, %v3384
        %v3410 = vpack.c.bf16 %v3387, %v3386
        %v3411 = vpack.c.bf16 %v3389, %v3388
        %v3412 = vpack.c.bf16 %v3391, %v3390
        %v3413 = vpack.c.bf16 %v3393, %v3392
        %v3414 = vpack.c.bf16 %v3395, %v3394
        %v3415 = vpack.c.bf16 %v3397, %v3396
        %v3416 = vpack.c.bf16 %v3399, %v3398
        %v3417 = vpack.c.bf16 %v3401, %v3400
        %v3418 = vld [vmem:[%s3] sm:$0xf]
        %v3419 = vld [vmem:[%s3 + $0x4] sm:$0x3]
        %v3420 = vld [vmem:[#allocation3 + $0x1] sm:$0xff]
        %v3421 = vld [vmem:[#allocation3 + $0x9] sm:$0xff]
        %v3422 = vld [vmem:[#allocation3 + $0x19] sm:$0xff]
        %v3423 = vld [vmem:[#allocation3 + $0x21] sm:$0xff]
        %v3424 = vld [vmem:[#allocation3 + $0x31] sm:$0xff]
        %v3425 = vld [vmem:[#allocation3 + $0x39] sm:$0xff]
        %v3426 = vld [vmem:[#allocation3 + $0x49] sm:$0xff]
        %v3427 = vld [vmem:[#allocation3 + $0x51] sm:$0xff]
        %v3428 = vld [vmem:[#allocation3 + $0x61] sm:$0xff]
        %v3429 = vld [vmem:[#allocation3 + $0x69] sm:$0xff]
        %v3430 = vld [vmem:[#allocation3 + $0x79] sm:$0xff]
        %v3431 = vld [vmem:[#allocation3 + $0x81] sm:$0xff]
        %v3432 = vld [vmem:[#allocation3 + $0x91] sm:$0xff]
        %v3433 = vld [vmem:[#allocation3 + $0x99] sm:$0xff]
        %v3434 = vld [vmem:[#allocation3 + $0xa9] sm:$0xff]
        %v3435 = vld [vmem:[#allocation3 + $0xb1] sm:$0xff]
        %v3436 = vld [vmem:[#allocation3 + $0xc1] sm:$0xff]
        %v3437 = vld [vmem:[#allocation3 + $0xc9] sm:$0xff]
        %v3438 = vld [vmem:[#allocation3 + $0xd9] sm:$0xff]
        %v3439 = vld [vmem:[#allocation3 + $0xe1] sm:$0xff]
        %v3440 = vld [vmem:[#allocation3 + $0xf1] sm:$0xff]
        %v3441 = vld [vmem:[#allocation3 + $0xf9] sm:$0xff]
        %v3442 = vld [vmem:[#allocation3 + $0x109] sm:$0xff]
        %v3443 = vld [vmem:[#allocation3 + $0x111] sm:$0xff]
        %v3444 = vld [vmem:[#allocation3 + $0x121] sm:$0xff]
        %v3445 = vld [vmem:[#allocation3 + $0x129] sm:$0xff]
        %v3446 = vld [vmem:[#allocation3 + $0x139] sm:$0xff]
        %v3447 = vld [vmem:[#allocation3 + $0x141] sm:$0xff]
        %v3448 = vld [vmem:[#allocation3 + $0x151] sm:$0xff]
        %v3449 = vld [vmem:[#allocation3 + $0x159] sm:$0xff]
        %v3450 = vld [vmem:[#allocation3 + $0x169] sm:$0xff]
        %v3451 = vld [vmem:[#allocation3 + $0x171] sm:$0xff]
        %v3452 = vpack.c.bf16 %v3421, %v3420
        %v3453 = vpack.c.bf16 %v3423, %v3422
        %v3454 = vpack.c.bf16 %v3425, %v3424
        %v3455 = vpack.c.bf16 %v3427, %v3426
        %v3456 = vpack.c.bf16 %v3429, %v3428
        %v3457 = vpack.c.bf16 %v3431, %v3430
        %v3458 = vpack.c.bf16 %v3433, %v3432
        %v3459 = vpack.c.bf16 %v3435, %v3434
        %v3460 = vpack.c.bf16 %v3437, %v3436
        %v3461 = vpack.c.bf16 %v3439, %v3438
        %v3462 = vpack.c.bf16 %v3441, %v3440
        %v3463 = vpack.c.bf16 %v3443, %v3442
        %v3464 = vpack.c.bf16 %v3445, %v3444
        %v3465 = vpack.c.bf16 %v3447, %v3446
        %v3466 = vpack.c.bf16 %v3449, %v3448
        %v3467 = vpack.c.bf16 %v3451, %v3450
        %s3468 = scalar_lea.vmem %s3, 8
        %v3469 = vld [vmem:[%s3468] sm:$0xf]
        %v3470 = vld [vmem:[%s3468 + $0x4] sm:$0x3]
        %v3473 = vunpack.c.l.b16 %v3469
        %v3474 = vunpack.c.l.b16 %v3470
        %v3475 = vpack.c.b16 %v3474, %v3473
        %v3477 = vsel %vm3281, %v3452, 0
        %v3480 = vsel %vm3281, %v3453, 0
        %v3483 = vsel %vm3281, %v3454, 0
        %v3486 = vsel %vm3281, %v3455, 0
        %v3489 = vsel %vm3281, %v3456, 0
        %v3492 = vsel %vm3281, %v3457, 0
        %v3495 = vsel %vm3281, %v3458, 0
        %v3498 = vsel %vm3281, %v3459, 0
        %v3501 = vsel %vm3281, %v3460, 0
        %v3504 = vsel %vm3281, %v3461, 0
        %v3507 = vsel %vm3281, %v3462, 0
        %v3510 = vsel %vm3281, %v3463, 0
        %v3513 = vsel %vm3281, %v3464, 0
        %v3516 = vsel %vm3281, %v3465, 0
        %v3519 = vsel %vm3281, %v3466, 0
        %v3522 = vsel %vm3281, %v3467, 0
        %vm3524 = vcmask 1045504
        %v3526 = vsel %vm3524, %v3475, 0
        %3528 = vmatprep.subr.bf16.mxu0 0
        %3529 = vmatpush1.bf16.msra.mxu0 %v3526
        %3530 = vmatprep.subr.bf16.mxu0 0
        %3531 = vmatpush1.bf16.msra.mxu0 0
        %3532 = vmatprep.subr.bf16.mxu0 0
        %3533 = vmatpush1.bf16.msra.mxu0 0
        %3534 = vmatprep.subr.bf16.mxu0 0
        %3535 = vmatpush1.bf16.msra.mxu0 0
        %3536 = vmatprep.subr.bf16.mxu0 0
        %3537 = vmatpush1.bf16.msra.mxu0 0
        %3538 = vmatprep.subr.bf16.mxu0 0
        %3539 = vmatpush1.bf16.msra.mxu0 0
        %3540 = vmatprep.subr.bf16.mxu0 0
        %3541 = vmatpush1.bf16.msra.mxu0 0
        %3542 = vmatprep.subr.bf16.mxu0 0
        %3543 = vmatpush1.bf16.msra.mxu0 0
        %3544 = vmatprep.subr.bf16.mxu0 0
        %3545 = vmatpush1.bf16.msra.mxu0 0
        %3546 = vmatprep.subr.bf16.mxu0 0
        %3547 = vmatpush1.bf16.msra.mxu0 0
        %3548 = vmatprep.subr.bf16.mxu0 0
        %3549 = vmatpush1.bf16.msra.mxu0 0
        %3550 = vmatprep.subr.bf16.mxu0 0
        %3551 = vmatpush1.bf16.msra.mxu0 0
        %3552 = vmatprep.subr.bf16.mxu0 0
        %3553 = vmatpush1.bf16.msra.mxu0 0
        %3554 = vmatprep.subr.bf16.mxu0 0
        %3555 = vmatpush1.bf16.msra.mxu0 0
        %3556 = vmatprep.subr.bf16.mxu0 0
        %3557 = vmatpush1.bf16.msra.mxu0 0
        %3558 = vmatprep.subr.bf16.mxu0 0
        %3559 = vmatpush1.bf16.msra.mxu0 0
        %3560 = vmatprep.mubr.bf16.mxu0 0
        %3561 = vmatmul.mubr.bf16.gmra.mrb[0].mxu0 %v3477
        %v3562 = vpop.f32.mrb[0].mxu0
        %v3563 = vadd.f32 0.0, %v3562
        %v3564 = vpop.f32.mrb[0].mxu0
        %v3565 = vpop.f32.mrb[0].mxu0
        %v3566 = vadd.f32 0.0, %v3565
        %v3567 = vpop.f32.mrb[0].mxu0
        %3568 = vmatprep.mubr.bf16.mxu0 0
        %3569 = vmatmul.mubr.bf16.gmra.mrb[0].mxu0 %v3480
        %v3570 = vpop.f32.mrb[0].mxu0
        %v3571 = vadd.f32 0.0, %v3570
        %v3572 = vpop.f32.mrb[0].mxu0
        %v3573 = vpop.f32.mrb[0].mxu0
        %v3574 = vadd.f32 0.0, %v3573
        %v3575 = vpop.f32.mrb[0].mxu0
        %3576 = vmatprep.mubr.bf16.mxu0 0
        %3577 = vmatmul.mubr.bf16.gmra.mrb[0].mxu0 %v3483
        %v3578 = vpop.f32.mrb[0].mxu0
        %v3579 = vadd.f32 0.0, %v3578
        %v3580 = vpop.f32.mrb[0].mxu0
        %v3581 = vpop.f32.mrb[0].mxu0
        %v3582 = vadd.f32 0.0, %v3581
        %v3583 = vpop.f32.mrb[0].mxu0
        %3584 = vmatprep.mubr.bf16.mxu0 0
        %3585 = vmatmul.mubr.bf16.gmra.mrb[0].mxu0 %v3486
        %v3586 = vpop.f32.mrb[0].mxu0
        %v3587 = vadd.f32 0.0, %v3586
        %v3588 = vpop.f32.mrb[0].mxu0
        %v3589 = vpop.f32.mrb[0].mxu0
        %v3590 = vadd.f32 0.0, %v3589
        %v3591 = vpop.f32.mrb[0].mxu0
        %3592 = vmatprep.mubr.bf16.mxu0 0
        %3593 = vmatmul.mubr.bf16.gmra.mrb[0].mxu0 %v3489
        %v3594 = vpop.f32.mrb[0].mxu0
        %v3595 = vadd.f32 0.0, %v3594
        %v3596 = vpop.f32.mrb[0].mxu0
        %v3597 = vpop.f32.mrb[0].mxu0
        %v3598 = vadd.f32 0.0, %v3597
        %v3599 = vpop.f32.mrb[0].mxu0
        %3600 = vmatprep.mubr.bf16.mxu0 0
        %3601 = vmatmul.mubr.bf16.gmra.mrb[0].mxu0 %v3492
        %v3602 = vpop.f32.mrb[0].mxu0
        %v3603 = vadd.f32 0.0, %v3602
        %v3604 = vpop.f32.mrb[0].mxu0
        %v3605 = vpop.f32.mrb[0].mxu0
        %v3606 = vadd.f32 0.0, %v3605
        %v3607 = vpop.f32.mrb[0].mxu0
        %3608 = vmatprep.mubr.bf16.mxu0 0
        %3609 = vmatmul.mubr.bf16.gmra.mrb[0].mxu0 %v3495
        %v3610 = vpop.f32.mrb[0].mxu0
        %v3611 = vadd.f32 0.0, %v3610
        %v3612 = vpop.f32.mrb[0].mxu0
        %v3613 = vpop.f32.mrb[0].mxu0
        %v3614 = vadd.f32 0.0, %v3613
        %v3615 = vpop.f32.mrb[0].mxu0
        %3616 = vmatprep.mubr.bf16.mxu0 0
        %3617 = vmatmul.mubr.bf16.gmra.mrb[0].mxu0 %v3498
        %v3618 = vpop.f32.mrb[0].mxu0
        %v3619 = vadd.f32 0.0, %v3618
        %v3620 = vpop.f32.mrb[0].mxu0
        %v3621 = vpop.f32.mrb[0].mxu0
        %v3622 = vadd.f32 0.0, %v3621
        %v3623 = vpop.f32.mrb[0].mxu0
        %3624 = vmatprep.mubr.bf16.mxu0 0
        %3625 = vmatmul.mubr.bf16.gmra.mrb[0].mxu0 %v3501
        %v3626 = vpop.f32.mrb[0].mxu0
        %v3627 = vadd.f32 0.0, %v3626
        %v3628 = vpop.f32.mrb[0].mxu0
        %v3629 = vpop.f32.mrb[0].mxu0
        %v3630 = vadd.f32 0.0, %v3629
        %v3631 = vpop.f32.mrb[0].mxu0
        %3632 = vmatprep.mubr.bf16.mxu0 0
        %3633 = vmatmul.mubr.bf16.gmra.mrb[0].mxu0 %v3504
        %v3634 = vpop.f32.mrb[0].mxu0
        %v3635 = vadd.f32 0.0, %v3634
        %v3636 = vpop.f32.mrb[0].mxu0
        %v3637 = vpop.f32.mrb[0].mxu0
        %v3638 = vadd.f32 0.0, %v3637
        %v3639 = vpop.f32.mrb[0].mxu0
        %3640 = vmatprep.mubr.bf16.mxu0 0
        %3641 = vmatmul.mubr.bf16.gmra.mrb[0].mxu0 %v3507
        %v3642 = vpop.f32.mrb[0].mxu0
        %v3643 = vadd.f32 0.0, %v3642
        %v3644 = vpop.f32.mrb[0].mxu0
        %v3645 = vpop.f32.mrb[0].mxu0
        %v3646 = vadd.f32 0.0, %v3645
        %v3647 = vpop.f32.mrb[0].mxu0
        %3648 = vmatprep.mubr.bf16.mxu0 0
        %3649 = vmatmul.mubr.bf16.gmra.mrb[0].mxu0 %v3510
        %v3650 = vpop.f32.mrb[0].mxu0
        %v3651 = vadd.f32 0.0, %v3650
        %v3652 = vpop.f32.mrb[0].mxu0
        %v3653 = vpop.f32.mrb[0].mxu0
        %v3654 = vadd.f32 0.0, %v3653
        %v3655 = vpop.f32.mrb[0].mxu0
        %3656 = vmatprep.mubr.bf16.mxu0 0
        %3657 = vmatmul.mubr.bf16.gmra.mrb[0].mxu0 %v3513
        %v3658 = vpop.f32.mrb[0].mxu0
        %v3659 = vadd.f32 0.0, %v3658
        %v3660 = vpop.f32.mrb[0].mxu0
        %v3661 = vpop.f32.mrb[0].mxu0
        %v3662 = vadd.f32 0.0, %v3661
        %v3663 = vpop.f32.mrb[0].mxu0
        %3664 = vmatprep.mubr.bf16.mxu0 0
        %3665 = vmatmul.mubr.bf16.gmra.mrb[0].mxu0 %v3516
        %v3666 = vpop.f32.mrb[0].mxu0
        %v3667 = vadd.f32 0.0, %v3666
        %v3668 = vpop.f32.mrb[0].mxu0
        %v3669 = vpop.f32.mrb[0].mxu0
        %v3670 = vadd.f32 0.0, %v3669
        %v3671 = vpop.f32.mrb[0].mxu0
        %3672 = vmatprep.mubr.bf16.mxu0 0
        %3673 = vmatmul.mubr.bf16.gmra.mrb[0].mxu0 %v3519
        %v3674 = vpop.f32.mrb[0].mxu0
        %v3675 = vadd.f32 0.0, %v3674
        %v3676 = vpop.f32.mrb[0].mxu0
        %v3677 = vpop.f32.mrb[0].mxu0
        %v3678 = vadd.f32 0.0, %v3677
        %v3679 = vpop.f32.mrb[0].mxu0
        %3680 = vmatprep.mubr.bf16.mxu0 0
        %3681 = vmatmul.mubr.bf16.gmra.mrb[0].mxu0 %v3522
        %v3682 = vpop.f32.mrb[0].mxu0
        %v3683 = vadd.f32 0.0, %v3682
        %v3684 = vpop.f32.mrb[0].mxu0
        %v3685 = vpop.f32.mrb[0].mxu0
        %v3686 = vadd.f32 0.0, %v3685
        %v3687 = vpop.f32.mrb[0].mxu0
        %3688 = vdwg.mxu0
        %v3691 = vunpack.c.l.b16 %v3418
        %v3692 = vunpack.c.l.b16 %v3419
        %v3693 = vpack.c.b16 %v3692, %v3691
        %v3695 = vsel %vm3281, %v3402, 0
        %v3698 = vsel %vm3281, %v3403, 0
        %v3701 = vsel %vm3281, %v3404, 0
        %v3704 = vsel %vm3281, %v3405, 0
        %v3707 = vsel %vm3281, %v3406, 0
        %v3710 = vsel %vm3281, %v3407, 0
        %v3713 = vsel %vm3281, %v3408, 0
        %v3716 = vsel %vm3281, %v3409, 0
        %v3719 = vsel %vm3281, %v3410, 0
        %v3722 = vsel %vm3281, %v3411, 0
        %v3725 = vsel %vm3281, %v3412, 0
        %v3728 = vsel %vm3281, %v3413, 0
        %v3731 = vsel %vm3281, %v3414, 0
        %v3734 = vsel %vm3281, %v3415, 0
        %v3737 = vsel %vm3281, %v3416, 0
        %v3740 = vsel %vm3281, %v3417, 0
        %v3743 = vsel %vm3524, %v3693, 0
        %3745 = vmatprep.subr.bf16.mxu0 0
        %3746 = vmatpush1.bf16.msra.mxu0 %v3743
        %3747 = vmatprep.subr.bf16.mxu0 0
        %3748 = vmatpush1.bf16.msra.mxu0 0
        %3749 = vmatprep.subr.bf16.mxu0 0
        %3750 = vmatpush1.bf16.msra.mxu0 0
        %3751 = vmatprep.subr.bf16.mxu0 0
        %3752 = vmatpush1.bf16.msra.mxu0 0
        %3753 = vmatprep.subr.bf16.mxu0 0
        %3754 = vmatpush1.bf16.msra.mxu0 0
        %3755 = vmatprep.subr.bf16.mxu0 0
        %3756 = vmatpush1.bf16.msra.mxu0 0
        %3757 = vmatprep.subr.bf16.mxu0 0
        %3758 = vmatpush1.bf16.msra.mxu0 0
        %3759 = vmatprep.subr.bf16.mxu0 0
        %3760 = vmatpush1.bf16.msra.mxu0 0
        %3761 = vmatprep.subr.bf16.mxu0 0
        %3762 = vmatpush1.bf16.msra.mxu0 0
        %3763 = vmatprep.subr.bf16.mxu0 0
        %3764 = vmatpush1.bf16.msra.mxu0 0
        %3765 = vmatprep.subr.bf16.mxu0 0
        %3766 = vmatpush1.bf16.msra.mxu0 0
        %3767 = vmatprep.subr.bf16.mxu0 0
        %3768 = vmatpush1.bf16.msra.mxu0 0
        %3769 = vmatprep.subr.bf16.mxu0 0
        %3770 = vmatpush1.bf16.msra.mxu0 0
        %3771 = vmatprep.subr.bf16.mxu0 0
        %3772 = vmatpush1.bf16.msra.mxu0 0
        %3773 = vmatprep.subr.bf16.mxu0 0
        %3774 = vmatpush1.bf16.msra.mxu0 0
        %3775 = vmatprep.subr.bf16.mxu0 0
        %3776 = vmatpush1.bf16.msra.mxu0 0
        %3777 = vmatprep.mubr.bf16.mxu0 0
        %3778 = vmatmul.mubr.bf16.gmra.mrb[0].mxu0 %v3695
        %v3779 = vpop.f32.mrb[0].mxu0
        %v3780 = vadd.f32 %v3563, %v3779
        %v3781 = vpop.f32.mrb[0].mxu0
        %v3782 = vpop.f32.mrb[0].mxu0
        %v3783 = vadd.f32 %v3566, %v3782
        %v3784 = vpop.f32.mrb[0].mxu0
        %3785 = vmatprep.mubr.bf16.mxu0 0
        %3786 = vmatmul.mubr.bf16.gmra.mrb[0].mxu0 %v3698
        %v3787 = vpop.f32.mrb[0].mxu0
        %v3788 = vadd.f32 %v3571, %v3787
        %v3789 = vpop.f32.mrb[0].mxu0
        %v3790 = vpop.f32.mrb[0].mxu0
        %v3791 = vadd.f32 %v3574, %v3790
        %v3792 = vpop.f32.mrb[0].mxu0
        %3793 = vmatprep.mubr.bf16.mxu0 0
        %3794 = vmatmul.mubr.bf16.gmra.mrb[0].mxu0 %v3701
        %v3795 = vpop.f32.mrb[0].mxu0
        %v3796 = vadd.f32 %v3579, %v3795
        %v3797 = vpop.f32.mrb[0].mxu0
        %v3798 = vpop.f32.mrb[0].mxu0
        %v3799 = vadd.f32 %v3582, %v3798
        %v3800 = vpop.f32.mrb[0].mxu0
        %3801 = vmatprep.mubr.bf16.mxu0 0
        %3802 = vmatmul.mubr.bf16.gmra.mrb[0].mxu0 %v3704
        %v3803 = vpop.f32.mrb[0].mxu0
        %v3804 = vadd.f32 %v3587, %v3803
        %v3805 = vpop.f32.mrb[0].mxu0
        %v3806 = vpop.f32.mrb[0].mxu0
        %v3807 = vadd.f32 %v3590, %v3806
        %v3808 = vpop.f32.mrb[0].mxu0
        %3809 = vmatprep.mubr.bf16.mxu0 0
        %3810 = vmatmul.mubr.bf16.gmra.mrb[0].mxu0 %v3707
        %v3811 = vpop.f32.mrb[0].mxu0
        %v3812 = vadd.f32 %v3595, %v3811
        %v3813 = vpop.f32.mrb[0].mxu0
        %v3814 = vpop.f32.mrb[0].mxu0
        %v3815 = vadd.f32 %v3598, %v3814
        %v3816 = vpop.f32.mrb[0].mxu0
        %3817 = vmatprep.mubr.bf16.mxu0 0
        %3818 = vmatmul.mubr.bf16.gmra.mrb[0].mxu0 %v3710
        %v3819 = vpop.f32.mrb[0].mxu0
        %v3820 = vadd.f32 %v3603, %v3819
        %v3821 = vpop.f32.mrb[0].mxu0
        %v3822 = vpop.f32.mrb[0].mxu0
        %v3823 = vadd.f32 %v3606, %v3822
        %v3824 = vpop.f32.mrb[0].mxu0
        %3825 = vmatprep.mubr.bf16.mxu0 0
        %3826 = vmatmul.mubr.bf16.gmra.mrb[0].mxu0 %v3713
        %v3827 = vpop.f32.mrb[0].mxu0
        %v3828 = vadd.f32 %v3611, %v3827
        %v3829 = vpop.f32.mrb[0].mxu0
        %v3830 = vpop.f32.mrb[0].mxu0
        %v3831 = vadd.f32 %v3614, %v3830
        %v3832 = vpop.f32.mrb[0].mxu0
        %3833 = vmatprep.mubr.bf16.mxu0 0
        %3834 = vmatmul.mubr.bf16.gmra.mrb[0].mxu0 %v3716
        %v3835 = vpop.f32.mrb[0].mxu0
        %v3836 = vadd.f32 %v3619, %v3835
        %v3837 = vpop.f32.mrb[0].mxu0
        %v3838 = vpop.f32.mrb[0].mxu0
        %v3839 = vadd.f32 %v3622, %v3838
        %v3840 = vpop.f32.mrb[0].mxu0
        %3841 = vmatprep.mubr.bf16.mxu0 0
        %3842 = vmatmul.mubr.bf16.gmra.mrb[0].mxu0 %v3719
        %v3843 = vpop.f32.mrb[0].mxu0
        %v3844 = vadd.f32 %v3627, %v3843
        %v3845 = vpop.f32.mrb[0].mxu0
        %v3846 = vpop.f32.mrb[0].mxu0
        %v3847 = vadd.f32 %v3630, %v3846
        %v3848 = vpop.f32.mrb[0].mxu0
        %3849 = vmatprep.mubr.bf16.mxu0 0
        %3850 = vmatmul.mubr.bf16.gmra.mrb[0].mxu0 %v3722
        %v3851 = vpop.f32.mrb[0].mxu0
        %v3852 = vadd.f32 %v3635, %v3851
        %v3853 = vpop.f32.mrb[0].mxu0
        %v3854 = vpop.f32.mrb[0].mxu0
        %v3855 = vadd.f32 %v3638, %v3854
        %v3856 = vpop.f32.mrb[0].mxu0
        %3857 = vmatprep.mubr.bf16.mxu0 0
        %3858 = vmatmul.mubr.bf16.gmra.mrb[0].mxu0 %v3725
        %v3859 = vpop.f32.mrb[0].mxu0
        %v3860 = vadd.f32 %v3643, %v3859
        %v3861 = vpop.f32.mrb[0].mxu0
        %v3862 = vpop.f32.mrb[0].mxu0
        %v3863 = vadd.f32 %v3646, %v3862
        %v3864 = vpop.f32.mrb[0].mxu0
        %3865 = vmatprep.mubr.bf16.mxu0 0
        %3866 = vmatmul.mubr.bf16.gmra.mrb[0].mxu0 %v3728
        %v3867 = vpop.f32.mrb[0].mxu0
        %v3868 = vadd.f32 %v3651, %v3867
        %v3869 = vpop.f32.mrb[0].mxu0
        %v3870 = vpop.f32.mrb[0].mxu0
        %v3871 = vadd.f32 %v3654, %v3870
        %v3872 = vpop.f32.mrb[0].mxu0
        %3873 = vmatprep.mubr.bf16.mxu0 0
        %3874 = vmatmul.mubr.bf16.gmra.mrb[0].mxu0 %v3731
        %v3875 = vpop.f32.mrb[0].mxu0
        %v3876 = vadd.f32 %v3659, %v3875
        %v3877 = vpop.f32.mrb[0].mxu0
        %v3878 = vpop.f32.mrb[0].mxu0
        %v3879 = vadd.f32 %v3662, %v3878
        %v3880 = vpop.f32.mrb[0].mxu0
        %3881 = vmatprep.mubr.bf16.mxu0 0
        %3882 = vmatmul.mubr.bf16.gmra.mrb[0].mxu0 %v3734
        %v3883 = vpop.f32.mrb[0].mxu0
        %v3884 = vadd.f32 %v3667, %v3883
        %v3885 = vpop.f32.mrb[0].mxu0
        %v3886 = vpop.f32.mrb[0].mxu0
        %v3887 = vadd.f32 %v3670, %v3886
        %v3888 = vpop.f32.mrb[0].mxu0
        %3889 = vmatprep.mubr.bf16.mxu0 0
        %3890 = vmatmul.mubr.bf16.gmra.mrb[0].mxu0 %v3737
        %v3891 = vpop.f32.mrb[0].mxu0
        %v3892 = vadd.f32 %v3675, %v3891
        %v3893 = vpop.f32.mrb[0].mxu0
        %v3894 = vpop.f32.mrb[0].mxu0
        %v3895 = vadd.f32 %v3678, %v3894
        %v3896 = vpop.f32.mrb[0].mxu0
        %3897 = vmatprep.mubr.bf16.mxu0 0
        %3898 = vmatmul.mubr.bf16.gmra.mrb[0].mxu0 %v3740
        %v3899 = vpop.f32.mrb[0].mxu0
        %v3900 = vadd.f32 %v3683, %v3899
        %v3901 = vpop.f32.mrb[0].mxu0
        %v3902 = vpop.f32.mrb[0].mxu0
        %v3903 = vadd.f32 %v3686, %v3902
        %v3904 = vpop.f32.mrb[0].mxu0
        %3905 = vdwg.mxu0
        %v3906 = vld [vmem:[#allocation3 + $0x2] sm:$0xff]
        %v3907 = vld [vmem:[#allocation3 + $0xa] sm:$0xff]
        %v3908 = vld [vmem:[#allocation3 + $0x1a] sm:$0xff]
        %v3909 = vld [vmem:[#allocation3 + $0x22] sm:$0xff]
        %v3910 = vld [vmem:[#allocation3 + $0x32] sm:$0xff]
        %v3911 = vld [vmem:[#allocation3 + $0x3a] sm:$0xff]
        %v3912 = vld [vmem:[#allocation3 + $0x4a] sm:$0xff]
        %v3913 = vld [vmem:[#allocation3 + $0x52] sm:$0xff]
        %v3914 = vld [vmem:[#allocation3 + $0x62] sm:$0xff]
        %v3915 = vld [vmem:[#allocation3 + $0x6a] sm:$0xff]
        %v3916 = vld [vmem:[#allocation3 + $0x7a] sm:$0xff]
        %v3917 = vld [vmem:[#allocation3 + $0x82] sm:$0xff]
        %v3918 = vld [vmem:[#allocation3 + $0x92] sm:$0xff]
        %v3919 = vld [vmem:[#allocation3 + $0x9a] sm:$0xff]
        %v3920 = vld [vmem:[#allocation3 + $0xaa] sm:$0xff]
        %v3921 = vld [vmem:[#allocation3 + $0xb2] sm:$0xff]
        %v3922 = vld [vmem:[#allocation3 + $0xc2] sm:$0xff]
        %v3923 = vld [vmem:[#allocation3 + $0xca] sm:$0xff]
        %v3924 = vld [vmem:[#allocation3 + $0xda] sm:$0xff]
        %v3925 = vld [vmem:[#allocation3 + $0xe2] sm:$0xff]
        %v3926 = vld [vmem:[#allocation3 + $0xf2] sm:$0xff]
        %v3927 = vld [vmem:[#allocation3 + $0xfa] sm:$0xff]
        %v3928 = vld [vmem:[#allocation3 + $0x10a] sm:$0xff]
        %v3929 = vld [vmem:[#allocation3 + $0x112] sm:$0xff]
        %v3930 = vld [vmem:[#allocation3 + $0x122] sm:$0xff]
        %v3931 = vld [vmem:[#allocation3 + $0x12a] sm:$0xff]
        %v3932 = vld [vmem:[#allocation3 + $0x13a] sm:$0xff]
        %v3933 = vld [vmem:[#allocation3 + $0x142] sm:$0xff]
        %v3934 = vld [vmem:[#allocation3 + $0x152] sm:$0xff]
        %v3935 = vld [vmem:[#allocation3 + $0x15a] sm:$0xff]
        %v3936 = vld [vmem:[#allocation3 + $0x16a] sm:$0xff]
        %v3937 = vld [vmem:[#allocation3 + $0x172] sm:$0xff]
        %v3938 = vpack.c.bf16 %v3907, %v3906
        %v3939 = vpack.c.bf16 %v3909, %v3908
        %v3940 = vpack.c.bf16 %v3911, %v3910
        %v3941 = vpack.c.bf16 %v3913, %v3912
        %v3942 = vpack.c.bf16 %v3915, %v3914
        %v3943 = vpack.c.bf16 %v3917, %v3916
        %v3944 = vpack.c.bf16 %v3919, %v3918
        %v3945 = vpack.c.bf16 %v3921, %v3920
        %v3946 = vpack.c.bf16 %v3923, %v3922
        %v3947 = vpack.c.bf16 %v3925, %v3924
        %v3948 = vpack.c.bf16 %v3927, %v3926
        %v3949 = vpack.c.bf16 %v3929, %v3928
        %v3950 = vpack.c.bf16 %v3931, %v3930
        %v3951 = vpack.c.bf16 %v3933, %v3932
        %v3952 = vpack.c.bf16 %v3935, %v3934
        %v3953 = vpack.c.bf16 %v3937, %v3936
        %s3954 = scalar_lea.vmem %s3, 16
        %v3955 = vld [vmem:[%s3954] sm:$0xf]
        %v3956 = vld [vmem:[%s3954 + $0x4] sm:$0x3]
        %v3959 = vunpack.c.l.b16 %v3955
        %v3960 = vunpack.c.l.b16 %v3956
        %v3961 = vpack.c.b16 %v3960, %v3959
        %v3963 = vsel %vm3281, %v3938, 0
        %v3966 = vsel %vm3281, %v3939, 0
        %v3969 = vsel %vm3281, %v3940, 0
        %v3972 = vsel %vm3281, %v3941, 0
        %v3975 = vsel %vm3281, %v3942, 0
        %v3978 = vsel %vm3281, %v3943, 0
        %v3981 = vsel %vm3281, %v3944, 0
        %v3984 = vsel %vm3281, %v3945, 0
        %v3987 = vsel %vm3281, %v3946, 0
        %v3990 = vsel %vm3281, %v3947, 0
        %v3993 = vsel %vm3281, %v3948, 0
        %v3996 = vsel %vm3281, %v3949, 0
        %v3999 = vsel %vm3281, %v3950, 0
        %v4002 = vsel %vm3281, %v3951, 0
        %v4005 = vsel %vm3281, %v3952, 0
        %v4008 = vsel %vm3281, %v3953, 0
        %v4011 = vsel %vm3524, %v3961, 0
        %4013 = vmatprep.subr.bf16.mxu0 0
        %4014 = vmatpush1.bf16.msra.mxu0 %v4011
        %4015 = vmatprep.subr.bf16.mxu0 0
        %4016 = vmatpush1.bf16.msra.mxu0 0
        %4017 = vmatprep.subr.bf16.mxu0 0
        %4018 = vmatpush1.bf16.msra.mxu0 0
        %4019 = vmatprep.subr.bf16.mxu0 0
        %4020 = vmatpush1.bf16.msra.mxu0 0
        %4021 = vmatprep.subr.bf16.mxu0 0
        %4022 = vmatpush1.bf16.msra.mxu0 0
        %4023 = vmatprep.subr.bf16.mxu0 0
        %4024 = vmatpush1.bf16.msra.mxu0 0
        %4025 = vmatprep.subr.bf16.mxu0 0
        %4026 = vmatpush1.bf16.msra.mxu0 0
        %4027 = vmatprep.subr.bf16.mxu0 0
        %4028 = vmatpush1.bf16.msra.mxu0 0
        %4029 = vmatprep.subr.bf16.mxu0 0
        %4030 = vmatpush1.bf16.msra.mxu0 0
        %4031 = vmatprep.subr.bf16.mxu0 0
        %4032 = vmatpush1.bf16.msra.mxu0 0
        %4033 = vmatprep.subr.bf16.mxu0 0
        %4034 = vmatpush1.bf16.msra.mxu0 0
        %4035 = vmatprep.subr.bf16.mxu0 0
        %4036 = vmatpush1.bf16.msra.mxu0 0
        %4037 = vmatprep.subr.bf16.mxu0 0
        %4038 = vmatpush1.bf16.msra.mxu0 0
        %4039 = vmatprep.subr.bf16.mxu0 0
        %4040 = vmatpush1.bf16.msra.mxu0 0
        %4041 = vmatprep.subr.bf16.mxu0 0
        %4042 = vmatpush1.bf16.msra.mxu0 0
        %4043 = vmatprep.subr.bf16.mxu0 0
        %4044 = vmatpush1.bf16.msra.mxu0 0
        %4045 = vmatprep.mubr.bf16.mxu0 0
        %4046 = vmatmul.mubr.bf16.gmra.mrb[0].mxu0 %v3963
        %v4047 = vpop.f32.mrb[0].mxu0
        %v4048 = vadd.f32 0.0, %v4047
        %v4049 = vpop.f32.mrb[0].mxu0
        %v4050 = vpop.f32.mrb[0].mxu0
        %v4051 = vadd.f32 0.0, %v4050
        %v4052 = vpop.f32.mrb[0].mxu0
        %4053 = vmatprep.mubr.bf16.mxu0 0
        %4054 = vmatmul.mubr.bf16.gmra.mrb[0].mxu0 %v3966
        %v4055 = vpop.f32.mrb[0].mxu0
        %v4056 = vadd.f32 0.0, %v4055
        %v4057 = vpop.f32.mrb[0].mxu0
        %v4058 = vpop.f32.mrb[0].mxu0
        %v4059 = vadd.f32 0.0, %v4058
        %v4060 = vpop.f32.mrb[0].mxu0
        %4061 = vmatprep.mubr.bf16.mxu0 0
        %4062 = vmatmul.mubr.bf16.gmra.mrb[0].mxu0 %v3969
        %v4063 = vpop.f32.mrb[0].mxu0
        %v4064 = vadd.f32 0.0, %v4063
        %v4065 = vpop.f32.mrb[0].mxu0
        %v4066 = vpop.f32.mrb[0].mxu0
        %v4067 = vadd.f32 0.0, %v4066
        %v4068 = vpop.f32.mrb[0].mxu0
        %4069 = vmatprep.mubr.bf16.mxu0 0
        %4070 = vmatmul.mubr.bf16.gmra.mrb[0].mxu0 %v3972
        %v4071 = vpop.f32.mrb[0].mxu0
        %v4072 = vadd.f32 0.0, %v4071
        %v4073 = vpop.f32.mrb[0].mxu0
        %v4074 = vpop.f32.mrb[0].mxu0
        %v4075 = vadd.f32 0.0, %v4074
        %v4076 = vpop.f32.mrb[0].mxu0
        %4077 = vmatprep.mubr.bf16.mxu0 0
        %4078 = vmatmul.mubr.bf16.gmra.mrb[0].mxu0 %v3975
        %v4079 = vpop.f32.mrb[0].mxu0
        %v4080 = vadd.f32 0.0, %v4079
        %v4081 = vpop.f32.mrb[0].mxu0
        %v4082 = vpop.f32.mrb[0].mxu0
        %v4083 = vadd.f32 0.0, %v4082
        %v4084 = vpop.f32.mrb[0].mxu0
        %4085 = vmatprep.mubr.bf16.mxu0 0
        %4086 = vmatmul.mubr.bf16.gmra.mrb[0].mxu0 %v3978
        %v4087 = vpop.f32.mrb[0].mxu0
        %v4088 = vadd.f32 0.0, %v4087
        %v4089 = vpop.f32.mrb[0].mxu0
        %v4090 = vpop.f32.mrb[0].mxu0
        %v4091 = vadd.f32 0.0, %v4090
        %v4092 = vpop.f32.mrb[0].mxu0
        %4093 = vmatprep.mubr.bf16.mxu0 0
        %4094 = vmatmul.mubr.bf16.gmra.mrb[0].mxu0 %v3981
        %v4095 = vpop.f32.mrb[0].mxu0
        %v4096 = vadd.f32 0.0, %v4095
        %v4097 = vpop.f32.mrb[0].mxu0
        %v4098 = vpop.f32.mrb[0].mxu0
        %v4099 = vadd.f32 0.0, %v4098
        %v4100 = vpop.f32.mrb[0].mxu0
        %4101 = vmatprep.mubr.bf16.mxu0 0
        %4102 = vmatmul.mubr.bf16.gmra.mrb[0].mxu0 %v3984
        %v4103 = vpop.f32.mrb[0].mxu0
        %v4104 = vadd.f32 0.0, %v4103
        %v4105 = vpop.f32.mrb[0].mxu0
        %v4106 = vpop.f32.mrb[0].mxu0
        %v4107 = vadd.f32 0.0, %v4106
        %v4108 = vpop.f32.mrb[0].mxu0
        %4109 = vmatprep.mubr.bf16.mxu0 0
        %4110 = vmatmul.mubr.bf16.gmra.mrb[0].mxu0 %v3987
        %v4111 = vpop.f32.mrb[0].mxu0
        %v4112 = vadd.f32 0.0, %v4111
        %v4113 = vpop.f32.mrb[0].mxu0
        %v4114 = vpop.f32.mrb[0].mxu0
        %v4115 = vadd.f32 0.0, %v4114
        %v4116 = vpop.f32.mrb[0].mxu0
        %4117 = vmatprep.mubr.bf16.mxu0 0
        %4118 = vmatmul.mubr.bf16.gmra.mrb[0].mxu0 %v3990
        %v4119 = vpop.f32.mrb[0].mxu0
        %v4120 = vadd.f32 0.0, %v4119
        %v4121 = vpop.f32.mrb[0].mxu0
        %v4122 = vpop.f32.mrb[0].mxu0
        %v4123 = vadd.f32 0.0, %v4122
        %v4124 = vpop.f32.mrb[0].mxu0
        %4125 = vmatprep.mubr.bf16.mxu0 0
        %4126 = vmatmul.mubr.bf16.gmra.mrb[0].mxu0 %v3993
        %v4127 = vpop.f32.mrb[0].mxu0
        %v4128 = vadd.f32 0.0, %v4127
        %v4129 = vpop.f32.mrb[0].mxu0
        %v4130 = vpop.f32.mrb[0].mxu0
        %v4131 = vadd.f32 0.0, %v4130
        %v4132 = vpop.f32.mrb[0].mxu0
        %4133 = vmatprep.mubr.bf16.mxu0 0
        %4134 = vmatmul.mubr.bf16.gmra.mrb[0].mxu0 %v3996
        %v4135 = vpop.f32.mrb[0].mxu0
        %v4136 = vadd.f32 0.0, %v4135
        %v4137 = vpop.f32.mrb[0].mxu0
        %v4138 = vpop.f32.mrb[0].mxu0
        %v4139 = vadd.f32 0.0, %v4138
        %v4140 = vpop.f32.mrb[0].mxu0
        %4141 = vmatprep.mubr.bf16.mxu0 0
        %4142 = vmatmul.mubr.bf16.gmra.mrb[0].mxu0 %v3999
        %v4143 = vpop.f32.mrb[0].mxu0
        %v4144 = vadd.f32 0.0, %v4143
        %v4145 = vpop.f32.mrb[0].mxu0
        %v4146 = vpop.f32.mrb[0].mxu0
        %v4147 = vadd.f32 0.0, %v4146
        %v4148 = vpop.f32.mrb[0].mxu0
        %4149 = vmatprep.mubr.bf16.mxu0 0
        %4150 = vmatmul.mubr.bf16.gmra.mrb[0].mxu0 %v4002
        %v4151 = vpop.f32.mrb[0].mxu0
        %v4152 = vadd.f32 0.0, %v4151
        %v4153 = vpop.f32.mrb[0].mxu0
        %v4154 = vpop.f32.mrb[0].mxu0
        %v4155 = vadd.f32 0.0, %v4154
        %v4156 = vpop.f32.mrb[0].mxu0
        %4157 = vmatprep.mubr.bf16.mxu0 0
        %4158 = vmatmul.mubr.bf16.gmra.mrb[0].mxu0 %v4005
        %v4159 = vpop.f32.mrb[0].mxu0
        %v4160 = vadd.f32 0.0, %v4159
        %v4161 = vpop.f32.mrb[0].mxu0
        %v4162 = vpop.f32.mrb[0].mxu0
        %v4163 = vadd.f32 0.0, %v4162
        %v4164 = vpop.f32.mrb[0].mxu0
        %4165 = vmatprep.mubr.bf16.mxu0 0
        %4166 = vmatmul.mubr.bf16.gmra.mrb[0].mxu0 %v4008
        %v4167 = vpop.f32.mrb[0].mxu0
        %v4168 = vadd.f32 0.0, %v4167
        %v4169 = vpop.f32.mrb[0].mxu0
        %v4170 = vpop.f32.mrb[0].mxu0
        %v4171 = vadd.f32 0.0, %v4170
        %v4172 = vpop.f32.mrb[0].mxu0
        %4173 = vdwg.mxu0
        %v4174 = vadd.f32 %v3780, %v4048
        %v4175 = vadd.f32 %v3783, %v4051
        %v4176 = vadd.f32 %v3788, %v4056
        %v4177 = vadd.f32 %v3791, %v4059
        %v4178 = vadd.f32 %v3796, %v4064
        %v4179 = vadd.f32 %v3799, %v4067
        %v4180 = vadd.f32 %v3804, %v4072
        %v4181 = vadd.f32 %v3807, %v4075
        %v4182 = vadd.f32 %v3812, %v4080
        %v4183 = vadd.f32 %v3815, %v4083
        %v4184 = vadd.f32 %v3820, %v4088
        %v4185 = vadd.f32 %v3823, %v4091
        %v4186 = vadd.f32 %v3828, %v4096
        %v4187 = vadd.f32 %v3831, %v4099
        %v4188 = vadd.f32 %v3836, %v4104
        %v4189 = vadd.f32 %v3839, %v4107
        %v4190 = vadd.f32 %v3844, %v4112
        %v4191 = vadd.f32 %v3847, %v4115
        %v4192 = vadd.f32 %v3852, %v4120
        %v4193 = vadd.f32 %v3855, %v4123
        %v4194 = vadd.f32 %v3860, %v4128
        %v4195 = vadd.f32 %v3863, %v4131
        %v4196 = vadd.f32 %v3868, %v4136
        %v4197 = vadd.f32 %v3871, %v4139
        %v4198 = vadd.f32 %v3876, %v4144
        %v4199 = vadd.f32 %v3879, %v4147
        %v4200 = vadd.f32 %v3884, %v4152
        %v4201 = vadd.f32 %v3887, %v4155
        %v4202 = vadd.f32 %v3892, %v4160
        %v4203 = vadd.f32 %v3895, %v4163
        %v4204 = vadd.f32 %v3900, %v4168
        %v4205 = vadd.f32 %v3903, %v4171
        %v4206 = vld [vmem:[%s3337] sm:$0xff]
        %v4207 = vld [vmem:[%s3337 + $0x8] sm:$0xff]
        %v4208 = vld [vmem:[%s3337 + $0x18] sm:$0xff]
        %v4209 = vld [vmem:[%s3337 + $0x20] sm:$0xff]
        %v4210 = vld [vmem:[%s3337 + $0x30] sm:$0xff]
        %v4211 = vld [vmem:[%s3337 + $0x38] sm:$0xff]
        %v4212 = vld [vmem:[%s3337 + $0x48] sm:$0xff]
        %v4213 = vld [vmem:[%s3337 + $0x50] sm:$0xff]
        %v4214 = vld [vmem:[%s3337 + $0x60] sm:$0xff]
        %v4215 = vld [vmem:[%s3337 + $0x68] sm:$0xff]
        %v4216 = vld [vmem:[%s3337 + $0x78] sm:$0xff]
        %v4217 = vld [vmem:[%s3337 + $0x80] sm:$0xff]
        %v4218 = vld [vmem:[%s3337 + $0x90] sm:$0xff]
        %v4219 = vld [vmem:[%s3337 + $0x98] sm:$0xff]
        %v4220 = vld [vmem:[%s3337 + $0xa8] sm:$0xff]
        %v4221 = vld [vmem:[%s3337 + $0xb0] sm:$0xff]
        %v4222 = vld [vmem:[%s3337 + $0xc0] sm:$0xff]
        %v4223 = vld [vmem:[%s3337 + $0xc8] sm:$0xff]
        %v4224 = vld [vmem:[%s3337 + $0xd8] sm:$0xff]
        %v4225 = vld [vmem:[%s3337 + $0xe0] sm:$0xff]
        %v4226 = vld [vmem:[%s3337 + $0xf0] sm:$0xff]
        %v4227 = vld [vmem:[%s3337 + $0xf8] sm:$0xff]
        %v4228 = vld [vmem:[%s3337 + $0x108] sm:$0xff]
        %v4229 = vld [vmem:[%s3337 + $0x110] sm:$0xff]
        %v4230 = vld [vmem:[%s3337 + $0x120] sm:$0xff]
        %v4231 = vld [vmem:[%s3337 + $0x128] sm:$0xff]
        %v4232 = vld [vmem:[%s3337 + $0x138] sm:$0xff]
        %v4233 = vld [vmem:[%s3337 + $0x140] sm:$0xff]
        %v4234 = vld [vmem:[%s3337 + $0x150] sm:$0xff]
        %v4235 = vld [vmem:[%s3337 + $0x158] sm:$0xff]
        %v4236 = vld [vmem:[%s3337 + $0x168] sm:$0xff]
        %v4237 = vld [vmem:[%s3337 + $0x170] sm:$0xff]
        %v4238 = vpack.c.bf16 %v4207, %v4206
        %v4239 = vpack.c.bf16 %v4209, %v4208
        %v4240 = vpack.c.bf16 %v4211, %v4210
        %v4241 = vpack.c.bf16 %v4213, %v4212
        %v4242 = vpack.c.bf16 %v4215, %v4214
        %v4243 = vpack.c.bf16 %v4217, %v4216
        %v4244 = vpack.c.bf16 %v4219, %v4218
        %v4245 = vpack.c.bf16 %v4221, %v4220
        %v4246 = vpack.c.bf16 %v4223, %v4222
        %v4247 = vpack.c.bf16 %v4225, %v4224
        %v4248 = vpack.c.bf16 %v4227, %v4226
        %v4249 = vpack.c.bf16 %v4229, %v4228
        %v4250 = vpack.c.bf16 %v4231, %v4230
        %v4251 = vpack.c.bf16 %v4233, %v4232
        %v4252 = vpack.c.bf16 %v4235, %v4234
        %v4253 = vpack.c.bf16 %v4237, %v4236
        %s4254 = scalar_lea.vmem %s3, 24
        %v4255 = vld [vmem:[%s4254] sm:$0xf]
        %v4256 = vld [vmem:[%s4254 + $0x4] sm:$0x3]
        %v4259 = vunpack.c.l.b16 %v4255
        %v4260 = vunpack.c.l.b16 %v4256
        %v4261 = vpack.c.b16 %v4260, %v4259
        %v4263 = vsel %vm3281, %v4238, 0
        %v4266 = vsel %vm3281, %v4239, 0
        %v4269 = vsel %vm3281, %v4240, 0
        %v4272 = vsel %vm3281, %v4241, 0
        %v4275 = vsel %vm3281, %v4242, 0
        %v4278 = vsel %vm3281, %v4243, 0
        %v4281 = vsel %vm3281, %v4244, 0
        %v4284 = vsel %vm3281, %v4245, 0
        %v4287 = vsel %vm3281, %v4246, 0
        %v4290 = vsel %vm3281, %v4247, 0
        %v4293 = vsel %vm3281, %v4248, 0
        %v4296 = vsel %vm3281, %v4249, 0
        %v4299 = vsel %vm3281, %v4250, 0
        %v4302 = vsel %vm3281, %v4251, 0
        %v4305 = vsel %vm3281, %v4252, 0
        %v4308 = vsel %vm3281, %v4253, 0
        %v4311 = vsel %vm3524, %v4261, 0
        %4313 = vmatprep.subr.bf16.mxu0 0
        %4314 = vmatpush1.bf16.msra.mxu0 %v4311
        %4315 = vmatprep.subr.bf16.mxu0 0
        %4316 = vmatpush1.bf16.msra.mxu0 0
        %4317 = vmatprep.subr.bf16.mxu0 0
        %4318 = vmatpush1.bf16.msra.mxu0 0
        %4319 = vmatprep.subr.bf16.mxu0 0
        %4320 = vmatpush1.bf16.msra.mxu0 0
        %4321 = vmatprep.subr.bf16.mxu0 0
        %4322 = vmatpush1.bf16.msra.mxu0 0
        %4323 = vmatprep.subr.bf16.mxu0 0
        %4324 = vmatpush1.bf16.msra.mxu0 0
        %4325 = vmatprep.subr.bf16.mxu0 0
        %4326 = vmatpush1.bf16.msra.mxu0 0
        %4327 = vmatprep.subr.bf16.mxu0 0
        %4328 = vmatpush1.bf16.msra.mxu0 0
        %4329 = vmatprep.subr.bf16.mxu0 0
        %4330 = vmatpush1.bf16.msra.mxu0 0
        %4331 = vmatprep.subr.bf16.mxu0 0
        %4332 = vmatpush1.bf16.msra.mxu0 0
        %4333 = vmatprep.subr.bf16.mxu0 0
        %4334 = vmatpush1.bf16.msra.mxu0 0
        %4335 = vmatprep.subr.bf16.mxu0 0
        %4336 = vmatpush1.bf16.msra.mxu0 0
        %4337 = vmatprep.subr.bf16.mxu0 0
        %4338 = vmatpush1.bf16.msra.mxu0 0
        %4339 = vmatprep.subr.bf16.mxu0 0
        %4340 = vmatpush1.bf16.msra.mxu0 0
        %4341 = vmatprep.subr.bf16.mxu0 0
        %4342 = vmatpush1.bf16.msra.mxu0 0
        %4343 = vmatprep.subr.bf16.mxu0 0
        %4344 = vmatpush1.bf16.msra.mxu0 0
        %4345 = vmatprep.mubr.bf16.mxu0 0
        %4346 = vmatmul.mubr.bf16.gmra.mrb[0].mxu0 %v4263
        %v4347 = vpop.f32.mrb[0].mxu0
        %v4348 = vadd.f32 0.0, %v4347
        %v4349 = vpop.f32.mrb[0].mxu0
        %v4350 = vpop.f32.mrb[0].mxu0
        %v4351 = vadd.f32 0.0, %v4350
        %v4352 = vpop.f32.mrb[0].mxu0
        %4353 = vmatprep.mubr.bf16.mxu0 0
        %4354 = vmatmul.mubr.bf16.gmra.mrb[0].mxu0 %v4266
        %v4355 = vpop.f32.mrb[0].mxu0
        %v4356 = vadd.f32 0.0, %v4355
        %v4357 = vpop.f32.mrb[0].mxu0
        %v4358 = vpop.f32.mrb[0].mxu0
        %v4359 = vadd.f32 0.0, %v4358
        %v4360 = vpop.f32.mrb[0].mxu0
        %4361 = vmatprep.mubr.bf16.mxu0 0
        %4362 = vmatmul.mubr.bf16.gmra.mrb[0].mxu0 %v4269
        %v4363 = vpop.f32.mrb[0].mxu0
        %v4364 = vadd.f32 0.0, %v4363
        %v4365 = vpop.f32.mrb[0].mxu0
        %v4366 = vpop.f32.mrb[0].mxu0
        %v4367 = vadd.f32 0.0, %v4366
        %v4368 = vpop.f32.mrb[0].mxu0
        %4369 = vmatprep.mubr.bf16.mxu0 0
        %4370 = vmatmul.mubr.bf16.gmra.mrb[0].mxu0 %v4272
        %v4371 = vpop.f32.mrb[0].mxu0
        %v4372 = vadd.f32 0.0, %v4371
        %v4373 = vpop.f32.mrb[0].mxu0
        %v4374 = vpop.f32.mrb[0].mxu0
        %v4375 = vadd.f32 0.0, %v4374
        %v4376 = vpop.f32.mrb[0].mxu0
        %4377 = vmatprep.mubr.bf16.mxu0 0
        %4378 = vmatmul.mubr.bf16.gmra.mrb[0].mxu0 %v4275
        %v4379 = vpop.f32.mrb[0].mxu0
        %v4380 = vadd.f32 0.0, %v4379
        %v4381 = vpop.f32.mrb[0].mxu0
        %v4382 = vpop.f32.mrb[0].mxu0
        %v4383 = vadd.f32 0.0, %v4382
        %v4384 = vpop.f32.mrb[0].mxu0
        %4385 = vmatprep.mubr.bf16.mxu0 0
        %4386 = vmatmul.mubr.bf16.gmra.mrb[0].mxu0 %v4278
        %v4387 = vpop.f32.mrb[0].mxu0
        %v4388 = vadd.f32 0.0, %v4387
        %v4389 = vpop.f32.mrb[0].mxu0
        %v4390 = vpop.f32.mrb[0].mxu0
        %v4391 = vadd.f32 0.0, %v4390
        %v4392 = vpop.f32.mrb[0].mxu0
        %4393 = vmatprep.mubr.bf16.mxu0 0
        %4394 = vmatmul.mubr.bf16.gmra.mrb[0].mxu0 %v4281
        %v4395 = vpop.f32.mrb[0].mxu0
        %v4396 = vadd.f32 0.0, %v4395
        %v4397 = vpop.f32.mrb[0].mxu0
        %v4398 = vpop.f32.mrb[0].mxu0
        %v4399 = vadd.f32 0.0, %v4398
        %v4400 = vpop.f32.mrb[0].mxu0
        %4401 = vmatprep.mubr.bf16.mxu0 0
        %4402 = vmatmul.mubr.bf16.gmra.mrb[0].mxu0 %v4284
        %v4403 = vpop.f32.mrb[0].mxu0
        %v4404 = vadd.f32 0.0, %v4403
        %v4405 = vpop.f32.mrb[0].mxu0
        %v4406 = vpop.f32.mrb[0].mxu0
        %v4407 = vadd.f32 0.0, %v4406
        %v4408 = vpop.f32.mrb[0].mxu0
        %4409 = vmatprep.mubr.bf16.mxu0 0
        %4410 = vmatmul.mubr.bf16.gmra.mrb[0].mxu0 %v4287
        %v4411 = vpop.f32.mrb[0].mxu0
        %v4412 = vadd.f32 0.0, %v4411
        %v4413 = vpop.f32.mrb[0].mxu0
        %v4414 = vpop.f32.mrb[0].mxu0
        %v4415 = vadd.f32 0.0, %v4414
        %v4416 = vpop.f32.mrb[0].mxu0
        %4417 = vmatprep.mubr.bf16.mxu0 0
        %4418 = vmatmul.mubr.bf16.gmra.mrb[0].mxu0 %v4290
        %v4419 = vpop.f32.mrb[0].mxu0
        %v4420 = vadd.f32 0.0, %v4419
        %v4421 = vpop.f32.mrb[0].mxu0
        %v4422 = vpop.f32.mrb[0].mxu0
        %v4423 = vadd.f32 0.0, %v4422
        %v4424 = vpop.f32.mrb[0].mxu0
        %4425 = vmatprep.mubr.bf16.mxu0 0
        %4426 = vmatmul.mubr.bf16.gmra.mrb[0].mxu0 %v4293
        %v4427 = vpop.f32.mrb[0].mxu0
        %v4428 = vadd.f32 0.0, %v4427
        %v4429 = vpop.f32.mrb[0].mxu0
        %v4430 = vpop.f32.mrb[0].mxu0
        %v4431 = vadd.f32 0.0, %v4430
        %v4432 = vpop.f32.mrb[0].mxu0
        %4433 = vmatprep.mubr.bf16.mxu0 0
        %4434 = vmatmul.mubr.bf16.gmra.mrb[0].mxu0 %v4296
        %v4435 = vpop.f32.mrb[0].mxu0
        %v4436 = vadd.f32 0.0, %v4435
        %v4437 = vpop.f32.mrb[0].mxu0
        %v4438 = vpop.f32.mrb[0].mxu0
        %v4439 = vadd.f32 0.0, %v4438
        %v4440 = vpop.f32.mrb[0].mxu0
        %4441 = vmatprep.mubr.bf16.mxu0 0
        %4442 = vmatmul.mubr.bf16.gmra.mrb[0].mxu0 %v4299
        %v4443 = vpop.f32.mrb[0].mxu0
        %v4444 = vadd.f32 0.0, %v4443
        %v4445 = vpop.f32.mrb[0].mxu0
        %v4446 = vpop.f32.mrb[0].mxu0
        %v4447 = vadd.f32 0.0, %v4446
        %v4448 = vpop.f32.mrb[0].mxu0
        %4449 = vmatprep.mubr.bf16.mxu0 0
        %4450 = vmatmul.mubr.bf16.gmra.mrb[0].mxu0 %v4302
        %v4451 = vpop.f32.mrb[0].mxu0
        %v4452 = vadd.f32 0.0, %v4451
        %v4453 = vpop.f32.mrb[0].mxu0
        %v4454 = vpop.f32.mrb[0].mxu0
        %v4455 = vadd.f32 0.0, %v4454
        %v4456 = vpop.f32.mrb[0].mxu0
        %4457 = vmatprep.mubr.bf16.mxu0 0
        %4458 = vmatmul.mubr.bf16.gmra.mrb[0].mxu0 %v4305
        %v4459 = vpop.f32.mrb[0].mxu0
        %v4460 = vadd.f32 0.0, %v4459
        %v4461 = vpop.f32.mrb[0].mxu0
        %v4462 = vpop.f32.mrb[0].mxu0
        %v4463 = vadd.f32 0.0, %v4462
        %v4464 = vpop.f32.mrb[0].mxu0
        %4465 = vmatprep.mubr.bf16.mxu0 0
        %4466 = vmatmul.mubr.bf16.gmra.mrb[0].mxu0 %v4308
        %v4467 = vpop.f32.mrb[0].mxu0
        %v4468 = vadd.f32 0.0, %v4467
        %v4469 = vpop.f32.mrb[0].mxu0
        %v4470 = vpop.f32.mrb[0].mxu0
        %v4471 = vadd.f32 0.0, %v4470
        %v4472 = vpop.f32.mrb[0].mxu0
        %4473 = vdwg.mxu0
        %v4474 = vadd.f32 %v4174, %v4348
        %v4475 = vadd.f32 %v4175, %v4351
        %v4476 = vadd.f32 %v4176, %v4356
        %v4477 = vadd.f32 %v4177, %v4359
        %v4478 = vadd.f32 %v4178, %v4364
        %v4479 = vadd.f32 %v4179, %v4367
        %v4480 = vadd.f32 %v4180, %v4372
        %v4481 = vadd.f32 %v4181, %v4375
        %v4482 = vadd.f32 %v4182, %v4380
        %v4483 = vadd.f32 %v4183, %v4383
        %v4484 = vadd.f32 %v4184, %v4388
        %v4485 = vadd.f32 %v4185, %v4391
        %v4486 = vadd.f32 %v4186, %v4396
        %v4487 = vadd.f32 %v4187, %v4399
        %v4488 = vadd.f32 %v4188, %v4404
        %v4489 = vadd.f32 %v4189, %v4407
        %v4490 = vadd.f32 %v4190, %v4412
        %v4491 = vadd.f32 %v4191, %v4415
        %v4492 = vadd.f32 %v4192, %v4420
        %v4493 = vadd.f32 %v4193, %v4423
        %v4494 = vadd.f32 %v4194, %v4428
        %v4495 = vadd.f32 %v4195, %v4431
        %v4496 = vadd.f32 %v4196, %v4436
        %v4497 = vadd.f32 %v4197, %v4439
        %v4498 = vadd.f32 %v4198, %v4444
        %v4499 = vadd.f32 %v4199, %v4447
        %v4500 = vadd.f32 %v4200, %v4452
        %v4501 = vadd.f32 %v4201, %v4455
        %v4502 = vadd.f32 %v4202, %v4460
        %v4503 = vadd.f32 %v4203, %v4463
        %v4504 = vadd.f32 %v4204, %v4468
        %v4505 = vadd.f32 %v4205, %v4471
        %v4506 = vld [vmem:[%s3337 + $0x1] sm:$0xff]
        %v4507 = vld [vmem:[%s3337 + $0x9] sm:$0xff]
        %v4508 = vld [vmem:[%s3337 + $0x19] sm:$0xff]
        %v4509 = vld [vmem:[%s3337 + $0x21] sm:$0xff]
        %v4510 = vld [vmem:[%s3337 + $0x31] sm:$0xff]
        %v4511 = vld [vmem:[%s3337 + $0x39] sm:$0xff]
        %v4512 = vld [vmem:[%s3337 + $0x49] sm:$0xff]
        %v4513 = vld [vmem:[%s3337 + $0x51] sm:$0xff]
        %v4514 = vld [vmem:[%s3337 + $0x61] sm:$0xff]
        %v4515 = vld [vmem:[%s3337 + $0x69] sm:$0xff]
        %v4516 = vld [vmem:[%s3337 + $0x79] sm:$0xff]
        %v4517 = vld [vmem:[%s3337 + $0x81] sm:$0xff]
        %v4518 = vld [vmem:[%s3337 + $0x91] sm:$0xff]
        %v4519 = vld [vmem:[%s3337 + $0x99] sm:$0xff]
        %v4520 = vld [vmem:[%s3337 + $0xa9] sm:$0xff]
        %v4521 = vld [vmem:[%s3337 + $0xb1] sm:$0xff]
        %v4522 = vld [vmem:[%s3337 + $0xc1] sm:$0xff]
        %v4523 = vld [vmem:[%s3337 + $0xc9] sm:$0xff]
        %v4524 = vld [vmem:[%s3337 + $0xd9] sm:$0xff]
        %v4525 = vld [vmem:[%s3337 + $0xe1] sm:$0xff]
        %v4526 = vld [vmem:[%s3337 + $0xf1] sm:$0xff]
        %v4527 = vld [vmem:[%s3337 + $0xf9] sm:$0xff]
        %v4528 = vld [vmem:[%s3337 + $0x109] sm:$0xff]
        %v4529 = vld [vmem:[%s3337 + $0x111] sm:$0xff]
        %v4530 = vld [vmem:[%s3337 + $0x121] sm:$0xff]
        %v4531 = vld [vmem:[%s3337 + $0x129] sm:$0xff]
        %v4532 = vld [vmem:[%s3337 + $0x139] sm:$0xff]
        %v4533 = vld [vmem:[%s3337 + $0x141] sm:$0xff]
        %v4534 = vld [vmem:[%s3337 + $0x151] sm:$0xff]
        %v4535 = vld [vmem:[%s3337 + $0x159] sm:$0xff]
        %v4536 = vld [vmem:[%s3337 + $0x169] sm:$0xff]
        %v4537 = vld [vmem:[%s3337 + $0x171] sm:$0xff]
        %v4538 = vpack.c.bf16 %v4507, %v4506
        %v4539 = vpack.c.bf16 %v4509, %v4508
        %v4540 = vpack.c.bf16 %v4511, %v4510
        %v4541 = vpack.c.bf16 %v4513, %v4512
        %v4542 = vpack.c.bf16 %v4515, %v4514
        %v4543 = vpack.c.bf16 %v4517, %v4516
        %v4544 = vpack.c.bf16 %v4519, %v4518
        %v4545 = vpack.c.bf16 %v4521, %v4520
        %v4546 = vpack.c.bf16 %v4523, %v4522
        %v4547 = vpack.c.bf16 %v4525, %v4524
        %v4548 = vpack.c.bf16 %v4527, %v4526
        %v4549 = vpack.c.bf16 %v4529, %v4528
        %v4550 = vpack.c.bf16 %v4531, %v4530
        %v4551 = vpack.c.bf16 %v4533, %v4532
        %v4552 = vpack.c.bf16 %v4535, %v4534
        %v4553 = vpack.c.bf16 %v4537, %v4536
        %s4554 = scalar_lea.vmem %s3, 32
        %v4555 = vld [vmem:[%s4554] sm:$0xf]
        %v4556 = vld [vmem:[%s4554 + $0x4] sm:$0x3]
        %v4559 = vunpack.c.l.b16 %v4555
        %v4560 = vunpack.c.l.b16 %v4556
        %v4561 = vpack.c.b16 %v4560, %v4559
        %v4563 = vsel %vm3281, %v4538, 0
        %v4566 = vsel %vm3281, %v4539, 0
        %v4569 = vsel %vm3281, %v4540, 0
        %v4572 = vsel %vm3281, %v4541, 0
        %v4575 = vsel %vm3281, %v4542, 0
        %v4578 = vsel %vm3281, %v4543, 0
        %v4581 = vsel %vm3281, %v4544, 0
        %v4584 = vsel %vm3281, %v4545, 0
        %v4587 = vsel %vm3281, %v4546, 0
        %v4590 = vsel %vm3281, %v4547, 0
        %v4593 = vsel %vm3281, %v4548, 0
        %v4596 = vsel %vm3281, %v4549, 0
        %v4599 = vsel %vm3281, %v4550, 0
        %v4602 = vsel %vm3281, %v4551, 0
        %v4605 = vsel %vm3281, %v4552, 0
        %v4608 = vsel %vm3281, %v4553, 0
        %v4611 = vsel %vm3524, %v4561, 0
        %4613 = vmatprep.subr.bf16.mxu0 0
        %4614 = vmatpush1.bf16.msra.mxu0 %v4611
        %4615 = vmatprep.subr.bf16.mxu0 0
        %4616 = vmatpush1.bf16.msra.mxu0 0
        %4617 = vmatprep.subr.bf16.mxu0 0
        %4618 = vmatpush1.bf16.msra.mxu0 0
        %4619 = vmatprep.subr.bf16.mxu0 0
        %4620 = vmatpush1.bf16.msra.mxu0 0
        %4621 = vmatprep.subr.bf16.mxu0 0
        %4622 = vmatpush1.bf16.msra.mxu0 0
        %4623 = vmatprep.subr.bf16.mxu0 0
        %4624 = vmatpush1.bf16.msra.mxu0 0
        %4625 = vmatprep.subr.bf16.mxu0 0
        %4626 = vmatpush1.bf16.msra.mxu0 0
        %4627 = vmatprep.subr.bf16.mxu0 0
        %4628 = vmatpush1.bf16.msra.mxu0 0
        %4629 = vmatprep.subr.bf16.mxu0 0
        %4630 = vmatpush1.bf16.msra.mxu0 0
        %4631 = vmatprep.subr.bf16.mxu0 0
        %4632 = vmatpush1.bf16.msra.mxu0 0
        %4633 = vmatprep.subr.bf16.mxu0 0
        %4634 = vmatpush1.bf16.msra.mxu0 0
        %4635 = vmatprep.subr.bf16.mxu0 0
        %4636 = vmatpush1.bf16.msra.mxu0 0
        %4637 = vmatprep.subr.bf16.mxu0 0
        %4638 = vmatpush1.bf16.msra.mxu0 0
        %4639 = vmatprep.subr.bf16.mxu0 0
        %4640 = vmatpush1.bf16.msra.mxu0 0
        %4641 = vmatprep.subr.bf16.mxu0 0
        %4642 = vmatpush1.bf16.msra.mxu0 0
        %4643 = vmatprep.subr.bf16.mxu0 0
        %4644 = vmatpush1.bf16.msra.mxu0 0
        %4645 = vmatprep.mubr.bf16.mxu0 0
        %4646 = vmatmul.mubr.bf16.gmra.mrb[0].mxu0 %v4563
        %v4647 = vpop.f32.mrb[0].mxu0
        %v4648 = vadd.f32 0.0, %v4647
        %v4649 = vpop.f32.mrb[0].mxu0
        %v4650 = vpop.f32.mrb[0].mxu0
        %v4651 = vadd.f32 0.0, %v4650
        %v4652 = vpop.f32.mrb[0].mxu0
        %4653 = vmatprep.mubr.bf16.mxu0 0
        %4654 = vmatmul.mubr.bf16.gmra.mrb[0].mxu0 %v4566
        %v4655 = vpop.f32.mrb[0].mxu0
        %v4656 = vadd.f32 0.0, %v4655
        %v4657 = vpop.f32.mrb[0].mxu0
        %v4658 = vpop.f32.mrb[0].mxu0
        %v4659 = vadd.f32 0.0, %v4658
        %v4660 = vpop.f32.mrb[0].mxu0
        %4661 = vmatprep.mubr.bf16.mxu0 0
        %4662 = vmatmul.mubr.bf16.gmra.mrb[0].mxu0 %v4569
        %v4663 = vpop.f32.mrb[0].mxu0
        %v4664 = vadd.f32 0.0, %v4663
        %v4665 = vpop.f32.mrb[0].mxu0
        %v4666 = vpop.f32.mrb[0].mxu0
        %v4667 = vadd.f32 0.0, %v4666
        %v4668 = vpop.f32.mrb[0].mxu0
        %4669 = vmatprep.mubr.bf16.mxu0 0
        %4670 = vmatmul.mubr.bf16.gmra.mrb[0].mxu0 %v4572
        %v4671 = vpop.f32.mrb[0].mxu0
        %v4672 = vadd.f32 0.0, %v4671
        %v4673 = vpop.f32.mrb[0].mxu0
        %v4674 = vpop.f32.mrb[0].mxu0
        %v4675 = vadd.f32 0.0, %v4674
        %v4676 = vpop.f32.mrb[0].mxu0
        %4677 = vmatprep.mubr.bf16.mxu0 0
        %4678 = vmatmul.mubr.bf16.gmra.mrb[0].mxu0 %v4575
        %v4679 = vpop.f32.mrb[0].mxu0
        %v4680 = vadd.f32 0.0, %v4679
        %v4681 = vpop.f32.mrb[0].mxu0
        %v4682 = vpop.f32.mrb[0].mxu0
        %v4683 = vadd.f32 0.0, %v4682
        %v4684 = vpop.f32.mrb[0].mxu0
        %4685 = vmatprep.mubr.bf16.mxu0 0
        %4686 = vmatmul.mubr.bf16.gmra.mrb[0].mxu0 %v4578
        %v4687 = vpop.f32.mrb[0].mxu0
        %v4688 = vadd.f32 0.0, %v4687
        %v4689 = vpop.f32.mrb[0].mxu0
        %v4690 = vpop.f32.mrb[0].mxu0
        %v4691 = vadd.f32 0.0, %v4690
        %v4692 = vpop.f32.mrb[0].mxu0
        %4693 = vmatprep.mubr.bf16.mxu0 0
        %4694 = vmatmul.mubr.bf16.gmra.mrb[0].mxu0 %v4581
        %v4695 = vpop.f32.mrb[0].mxu0
        %v4696 = vadd.f32 0.0, %v4695
        %v4697 = vpop.f32.mrb[0].mxu0
        %v4698 = vpop.f32.mrb[0].mxu0
        %v4699 = vadd.f32 0.0, %v4698
        %v4700 = vpop.f32.mrb[0].mxu0
        %4701 = vmatprep.mubr.bf16.mxu0 0
        %4702 = vmatmul.mubr.bf16.gmra.mrb[0].mxu0 %v4584
        %v4703 = vpop.f32.mrb[0].mxu0
        %v4704 = vadd.f32 0.0, %v4703
        %v4705 = vpop.f32.mrb[0].mxu0
        %v4706 = vpop.f32.mrb[0].mxu0
        %v4707 = vadd.f32 0.0, %v4706
        %v4708 = vpop.f32.mrb[0].mxu0
        %4709 = vmatprep.mubr.bf16.mxu0 0
        %4710 = vmatmul.mubr.bf16.gmra.mrb[0].mxu0 %v4587
        %v4711 = vpop.f32.mrb[0].mxu0
        %v4712 = vadd.f32 0.0, %v4711
        %v4713 = vpop.f32.mrb[0].mxu0
        %v4714 = vpop.f32.mrb[0].mxu0
        %v4715 = vadd.f32 0.0, %v4714
        %v4716 = vpop.f32.mrb[0].mxu0
        %4717 = vmatprep.mubr.bf16.mxu0 0
        %4718 = vmatmul.mubr.bf16.gmra.mrb[0].mxu0 %v4590
        %v4719 = vpop.f32.mrb[0].mxu0
        %v4720 = vadd.f32 0.0, %v4719
        %v4721 = vpop.f32.mrb[0].mxu0
        %v4722 = vpop.f32.mrb[0].mxu0
        %v4723 = vadd.f32 0.0, %v4722
        %v4724 = vpop.f32.mrb[0].mxu0
        %4725 = vmatprep.mubr.bf16.mxu0 0
        %4726 = vmatmul.mubr.bf16.gmra.mrb[0].mxu0 %v4593
        %v4727 = vpop.f32.mrb[0].mxu0
        %v4728 = vadd.f32 0.0, %v4727
        %v4729 = vpop.f32.mrb[0].mxu0
        %v4730 = vpop.f32.mrb[0].mxu0
        %v4731 = vadd.f32 0.0, %v4730
        %v4732 = vpop.f32.mrb[0].mxu0
        %4733 = vmatprep.mubr.bf16.mxu0 0
        %4734 = vmatmul.mubr.bf16.gmra.mrb[0].mxu0 %v4596
        %v4735 = vpop.f32.mrb[0].mxu0
        %v4736 = vadd.f32 0.0, %v4735
        %v4737 = vpop.f32.mrb[0].mxu0
        %v4738 = vpop.f32.mrb[0].mxu0
        %v4739 = vadd.f32 0.0, %v4738
        %v4740 = vpop.f32.mrb[0].mxu0
        %4741 = vmatprep.mubr.bf16.mxu0 0
        %4742 = vmatmul.mubr.bf16.gmra.mrb[0].mxu0 %v4599
        %v4743 = vpop.f32.mrb[0].mxu0
        %v4744 = vadd.f32 0.0, %v4743
        %v4745 = vpop.f32.mrb[0].mxu0
        %v4746 = vpop.f32.mrb[0].mxu0
        %v4747 = vadd.f32 0.0, %v4746
        %v4748 = vpop.f32.mrb[0].mxu0
        %4749 = vmatprep.mubr.bf16.mxu0 0
        %4750 = vmatmul.mubr.bf16.gmra.mrb[0].mxu0 %v4602
        %v4751 = vpop.f32.mrb[0].mxu0
        %v4752 = vadd.f32 0.0, %v4751
        %v4753 = vpop.f32.mrb[0].mxu0
        %v4754 = vpop.f32.mrb[0].mxu0
        %v4755 = vadd.f32 0.0, %v4754
        %v4756 = vpop.f32.mrb[0].mxu0
        %4757 = vmatprep.mubr.bf16.mxu0 0
        %4758 = vmatmul.mubr.bf16.gmra.mrb[0].mxu0 %v4605
        %v4759 = vpop.f32.mrb[0].mxu0
        %v4760 = vadd.f32 0.0, %v4759
        %v4761 = vpop.f32.mrb[0].mxu0
        %v4762 = vpop.f32.mrb[0].mxu0
        %v4763 = vadd.f32 0.0, %v4762
        %v4764 = vpop.f32.mrb[0].mxu0
        %4765 = vmatprep.mubr.bf16.mxu0 0
        %4766 = vmatmul.mubr.bf16.gmra.mrb[0].mxu0 %v4608
        %v4767 = vpop.f32.mrb[0].mxu0
        %v4768 = vadd.f32 0.0, %v4767
        %v4769 = vpop.f32.mrb[0].mxu0
        %v4770 = vpop.f32.mrb[0].mxu0
        %v4771 = vadd.f32 0.0, %v4770
        %v4772 = vpop.f32.mrb[0].mxu0
        %4773 = vdwg.mxu0
        %v4774 = vadd.f32 %v4474, %v4648
        %v4775 = vadd.f32 %v4475, %v4651
        %v4776 = vadd.f32 %v4476, %v4656
        %v4777 = vadd.f32 %v4477, %v4659
        %v4778 = vadd.f32 %v4478, %v4664
        %v4779 = vadd.f32 %v4479, %v4667
        %v4780 = vadd.f32 %v4480, %v4672
        %v4781 = vadd.f32 %v4481, %v4675
        %v4782 = vadd.f32 %v4482, %v4680
        %v4783 = vadd.f32 %v4483, %v4683
        %v4784 = vadd.f32 %v4484, %v4688
        %v4785 = vadd.f32 %v4485, %v4691
        %v4786 = vadd.f32 %v4486, %v4696
        %v4787 = vadd.f32 %v4487, %v4699
        %v4788 = vadd.f32 %v4488, %v4704
        %v4789 = vadd.f32 %v4489, %v4707
        %v4790 = vadd.f32 %v4490, %v4712
        %v4791 = vadd.f32 %v4491, %v4715
        %v4792 = vadd.f32 %v4492, %v4720
        %v4793 = vadd.f32 %v4493, %v4723
        %v4794 = vadd.f32 %v4494, %v4728
        %v4795 = vadd.f32 %v4495, %v4731
        %v4796 = vadd.f32 %v4496, %v4736
        %v4797 = vadd.f32 %v4497, %v4739
        %v4798 = vadd.f32 %v4498, %v4744
        %v4799 = vadd.f32 %v4499, %v4747
        %v4800 = vadd.f32 %v4500, %v4752
        %v4801 = vadd.f32 %v4501, %v4755
        %v4802 = vadd.f32 %v4502, %v4760
        %v4803 = vadd.f32 %v4503, %v4763
        %v4804 = vadd.f32 %v4504, %v4768
        %v4805 = vadd.f32 %v4505, %v4771
        %v4806 = vld [vmem:[%s3337 + $0x2] sm:$0xff]
        %v4807 = vld [vmem:[%s3337 + $0xa] sm:$0xff]
        %v4808 = vld [vmem:[%s3337 + $0x1a] sm:$0xff]
        %v4809 = vld [vmem:[%s3337 + $0x22] sm:$0xff]
        %v4810 = vld [vmem:[%s3337 + $0x32] sm:$0xff]
        %v4811 = vld [vmem:[%s3337 + $0x3a] sm:$0xff]
        %v4812 = vld [vmem:[%s3337 + $0x4a] sm:$0xff]
        %v4813 = vld [vmem:[%s3337 + $0x52] sm:$0xff]
        %v4814 = vld [vmem:[%s3337 + $0x62] sm:$0xff]
        %v4815 = vld [vmem:[%s3337 + $0x6a] sm:$0xff]
        %v4816 = vld [vmem:[%s3337 + $0x7a] sm:$0xff]
        %v4817 = vld [vmem:[%s3337 + $0x82] sm:$0xff]
        %v4818 = vld [vmem:[%s3337 + $0x92] sm:$0xff]
        %v4819 = vld [vmem:[%s3337 + $0x9a] sm:$0xff]
        %v4820 = vld [vmem:[%s3337 + $0xaa] sm:$0xff]
        %v4821 = vld [vmem:[%s3337 + $0xb2] sm:$0xff]
        %v4822 = vld [vmem:[%s3337 + $0xc2] sm:$0xff]
        %v4823 = vld [vmem:[%s3337 + $0xca] sm:$0xff]
        %v4824 = vld [vmem:[%s3337 + $0xda] sm:$0xff]
        %v4825 = vld [vmem:[%s3337 + $0xe2] sm:$0xff]
        %v4826 = vld [vmem:[%s3337 + $0xf2] sm:$0xff]
        %v4827 = vld [vmem:[%s3337 + $0xfa] sm:$0xff]
        %v4828 = vld [vmem:[%s3337 + $0x10a] sm:$0xff]
        %v4829 = vld [vmem:[%s3337 + $0x112] sm:$0xff]
        %v4830 = vld [vmem:[%s3337 + $0x122] sm:$0xff]
        %v4831 = vld [vmem:[%s3337 + $0x12a] sm:$0xff]
        %v4832 = vld [vmem:[%s3337 + $0x13a] sm:$0xff]
        %v4833 = vld [vmem:[%s3337 + $0x142] sm:$0xff]
        %v4834 = vld [vmem:[%s3337 + $0x152] sm:$0xff]
        %v4835 = vld [vmem:[%s3337 + $0x15a] sm:$0xff]
        %v4836 = vld [vmem:[%s3337 + $0x16a] sm:$0xff]
        %v4837 = vld [vmem:[%s3337 + $0x172] sm:$0xff]
        %v4838 = vpack.c.bf16 %v4807, %v4806
        %v4839 = vpack.c.bf16 %v4809, %v4808
        %v4840 = vpack.c.bf16 %v4811, %v4810
        %v4841 = vpack.c.bf16 %v4813, %v4812
        %v4842 = vpack.c.bf16 %v4815, %v4814
        %v4843 = vpack.c.bf16 %v4817, %v4816
        %v4844 = vpack.c.bf16 %v4819, %v4818
        %v4845 = vpack.c.bf16 %v4821, %v4820
        %v4846 = vpack.c.bf16 %v4823, %v4822
        %v4847 = vpack.c.bf16 %v4825, %v4824
        %v4848 = vpack.c.bf16 %v4827, %v4826
        %v4849 = vpack.c.bf16 %v4829, %v4828
        %v4850 = vpack.c.bf16 %v4831, %v4830
        %v4851 = vpack.c.bf16 %v4833, %v4832
        %v4852 = vpack.c.bf16 %v4835, %v4834
        %v4853 = vpack.c.bf16 %v4837, %v4836
        %s4854 = scalar_lea.vmem %s3, 40
        %v4855 = vld [vmem:[%s4854] sm:$0xf]
        %v4856 = vld [vmem:[%s4854 + $0x4] sm:$0x3]
        %v4859 = vunpack.c.l.b16 %v4855
        %v4860 = vunpack.c.l.b16 %v4856
        %v4861 = vpack.c.b16 %v4860, %v4859
        %v4863 = vsel %vm3281, %v4838, 0
        %v4866 = vsel %vm3281, %v4839, 0
        %v4869 = vsel %vm3281, %v4840, 0
        %v4872 = vsel %vm3281, %v4841, 0
        %v4875 = vsel %vm3281, %v4842, 0
        %v4878 = vsel %vm3281, %v4843, 0
        %v4881 = vsel %vm3281, %v4844, 0
        %v4884 = vsel %vm3281, %v4845, 0
        %v4887 = vsel %vm3281, %v4846, 0
        %v4890 = vsel %vm3281, %v4847, 0
        %v4893 = vsel %vm3281, %v4848, 0
        %v4896 = vsel %vm3281, %v4849, 0
        %v4899 = vsel %vm3281, %v4850, 0
        %v4902 = vsel %vm3281, %v4851, 0
        %v4905 = vsel %vm3281, %v4852, 0
        %v4908 = vsel %vm3281, %v4853, 0
        %v4911 = vsel %vm3524, %v4861, 0
        %4913 = vmatprep.subr.bf16.mxu0 0
        %4914 = vmatpush1.bf16.msra.mxu0 %v4911
        %4915 = vmatprep.subr.bf16.mxu0 0
        %4916 = vmatpush1.bf16.msra.mxu0 0
        %4917 = vmatprep.subr.bf16.mxu0 0
        %4918 = vmatpush1.bf16.msra.mxu0 0
        %4919 = vmatprep.subr.bf16.mxu0 0
        %4920 = vmatpush1.bf16.msra.mxu0 0
        %4921 = vmatprep.subr.bf16.mxu0 0
        %4922 = vmatpush1.bf16.msra.mxu0 0
        %4923 = vmatprep.subr.bf16.mxu0 0
        %4924 = vmatpush1.bf16.msra.mxu0 0
        %4925 = vmatprep.subr.bf16.mxu0 0
        %4926 = vmatpush1.bf16.msra.mxu0 0
        %4927 = vmatprep.subr.bf16.mxu0 0
        %4928 = vmatpush1.bf16.msra.mxu0 0
        %4929 = vmatprep.subr.bf16.mxu0 0
        %4930 = vmatpush1.bf16.msra.mxu0 0
        %4931 = vmatprep.subr.bf16.mxu0 0
        %4932 = vmatpush1.bf16.msra.mxu0 0
        %4933 = vmatprep.subr.bf16.mxu0 0
        %4934 = vmatpush1.bf16.msra.mxu0 0
        %4935 = vmatprep.subr.bf16.mxu0 0
        %4936 = vmatpush1.bf16.msra.mxu0 0
        %4937 = vmatprep.subr.bf16.mxu0 0
        %4938 = vmatpush1.bf16.msra.mxu0 0
        %4939 = vmatprep.subr.bf16.mxu0 0
        %4940 = vmatpush1.bf16.msra.mxu0 0
        %4941 = vmatprep.subr.bf16.mxu0 0
        %4942 = vmatpush1.bf16.msra.mxu0 0
        %4943 = vmatprep.subr.bf16.mxu0 0
        %4944 = vmatpush1.bf16.msra.mxu0 0
        %4945 = vmatprep.mubr.bf16.mxu0 0
        %4946 = vmatmul.mubr.bf16.gmra.mrb[0].mxu0 %v4863
        %v4947 = vpop.f32.mrb[0].mxu0
        %v4948 = vadd.f32 0.0, %v4947
        %v4949 = vpop.f32.mrb[0].mxu0
        %v4950 = vpop.f32.mrb[0].mxu0
        %v4951 = vadd.f32 0.0, %v4950
        %v4952 = vpop.f32.mrb[0].mxu0
        %4953 = vmatprep.mubr.bf16.mxu0 0
        %4954 = vmatmul.mubr.bf16.gmra.mrb[0].mxu0 %v4866
        %v4955 = vpop.f32.mrb[0].mxu0
        %v4956 = vadd.f32 0.0, %v4955
        %v4957 = vpop.f32.mrb[0].mxu0
        %v4958 = vpop.f32.mrb[0].mxu0
        %v4959 = vadd.f32 0.0, %v4958
        %v4960 = vpop.f32.mrb[0].mxu0
        %4961 = vmatprep.mubr.bf16.mxu0 0
        %4962 = vmatmul.mubr.bf16.gmra.mrb[0].mxu0 %v4869
        %v4963 = vpop.f32.mrb[0].mxu0
        %v4964 = vadd.f32 0.0, %v4963
        %v4965 = vpop.f32.mrb[0].mxu0
        %v4966 = vpop.f32.mrb[0].mxu0
        %v4967 = vadd.f32 0.0, %v4966
        %v4968 = vpop.f32.mrb[0].mxu0
        %4969 = vmatprep.mubr.bf16.mxu0 0
        %4970 = vmatmul.mubr.bf16.gmra.mrb[0].mxu0 %v4872
        %v4971 = vpop.f32.mrb[0].mxu0
        %v4972 = vadd.f32 0.0, %v4971
        %v4973 = vpop.f32.mrb[0].mxu0
        %v4974 = vpop.f32.mrb[0].mxu0
        %v4975 = vadd.f32 0.0, %v4974
        %v4976 = vpop.f32.mrb[0].mxu0
        %4977 = vmatprep.mubr.bf16.mxu0 0
        %4978 = vmatmul.mubr.bf16.gmra.mrb[0].mxu0 %v4875
        %v4979 = vpop.f32.mrb[0].mxu0
        %v4980 = vadd.f32 0.0, %v4979
        %v4981 = vpop.f32.mrb[0].mxu0
        %v4982 = vpop.f32.mrb[0].mxu0
        %v4983 = vadd.f32 0.0, %v4982
        %v4984 = vpop.f32.mrb[0].mxu0
        %4985 = vmatprep.mubr.bf16.mxu0 0
        %4986 = vmatmul.mubr.bf16.gmra.mrb[0].mxu0 %v4878
        %v4987 = vpop.f32.mrb[0].mxu0
        %v4988 = vadd.f32 0.0, %v4987
        %v4989 = vpop.f32.mrb[0].mxu0
        %v4990 = vpop.f32.mrb[0].mxu0
        %v4991 = vadd.f32 0.0, %v4990
        %v4992 = vpop.f32.mrb[0].mxu0
        %4993 = vmatprep.mubr.bf16.mxu0 0
        %4994 = vmatmul.mubr.bf16.gmra.mrb[0].mxu0 %v4881
        %v4995 = vpop.f32.mrb[0].mxu0
        %v4996 = vadd.f32 0.0, %v4995
        %v4997 = vpop.f32.mrb[0].mxu0
        %v4998 = vpop.f32.mrb[0].mxu0
        %v4999 = vadd.f32 0.0, %v4998
        %v5000 = vpop.f32.mrb[0].mxu0
        %5001 = vmatprep.mubr.bf16.mxu0 0
        %5002 = vmatmul.mubr.bf16.gmra.mrb[0].mxu0 %v4884
        %v5003 = vpop.f32.mrb[0].mxu0
        %v5004 = vadd.f32 0.0, %v5003
        %v5005 = vpop.f32.mrb[0].mxu0
        %v5006 = vpop.f32.mrb[0].mxu0
        %v5007 = vadd.f32 0.0, %v5006
        %v5008 = vpop.f32.mrb[0].mxu0
        %5009 = vmatprep.mubr.bf16.mxu0 0
        %5010 = vmatmul.mubr.bf16.gmra.mrb[0].mxu0 %v4887
        %v5011 = vpop.f32.mrb[0].mxu0
        %v5012 = vadd.f32 0.0, %v5011
        %v5013 = vpop.f32.mrb[0].mxu0
        %v5014 = vpop.f32.mrb[0].mxu0
        %v5015 = vadd.f32 0.0, %v5014
        %v5016 = vpop.f32.mrb[0].mxu0
        %5017 = vmatprep.mubr.bf16.mxu0 0
        %5018 = vmatmul.mubr.bf16.gmra.mrb[0].mxu0 %v4890
        %v5019 = vpop.f32.mrb[0].mxu0
        %v5020 = vadd.f32 0.0, %v5019
        %v5021 = vpop.f32.mrb[0].mxu0
        %v5022 = vpop.f32.mrb[0].mxu0
        %v5023 = vadd.f32 0.0, %v5022
        %v5024 = vpop.f32.mrb[0].mxu0
        %5025 = vmatprep.mubr.bf16.mxu0 0
        %5026 = vmatmul.mubr.bf16.gmra.mrb[0].mxu0 %v4893
        %v5027 = vpop.f32.mrb[0].mxu0
        %v5028 = vadd.f32 0.0, %v5027
        %v5029 = vpop.f32.mrb[0].mxu0
        %v5030 = vpop.f32.mrb[0].mxu0
        %v5031 = vadd.f32 0.0, %v5030
        %v5032 = vpop.f32.mrb[0].mxu0
        %5033 = vmatprep.mubr.bf16.mxu0 0
        %5034 = vmatmul.mubr.bf16.gmra.mrb[0].mxu0 %v4896
        %v5035 = vpop.f32.mrb[0].mxu0
        %v5036 = vadd.f32 0.0, %v5035
        %v5037 = vpop.f32.mrb[0].mxu0
        %v5038 = vpop.f32.mrb[0].mxu0
        %v5039 = vadd.f32 0.0, %v5038
        %v5040 = vpop.f32.mrb[0].mxu0
        %5041 = vmatprep.mubr.bf16.mxu0 0
        %5042 = vmatmul.mubr.bf16.gmra.mrb[0].mxu0 %v4899
        %v5043 = vpop.f32.mrb[0].mxu0
        %v5044 = vadd.f32 0.0, %v5043
        %v5045 = vpop.f32.mrb[0].mxu0
        %v5046 = vpop.f32.mrb[0].mxu0
        %v5047 = vadd.f32 0.0, %v5046
        %v5048 = vpop.f32.mrb[0].mxu0
        %5049 = vmatprep.mubr.bf16.mxu0 0
        %5050 = vmatmul.mubr.bf16.gmra.mrb[0].mxu0 %v4902
        %v5051 = vpop.f32.mrb[0].mxu0
        %v5052 = vadd.f32 0.0, %v5051
        %v5053 = vpop.f32.mrb[0].mxu0
        %v5054 = vpop.f32.mrb[0].mxu0
        %v5055 = vadd.f32 0.0, %v5054
        %v5056 = vpop.f32.mrb[0].mxu0
        %5057 = vmatprep.mubr.bf16.mxu0 0
        %5058 = vmatmul.mubr.bf16.gmra.mrb[0].mxu0 %v4905
        %v5059 = vpop.f32.mrb[0].mxu0
        %v5060 = vadd.f32 0.0, %v5059
        %v5061 = vpop.f32.mrb[0].mxu0
        %v5062 = vpop.f32.mrb[0].mxu0
        %v5063 = vadd.f32 0.0, %v5062
        %v5064 = vpop.f32.mrb[0].mxu0
        %5065 = vmatprep.mubr.bf16.mxu0 0
        %5066 = vmatmul.mubr.bf16.gmra.mrb[0].mxu0 %v4908
        %v5067 = vpop.f32.mrb[0].mxu0
        %v5068 = vadd.f32 0.0, %v5067
        %v5069 = vpop.f32.mrb[0].mxu0
        %v5070 = vpop.f32.mrb[0].mxu0
        %v5071 = vadd.f32 0.0, %v5070
        %v5072 = vpop.f32.mrb[0].mxu0
        %5073 = vdwg.mxu0
        %v5074 = vadd.f32 %v4774, %v4948
        %v5075 = vadd.f32 %v4775, %v4951
        %v5076 = vadd.f32 %v4776, %v4956
        %v5077 = vadd.f32 %v4777, %v4959
        %v5078 = vadd.f32 %v4778, %v4964
        %v5079 = vadd.f32 %v4779, %v4967
        %v5080 = vadd.f32 %v4780, %v4972
        %v5081 = vadd.f32 %v4781, %v4975
        %v5082 = vadd.f32 %v4782, %v4980
        %v5083 = vadd.f32 %v4783, %v4983
        %v5084 = vadd.f32 %v4784, %v4988
        %v5085 = vadd.f32 %v4785, %v4991
        %v5086 = vadd.f32 %v4786, %v4996
        %v5087 = vadd.f32 %v4787, %v4999
        %v5088 = vadd.f32 %v4788, %v5004
        %v5089 = vadd.f32 %v4789, %v5007
        %v5090 = vadd.f32 %v4790, %v5012
        %v5091 = vadd.f32 %v4791, %v5015
        %v5092 = vadd.f32 %v4792, %v5020
        %v5093 = vadd.f32 %v4793, %v5023
        %v5094 = vadd.f32 %v4794, %v5028
        %v5095 = vadd.f32 %v4795, %v5031
        %v5096 = vadd.f32 %v4796, %v5036
        %v5097 = vadd.f32 %v4797, %v5039
        %v5098 = vadd.f32 %v4798, %v5044
        %v5099 = vadd.f32 %v4799, %v5047
        %v5100 = vadd.f32 %v4800, %v5052
        %v5101 = vadd.f32 %v4801, %v5055
        %v5102 = vadd.f32 %v4802, %v5060
        %v5103 = vadd.f32 %v4803, %v5063
        %v5104 = vadd.f32 %v4804, %v5068
        %v5105 = vadd.f32 %v4805, %v5071
        %s5106 = scalar_lea.vmem [#allocation3], 48
        %v5107 = vld [vmem:[%s5106] sm:$0xff]
        %v5108 = vld [vmem:[%s5106 + $0x8] sm:$0xff]
        %v5109 = vld [vmem:[%s5106 + $0x18] sm:$0xff]
        %v5110 = vld [vmem:[%s5106 + $0x20] sm:$0xff]
        %v5111 = vld [vmem:[%s5106 + $0x30] sm:$0xff]
        %v5112 = vld [vmem:[%s5106 + $0x38] sm:$0xff]
        %v5113 = vld [vmem:[%s5106 + $0x48] sm:$0xff]
        %v5114 = vld [vmem:[%s5106 + $0x50] sm:$0xff]
        %v5115 = vld [vmem:[%s5106 + $0x60] sm:$0xff]
        %v5116 = vld [vmem:[%s5106 + $0x68] sm:$0xff]
        %v5117 = vld [vmem:[%s5106 + $0x78] sm:$0xff]
        %v5118 = vld [vmem:[%s5106 + $0x80] sm:$0xff]
        %v5119 = vld [vmem:[%s5106 + $0x90] sm:$0xff]
        %v5120 = vld [vmem:[%s5106 + $0x98] sm:$0xff]
        %v5121 = vld [vmem:[%s5106 + $0xa8] sm:$0xff]
        %v5122 = vld [vmem:[%s5106 + $0xb0] sm:$0xff]
        %v5123 = vld [vmem:[%s5106 + $0xc0] sm:$0xff]
        %v5124 = vld [vmem:[%s5106 + $0xc8] sm:$0xff]
        %v5125 = vld [vmem:[%s5106 + $0xd8] sm:$0xff]
        %v5126 = vld [vmem:[%s5106 + $0xe0] sm:$0xff]
        %v5127 = vld [vmem:[%s5106 + $0xf0] sm:$0xff]
        %v5128 = vld [vmem:[%s5106 + $0xf8] sm:$0xff]
        %v5129 = vld [vmem:[%s5106 + $0x108] sm:$0xff]
        %v5130 = vld [vmem:[%s5106 + $0x110] sm:$0xff]
        %v5131 = vld [vmem:[%s5106 + $0x120] sm:$0xff]
        %v5132 = vld [vmem:[%s5106 + $0x128] sm:$0xff]
        %v5133 = vld [vmem:[%s5106 + $0x138] sm:$0xff]
        %v5134 = vld [vmem:[%s5106 + $0x140] sm:$0xff]
        %v5135 = vld [vmem:[%s5106 + $0x150] sm:$0xff]
        %v5136 = vld [vmem:[%s5106 + $0x158] sm:$0xff]
        %v5137 = vld [vmem:[%s5106 + $0x168] sm:$0xff]
        %v5138 = vld [vmem:[%s5106 + $0x170] sm:$0xff]
        %v5139 = vpack.c.bf16 %v5108, %v5107
        %v5140 = vpack.c.bf16 %v5110, %v5109
        %v5141 = vpack.c.bf16 %v5112, %v5111
        %v5142 = vpack.c.bf16 %v5114, %v5113
        %v5143 = vpack.c.bf16 %v5116, %v5115
        %v5144 = vpack.c.bf16 %v5118, %v5117
        %v5145 = vpack.c.bf16 %v5120, %v5119
        %v5146 = vpack.c.bf16 %v5122, %v5121
        %v5147 = vpack.c.bf16 %v5124, %v5123
        %v5148 = vpack.c.bf16 %v5126, %v5125
        %v5149 = vpack.c.bf16 %v5128, %v5127
        %v5150 = vpack.c.bf16 %v5130, %v5129
        %v5151 = vpack.c.bf16 %v5132, %v5131
        %v5152 = vpack.c.bf16 %v5134, %v5133
        %v5153 = vpack.c.bf16 %v5136, %v5135
        %v5154 = vpack.c.bf16 %v5138, %v5137
        %s5155 = scalar_lea.vmem %s3, 48
        %v5156 = vld [vmem:[%s5155] sm:$0xf]
        %v5157 = vld [vmem:[%s5155 + $0x4] sm:$0x3]
        %v5160 = vunpack.c.l.b16 %v5156
        %v5161 = vunpack.c.l.b16 %v5157
        %v5162 = vpack.c.b16 %v5161, %v5160
        %v5164 = vsel %vm3281, %v5139, 0
        %v5167 = vsel %vm3281, %v5140, 0
        %v5170 = vsel %vm3281, %v5141, 0
        %v5173 = vsel %vm3281, %v5142, 0
        %v5176 = vsel %vm3281, %v5143, 0
        %v5179 = vsel %vm3281, %v5144, 0
        %v5182 = vsel %vm3281, %v5145, 0
        %v5185 = vsel %vm3281, %v5146, 0
        %v5188 = vsel %vm3281, %v5147, 0
        %v5191 = vsel %vm3281, %v5148, 0
        %v5194 = vsel %vm3281, %v5149, 0
        %v5197 = vsel %vm3281, %v5150, 0
        %v5200 = vsel %vm3281, %v5151, 0
        %v5203 = vsel %vm3281, %v5152, 0
        %v5206 = vsel %vm3281, %v5153, 0
        %v5209 = vsel %vm3281, %v5154, 0
        %v5212 = vsel %vm3524, %v5162, 0
        %5214 = vmatprep.subr.bf16.mxu0 0
        %5215 = vmatpush1.bf16.msra.mxu0 %v5212
        %5216 = vmatprep.subr.bf16.mxu0 0
        %5217 = vmatpush1.bf16.msra.mxu0 0
        %5218 = vmatprep.subr.bf16.mxu0 0
        %5219 = vmatpush1.bf16.msra.mxu0 0
        %5220 = vmatprep.subr.bf16.mxu0 0
        %5221 = vmatpush1.bf16.msra.mxu0 0
        %5222 = vmatprep.subr.bf16.mxu0 0
        %5223 = vmatpush1.bf16.msra.mxu0 0
        %5224 = vmatprep.subr.bf16.mxu0 0
        %5225 = vmatpush1.bf16.msra.mxu0 0
        %5226 = vmatprep.subr.bf16.mxu0 0
        %5227 = vmatpush1.bf16.msra.mxu0 0
        %5228 = vmatprep.subr.bf16.mxu0 0
        %5229 = vmatpush1.bf16.msra.mxu0 0
        %5230 = vmatprep.subr.bf16.mxu0 0
        %5231 = vmatpush1.bf16.msra.mxu0 0
        %5232 = vmatprep.subr.bf16.mxu0 0
        %5233 = vmatpush1.bf16.msra.mxu0 0
        %5234 = vmatprep.subr.bf16.mxu0 0
        %5235 = vmatpush1.bf16.msra.mxu0 0
        %5236 = vmatprep.subr.bf16.mxu0 0
        %5237 = vmatpush1.bf16.msra.mxu0 0
        %5238 = vmatprep.subr.bf16.mxu0 0
        %5239 = vmatpush1.bf16.msra.mxu0 0
        %5240 = vmatprep.subr.bf16.mxu0 0
        %5241 = vmatpush1.bf16.msra.mxu0 0
        %5242 = vmatprep.subr.bf16.mxu0 0
        %5243 = vmatpush1.bf16.msra.mxu0 0
        %5244 = vmatprep.subr.bf16.mxu0 0
        %5245 = vmatpush1.bf16.msra.mxu0 0
        %5246 = vmatprep.mubr.bf16.mxu0 0
        %5247 = vmatmul.mubr.bf16.gmra.mrb[0].mxu0 %v5164
        %v5248 = vpop.f32.mrb[0].mxu0
        %v5249 = vadd.f32 0.0, %v5248
        %v5250 = vpop.f32.mrb[0].mxu0
        %v5251 = vpop.f32.mrb[0].mxu0
        %v5252 = vadd.f32 0.0, %v5251
        %v5253 = vpop.f32.mrb[0].mxu0
        %5254 = vmatprep.mubr.bf16.mxu0 0
        %5255 = vmatmul.mubr.bf16.gmra.mrb[0].mxu0 %v5167
        %v5256 = vpop.f32.mrb[0].mxu0
        %v5257 = vadd.f32 0.0, %v5256
        %v5258 = vpop.f32.mrb[0].mxu0
        %v5259 = vpop.f32.mrb[0].mxu0
        %v5260 = vadd.f32 0.0, %v5259
        %v5261 = vpop.f32.mrb[0].mxu0
        %5262 = vmatprep.mubr.bf16.mxu0 0
        %5263 = vmatmul.mubr.bf16.gmra.mrb[0].mxu0 %v5170
        %v5264 = vpop.f32.mrb[0].mxu0
        %v5265 = vadd.f32 0.0, %v5264
        %v5266 = vpop.f32.mrb[0].mxu0
        %v5267 = vpop.f32.mrb[0].mxu0
        %v5268 = vadd.f32 0.0, %v5267
        %v5269 = vpop.f32.mrb[0].mxu0
        %5270 = vmatprep.mubr.bf16.mxu0 0
        %5271 = vmatmul.mubr.bf16.gmra.mrb[0].mxu0 %v5173
        %v5272 = vpop.f32.mrb[0].mxu0
        %v5273 = vadd.f32 0.0, %v5272
        %v5274 = vpop.f32.mrb[0].mxu0
        %v5275 = vpop.f32.mrb[0].mxu0
        %v5276 = vadd.f32 0.0, %v5275
        %v5277 = vpop.f32.mrb[0].mxu0
        %5278 = vmatprep.mubr.bf16.mxu0 0
        %5279 = vmatmul.mubr.bf16.gmra.mrb[0].mxu0 %v5176
        %v5280 = vpop.f32.mrb[0].mxu0
        %v5281 = vadd.f32 0.0, %v5280
        %v5282 = vpop.f32.mrb[0].mxu0
        %v5283 = vpop.f32.mrb[0].mxu0
        %v5284 = vadd.f32 0.0, %v5283
        %v5285 = vpop.f32.mrb[0].mxu0
        %5286 = vmatprep.mubr.bf16.mxu0 0
        %5287 = vmatmul.mubr.bf16.gmra.mrb[0].mxu0 %v5179
        %v5288 = vpop.f32.mrb[0].mxu0
        %v5289 = vadd.f32 0.0, %v5288
        %v5290 = vpop.f32.mrb[0].mxu0
        %v5291 = vpop.f32.mrb[0].mxu0
        %v5292 = vadd.f32 0.0, %v5291
        %v5293 = vpop.f32.mrb[0].mxu0
        %5294 = vmatprep.mubr.bf16.mxu0 0
        %5295 = vmatmul.mubr.bf16.gmra.mrb[0].mxu0 %v5182
        %v5296 = vpop.f32.mrb[0].mxu0
        %v5297 = vadd.f32 0.0, %v5296
        %v5298 = vpop.f32.mrb[0].mxu0
        %v5299 = vpop.f32.mrb[0].mxu0
        %v5300 = vadd.f32 0.0, %v5299
        %v5301 = vpop.f32.mrb[0].mxu0
        %5302 = vmatprep.mubr.bf16.mxu0 0
        %5303 = vmatmul.mubr.bf16.gmra.mrb[0].mxu0 %v5185
        %v5304 = vpop.f32.mrb[0].mxu0
        %v5305 = vadd.f32 0.0, %v5304
        %v5306 = vpop.f32.mrb[0].mxu0
        %v5307 = vpop.f32.mrb[0].mxu0
        %v5308 = vadd.f32 0.0, %v5307
        %v5309 = vpop.f32.mrb[0].mxu0
        %5310 = vmatprep.mubr.bf16.mxu0 0
        %5311 = vmatmul.mubr.bf16.gmra.mrb[0].mxu0 %v5188
        %v5312 = vpop.f32.mrb[0].mxu0
        %v5313 = vadd.f32 0.0, %v5312
        %v5314 = vpop.f32.mrb[0].mxu0
        %v5315 = vpop.f32.mrb[0].mxu0
        %v5316 = vadd.f32 0.0, %v5315
        %v5317 = vpop.f32.mrb[0].mxu0
        %5318 = vmatprep.mubr.bf16.mxu0 0
        %5319 = vmatmul.mubr.bf16.gmra.mrb[0].mxu0 %v5191
        %v5320 = vpop.f32.mrb[0].mxu0
        %v5321 = vadd.f32 0.0, %v5320
        %v5322 = vpop.f32.mrb[0].mxu0
        %v5323 = vpop.f32.mrb[0].mxu0
        %v5324 = vadd.f32 0.0, %v5323
        %v5325 = vpop.f32.mrb[0].mxu0
        %5326 = vmatprep.mubr.bf16.mxu0 0
        %5327 = vmatmul.mubr.bf16.gmra.mrb[0].mxu0 %v5194
        %v5328 = vpop.f32.mrb[0].mxu0
        %v5329 = vadd.f32 0.0, %v5328
        %v5330 = vpop.f32.mrb[0].mxu0
        %v5331 = vpop.f32.mrb[0].mxu0
        %v5332 = vadd.f32 0.0, %v5331
        %v5333 = vpop.f32.mrb[0].mxu0
        %5334 = vmatprep.mubr.bf16.mxu0 0
        %5335 = vmatmul.mubr.bf16.gmra.mrb[0].mxu0 %v5197
        %v5336 = vpop.f32.mrb[0].mxu0
        %v5337 = vadd.f32 0.0, %v5336
        %v5338 = vpop.f32.mrb[0].mxu0
        %v5339 = vpop.f32.mrb[0].mxu0
        %v5340 = vadd.f32 0.0, %v5339
        %v5341 = vpop.f32.mrb[0].mxu0
        %5342 = vmatprep.mubr.bf16.mxu0 0
        %5343 = vmatmul.mubr.bf16.gmra.mrb[0].mxu0 %v5200
        %v5344 = vpop.f32.mrb[0].mxu0
        %v5345 = vadd.f32 0.0, %v5344
        %v5346 = vpop.f32.mrb[0].mxu0
        %v5347 = vpop.f32.mrb[0].mxu0
        %v5348 = vadd.f32 0.0, %v5347
        %v5349 = vpop.f32.mrb[0].mxu0
        %5350 = vmatprep.mubr.bf16.mxu0 0
        %5351 = vmatmul.mubr.bf16.gmra.mrb[0].mxu0 %v5203
        %v5352 = vpop.f32.mrb[0].mxu0
        %v5353 = vadd.f32 0.0, %v5352
        %v5354 = vpop.f32.mrb[0].mxu0
        %v5355 = vpop.f32.mrb[0].mxu0
        %v5356 = vadd.f32 0.0, %v5355
        %v5357 = vpop.f32.mrb[0].mxu0
        %5358 = vmatprep.mubr.bf16.mxu0 0
        %5359 = vmatmul.mubr.bf16.gmra.mrb[0].mxu0 %v5206
        %v5360 = vpop.f32.mrb[0].mxu0
        %v5361 = vadd.f32 0.0, %v5360
        %v5362 = vpop.f32.mrb[0].mxu0
        %v5363 = vpop.f32.mrb[0].mxu0
        %v5364 = vadd.f32 0.0, %v5363
        %v5365 = vpop.f32.mrb[0].mxu0
        %5366 = vmatprep.mubr.bf16.mxu0 0
        %5367 = vmatmul.mubr.bf16.gmra.mrb[0].mxu0 %v5209
        %v5368 = vpop.f32.mrb[0].mxu0
        %v5369 = vadd.f32 0.0, %v5368
        %v5370 = vpop.f32.mrb[0].mxu0
        %v5371 = vpop.f32.mrb[0].mxu0
        %v5372 = vadd.f32 0.0, %v5371
        %v5373 = vpop.f32.mrb[0].mxu0
        %5374 = vdwg.mxu0
        %v5375 = vadd.f32 %v5074, %v5249
        %v5376 = vadd.f32 %v5075, %v5252
        %v5377 = vadd.f32 %v5076, %v5257
        %v5378 = vadd.f32 %v5077, %v5260
        %v5379 = vadd.f32 %v5078, %v5265
        %v5380 = vadd.f32 %v5079, %v5268
        %v5381 = vadd.f32 %v5080, %v5273
        %v5382 = vadd.f32 %v5081, %v5276
        %v5383 = vadd.f32 %v5082, %v5281
        %v5384 = vadd.f32 %v5083, %v5284
        %v5385 = vadd.f32 %v5084, %v5289
        %v5386 = vadd.f32 %v5085, %v5292
        %v5387 = vadd.f32 %v5086, %v5297
        %v5388 = vadd.f32 %v5087, %v5300
        %v5389 = vadd.f32 %v5088, %v5305
        %v5390 = vadd.f32 %v5089, %v5308
        %v5391 = vadd.f32 %v5090, %v5313
        %v5392 = vadd.f32 %v5091, %v5316
        %v5393 = vadd.f32 %v5092, %v5321
        %v5394 = vadd.f32 %v5093, %v5324
        %v5395 = vadd.f32 %v5094, %v5329
        %v5396 = vadd.f32 %v5095, %v5332
        %v5397 = vadd.f32 %v5096, %v5337
        %v5398 = vadd.f32 %v5097, %v5340
        %v5399 = vadd.f32 %v5098, %v5345
        %v5400 = vadd.f32 %v5099, %v5348
        %v5401 = vadd.f32 %v5100, %v5353
        %v5402 = vadd.f32 %v5101, %v5356
        %v5403 = vadd.f32 %v5102, %v5361
        %v5404 = vadd.f32 %v5103, %v5364
        %v5405 = vadd.f32 %v5104, %v5369
        %v5406 = vadd.f32 %v5105, %v5372
        %v5407 = vld [vmem:[%s5106 + $0x1] sm:$0xff]
        %v5408 = vld [vmem:[%s5106 + $0x9] sm:$0xff]
        %v5409 = vld [vmem:[%s5106 + $0x19] sm:$0xff]
        %v5410 = vld [vmem:[%s5106 + $0x21] sm:$0xff]
        %v5411 = vld [vmem:[%s5106 + $0x31] sm:$0xff]
        %v5412 = vld [vmem:[%s5106 + $0x39] sm:$0xff]
        %v5413 = vld [vmem:[%s5106 + $0x49] sm:$0xff]
        %v5414 = vld [vmem:[%s5106 + $0x51] sm:$0xff]
        %v5415 = vld [vmem:[%s5106 + $0x61] sm:$0xff]
        %v5416 = vld [vmem:[%s5106 + $0x69] sm:$0xff]
        %v5417 = vld [vmem:[%s5106 + $0x79] sm:$0xff]
        %v5418 = vld [vmem:[%s5106 + $0x81] sm:$0xff]
        %v5419 = vld [vmem:[%s5106 + $0x91] sm:$0xff]
        %v5420 = vld [vmem:[%s5106 + $0x99] sm:$0xff]
        %v5421 = vld [vmem:[%s5106 + $0xa9] sm:$0xff]
        %v5422 = vld [vmem:[%s5106 + $0xb1] sm:$0xff]
        %v5423 = vld [vmem:[%s5106 + $0xc1] sm:$0xff]
        %v5424 = vld [vmem:[%s5106 + $0xc9] sm:$0xff]
        %v5425 = vld [vmem:[%s5106 + $0xd9] sm:$0xff]
        %v5426 = vld [vmem:[%s5106 + $0xe1] sm:$0xff]
        %v5427 = vld [vmem:[%s5106 + $0xf1] sm:$0xff]
        %v5428 = vld [vmem:[%s5106 + $0xf9] sm:$0xff]
        %v5429 = vld [vmem:[%s5106 + $0x109] sm:$0xff]
        %v5430 = vld [vmem:[%s5106 + $0x111] sm:$0xff]
        %v5431 = vld [vmem:[%s5106 + $0x121] sm:$0xff]
        %v5432 = vld [vmem:[%s5106 + $0x129] sm:$0xff]
        %v5433 = vld [vmem:[%s5106 + $0x139] sm:$0xff]
        %v5434 = vld [vmem:[%s5106 + $0x141] sm:$0xff]
        %v5435 = vld [vmem:[%s5106 + $0x151] sm:$0xff]
        %v5436 = vld [vmem:[%s5106 + $0x159] sm:$0xff]
        %v5437 = vld [vmem:[%s5106 + $0x169] sm:$0xff]
        %v5438 = vld [vmem:[%s5106 + $0x171] sm:$0xff]
        %v5439 = vpack.c.bf16 %v5408, %v5407
        %v5440 = vpack.c.bf16 %v5410, %v5409
        %v5441 = vpack.c.bf16 %v5412, %v5411
        %v5442 = vpack.c.bf16 %v5414, %v5413
        %v5443 = vpack.c.bf16 %v5416, %v5415
        %v5444 = vpack.c.bf16 %v5418, %v5417
        %v5445 = vpack.c.bf16 %v5420, %v5419
        %v5446 = vpack.c.bf16 %v5422, %v5421
        %v5447 = vpack.c.bf16 %v5424, %v5423
        %v5448 = vpack.c.bf16 %v5426, %v5425
        %v5449 = vpack.c.bf16 %v5428, %v5427
        %v5450 = vpack.c.bf16 %v5430, %v5429
        %v5451 = vpack.c.bf16 %v5432, %v5431
        %v5452 = vpack.c.bf16 %v5434, %v5433
        %v5453 = vpack.c.bf16 %v5436, %v5435
        %v5454 = vpack.c.bf16 %v5438, %v5437
        %s5455 = scalar_lea.vmem %s3, 56
        %v5456 = vld [vmem:[%s5455] sm:$0xf]
        %v5457 = vld [vmem:[%s5455 + $0x4] sm:$0x3]
        %v5460 = vunpack.c.l.b16 %v5456
        %v5461 = vunpack.c.l.b16 %v5457
        %v5462 = vpack.c.b16 %v5461, %v5460
        %v5464 = vsel %vm3281, %v5439, 0
        %v5467 = vsel %vm3281, %v5440, 0
        %v5470 = vsel %vm3281, %v5441, 0
        %v5473 = vsel %vm3281, %v5442, 0
        %v5476 = vsel %vm3281, %v5443, 0
        %v5479 = vsel %vm3281, %v5444, 0
        %v5482 = vsel %vm3281, %v5445, 0
        %v5485 = vsel %vm3281, %v5446, 0
        %v5488 = vsel %vm3281, %v5447, 0
        %v5491 = vsel %vm3281, %v5448, 0
        %v5494 = vsel %vm3281, %v5449, 0
        %v5497 = vsel %vm3281, %v5450, 0
        %v5500 = vsel %vm3281, %v5451, 0
        %v5503 = vsel %vm3281, %v5452, 0
        %v5506 = vsel %vm3281, %v5453, 0
        %v5509 = vsel %vm3281, %v5454, 0
        %v5512 = vsel %vm3524, %v5462, 0
        %5514 = vmatprep.subr.bf16.mxu0 0
        %5515 = vmatpush1.bf16.msra.mxu0 %v5512
        %5516 = vmatprep.subr.bf16.mxu0 0
        %5517 = vmatpush1.bf16.msra.mxu0 0
        %5518 = vmatprep.subr.bf16.mxu0 0
        %5519 = vmatpush1.bf16.msra.mxu0 0
        %5520 = vmatprep.subr.bf16.mxu0 0
        %5521 = vmatpush1.bf16.msra.mxu0 0
        %5522 = vmatprep.subr.bf16.mxu0 0
        %5523 = vmatpush1.bf16.msra.mxu0 0
        %5524 = vmatprep.subr.bf16.mxu0 0
        %5525 = vmatpush1.bf16.msra.mxu0 0
        %5526 = vmatprep.subr.bf16.mxu0 0
        %5527 = vmatpush1.bf16.msra.mxu0 0
        %5528 = vmatprep.subr.bf16.mxu0 0
        %5529 = vmatpush1.bf16.msra.mxu0 0
        %5530 = vmatprep.subr.bf16.mxu0 0
        %5531 = vmatpush1.bf16.msra.mxu0 0
        %5532 = vmatprep.subr.bf16.mxu0 0
        %5533 = vmatpush1.bf16.msra.mxu0 0
        %5534 = vmatprep.subr.bf16.mxu0 0
        %5535 = vmatpush1.bf16.msra.mxu0 0
        %5536 = vmatprep.subr.bf16.mxu0 0
        %5537 = vmatpush1.bf16.msra.mxu0 0
        %5538 = vmatprep.subr.bf16.mxu0 0
        %5539 = vmatpush1.bf16.msra.mxu0 0
        %5540 = vmatprep.subr.bf16.mxu0 0
        %5541 = vmatpush1.bf16.msra.mxu0 0
        %5542 = vmatprep.subr.bf16.mxu0 0
        %5543 = vmatpush1.bf16.msra.mxu0 0
        %5544 = vmatprep.subr.bf16.mxu0 0
        %5545 = vmatpush1.bf16.msra.mxu0 0
        %5546 = vmatprep.mubr.bf16.mxu0 0
        %5547 = vmatmul.mubr.bf16.gmra.mrb[0].mxu0 %v5464
        %v5548 = vpop.f32.mrb[0].mxu0
        %v5549 = vadd.f32 0.0, %v5548
        %v5550 = vpop.f32.mrb[0].mxu0
        %v5551 = vpop.f32.mrb[0].mxu0
        %v5552 = vadd.f32 0.0, %v5551
        %v5553 = vpop.f32.mrb[0].mxu0
        %5554 = vmatprep.mubr.bf16.mxu0 0
        %5555 = vmatmul.mubr.bf16.gmra.mrb[0].mxu0 %v5467
        %v5556 = vpop.f32.mrb[0].mxu0
        %v5557 = vadd.f32 0.0, %v5556
        %v5558 = vpop.f32.mrb[0].mxu0
        %v5559 = vpop.f32.mrb[0].mxu0
        %v5560 = vadd.f32 0.0, %v5559
        %v5561 = vpop.f32.mrb[0].mxu0
        %5562 = vmatprep.mubr.bf16.mxu0 0
        %5563 = vmatmul.mubr.bf16.gmra.mrb[0].mxu0 %v5470
        %v5564 = vpop.f32.mrb[0].mxu0
        %v5565 = vadd.f32 0.0, %v5564
        %v5566 = vpop.f32.mrb[0].mxu0
        %v5567 = vpop.f32.mrb[0].mxu0
        %v5568 = vadd.f32 0.0, %v5567
        %v5569 = vpop.f32.mrb[0].mxu0
        %5570 = vmatprep.mubr.bf16.mxu0 0
        %5571 = vmatmul.mubr.bf16.gmra.mrb[0].mxu0 %v5473
        %v5572 = vpop.f32.mrb[0].mxu0
        %v5573 = vadd.f32 0.0, %v5572
        %v5574 = vpop.f32.mrb[0].mxu0
        %v5575 = vpop.f32.mrb[0].mxu0
        %v5576 = vadd.f32 0.0, %v5575
        %v5577 = vpop.f32.mrb[0].mxu0
        %5578 = vmatprep.mubr.bf16.mxu0 0
        %5579 = vmatmul.mubr.bf16.gmra.mrb[0].mxu0 %v5476
        %v5580 = vpop.f32.mrb[0].mxu0
        %v5581 = vadd.f32 0.0, %v5580
        %v5582 = vpop.f32.mrb[0].mxu0
        %v5583 = vpop.f32.mrb[0].mxu0
        %v5584 = vadd.f32 0.0, %v5583
        %v5585 = vpop.f32.mrb[0].mxu0
        %5586 = vmatprep.mubr.bf16.mxu0 0
        %5587 = vmatmul.mubr.bf16.gmra.mrb[0].mxu0 %v5479
        %v5588 = vpop.f32.mrb[0].mxu0
        %v5589 = vadd.f32 0.0, %v5588
        %v5590 = vpop.f32.mrb[0].mxu0
        %v5591 = vpop.f32.mrb[0].mxu0
        %v5592 = vadd.f32 0.0, %v5591
        %v5593 = vpop.f32.mrb[0].mxu0
        %5594 = vmatprep.mubr.bf16.mxu0 0
        %5595 = vmatmul.mubr.bf16.gmra.mrb[0].mxu0 %v5482
        %v5596 = vpop.f32.mrb[0].mxu0
        %v5597 = vadd.f32 0.0, %v5596
        %v5598 = vpop.f32.mrb[0].mxu0
        %v5599 = vpop.f32.mrb[0].mxu0
        %v5600 = vadd.f32 0.0, %v5599
        %v5601 = vpop.f32.mrb[0].mxu0
        %5602 = vmatprep.mubr.bf16.mxu0 0
        %5603 = vmatmul.mubr.bf16.gmra.mrb[0].mxu0 %v5485
        %v5604 = vpop.f32.mrb[0].mxu0
        %v5605 = vadd.f32 0.0, %v5604
        %v5606 = vpop.f32.mrb[0].mxu0
        %v5607 = vpop.f32.mrb[0].mxu0
        %v5608 = vadd.f32 0.0, %v5607
        %v5609 = vpop.f32.mrb[0].mxu0
        %5610 = vmatprep.mubr.bf16.mxu0 0
        %5611 = vmatmul.mubr.bf16.gmra.mrb[0].mxu0 %v5488
        %v5612 = vpop.f32.mrb[0].mxu0
        %v5613 = vadd.f32 0.0, %v5612
        %v5614 = vpop.f32.mrb[0].mxu0
        %v5615 = vpop.f32.mrb[0].mxu0
        %v5616 = vadd.f32 0.0, %v5615
        %v5617 = vpop.f32.mrb[0].mxu0
        %5618 = vmatprep.mubr.bf16.mxu0 0
        %5619 = vmatmul.mubr.bf16.gmra.mrb[0].mxu0 %v5491
        %v5620 = vpop.f32.mrb[0].mxu0
        %v5621 = vadd.f32 0.0, %v5620
        %v5622 = vpop.f32.mrb[0].mxu0
        %v5623 = vpop.f32.mrb[0].mxu0
        %v5624 = vadd.f32 0.0, %v5623
        %v5625 = vpop.f32.mrb[0].mxu0
        %5626 = vmatprep.mubr.bf16.mxu0 0
        %5627 = vmatmul.mubr.bf16.gmra.mrb[0].mxu0 %v5494
        %v5628 = vpop.f32.mrb[0].mxu0
        %v5629 = vadd.f32 0.0, %v5628
        %v5630 = vpop.f32.mrb[0].mxu0
        %v5631 = vpop.f32.mrb[0].mxu0
        %v5632 = vadd.f32 0.0, %v5631
        %v5633 = vpop.f32.mrb[0].mxu0
        %5634 = vmatprep.mubr.bf16.mxu0 0
        %5635 = vmatmul.mubr.bf16.gmra.mrb[0].mxu0 %v5497
        %v5636 = vpop.f32.mrb[0].mxu0
        %v5637 = vadd.f32 0.0, %v5636
        %v5638 = vpop.f32.mrb[0].mxu0
        %v5639 = vpop.f32.mrb[0].mxu0
        %v5640 = vadd.f32 0.0, %v5639
        %v5641 = vpop.f32.mrb[0].mxu0
        %5642 = vmatprep.mubr.bf16.mxu0 0
        %5643 = vmatmul.mubr.bf16.gmra.mrb[0].mxu0 %v5500
        %v5644 = vpop.f32.mrb[0].mxu0
        %v5645 = vadd.f32 0.0, %v5644
        %v5646 = vpop.f32.mrb[0].mxu0
        %v5647 = vpop.f32.mrb[0].mxu0
        %v5648 = vadd.f32 0.0, %v5647
        %v5649 = vpop.f32.mrb[0].mxu0
        %5650 = vmatprep.mubr.bf16.mxu0 0
        %5651 = vmatmul.mubr.bf16.gmra.mrb[0].mxu0 %v5503
        %v5652 = vpop.f32.mrb[0].mxu0
        %v5653 = vadd.f32 0.0, %v5652
        %v5654 = vpop.f32.mrb[0].mxu0
        %v5655 = vpop.f32.mrb[0].mxu0
        %v5656 = vadd.f32 0.0, %v5655
        %v5657 = vpop.f32.mrb[0].mxu0
        %5658 = vmatprep.mubr.bf16.mxu0 0
        %5659 = vmatmul.mubr.bf16.gmra.mrb[0].mxu0 %v5506
        %v5660 = vpop.f32.mrb[0].mxu0
        %v5661 = vadd.f32 0.0, %v5660
        %v5662 = vpop.f32.mrb[0].mxu0
        %v5663 = vpop.f32.mrb[0].mxu0
        %v5664 = vadd.f32 0.0, %v5663
        %v5665 = vpop.f32.mrb[0].mxu0
        %5666 = vmatprep.mubr.bf16.mxu0 0
        %5667 = vmatmul.mubr.bf16.gmra.mrb[0].mxu0 %v5509
        %v5668 = vpop.f32.mrb[0].mxu0
        %v5669 = vadd.f32 0.0, %v5668
        %v5670 = vpop.f32.mrb[0].mxu0
        %v5671 = vpop.f32.mrb[0].mxu0
        %v5672 = vadd.f32 0.0, %v5671
        %v5673 = vpop.f32.mrb[0].mxu0
        %5674 = vdwg.mxu0
        %v5675 = vadd.f32 %v5375, %v5549
        %v5676 = vadd.f32 %v5376, %v5552
        %v5677 = vadd.f32 %v5377, %v5557
        %v5678 = vadd.f32 %v5378, %v5560
        %v5679 = vadd.f32 %v5379, %v5565
        %v5680 = vadd.f32 %v5380, %v5568
        %v5681 = vadd.f32 %v5381, %v5573
        %v5682 = vadd.f32 %v5382, %v5576
        %v5683 = vadd.f32 %v5383, %v5581
        %v5684 = vadd.f32 %v5384, %v5584
        %v5685 = vadd.f32 %v5385, %v5589
        %v5686 = vadd.f32 %v5386, %v5592
        %v5687 = vadd.f32 %v5387, %v5597
        %v5688 = vadd.f32 %v5388, %v5600
        %v5689 = vadd.f32 %v5389, %v5605
        %v5690 = vadd.f32 %v5390, %v5608
        %v5691 = vadd.f32 %v5391, %v5613
        %v5692 = vadd.f32 %v5392, %v5616
        %v5693 = vadd.f32 %v5393, %v5621
        %v5694 = vadd.f32 %v5394, %v5624
        %v5695 = vadd.f32 %v5395, %v5629
        %v5696 = vadd.f32 %v5396, %v5632
        %v5697 = vadd.f32 %v5397, %v5637
        %v5698 = vadd.f32 %v5398, %v5640
        %v5699 = vadd.f32 %v5399, %v5645
        %v5700 = vadd.f32 %v5400, %v5648
        %v5701 = vadd.f32 %v5401, %v5653
        %v5702 = vadd.f32 %v5402, %v5656
        %v5703 = vadd.f32 %v5403, %v5661
        %v5704 = vadd.f32 %v5404, %v5664
        %v5705 = vadd.f32 %v5405, %v5669
        %v5706 = vadd.f32 %v5406, %v5672
        %v5707 = vld [vmem:[%s5106 + $0x2] sm:$0xff]
        %v5708 = vld [vmem:[%s5106 + $0xa] sm:$0xff]
        %v5709 = vld [vmem:[%s5106 + $0x1a] sm:$0xff]
        %v5710 = vld [vmem:[%s5106 + $0x22] sm:$0xff]
        %v5711 = vld [vmem:[%s5106 + $0x32] sm:$0xff]
        %v5712 = vld [vmem:[%s5106 + $0x3a] sm:$0xff]
        %v5713 = vld [vmem:[%s5106 + $0x4a] sm:$0xff]
        %v5714 = vld [vmem:[%s5106 + $0x52] sm:$0xff]
        %v5715 = vld [vmem:[%s5106 + $0x62] sm:$0xff]
        %v5716 = vld [vmem:[%s5106 + $0x6a] sm:$0xff]
        %v5717 = vld [vmem:[%s5106 + $0x7a] sm:$0xff]
        %v5718 = vld [vmem:[%s5106 + $0x82] sm:$0xff]
        %v5719 = vld [vmem:[%s5106 + $0x92] sm:$0xff]
        %v5720 = vld [vmem:[%s5106 + $0x9a] sm:$0xff]
        %v5721 = vld [vmem:[%s5106 + $0xaa] sm:$0xff]
        %v5722 = vld [vmem:[%s5106 + $0xb2] sm:$0xff]
        %v5723 = vld [vmem:[%s5106 + $0xc2] sm:$0xff]
        %v5724 = vld [vmem:[%s5106 + $0xca] sm:$0xff]
        %v5725 = vld [vmem:[%s5106 + $0xda] sm:$0xff]
        %v5726 = vld [vmem:[%s5106 + $0xe2] sm:$0xff]
        %v5727 = vld [vmem:[%s5106 + $0xf2] sm:$0xff]
        %v5728 = vld [vmem:[%s5106 + $0xfa] sm:$0xff]
        %v5729 = vld [vmem:[%s5106 + $0x10a] sm:$0xff]
        %v5730 = vld [vmem:[%s5106 + $0x112] sm:$0xff]
        %v5731 = vld [vmem:[%s5106 + $0x122] sm:$0xff]
        %v5732 = vld [vmem:[%s5106 + $0x12a] sm:$0xff]
        %v5733 = vld [vmem:[%s5106 + $0x13a] sm:$0xff]
        %v5734 = vld [vmem:[%s5106 + $0x142] sm:$0xff]
        %v5735 = vld [vmem:[%s5106 + $0x152] sm:$0xff]
        %v5736 = vld [vmem:[%s5106 + $0x15a] sm:$0xff]
        %v5737 = vld [vmem:[%s5106 + $0x16a] sm:$0xff]
        %v5738 = vld [vmem:[%s5106 + $0x172] sm:$0xff]
        %v5739 = vpack.c.bf16 %v5708, %v5707
        %v5740 = vpack.c.bf16 %v5710, %v5709
        %v5741 = vpack.c.bf16 %v5712, %v5711
        %v5742 = vpack.c.bf16 %v5714, %v5713
        %v5743 = vpack.c.bf16 %v5716, %v5715
        %v5744 = vpack.c.bf16 %v5718, %v5717
        %v5745 = vpack.c.bf16 %v5720, %v5719
        %v5746 = vpack.c.bf16 %v5722, %v5721
        %v5747 = vpack.c.bf16 %v5724, %v5723
        %v5748 = vpack.c.bf16 %v5726, %v5725
        %v5749 = vpack.c.bf16 %v5728, %v5727
        %v5750 = vpack.c.bf16 %v5730, %v5729
        %v5751 = vpack.c.bf16 %v5732, %v5731
        %v5752 = vpack.c.bf16 %v5734, %v5733
        %v5753 = vpack.c.bf16 %v5736, %v5735
        %v5754 = vpack.c.bf16 %v5738, %v5737
        %s5755 = scalar_lea.vmem %s3, 64
        %v5756 = vld [vmem:[%s5755] sm:$0xf]
        %v5757 = vld [vmem:[%s5755 + $0x4] sm:$0x3]
        %v5760 = vunpack.c.l.b16 %v5756
        %v5761 = vunpack.c.l.b16 %v5757
        %v5762 = vpack.c.b16 %v5761, %v5760
        %v5764 = vsel %vm3281, %v5739, 0
        %v5767 = vsel %vm3281, %v5740, 0
        %v5770 = vsel %vm3281, %v5741, 0
        %v5773 = vsel %vm3281, %v5742, 0
        %v5776 = vsel %vm3281, %v5743, 0
        %v5779 = vsel %vm3281, %v5744, 0
        %v5782 = vsel %vm3281, %v5745, 0
        %v5785 = vsel %vm3281, %v5746, 0
        %v5788 = vsel %vm3281, %v5747, 0
        %v5791 = vsel %vm3281, %v5748, 0
        %v5794 = vsel %vm3281, %v5749, 0
        %v5797 = vsel %vm3281, %v5750, 0
        %v5800 = vsel %vm3281, %v5751, 0
        %v5803 = vsel %vm3281, %v5752, 0
        %v5806 = vsel %vm3281, %v5753, 0
        %v5809 = vsel %vm3281, %v5754, 0
        %v5812 = vsel %vm3524, %v5762, 0
        %5814 = vmatprep.subr.bf16.mxu0 0
        %5815 = vmatpush1.bf16.msra.mxu0 %v5812
        %5816 = vmatprep.subr.bf16.mxu0 0
        %5817 = vmatpush1.bf16.msra.mxu0 0
        %5818 = vmatprep.subr.bf16.mxu0 0
        %5819 = vmatpush1.bf16.msra.mxu0 0
        %5820 = vmatprep.subr.bf16.mxu0 0
        %5821 = vmatpush1.bf16.msra.mxu0 0
        %5822 = vmatprep.subr.bf16.mxu0 0
        %5823 = vmatpush1.bf16.msra.mxu0 0
        %5824 = vmatprep.subr.bf16.mxu0 0
        %5825 = vmatpush1.bf16.msra.mxu0 0
        %5826 = vmatprep.subr.bf16.mxu0 0
        %5827 = vmatpush1.bf16.msra.mxu0 0
        %5828 = vmatprep.subr.bf16.mxu0 0
        %5829 = vmatpush1.bf16.msra.mxu0 0
        %5830 = vmatprep.subr.bf16.mxu0 0
        %5831 = vmatpush1.bf16.msra.mxu0 0
        %5832 = vmatprep.subr.bf16.mxu0 0
        %5833 = vmatpush1.bf16.msra.mxu0 0
        %5834 = vmatprep.subr.bf16.mxu0 0
        %5835 = vmatpush1.bf16.msra.mxu0 0
        %5836 = vmatprep.subr.bf16.mxu0 0
        %5837 = vmatpush1.bf16.msra.mxu0 0
        %5838 = vmatprep.subr.bf16.mxu0 0
        %5839 = vmatpush1.bf16.msra.mxu0 0
        %5840 = vmatprep.subr.bf16.mxu0 0
        %5841 = vmatpush1.bf16.msra.mxu0 0
        %5842 = vmatprep.subr.bf16.mxu0 0
        %5843 = vmatpush1.bf16.msra.mxu0 0
        %5844 = vmatprep.subr.bf16.mxu0 0
        %5845 = vmatpush1.bf16.msra.mxu0 0
        %5846 = vmatprep.mubr.bf16.mxu0 0
        %5847 = vmatmul.mubr.bf16.gmra.mrb[0].mxu0 %v5764
        %v5848 = vpop.f32.mrb[0].mxu0
        %v5849 = vadd.f32 0.0, %v5848
        %v5850 = vpop.f32.mrb[0].mxu0
        %v5851 = vpop.f32.mrb[0].mxu0
        %v5852 = vadd.f32 0.0, %v5851
        %v5853 = vpop.f32.mrb[0].mxu0
        %5854 = vmatprep.mubr.bf16.mxu0 0
        %5855 = vmatmul.mubr.bf16.gmra.mrb[0].mxu0 %v5767
        %v5856 = vpop.f32.mrb[0].mxu0
        %v5857 = vadd.f32 0.0, %v5856
        %v5858 = vpop.f32.mrb[0].mxu0
        %v5859 = vpop.f32.mrb[0].mxu0
        %v5860 = vadd.f32 0.0, %v5859
        %v5861 = vpop.f32.mrb[0].mxu0
        %5862 = vmatprep.mubr.bf16.mxu0 0
        %5863 = vmatmul.mubr.bf16.gmra.mrb[0].mxu0 %v5770
        %v5864 = vpop.f32.mrb[0].mxu0
        %v5865 = vadd.f32 0.0, %v5864
        %v5866 = vpop.f32.mrb[0].mxu0
        %v5867 = vpop.f32.mrb[0].mxu0
        %v5868 = vadd.f32 0.0, %v5867
        %v5869 = vpop.f32.mrb[0].mxu0
        %5870 = vmatprep.mubr.bf16.mxu0 0
        %5871 = vmatmul.mubr.bf16.gmra.mrb[0].mxu0 %v5773
        %v5872 = vpop.f32.mrb[0].mxu0
        %v5873 = vadd.f32 0.0, %v5872
        %v5874 = vpop.f32.mrb[0].mxu0
        %v5875 = vpop.f32.mrb[0].mxu0
        %v5876 = vadd.f32 0.0, %v5875
        %v5877 = vpop.f32.mrb[0].mxu0
        %5878 = vmatprep.mubr.bf16.mxu0 0
        %5879 = vmatmul.mubr.bf16.gmra.mrb[0].mxu0 %v5776
        %v5880 = vpop.f32.mrb[0].mxu0
        %v5881 = vadd.f32 0.0, %v5880
        %v5882 = vpop.f32.mrb[0].mxu0
        %v5883 = vpop.f32.mrb[0].mxu0
        %v5884 = vadd.f32 0.0, %v5883
        %v5885 = vpop.f32.mrb[0].mxu0
        %5886 = vmatprep.mubr.bf16.mxu0 0
        %5887 = vmatmul.mubr.bf16.gmra.mrb[0].mxu0 %v5779
        %v5888 = vpop.f32.mrb[0].mxu0
        %v5889 = vadd.f32 0.0, %v5888
        %v5890 = vpop.f32.mrb[0].mxu0
        %v5891 = vpop.f32.mrb[0].mxu0
        %v5892 = vadd.f32 0.0, %v5891
        %v5893 = vpop.f32.mrb[0].mxu0
        %5894 = vmatprep.mubr.bf16.mxu0 0
        %5895 = vmatmul.mubr.bf16.gmra.mrb[0].mxu0 %v5782
        %v5896 = vpop.f32.mrb[0].mxu0
        %v5897 = vadd.f32 0.0, %v5896
        %v5898 = vpop.f32.mrb[0].mxu0
        %v5899 = vpop.f32.mrb[0].mxu0
        %v5900 = vadd.f32 0.0, %v5899
        %v5901 = vpop.f32.mrb[0].mxu0
        %5902 = vmatprep.mubr.bf16.mxu0 0
        %5903 = vmatmul.mubr.bf16.gmra.mrb[0].mxu0 %v5785
        %v5904 = vpop.f32.mrb[0].mxu0
        %v5905 = vadd.f32 0.0, %v5904
        %v5906 = vpop.f32.mrb[0].mxu0
        %v5907 = vpop.f32.mrb[0].mxu0
        %v5908 = vadd.f32 0.0, %v5907
        %v5909 = vpop.f32.mrb[0].mxu0
        %5910 = vmatprep.mubr.bf16.mxu0 0
        %5911 = vmatmul.mubr.bf16.gmra.mrb[0].mxu0 %v5788
        %v5912 = vpop.f32.mrb[0].mxu0
        %v5913 = vadd.f32 0.0, %v5912
        %v5914 = vpop.f32.mrb[0].mxu0
        %v5915 = vpop.f32.mrb[0].mxu0
        %v5916 = vadd.f32 0.0, %v5915
        %v5917 = vpop.f32.mrb[0].mxu0
        %5918 = vmatprep.mubr.bf16.mxu0 0
        %5919 = vmatmul.mubr.bf16.gmra.mrb[0].mxu0 %v5791
        %v5920 = vpop.f32.mrb[0].mxu0
        %v5921 = vadd.f32 0.0, %v5920
        %v5922 = vpop.f32.mrb[0].mxu0
        %v5923 = vpop.f32.mrb[0].mxu0
        %v5924 = vadd.f32 0.0, %v5923
        %v5925 = vpop.f32.mrb[0].mxu0
        %5926 = vmatprep.mubr.bf16.mxu0 0
        %5927 = vmatmul.mubr.bf16.gmra.mrb[0].mxu0 %v5794
        %v5928 = vpop.f32.mrb[0].mxu0
        %v5929 = vadd.f32 0.0, %v5928
        %v5930 = vpop.f32.mrb[0].mxu0
        %v5931 = vpop.f32.mrb[0].mxu0
        %v5932 = vadd.f32 0.0, %v5931
        %v5933 = vpop.f32.mrb[0].mxu0
        %5934 = vmatprep.mubr.bf16.mxu0 0
        %5935 = vmatmul.mubr.bf16.gmra.mrb[0].mxu0 %v5797
        %v5936 = vpop.f32.mrb[0].mxu0
        %v5937 = vadd.f32 0.0, %v5936
        %v5938 = vpop.f32.mrb[0].mxu0
        %v5939 = vpop.f32.mrb[0].mxu0
        %v5940 = vadd.f32 0.0, %v5939
        %v5941 = vpop.f32.mrb[0].mxu0
        %5942 = vmatprep.mubr.bf16.mxu0 0
        %5943 = vmatmul.mubr.bf16.gmra.mrb[0].mxu0 %v5800
        %v5944 = vpop.f32.mrb[0].mxu0
        %v5945 = vadd.f32 0.0, %v5944
        %v5946 = vpop.f32.mrb[0].mxu0
        %v5947 = vpop.f32.mrb[0].mxu0
        %v5948 = vadd.f32 0.0, %v5947
        %v5949 = vpop.f32.mrb[0].mxu0
        %5950 = vmatprep.mubr.bf16.mxu0 0
        %5951 = vmatmul.mubr.bf16.gmra.mrb[0].mxu0 %v5803
        %v5952 = vpop.f32.mrb[0].mxu0
        %v5953 = vadd.f32 0.0, %v5952
        %v5954 = vpop.f32.mrb[0].mxu0
        %v5955 = vpop.f32.mrb[0].mxu0
        %v5956 = vadd.f32 0.0, %v5955
        %v5957 = vpop.f32.mrb[0].mxu0
        %5958 = vmatprep.mubr.bf16.mxu0 0
        %5959 = vmatmul.mubr.bf16.gmra.mrb[0].mxu0 %v5806
        %v5960 = vpop.f32.mrb[0].mxu0
        %v5961 = vadd.f32 0.0, %v5960
        %v5962 = vpop.f32.mrb[0].mxu0
        %v5963 = vpop.f32.mrb[0].mxu0
        %v5964 = vadd.f32 0.0, %v5963
        %v5965 = vpop.f32.mrb[0].mxu0
        %5966 = vmatprep.mubr.bf16.mxu0 0
        %5967 = vmatmul.mubr.bf16.gmra.mrb[0].mxu0 %v5809
        %v5968 = vpop.f32.mrb[0].mxu0
        %v5969 = vadd.f32 0.0, %v5968
        %v5970 = vpop.f32.mrb[0].mxu0
        %v5971 = vpop.f32.mrb[0].mxu0
        %v5972 = vadd.f32 0.0, %v5971
        %v5973 = vpop.f32.mrb[0].mxu0
        %5974 = vdwg.mxu0
        %v5975 = vadd.f32 %v5675, %v5849
        %v5976 = vadd.f32 %v5676, %v5852
        %v5977 = vadd.f32 %v5677, %v5857
        %v5978 = vadd.f32 %v5678, %v5860
        %v5979 = vadd.f32 %v5679, %v5865
        %v5980 = vadd.f32 %v5680, %v5868
        %v5981 = vadd.f32 %v5681, %v5873
        %v5982 = vadd.f32 %v5682, %v5876
        %v5983 = vadd.f32 %v5683, %v5881
        %v5984 = vadd.f32 %v5684, %v5884
        %v5985 = vadd.f32 %v5685, %v5889
        %v5986 = vadd.f32 %v5686, %v5892
        %v5987 = vadd.f32 %v5687, %v5897
        %v5988 = vadd.f32 %v5688, %v5900
        %v5989 = vadd.f32 %v5689, %v5905
        %v5990 = vadd.f32 %v5690, %v5908
        %v5991 = vadd.f32 %v5691, %v5913
        %v5992 = vadd.f32 %v5692, %v5916
        %v5993 = vadd.f32 %v5693, %v5921
        %v5994 = vadd.f32 %v5694, %v5924
        %v5995 = vadd.f32 %v5695, %v5929
        %v5996 = vadd.f32 %v5696, %v5932
        %v5997 = vadd.f32 %v5697, %v5937
        %v5998 = vadd.f32 %v5698, %v5940
        %v5999 = vadd.f32 %v5699, %v5945
        %v6000 = vadd.f32 %v5700, %v5948
        %v6001 = vadd.f32 %v5701, %v5953
        %v6002 = vadd.f32 %v5702, %v5956
        %v6003 = vadd.f32 %v5703, %v5961
        %v6004 = vadd.f32 %v5704, %v5964
        %v6005 = vadd.f32 %v5705, %v5969
        %v6006 = vadd.f32 %v5706, %v5972
        %v6007 = vld [vmem:[%s4] sm:$0x1]
        %v6009 = vlaneseq
        %v6010 = vshrl.u32 %v6009, 7
        %v6011 = vsub.s32 0, %v6010
        %v6012 = vrot.slane %v6007, %v6011
        %v6014 = vadd.f32 %v5975, %v6012
        %v6015 = vadd.f32 %v5976, %v6012
        %v6016 = vadd.f32 %v5977, %v6012
        %v6017 = vadd.f32 %v5978, %v6012
        %v6018 = vadd.f32 %v5979, %v6012
        %v6019 = vadd.f32 %v5980, %v6012
        %v6020 = vadd.f32 %v5981, %v6012
        %v6021 = vadd.f32 %v5982, %v6012
        %v6022 = vadd.f32 %v5983, %v6012
        %v6023 = vadd.f32 %v5984, %v6012
        %v6024 = vadd.f32 %v5985, %v6012
        %v6025 = vadd.f32 %v5986, %v6012
        %v6026 = vadd.f32 %v5987, %v6012
        %v6027 = vadd.f32 %v5988, %v6012
        %v6028 = vadd.f32 %v5989, %v6012
        %v6029 = vadd.f32 %v5990, %v6012
        %v6030 = vadd.f32 %v5991, %v6012
        %v6031 = vadd.f32 %v5992, %v6012
        %v6032 = vadd.f32 %v5993, %v6012
        %v6033 = vadd.f32 %v5994, %v6012
        %v6034 = vadd.f32 %v5995, %v6012
        %v6035 = vadd.f32 %v5996, %v6012
        %v6036 = vadd.f32 %v5997, %v6012
        %v6037 = vadd.f32 %v5998, %v6012
        %v6038 = vadd.f32 %v5999, %v6012
        %v6039 = vadd.f32 %v6000, %v6012
        %v6040 = vadd.f32 %v6001, %v6012
        %v6041 = vadd.f32 %v6002, %v6012
        %v6042 = vadd.f32 %v6003, %v6012
        %v6043 = vadd.f32 %v6004, %v6012
        %v6044 = vadd.f32 %v6005, %v6012
        %v6045 = vadd.f32 %v6006, %v6012
        %vm6046 = vcmp.ge.f32.partialorder %v6014, 0.0
        %vm6047 = vcmp.ge.f32.partialorder %v6015, 0.0
        %vm6048 = vcmp.ge.f32.partialorder %v6016, 0.0
        %vm6049 = vcmp.ge.f32.partialorder %v6017, 0.0
        %vm6050 = vcmp.ge.f32.partialorder %v6018, 0.0
        %vm6051 = vcmp.ge.f32.partialorder %v6019, 0.0
        %vm6052 = vcmp.ge.f32.partialorder %v6020, 0.0
        %vm6053 = vcmp.ge.f32.partialorder %v6021, 0.0
        %vm6054 = vcmp.ge.f32.partialorder %v6022, 0.0
        %vm6055 = vcmp.ge.f32.partialorder %v6023, 0.0
        %vm6056 = vcmp.ge.f32.partialorder %v6024, 0.0
        %vm6057 = vcmp.ge.f32.partialorder %v6025, 0.0
        %vm6058 = vcmp.ge.f32.partialorder %v6026, 0.0
        %vm6059 = vcmp.ge.f32.partialorder %v6027, 0.0
        %vm6060 = vcmp.ge.f32.partialorder %v6028, 0.0
        %vm6061 = vcmp.ge.f32.partialorder %v6029, 0.0
        %vm6062 = vcmp.ge.f32.partialorder %v6030, 0.0
        %vm6063 = vcmp.ge.f32.partialorder %v6031, 0.0
        %vm6064 = vcmp.ge.f32.partialorder %v6032, 0.0
        %vm6065 = vcmp.ge.f32.partialorder %v6033, 0.0
        %vm6066 = vcmp.ge.f32.partialorder %v6034, 0.0
        %vm6067 = vcmp.ge.f32.partialorder %v6035, 0.0
        %vm6068 = vcmp.ge.f32.partialorder %v6036, 0.0
        %vm6069 = vcmp.ge.f32.partialorder %v6037, 0.0
        %vm6070 = vcmp.ge.f32.partialorder %v6038, 0.0
        %vm6071 = vcmp.ge.f32.partialorder %v6039, 0.0
        %vm6072 = vcmp.ge.f32.partialorder %v6040, 0.0
        %vm6073 = vcmp.ge.f32.partialorder %v6041, 0.0
        %vm6074 = vcmp.ge.f32.partialorder %v6042, 0.0
        %vm6075 = vcmp.ge.f32.partialorder %v6043, 0.0
        %vm6076 = vcmp.ge.f32.partialorder %v6044, 0.0
        %vm6077 = vcmp.ge.f32.partialorder %v6045, 0.0
        %v6078 = vmul.f32 %v6014, 0.01
        %v6079 = vmul.f32 %v6015, 0.01
        %v6080 = vmul.f32 %v6016, 0.01
        %v6081 = vmul.f32 %v6017, 0.01
        %v6082 = vmul.f32 %v6018, 0.01
        %v6083 = vmul.f32 %v6019, 0.01
        %v6084 = vmul.f32 %v6020, 0.01
        %v6085 = vmul.f32 %v6021, 0.01
        %v6086 = vmul.f32 %v6022, 0.01
        %v6087 = vmul.f32 %v6023, 0.01
        %v6088 = vmul.f32 %v6024, 0.01
        %v6089 = vmul.f32 %v6025, 0.01
        %v6090 = vmul.f32 %v6026, 0.01
        %v6091 = vmul.f32 %v6027, 0.01
        %v6092 = vmul.f32 %v6028, 0.01
        %v6093 = vmul.f32 %v6029, 0.01
        %v6094 = vmul.f32 %v6030, 0.01
        %v6095 = vmul.f32 %v6031, 0.01
        %v6096 = vmul.f32 %v6032, 0.01
        %v6097 = vmul.f32 %v6033, 0.01
        %v6098 = vmul.f32 %v6034, 0.01
        %v6099 = vmul.f32 %v6035, 0.01
        %v6100 = vmul.f32 %v6036, 0.01
        %v6101 = vmul.f32 %v6037, 0.01
        %v6102 = vmul.f32 %v6038, 0.01
        %v6103 = vmul.f32 %v6039, 0.01
        %v6104 = vmul.f32 %v6040, 0.01
        %v6105 = vmul.f32 %v6041, 0.01
        %v6106 = vmul.f32 %v6042, 0.01
        %v6107 = vmul.f32 %v6043, 0.01
        %v6108 = vmul.f32 %v6044, 0.01
        %v6109 = vmul.f32 %v6045, 0.01
        %v6110 = vsel %vm6046, %v6014, %v6078
        %v6111 = vsel %vm6047, %v6015, %v6079
        %v6112 = vsel %vm6048, %v6016, %v6080
        %v6113 = vsel %vm6049, %v6017, %v6081
        %v6114 = vsel %vm6050, %v6018, %v6082
        %v6115 = vsel %vm6051, %v6019, %v6083
        %v6116 = vsel %vm6052, %v6020, %v6084
        %v6117 = vsel %vm6053, %v6021, %v6085
        %v6118 = vsel %vm6054, %v6022, %v6086
        %v6119 = vsel %vm6055, %v6023, %v6087
        %v6120 = vsel %vm6056, %v6024, %v6088
        %v6121 = vsel %vm6057, %v6025, %v6089
        %v6122 = vsel %vm6058, %v6026, %v6090
        %v6123 = vsel %vm6059, %v6027, %v6091
        %v6124 = vsel %vm6060, %v6028, %v6092
        %v6125 = vsel %vm6061, %v6029, %v6093
        %v6126 = vsel %vm6062, %v6030, %v6094
        %v6127 = vsel %vm6063, %v6031, %v6095
        %v6128 = vsel %vm6064, %v6032, %v6096
        %v6129 = vsel %vm6065, %v6033, %v6097
        %v6130 = vsel %vm6066, %v6034, %v6098
        %v6131 = vsel %vm6067, %v6035, %v6099
        %v6132 = vsel %vm6068, %v6036, %v6100
        %v6133 = vsel %vm6069, %v6037, %v6101
        %v6134 = vsel %vm6070, %v6038, %v6102
        %v6135 = vsel %vm6071, %v6039, %v6103
        %v6136 = vsel %vm6072, %v6040, %v6104
        %v6137 = vsel %vm6073, %v6041, %v6105
        %v6138 = vsel %vm6074, %v6042, %v6106
        %v6139 = vsel %vm6075, %v6043, %v6107
        %v6140 = vsel %vm6076, %v6044, %v6108
        %v6141 = vsel %vm6077, %v6045, %v6109
        %v6142 = vmax.f32 %v6110, %v6112
        %v6143 = vmax.f32 %v6111, %v6113
        %v6144 = vmax.f32 %v6114, %v6116
        %v6145 = vmax.f32 %v6115, %v6117
        %v6146 = vmax.f32 %v6118, %v6120
        %v6147 = vmax.f32 %v6119, %v6121
        %v6148 = vmax.f32 %v6122, %v6124
        %v6149 = vmax.f32 %v6123, %v6125
        %v6150 = vmax.f32 %v6126, %v6128
        %v6151 = vmax.f32 %v6127, %v6129
        %v6152 = vmax.f32 %v6130, %v6132
        %v6153 = vmax.f32 %v6131, %v6133
        %v6154 = vmax.f32 %v6134, %v6136
        %v6155 = vmax.f32 %v6135, %v6137
        %v6156 = vmax.f32 %v6138, %v6140
        %v6157 = vmax.f32 %v6139, %v6141
        %vm6158 = vcmask 195584
        %6159 = vst.msk [vmem:[#allocation4] sm:$0xff] %vm6158, 0.0
        %vm6160 = vcmask 189440
        %6161 = vst.msk [vmem:[#allocation4 + $0x8] sm:$0x3] %vm6160, 0.0
        %6162 = vst.msk [vmem:[#allocation4 + $0x10] sm:$0xff] %vm6158, 0.0
        %6163 = vst.msk [vmem:[#allocation4 + $0x18] sm:$0x3] %vm6160, 0.0
        %6164 = vst.msk [vmem:[#allocation4 + $0x20] sm:$0xff] %vm6158, 0.0
        %6165 = vst.msk [vmem:[#allocation4 + $0x28] sm:$0x3] %vm6160, 0.0
        %6166 = vst.msk [vmem:[#allocation4 + $0x30] sm:$0xff] %vm6158, 0.0
        %6167 = vst.msk [vmem:[#allocation4 + $0x38] sm:$0x3] %vm6160, 0.0
        %6168 = vst.msk [vmem:[#allocation4 + $0x40] sm:$0xff] %vm6158, 0.0
        %6169 = vst.msk [vmem:[#allocation4 + $0x48] sm:$0x3] %vm6160, 0.0
        %6170 = vst.msk [vmem:[#allocation4 + $0x50] sm:$0xff] %vm6158, 0.0
        %6171 = vst.msk [vmem:[#allocation4 + $0x58] sm:$0x3] %vm6160, 0.0
        %6172 = vst.msk [vmem:[#allocation4 + $0x60] sm:$0xff] %vm6158, 0.0
        %6173 = vst.msk [vmem:[#allocation4 + $0x68] sm:$0x3] %vm6160, 0.0
        %6174 = vst.msk [vmem:[#allocation4 + $0x70] sm:$0xff] %vm6158, 0.0
        %6175 = vst.msk [vmem:[#allocation4 + $0x78] sm:$0x3] %vm6160, 0.0
        %6176 = vst.msk [vmem:[#allocation4 + $0x80] sm:$0xff] %vm6158, 0.0
        %6177 = vst.msk [vmem:[#allocation4 + $0x88] sm:$0x3] %vm6160, 0.0
        %6178 = vst.msk [vmem:[#allocation4 + $0x90] sm:$0xff] %vm6158, 0.0
        %6179 = vst.msk [vmem:[#allocation4 + $0x98] sm:$0x3] %vm6160, 0.0
        %v6188 = vrot.slane %v6142, 1
        %v6189 = vrot.slane %v6144, 1
        %v6190 = vrot.slane %v6146, 1
        %v6191 = vrot.slane %v6148, 1
        %v6192 = vrot.slane %v6150, 1
        %v6193 = vrot.slane %v6152, 1
        %v6194 = vrot.slane %v6154, 1
        %v6195 = vrot.slane %v6156, 1
        %v6204 = vmax.f32 %v6142, %v6188
        %v6205 = vmax.f32 %v6144, %v6189
        %v6206 = vmax.f32 %v6146, %v6190
        %v6207 = vmax.f32 %v6148, %v6191
        %v6208 = vmax.f32 %v6150, %v6192
        %v6209 = vmax.f32 %v6152, %v6193
        %v6210 = vmax.f32 %v6154, %v6194
        %v6211 = vmax.f32 %v6156, %v6195
        %s6212 = scalar_lea.vmem [#allocation4], 16
        %vm6213 = vcmask 188416
        %6214 = vst.msk [vmem:[%s6212 + $0x1] sm:$0x1] %vm6213, %v6204
        %6215 = vst.msk [vmem:[%s6212 + $0x11] sm:$0x1] %vm6213, %v6205
        %6216 = vst.msk [vmem:[%s6212 + $0x21] sm:$0x1] %vm6213, %v6206
        %6217 = vst.msk [vmem:[%s6212 + $0x31] sm:$0x1] %vm6213, %v6207
        %6218 = vst.msk [vmem:[%s6212 + $0x41] sm:$0x1] %vm6213, %v6208
        %6219 = vst.msk [vmem:[%s6212 + $0x51] sm:$0x1] %vm6213, %v6209
        %6220 = vst.msk [vmem:[%s6212 + $0x61] sm:$0x1] %vm6213, %v6210
        %6221 = vst.msk [vmem:[%s6212 + $0x71] sm:$0x1] %vm6213, %v6211
        %vm6222 = vcmask 190466
        %6223 = vst.msk [vmem:[%s6212] sm:$0x4] %vm6222, %v6204
        %6224 = vst.msk [vmem:[%s6212 + $0x10] sm:$0x4] %vm6222, %v6205
        %6225 = vst.msk [vmem:[%s6212 + $0x20] sm:$0x4] %vm6222, %v6206
        %6226 = vst.msk [vmem:[%s6212 + $0x30] sm:$0x4] %vm6222, %v6207
        %6227 = vst.msk [vmem:[%s6212 + $0x40] sm:$0x4] %vm6222, %v6208
        %6228 = vst.msk [vmem:[%s6212 + $0x50] sm:$0x4] %vm6222, %v6209
        %6229 = vst.msk [vmem:[%s6212 + $0x60] sm:$0x4] %vm6222, %v6210
        %6230 = vst.msk [vmem:[%s6212 + $0x70] sm:$0x4] %vm6222, %v6211
        %vm6231 = vcmask 192516
        %6232 = vst.msk [vmem:[%s6212 - $0x1] sm:$0x10] %vm6231, %v6204
        %6233 = vst.msk [vmem:[%s6212 + $0xf] sm:$0x10] %vm6231, %v6205
        %6234 = vst.msk [vmem:[%s6212 + $0x1f] sm:$0x10] %vm6231, %v6206
        %6235 = vst.msk [vmem:[%s6212 + $0x2f] sm:$0x10] %vm6231, %v6207
        %6236 = vst.msk [vmem:[%s6212 + $0x3f] sm:$0x10] %vm6231, %v6208
        %6237 = vst.msk [vmem:[%s6212 + $0x4f] sm:$0x10] %vm6231, %v6209
        %6238 = vst.msk [vmem:[%s6212 + $0x5f] sm:$0x10] %vm6231, %v6210
        %6239 = vst.msk [vmem:[%s6212 + $0x6f] sm:$0x10] %vm6231, %v6211
        %vm6240 = vcmask 194566
        %6241 = vst.msk [vmem:[%s6212 - $0x2] sm:$0x40] %vm6240, %v6204
        %6242 = vst.msk [vmem:[%s6212 + $0xe] sm:$0x40] %vm6240, %v6205
        %6243 = vst.msk [vmem:[%s6212 + $0x1e] sm:$0x40] %vm6240, %v6206
        %6244 = vst.msk [vmem:[%s6212 + $0x2e] sm:$0x40] %vm6240, %v6207
        %6245 = vst.msk [vmem:[%s6212 + $0x3e] sm:$0x40] %vm6240, %v6208
        %6246 = vst.msk [vmem:[%s6212 + $0x4e] sm:$0x40] %vm6240, %v6209
        %6247 = vst.msk [vmem:[%s6212 + $0x5e] sm:$0x40] %vm6240, %v6210
        %6248 = vst.msk [vmem:[%s6212 + $0x6e] sm:$0x40] %vm6240, %v6211
        %v6257 = vrot.slane %v6143, 1
        %v6258 = vrot.slane %v6145, 1
        %v6259 = vrot.slane %v6147, 1
        %v6260 = vrot.slane %v6149, 1
        %v6261 = vrot.slane %v6151, 1
        %v6262 = vrot.slane %v6153, 1
        %v6263 = vrot.slane %v6155, 1
        %v6264 = vrot.slane %v6157, 1
        %v6273 = vmax.f32 %v6143, %v6257
        %v6274 = vmax.f32 %v6145, %v6258
        %v6275 = vmax.f32 %v6147, %v6259
        %v6276 = vmax.f32 %v6149, %v6260
        %v6277 = vmax.f32 %v6151, %v6261
        %v6278 = vmax.f32 %v6153, %v6262
        %v6279 = vmax.f32 %v6155, %v6263
        %v6280 = vmax.f32 %v6157, %v6264
        %6281 = vst.msk [vmem:[%s6212 + $0x5] sm:$0x1] %vm6213, %v6273
        %6282 = vst.msk [vmem:[%s6212 + $0x15] sm:$0x1] %vm6213, %v6274
        %6283 = vst.msk [vmem:[%s6212 + $0x25] sm:$0x1] %vm6213, %v6275
        %6284 = vst.msk [vmem:[%s6212 + $0x35] sm:$0x1] %vm6213, %v6276
        %6285 = vst.msk [vmem:[%s6212 + $0x45] sm:$0x1] %vm6213, %v6277
        %6286 = vst.msk [vmem:[%s6212 + $0x55] sm:$0x1] %vm6213, %v6278
        %6287 = vst.msk [vmem:[%s6212 + $0x65] sm:$0x1] %vm6213, %v6279
        %6288 = vst.msk [vmem:[%s6212 + $0x75] sm:$0x1] %vm6213, %v6280
        %6289 = vst.msk [vmem:[%s6212 + $0x4] sm:$0x4] %vm6222, %v6273
        %6290 = vst.msk [vmem:[%s6212 + $0x14] sm:$0x4] %vm6222, %v6274
        %6291 = vst.msk [vmem:[%s6212 + $0x24] sm:$0x4] %vm6222, %v6275
        %6292 = vst.msk [vmem:[%s6212 + $0x34] sm:$0x4] %vm6222, %v6276
        %6293 = vst.msk [vmem:[%s6212 + $0x44] sm:$0x4] %vm6222, %v6277
        %6294 = vst.msk [vmem:[%s6212 + $0x54] sm:$0x4] %vm6222, %v6278
        %6295 = vst.msk [vmem:[%s6212 + $0x64] sm:$0x4] %vm6222, %v6279
        %6296 = vst.msk [vmem:[%s6212 + $0x74] sm:$0x4] %vm6222, %v6280
        %6297 = vst.msk [vmem:[%s6212 + $0x3] sm:$0x10] %vm6231, %v6273
        %6298 = vst.msk [vmem:[%s6212 + $0x13] sm:$0x10] %vm6231, %v6274
        %6299 = vst.msk [vmem:[%s6212 + $0x23] sm:$0x10] %vm6231, %v6275
        %6300 = vst.msk [vmem:[%s6212 + $0x33] sm:$0x10] %vm6231, %v6276
        %6301 = vst.msk [vmem:[%s6212 + $0x43] sm:$0x10] %vm6231, %v6277
        %6302 = vst.msk [vmem:[%s6212 + $0x53] sm:$0x10] %vm6231, %v6278
        %6303 = vst.msk [vmem:[%s6212 + $0x63] sm:$0x10] %vm6231, %v6279
        %6304 = vst.msk [vmem:[%s6212 + $0x73] sm:$0x10] %vm6231, %v6280
        %6305 = vst.msk [vmem:[%s6212 + $0x2] sm:$0x40] %vm6240, %v6273
        %6306 = vst.msk [vmem:[%s6212 + $0x12] sm:$0x40] %vm6240, %v6274
        %6307 = vst.msk [vmem:[%s6212 + $0x22] sm:$0x40] %vm6240, %v6275
        %6308 = vst.msk [vmem:[%s6212 + $0x32] sm:$0x40] %vm6240, %v6276
        %6309 = vst.msk [vmem:[%s6212 + $0x42] sm:$0x40] %vm6240, %v6277
        %6310 = vst.msk [vmem:[%s6212 + $0x52] sm:$0x40] %vm6240, %v6278
        %6311 = vst.msk [vmem:[%s6212 + $0x62] sm:$0x40] %vm6240, %v6279
        %6312 = vst.msk [vmem:[%s6212 + $0x72] sm:$0x40] %vm6240, %v6280
        %v6313 = vld [vmem:[#allocation4] sm:$0xff]
        %v6314 = vld [vmem:[#allocation4 + $0x10] sm:$0xff]
        %v6315 = vld [vmem:[#allocation4 + $0x20] sm:$0xff]
        %v6316 = vld [vmem:[#allocation4 + $0x30] sm:$0xff]
        %v6317 = vld [vmem:[#allocation4 + $0x40] sm:$0xff]
        %v6318 = vld [vmem:[#allocation4 + $0x50] sm:$0xff]
        %v6319 = vld [vmem:[#allocation4 + $0x60] sm:$0xff]
        %v6320 = vld [vmem:[#allocation4 + $0x70] sm:$0xff]
        %v6321 = vpack.c.bf16 %v6314, %v6313
        %v6322 = vpack.c.bf16 %v6316, %v6315
        %v6323 = vpack.c.bf16 %v6318, %v6317
        %v6324 = vpack.c.bf16 %v6320, %v6319
        %v6325 = vld [vmem:[%s5] sm:$0xf]
        %v6326 = vld [vmem:[%s5 + $0x4] sm:$0xf]
        %v6327 = vld [vmem:[%s5 + $0x8] sm:$0xf]
        %v6328 = vld [vmem:[#allocation4 + $0x1] sm:$0xff]
        %v6329 = vld [vmem:[#allocation4 + $0x11] sm:$0xff]
        %v6330 = vld [vmem:[#allocation4 + $0x21] sm:$0xff]
        %v6331 = vld [vmem:[#allocation4 + $0x31] sm:$0xff]
        %v6332 = vld [vmem:[#allocation4 + $0x41] sm:$0xff]
        %v6333 = vld [vmem:[#allocation4 + $0x51] sm:$0xff]
        %v6334 = vld [vmem:[#allocation4 + $0x61] sm:$0xff]
        %v6335 = vld [vmem:[#allocation4 + $0x71] sm:$0xff]
        %v6336 = vpack.c.bf16 %v6329, %v6328
        %v6337 = vpack.c.bf16 %v6331, %v6330
        %v6338 = vpack.c.bf16 %v6333, %v6332
        %v6339 = vpack.c.bf16 %v6335, %v6334
        %s6340 = scalar_lea.vmem %s5, 12
        %v6341 = vld [vmem:[%s6340] sm:$0xf]
        %v6342 = vld [vmem:[%s6340 + $0x4] sm:$0xf]
        %v6343 = vld [vmem:[%s6340 + $0x8] sm:$0xf]
        %v6347 = vunpack.c.l.b16 %v6341
        %v6348 = vunpack.c.l.b16 %v6342
        %v6349 = vunpack.c.l.b16 %v6343
        %v6350 = vpack.c.b16 %v6348, %v6347
        %v6351 = vpack.c.b16 %v6349, %v6349
        %v6354 = vsel %vm6158, %v6336, 0
        %v6357 = vsel %vm6158, %v6337, 0
        %v6360 = vsel %vm6158, %v6338, 0
        %v6363 = vsel %vm6158, %v6339, 0
        %vm6365 = vcmask 1043456
        %v6367 = vsel %vm6365, %v6351, 0
        %6369 = vmatprep.subr.bf16.mxu0 0
        %6370 = vmatpush1.bf16.msra.mxu0 %v6350
        %6371 = vmatprep.subr.bf16.mxu0 0
        %6372 = vmatpush1.bf16.msra.mxu0 %v6367
        %6373 = vmatprep.subr.bf16.mxu0 0
        %6374 = vmatpush1.bf16.msra.mxu0 0
        %6375 = vmatprep.subr.bf16.mxu0 0
        %6376 = vmatpush1.bf16.msra.mxu0 0
        %6377 = vmatprep.subr.bf16.mxu0 0
        %6378 = vmatpush1.bf16.msra.mxu0 0
        %6379 = vmatprep.subr.bf16.mxu0 0
        %6380 = vmatpush1.bf16.msra.mxu0 0
        %6381 = vmatprep.subr.bf16.mxu0 0
        %6382 = vmatpush1.bf16.msra.mxu0 0
        %6383 = vmatprep.subr.bf16.mxu0 0
        %6384 = vmatpush1.bf16.msra.mxu0 0
        %6385 = vmatprep.subr.bf16.mxu0 0
        %6386 = vmatpush1.bf16.msra.mxu0 0
        %6387 = vmatprep.subr.bf16.mxu0 0
        %6388 = vmatpush1.bf16.msra.mxu0 0
        %6389 = vmatprep.subr.bf16.mxu0 0
        %6390 = vmatpush1.bf16.msra.mxu0 0
        %6391 = vmatprep.subr.bf16.mxu0 0
        %6392 = vmatpush1.bf16.msra.mxu0 0
        %6393 = vmatprep.subr.bf16.mxu0 0
        %6394 = vmatpush1.bf16.msra.mxu0 0
        %6395 = vmatprep.subr.bf16.mxu0 0
        %6396 = vmatpush1.bf16.msra.mxu0 0
        %6397 = vmatprep.subr.bf16.mxu0 0
        %6398 = vmatpush1.bf16.msra.mxu0 0
        %6399 = vmatprep.subr.bf16.mxu0 0
        %6400 = vmatpush1.bf16.msra.mxu0 0
        %6401 = vmatprep.mubr.bf16.mxu0 0
        %6402 = vmatmul.mubr.bf16.gmra.mrb[0].mxu0 %v6354
        %v6403 = vpop.f32.mrb[0].mxu0
        %v6404 = vadd.f32 0.0, %v6403
        %v6405 = vpop.f32.mrb[0].mxu0
        %v6406 = vpop.f32.mrb[0].mxu0
        %v6407 = vadd.f32 0.0, %v6406
        %v6408 = vpop.f32.mrb[0].mxu0
        %6409 = vmatprep.mubr.bf16.mxu0 0
        %6410 = vmatmul.mubr.bf16.gmra.mrb[0].mxu0 %v6357
        %v6411 = vpop.f32.mrb[0].mxu0
        %v6412 = vadd.f32 0.0, %v6411
        %v6413 = vpop.f32.mrb[0].mxu0
        %v6414 = vpop.f32.mrb[0].mxu0
        %v6415 = vadd.f32 0.0, %v6414
        %v6416 = vpop.f32.mrb[0].mxu0
        %6417 = vmatprep.mubr.bf16.mxu0 0
        %6418 = vmatmul.mubr.bf16.gmra.mrb[0].mxu0 %v6360
        %v6419 = vpop.f32.mrb[0].mxu0
        %v6420 = vadd.f32 0.0, %v6419
        %v6421 = vpop.f32.mrb[0].mxu0
        %v6422 = vpop.f32.mrb[0].mxu0
        %v6423 = vadd.f32 0.0, %v6422
        %v6424 = vpop.f32.mrb[0].mxu0
        %6425 = vmatprep.mubr.bf16.mxu0 0
        %6426 = vmatmul.mubr.bf16.gmra.mrb[0].mxu0 %v6363
        %v6427 = vpop.f32.mrb[0].mxu0
        %v6428 = vadd.f32 0.0, %v6427
        %v6429 = vpop.f32.mrb[0].mxu0
        %v6430 = vpop.f32.mrb[0].mxu0
        %v6431 = vadd.f32 0.0, %v6430
        %v6432 = vpop.f32.mrb[0].mxu0
        %6433 = vdwg.mxu0
        %v6437 = vunpack.c.l.b16 %v6325
        %v6438 = vunpack.c.l.b16 %v6326
        %v6439 = vunpack.c.l.b16 %v6327
        %v6440 = vpack.c.b16 %v6438, %v6437
        %v6441 = vpack.c.b16 %v6439, %v6439
        %v6444 = vsel %vm6158, %v6321, 0
        %v6447 = vsel %vm6158, %v6322, 0
        %v6450 = vsel %vm6158, %v6323, 0
        %v6453 = vsel %vm6158, %v6324, 0
        %v6456 = vsel %vm6365, %v6441, 0
        %6458 = vmatprep.subr.bf16.mxu0 0
        %6459 = vmatpush1.bf16.msra.mxu0 %v6440
        %6460 = vmatprep.subr.bf16.mxu0 0
        %6461 = vmatpush1.bf16.msra.mxu0 %v6456
        %6462 = vmatprep.subr.bf16.mxu0 0
        %6463 = vmatpush1.bf16.msra.mxu0 0
        %6464 = vmatprep.subr.bf16.mxu0 0
        %6465 = vmatpush1.bf16.msra.mxu0 0
        %6466 = vmatprep.subr.bf16.mxu0 0
        %6467 = vmatpush1.bf16.msra.mxu0 0
        %6468 = vmatprep.subr.bf16.mxu0 0
        %6469 = vmatpush1.bf16.msra.mxu0 0
        %6470 = vmatprep.subr.bf16.mxu0 0
        %6471 = vmatpush1.bf16.msra.mxu0 0
        %6472 = vmatprep.subr.bf16.mxu0 0
        %6473 = vmatpush1.bf16.msra.mxu0 0
        %6474 = vmatprep.subr.bf16.mxu0 0
        %6475 = vmatpush1.bf16.msra.mxu0 0
        %6476 = vmatprep.subr.bf16.mxu0 0
        %6477 = vmatpush1.bf16.msra.mxu0 0
        %6478 = vmatprep.subr.bf16.mxu0 0
        %6479 = vmatpush1.bf16.msra.mxu0 0
        %6480 = vmatprep.subr.bf16.mxu0 0
        %6481 = vmatpush1.bf16.msra.mxu0 0
        %6482 = vmatprep.subr.bf16.mxu0 0
        %6483 = vmatpush1.bf16.msra.mxu0 0
        %6484 = vmatprep.subr.bf16.mxu0 0
        %6485 = vmatpush1.bf16.msra.mxu0 0
        %6486 = vmatprep.subr.bf16.mxu0 0
        %6487 = vmatpush1.bf16.msra.mxu0 0
        %6488 = vmatprep.subr.bf16.mxu0 0
        %6489 = vmatpush1.bf16.msra.mxu0 0
        %6490 = vmatprep.mubr.bf16.mxu0 0
        %6491 = vmatmul.mubr.bf16.gmra.mrb[0].mxu0 %v6444
        %v6492 = vpop.f32.mrb[0].mxu0
        %v6493 = vadd.f32 %v6404, %v6492
        %v6494 = vpop.f32.mrb[0].mxu0
        %v6495 = vpop.f32.mrb[0].mxu0
        %v6496 = vadd.f32 %v6407, %v6495
        %v6497 = vpop.f32.mrb[0].mxu0
        %6498 = vmatprep.mubr.bf16.mxu0 0
        %6499 = vmatmul.mubr.bf16.gmra.mrb[0].mxu0 %v6447
        %v6500 = vpop.f32.mrb[0].mxu0
        %v6501 = vadd.f32 %v6412, %v6500
        %v6502 = vpop.f32.mrb[0].mxu0
        %v6503 = vpop.f32.mrb[0].mxu0
        %v6504 = vadd.f32 %v6415, %v6503
        %v6505 = vpop.f32.mrb[0].mxu0
        %6506 = vmatprep.mubr.bf16.mxu0 0
        %6507 = vmatmul.mubr.bf16.gmra.mrb[0].mxu0 %v6450
        %v6508 = vpop.f32.mrb[0].mxu0
        %v6509 = vadd.f32 %v6420, %v6508
        %v6510 = vpop.f32.mrb[0].mxu0
        %v6511 = vpop.f32.mrb[0].mxu0
        %v6512 = vadd.f32 %v6423, %v6511
        %v6513 = vpop.f32.mrb[0].mxu0
        %6514 = vmatprep.mubr.bf16.mxu0 0
        %6515 = vmatmul.mubr.bf16.gmra.mrb[0].mxu0 %v6453
        %v6516 = vpop.f32.mrb[0].mxu0
        %v6517 = vadd.f32 %v6428, %v6516
        %v6518 = vpop.f32.mrb[0].mxu0
        %v6519 = vpop.f32.mrb[0].mxu0
        %v6520 = vadd.f32 %v6431, %v6519
        %v6521 = vpop.f32.mrb[0].mxu0
        %6522 = vdwg.mxu0
        %v6523 = vld [vmem:[#allocation4 + $0x2] sm:$0xff]
        %v6524 = vld [vmem:[#allocation4 + $0x12] sm:$0xff]
        %v6525 = vld [vmem:[#allocation4 + $0x22] sm:$0xff]
        %v6526 = vld [vmem:[#allocation4 + $0x32] sm:$0xff]
        %v6527 = vld [vmem:[#allocation4 + $0x42] sm:$0xff]
        %v6528 = vld [vmem:[#allocation4 + $0x52] sm:$0xff]
        %v6529 = vld [vmem:[#allocation4 + $0x62] sm:$0xff]
        %v6530 = vld [vmem:[#allocation4 + $0x72] sm:$0xff]
        %v6531 = vpack.c.bf16 %v6524, %v6523
        %v6532 = vpack.c.bf16 %v6526, %v6525
        %v6533 = vpack.c.bf16 %v6528, %v6527
        %v6534 = vpack.c.bf16 %v6530, %v6529
        %s6535 = scalar_lea.vmem %s5, 24
        %v6536 = vld [vmem:[%s6535] sm:$0xf]
        %v6537 = vld [vmem:[%s6535 + $0x4] sm:$0xf]
        %v6538 = vld [vmem:[%s6535 + $0x8] sm:$0xf]
        %v6542 = vunpack.c.l.b16 %v6536
        %v6543 = vunpack.c.l.b16 %v6537
        %v6544 = vunpack.c.l.b16 %v6538
        %v6545 = vpack.c.b16 %v6543, %v6542
        %v6546 = vpack.c.b16 %v6544, %v6544
        %v6549 = vsel %vm6158, %v6531, 0
        %v6552 = vsel %vm6158, %v6532, 0
        %v6555 = vsel %vm6158, %v6533, 0
        %v6558 = vsel %vm6158, %v6534, 0
        %v6561 = vsel %vm6365, %v6546, 0
        %6563 = vmatprep.subr.bf16.mxu0 0
        %6564 = vmatpush1.bf16.msra.mxu0 %v6545
        %6565 = vmatprep.subr.bf16.mxu0 0
        %6566 = vmatpush1.bf16.msra.mxu0 %v6561
        %6567 = vmatprep.subr.bf16.mxu0 0
        %6568 = vmatpush1.bf16.msra.mxu0 0
        %6569 = vmatprep.subr.bf16.mxu0 0
        %6570 = vmatpush1.bf16.msra.mxu0 0
        %6571 = vmatprep.subr.bf16.mxu0 0
        %6572 = vmatpush1.bf16.msra.mxu0 0
        %6573 = vmatprep.subr.bf16.mxu0 0
        %6574 = vmatpush1.bf16.msra.mxu0 0
        %6575 = vmatprep.subr.bf16.mxu0 0
        %6576 = vmatpush1.bf16.msra.mxu0 0
        %6577 = vmatprep.subr.bf16.mxu0 0
        %6578 = vmatpush1.bf16.msra.mxu0 0
        %6579 = vmatprep.subr.bf16.mxu0 0
        %6580 = vmatpush1.bf16.msra.mxu0 0
        %6581 = vmatprep.subr.bf16.mxu0 0
        %6582 = vmatpush1.bf16.msra.mxu0 0
        %6583 = vmatprep.subr.bf16.mxu0 0
        %6584 = vmatpush1.bf16.msra.mxu0 0
        %6585 = vmatprep.subr.bf16.mxu0 0
        %6586 = vmatpush1.bf16.msra.mxu0 0
        %6587 = vmatprep.subr.bf16.mxu0 0
        %6588 = vmatpush1.bf16.msra.mxu0 0
        %6589 = vmatprep.subr.bf16.mxu0 0
        %6590 = vmatpush1.bf16.msra.mxu0 0
        %6591 = vmatprep.subr.bf16.mxu0 0
        %6592 = vmatpush1.bf16.msra.mxu0 0
        %6593 = vmatprep.subr.bf16.mxu0 0
        %6594 = vmatpush1.bf16.msra.mxu0 0
        %6595 = vmatprep.mubr.bf16.mxu0 0
        %6596 = vmatmul.mubr.bf16.gmra.mrb[0].mxu0 %v6549
        %v6597 = vpop.f32.mrb[0].mxu0
        %v6598 = vadd.f32 0.0, %v6597
        %v6599 = vpop.f32.mrb[0].mxu0
        %v6600 = vpop.f32.mrb[0].mxu0
        %v6601 = vadd.f32 0.0, %v6600
        %v6602 = vpop.f32.mrb[0].mxu0
        %6603 = vmatprep.mubr.bf16.mxu0 0
        %6604 = vmatmul.mubr.bf16.gmra.mrb[0].mxu0 %v6552
        %v6605 = vpop.f32.mrb[0].mxu0
        %v6606 = vadd.f32 0.0, %v6605
        %v6607 = vpop.f32.mrb[0].mxu0
        %v6608 = vpop.f32.mrb[0].mxu0
        %v6609 = vadd.f32 0.0, %v6608
        %v6610 = vpop.f32.mrb[0].mxu0
        %6611 = vmatprep.mubr.bf16.mxu0 0
        %6612 = vmatmul.mubr.bf16.gmra.mrb[0].mxu0 %v6555
        %v6613 = vpop.f32.mrb[0].mxu0
        %v6614 = vadd.f32 0.0, %v6613
        %v6615 = vpop.f32.mrb[0].mxu0
        %v6616 = vpop.f32.mrb[0].mxu0
        %v6617 = vadd.f32 0.0, %v6616
        %v6618 = vpop.f32.mrb[0].mxu0
        %6619 = vmatprep.mubr.bf16.mxu0 0
        %6620 = vmatmul.mubr.bf16.gmra.mrb[0].mxu0 %v6558
        %v6621 = vpop.f32.mrb[0].mxu0
        %v6622 = vadd.f32 0.0, %v6621
        %v6623 = vpop.f32.mrb[0].mxu0
        %v6624 = vpop.f32.mrb[0].mxu0
        %v6625 = vadd.f32 0.0, %v6624
        %v6626 = vpop.f32.mrb[0].mxu0
        %6627 = vdwg.mxu0
        %v6628 = vadd.f32 %v6493, %v6598
        %v6629 = vadd.f32 %v6496, %v6601
        %v6630 = vadd.f32 %v6501, %v6606
        %v6631 = vadd.f32 %v6504, %v6609
        %v6632 = vadd.f32 %v6509, %v6614
        %v6633 = vadd.f32 %v6512, %v6617
        %v6634 = vadd.f32 %v6517, %v6622
        %v6635 = vadd.f32 %v6520, %v6625
        %v6636 = vld [vmem:[%s6212] sm:$0xff]
        %v6637 = vld [vmem:[%s6212 + $0x10] sm:$0xff]
        %v6638 = vld [vmem:[%s6212 + $0x20] sm:$0xff]
        %v6639 = vld [vmem:[%s6212 + $0x30] sm:$0xff]
        %v6640 = vld [vmem:[%s6212 + $0x40] sm:$0xff]
        %v6641 = vld [vmem:[%s6212 + $0x50] sm:$0xff]
        %v6642 = vld [vmem:[%s6212 + $0x60] sm:$0xff]
        %v6643 = vld [vmem:[%s6212 + $0x70] sm:$0xff]
        %v6644 = vpack.c.bf16 %v6637, %v6636
        %v6645 = vpack.c.bf16 %v6639, %v6638
        %v6646 = vpack.c.bf16 %v6641, %v6640
        %v6647 = vpack.c.bf16 %v6643, %v6642
        %s6648 = scalar_lea.vmem %s5, 36
        %v6649 = vld [vmem:[%s6648] sm:$0xf]
        %v6650 = vld [vmem:[%s6648 + $0x4] sm:$0xf]
        %v6651 = vld [vmem:[%s6648 + $0x8] sm:$0xf]
        %v6655 = vunpack.c.l.b16 %v6649
        %v6656 = vunpack.c.l.b16 %v6650
        %v6657 = vunpack.c.l.b16 %v6651
        %v6658 = vpack.c.b16 %v6656, %v6655
        %v6659 = vpack.c.b16 %v6657, %v6657
        %v6662 = vsel %vm6158, %v6644, 0
        %v6665 = vsel %vm6158, %v6645, 0
        %v6668 = vsel %vm6158, %v6646, 0
        %v6671 = vsel %vm6158, %v6647, 0
        %v6674 = vsel %vm6365, %v6659, 0
        %6676 = vmatprep.subr.bf16.mxu0 0
        %6677 = vmatpush1.bf16.msra.mxu0 %v6658
        %6678 = vmatprep.subr.bf16.mxu0 0
        %6679 = vmatpush1.bf16.msra.mxu0 %v6674
        %6680 = vmatprep.subr.bf16.mxu0 0
        %6681 = vmatpush1.bf16.msra.mxu0 0
        %6682 = vmatprep.subr.bf16.mxu0 0
        %6683 = vmatpush1.bf16.msra.mxu0 0
        %6684 = vmatprep.subr.bf16.mxu0 0
        %6685 = vmatpush1.bf16.msra.mxu0 0
        %6686 = vmatprep.subr.bf16.mxu0 0
        %6687 = vmatpush1.bf16.msra.mxu0 0
        %6688 = vmatprep.subr.bf16.mxu0 0
        %6689 = vmatpush1.bf16.msra.mxu0 0
        %6690 = vmatprep.subr.bf16.mxu0 0
        %6691 = vmatpush1.bf16.msra.mxu0 0
        %6692 = vmatprep.subr.bf16.mxu0 0
        %6693 = vmatpush1.bf16.msra.mxu0 0
        %6694 = vmatprep.subr.bf16.mxu0 0
        %6695 = vmatpush1.bf16.msra.mxu0 0
        %6696 = vmatprep.subr.bf16.mxu0 0
        %6697 = vmatpush1.bf16.msra.mxu0 0
        %6698 = vmatprep.subr.bf16.mxu0 0
        %6699 = vmatpush1.bf16.msra.mxu0 0
        %6700 = vmatprep.subr.bf16.mxu0 0
        %6701 = vmatpush1.bf16.msra.mxu0 0
        %6702 = vmatprep.subr.bf16.mxu0 0
        %6703 = vmatpush1.bf16.msra.mxu0 0
        %6704 = vmatprep.subr.bf16.mxu0 0
        %6705 = vmatpush1.bf16.msra.mxu0 0
        %6706 = vmatprep.subr.bf16.mxu0 0
        %6707 = vmatpush1.bf16.msra.mxu0 0
        %6708 = vmatprep.mubr.bf16.mxu0 0
        %6709 = vmatmul.mubr.bf16.gmra.mrb[0].mxu0 %v6662
        %v6710 = vpop.f32.mrb[0].mxu0
        %v6711 = vadd.f32 0.0, %v6710
        %v6712 = vpop.f32.mrb[0].mxu0
        %v6713 = vpop.f32.mrb[0].mxu0
        %v6714 = vadd.f32 0.0, %v6713
        %v6715 = vpop.f32.mrb[0].mxu0
        %6716 = vmatprep.mubr.bf16.mxu0 0
        %6717 = vmatmul.mubr.bf16.gmra.mrb[0].mxu0 %v6665
        %v6718 = vpop.f32.mrb[0].mxu0
        %v6719 = vadd.f32 0.0, %v6718
        %v6720 = vpop.f32.mrb[0].mxu0
        %v6721 = vpop.f32.mrb[0].mxu0
        %v6722 = vadd.f32 0.0, %v6721
        %v6723 = vpop.f32.mrb[0].mxu0
        %6724 = vmatprep.mubr.bf16.mxu0 0
        %6725 = vmatmul.mubr.bf16.gmra.mrb[0].mxu0 %v6668
        %v6726 = vpop.f32.mrb[0].mxu0
        %v6727 = vadd.f32 0.0, %v6726
        %v6728 = vpop.f32.mrb[0].mxu0
        %v6729 = vpop.f32.mrb[0].mxu0
        %v6730 = vadd.f32 0.0, %v6729
        %v6731 = vpop.f32.mrb[0].mxu0
        %6732 = vmatprep.mubr.bf16.mxu0 0
        %6733 = vmatmul.mubr.bf16.gmra.mrb[0].mxu0 %v6671
        %v6734 = vpop.f32.mrb[0].mxu0
        %v6735 = vadd.f32 0.0, %v6734
        %v6736 = vpop.f32.mrb[0].mxu0
        %v6737 = vpop.f32.mrb[0].mxu0
        %v6738 = vadd.f32 0.0, %v6737
        %v6739 = vpop.f32.mrb[0].mxu0
        %6740 = vdwg.mxu0
        %v6741 = vadd.f32 %v6628, %v6711
        %v6742 = vadd.f32 %v6629, %v6714
        %v6743 = vadd.f32 %v6630, %v6719
        %v6744 = vadd.f32 %v6631, %v6722
        %v6745 = vadd.f32 %v6632, %v6727
        %v6746 = vadd.f32 %v6633, %v6730
        %v6747 = vadd.f32 %v6634, %v6735
        %v6748 = vadd.f32 %v6635, %v6738
        %v6749 = vld [vmem:[%s6212 + $0x1] sm:$0xff]
        %v6750 = vld [vmem:[%s6212 + $0x11] sm:$0xff]
        %v6751 = vld [vmem:[%s6212 + $0x21] sm:$0xff]
        %v6752 = vld [vmem:[%s6212 + $0x31] sm:$0xff]
        %v6753 = vld [vmem:[%s6212 + $0x41] sm:$0xff]
        %v6754 = vld [vmem:[%s6212 + $0x51] sm:$0xff]
        %v6755 = vld [vmem:[%s6212 + $0x61] sm:$0xff]
        %v6756 = vld [vmem:[%s6212 + $0x71] sm:$0xff]
        %v6757 = vpack.c.bf16 %v6750, %v6749
        %v6758 = vpack.c.bf16 %v6752, %v6751
        %v6759 = vpack.c.bf16 %v6754, %v6753
        %v6760 = vpack.c.bf16 %v6756, %v6755
        %s6761 = scalar_lea.vmem %s5, 48
        %v6762 = vld [vmem:[%s6761] sm:$0xf]
        %v6763 = vld [vmem:[%s6761 + $0x4] sm:$0xf]
        %v6764 = vld [vmem:[%s6761 + $0x8] sm:$0xf]
        %v6768 = vunpack.c.l.b16 %v6762
        %v6769 = vunpack.c.l.b16 %v6763
        %v6770 = vunpack.c.l.b16 %v6764
        %v6771 = vpack.c.b16 %v6769, %v6768
        %v6772 = vpack.c.b16 %v6770, %v6770
        %v6775 = vsel %vm6158, %v6757, 0
        %v6778 = vsel %vm6158, %v6758, 0
        %v6781 = vsel %vm6158, %v6759, 0
        %v6784 = vsel %vm6158, %v6760, 0
        %v6787 = vsel %vm6365, %v6772, 0
        %6789 = vmatprep.subr.bf16.mxu0 0
        %6790 = vmatpush1.bf16.msra.mxu0 %v6771
        %6791 = vmatprep.subr.bf16.mxu0 0
        %6792 = vmatpush1.bf16.msra.mxu0 %v6787
        %6793 = vmatprep.subr.bf16.mxu0 0
        %6794 = vmatpush1.bf16.msra.mxu0 0
        %6795 = vmatprep.subr.bf16.mxu0 0
        %6796 = vmatpush1.bf16.msra.mxu0 0
        %6797 = vmatprep.subr.bf16.mxu0 0
        %6798 = vmatpush1.bf16.msra.mxu0 0
        %6799 = vmatprep.subr.bf16.mxu0 0
        %6800 = vmatpush1.bf16.msra.mxu0 0
        %6801 = vmatprep.subr.bf16.mxu0 0
        %6802 = vmatpush1.bf16.msra.mxu0 0
        %6803 = vmatprep.subr.bf16.mxu0 0
        %6804 = vmatpush1.bf16.msra.mxu0 0
        %6805 = vmatprep.subr.bf16.mxu0 0
        %6806 = vmatpush1.bf16.msra.mxu0 0
        %6807 = vmatprep.subr.bf16.mxu0 0
        %6808 = vmatpush1.bf16.msra.mxu0 0
        %6809 = vmatprep.subr.bf16.mxu0 0
        %6810 = vmatpush1.bf16.msra.mxu0 0
        %6811 = vmatprep.subr.bf16.mxu0 0
        %6812 = vmatpush1.bf16.msra.mxu0 0
        %6813 = vmatprep.subr.bf16.mxu0 0
        %6814 = vmatpush1.bf16.msra.mxu0 0
        %6815 = vmatprep.subr.bf16.mxu0 0
        %6816 = vmatpush1.bf16.msra.mxu0 0
        %6817 = vmatprep.subr.bf16.mxu0 0
        %6818 = vmatpush1.bf16.msra.mxu0 0
        %6819 = vmatprep.subr.bf16.mxu0 0
        %6820 = vmatpush1.bf16.msra.mxu0 0
        %6821 = vmatprep.mubr.bf16.mxu0 0
        %6822 = vmatmul.mubr.bf16.gmra.mrb[0].mxu0 %v6775
        %v6823 = vpop.f32.mrb[0].mxu0
        %v6824 = vadd.f32 0.0, %v6823
        %v6825 = vpop.f32.mrb[0].mxu0
        %v6826 = vpop.f32.mrb[0].mxu0
        %v6827 = vadd.f32 0.0, %v6826
        %v6828 = vpop.f32.mrb[0].mxu0
        %6829 = vmatprep.mubr.bf16.mxu0 0
        %6830 = vmatmul.mubr.bf16.gmra.mrb[0].mxu0 %v6778
        %v6831 = vpop.f32.mrb[0].mxu0
        %v6832 = vadd.f32 0.0, %v6831
        %v6833 = vpop.f32.mrb[0].mxu0
        %v6834 = vpop.f32.mrb[0].mxu0
        %v6835 = vadd.f32 0.0, %v6834
        %v6836 = vpop.f32.mrb[0].mxu0
        %6837 = vmatprep.mubr.bf16.mxu0 0
        %6838 = vmatmul.mubr.bf16.gmra.mrb[0].mxu0 %v6781
        %v6839 = vpop.f32.mrb[0].mxu0
        %v6840 = vadd.f32 0.0, %v6839
        %v6841 = vpop.f32.mrb[0].mxu0
        %v6842 = vpop.f32.mrb[0].mxu0
        %v6843 = vadd.f32 0.0, %v6842
        %v6844 = vpop.f32.mrb[0].mxu0
        %6845 = vmatprep.mubr.bf16.mxu0 0
        %6846 = vmatmul.mubr.bf16.gmra.mrb[0].mxu0 %v6784
        %v6847 = vpop.f32.mrb[0].mxu0
        %v6848 = vadd.f32 0.0, %v6847
        %v6849 = vpop.f32.mrb[0].mxu0
        %v6850 = vpop.f32.mrb[0].mxu0
        %v6851 = vadd.f32 0.0, %v6850
        %v6852 = vpop.f32.mrb[0].mxu0
        %6853 = vdwg.mxu0
        %v6854 = vadd.f32 %v6741, %v6824
        %v6855 = vadd.f32 %v6742, %v6827
        %v6856 = vadd.f32 %v6743, %v6832
        %v6857 = vadd.f32 %v6744, %v6835
        %v6858 = vadd.f32 %v6745, %v6840
        %v6859 = vadd.f32 %v6746, %v6843
        %v6860 = vadd.f32 %v6747, %v6848
        %v6861 = vadd.f32 %v6748, %v6851
        %v6862 = vld [vmem:[%s6212 + $0x2] sm:$0xff]
        %v6863 = vld [vmem:[%s6212 + $0x12] sm:$0xff]
        %v6864 = vld [vmem:[%s6212 + $0x22] sm:$0xff]
        %v6865 = vld [vmem:[%s6212 + $0x32] sm:$0xff]
        %v6866 = vld [vmem:[%s6212 + $0x42] sm:$0xff]
        %v6867 = vld [vmem:[%s6212 + $0x52] sm:$0xff]
        %v6868 = vld [vmem:[%s6212 + $0x62] sm:$0xff]
        %v6869 = vld [vmem:[%s6212 + $0x72] sm:$0xff]
        %v6870 = vpack.c.bf16 %v6863, %v6862
        %v6871 = vpack.c.bf16 %v6865, %v6864
        %v6872 = vpack.c.bf16 %v6867, %v6866
        %v6873 = vpack.c.bf16 %v6869, %v6868
        %s6874 = scalar_lea.vmem %s5, 60
        %v6875 = vld [vmem:[%s6874] sm:$0xf]
        %v6876 = vld [vmem:[%s6874 + $0x4] sm:$0xf]
        %v6877 = vld [vmem:[%s6874 + $0x8] sm:$0xf]
        %v6881 = vunpack.c.l.b16 %v6875
        %v6882 = vunpack.c.l.b16 %v6876
        %v6883 = vunpack.c.l.b16 %v6877
        %v6884 = vpack.c.b16 %v6882, %v6881
        %v6885 = vpack.c.b16 %v6883, %v6883
        %v6888 = vsel %vm6158, %v6870, 0
        %v6891 = vsel %vm6158, %v6871, 0
        %v6894 = vsel %vm6158, %v6872, 0
        %v6897 = vsel %vm6158, %v6873, 0
        %v6900 = vsel %vm6365, %v6885, 0
        %6902 = vmatprep.subr.bf16.mxu0 0
        %6903 = vmatpush1.bf16.msra.mxu0 %v6884
        %6904 = vmatprep.subr.bf16.mxu0 0
        %6905 = vmatpush1.bf16.msra.mxu0 %v6900
        %6906 = vmatprep.subr.bf16.mxu0 0
        %6907 = vmatpush1.bf16.msra.mxu0 0
        %6908 = vmatprep.subr.bf16.mxu0 0
        %6909 = vmatpush1.bf16.msra.mxu0 0
        %6910 = vmatprep.subr.bf16.mxu0 0
        %6911 = vmatpush1.bf16.msra.mxu0 0
        %6912 = vmatprep.subr.bf16.mxu0 0
        %6913 = vmatpush1.bf16.msra.mxu0 0
        %6914 = vmatprep.subr.bf16.mxu0 0
        %6915 = vmatpush1.bf16.msra.mxu0 0
        %6916 = vmatprep.subr.bf16.mxu0 0
        %6917 = vmatpush1.bf16.msra.mxu0 0
        %6918 = vmatprep.subr.bf16.mxu0 0
        %6919 = vmatpush1.bf16.msra.mxu0 0
        %6920 = vmatprep.subr.bf16.mxu0 0
        %6921 = vmatpush1.bf16.msra.mxu0 0
        %6922 = vmatprep.subr.bf16.mxu0 0
        %6923 = vmatpush1.bf16.msra.mxu0 0
        %6924 = vmatprep.subr.bf16.mxu0 0
        %6925 = vmatpush1.bf16.msra.mxu0 0
        %6926 = vmatprep.subr.bf16.mxu0 0
        %6927 = vmatpush1.bf16.msra.mxu0 0
        %6928 = vmatprep.subr.bf16.mxu0 0
        %6929 = vmatpush1.bf16.msra.mxu0 0
        %6930 = vmatprep.subr.bf16.mxu0 0
        %6931 = vmatpush1.bf16.msra.mxu0 0
        %6932 = vmatprep.subr.bf16.mxu0 0
        %6933 = vmatpush1.bf16.msra.mxu0 0
        %6934 = vmatprep.mubr.bf16.mxu0 0
        %6935 = vmatmul.mubr.bf16.gmra.mrb[0].mxu0 %v6888
        %v6936 = vpop.f32.mrb[0].mxu0
        %v6937 = vadd.f32 0.0, %v6936
        %v6938 = vpop.f32.mrb[0].mxu0
        %v6939 = vpop.f32.mrb[0].mxu0
        %v6940 = vadd.f32 0.0, %v6939
        %v6941 = vpop.f32.mrb[0].mxu0
        %6942 = vmatprep.mubr.bf16.mxu0 0
        %6943 = vmatmul.mubr.bf16.gmra.mrb[0].mxu0 %v6891
        %v6944 = vpop.f32.mrb[0].mxu0
        %v6945 = vadd.f32 0.0, %v6944
        %v6946 = vpop.f32.mrb[0].mxu0
        %v6947 = vpop.f32.mrb[0].mxu0
        %v6948 = vadd.f32 0.0, %v6947
        %v6949 = vpop.f32.mrb[0].mxu0
        %6950 = vmatprep.mubr.bf16.mxu0 0
        %6951 = vmatmul.mubr.bf16.gmra.mrb[0].mxu0 %v6894
        %v6952 = vpop.f32.mrb[0].mxu0
        %v6953 = vadd.f32 0.0, %v6952
        %v6954 = vpop.f32.mrb[0].mxu0
        %v6955 = vpop.f32.mrb[0].mxu0
        %v6956 = vadd.f32 0.0, %v6955
        %v6957 = vpop.f32.mrb[0].mxu0
        %6958 = vmatprep.mubr.bf16.mxu0 0
        %6959 = vmatmul.mubr.bf16.gmra.mrb[0].mxu0 %v6897
        %v6960 = vpop.f32.mrb[0].mxu0
        %v6961 = vadd.f32 0.0, %v6960
        %v6962 = vpop.f32.mrb[0].mxu0
        %v6963 = vpop.f32.mrb[0].mxu0
        %v6964 = vadd.f32 0.0, %v6963
        %v6965 = vpop.f32.mrb[0].mxu0
        %6966 = vdwg.mxu0
        %v6967 = vadd.f32 %v6854, %v6937
        %v6968 = vadd.f32 %v6855, %v6940
        %v6969 = vadd.f32 %v6856, %v6945
        %v6970 = vadd.f32 %v6857, %v6948
        %v6971 = vadd.f32 %v6858, %v6953
        %v6972 = vadd.f32 %v6859, %v6956
        %v6973 = vadd.f32 %v6860, %v6961
        %v6974 = vadd.f32 %v6861, %v6964
        %s6975 = scalar_lea.vmem [#allocation4], 32
        %v6976 = vld [vmem:[%s6975] sm:$0xff]
        %v6977 = vld [vmem:[%s6975 + $0x10] sm:$0xff]
        %v6978 = vld [vmem:[%s6975 + $0x20] sm:$0xff]
        %v6979 = vld [vmem:[%s6975 + $0x30] sm:$0xff]
        %v6980 = vld [vmem:[%s6975 + $0x40] sm:$0xff]
        %v6981 = vld [vmem:[%s6975 + $0x50] sm:$0xff]
        %v6982 = vld [vmem:[%s6975 + $0x60] sm:$0xff]
        %v6983 = vld [vmem:[%s6975 + $0x70] sm:$0xff]
        %v6984 = vpack.c.bf16 %v6977, %v6976
        %v6985 = vpack.c.bf16 %v6979, %v6978
        %v6986 = vpack.c.bf16 %v6981, %v6980
        %v6987 = vpack.c.bf16 %v6983, %v6982
        %s6988 = scalar_lea.vmem %s5, 72
        %v6989 = vld [vmem:[%s6988] sm:$0xf]
        %v6990 = vld [vmem:[%s6988 + $0x4] sm:$0xf]
        %v6991 = vld [vmem:[%s6988 + $0x8] sm:$0xf]
        %v6995 = vunpack.c.l.b16 %v6989
        %v6996 = vunpack.c.l.b16 %v6990
        %v6997 = vunpack.c.l.b16 %v6991
        %v6998 = vpack.c.b16 %v6996, %v6995
        %v6999 = vpack.c.b16 %v6997, %v6997
        %v7002 = vsel %vm6158, %v6984, 0
        %v7005 = vsel %vm6158, %v6985, 0
        %v7008 = vsel %vm6158, %v6986, 0
        %v7011 = vsel %vm6158, %v6987, 0
        %v7014 = vsel %vm6365, %v6999, 0
        %7016 = vmatprep.subr.bf16.mxu0 0
        %7017 = vmatpush1.bf16.msra.mxu0 %v6998
        %7018 = vmatprep.subr.bf16.mxu0 0
        %7019 = vmatpush1.bf16.msra.mxu0 %v7014
        %7020 = vmatprep.subr.bf16.mxu0 0
        %7021 = vmatpush1.bf16.msra.mxu0 0
        %7022 = vmatprep.subr.bf16.mxu0 0
        %7023 = vmatpush1.bf16.msra.mxu0 0
        %7024 = vmatprep.subr.bf16.mxu0 0
        %7025 = vmatpush1.bf16.msra.mxu0 0
        %7026 = vmatprep.subr.bf16.mxu0 0
        %7027 = vmatpush1.bf16.msra.mxu0 0
        %7028 = vmatprep.subr.bf16.mxu0 0
        %7029 = vmatpush1.bf16.msra.mxu0 0
        %7030 = vmatprep.subr.bf16.mxu0 0
        %7031 = vmatpush1.bf16.msra.mxu0 0
        %7032 = vmatprep.subr.bf16.mxu0 0
        %7033 = vmatpush1.bf16.msra.mxu0 0
        %7034 = vmatprep.subr.bf16.mxu0 0
        %7035 = vmatpush1.bf16.msra.mxu0 0
        %7036 = vmatprep.subr.bf16.mxu0 0
        %7037 = vmatpush1.bf16.msra.mxu0 0
        %7038 = vmatprep.subr.bf16.mxu0 0
        %7039 = vmatpush1.bf16.msra.mxu0 0
        %7040 = vmatprep.subr.bf16.mxu0 0
        %7041 = vmatpush1.bf16.msra.mxu0 0
        %7042 = vmatprep.subr.bf16.mxu0 0
        %7043 = vmatpush1.bf16.msra.mxu0 0
        %7044 = vmatprep.subr.bf16.mxu0 0
        %7045 = vmatpush1.bf16.msra.mxu0 0
        %7046 = vmatprep.subr.bf16.mxu0 0
        %7047 = vmatpush1.bf16.msra.mxu0 0
        %7048 = vmatprep.mubr.bf16.mxu0 0
        %7049 = vmatmul.mubr.bf16.gmra.mrb[0].mxu0 %v7002
        %v7050 = vpop.f32.mrb[0].mxu0
        %v7051 = vadd.f32 0.0, %v7050
        %v7052 = vpop.f32.mrb[0].mxu0
        %v7053 = vpop.f32.mrb[0].mxu0
        %v7054 = vadd.f32 0.0, %v7053
        %v7055 = vpop.f32.mrb[0].mxu0
        %7056 = vmatprep.mubr.bf16.mxu0 0
        %7057 = vmatmul.mubr.bf16.gmra.mrb[0].mxu0 %v7005
        %v7058 = vpop.f32.mrb[0].mxu0
        %v7059 = vadd.f32 0.0, %v7058
        %v7060 = vpop.f32.mrb[0].mxu0
        %v7061 = vpop.f32.mrb[0].mxu0
        %v7062 = vadd.f32 0.0, %v7061
        %v7063 = vpop.f32.mrb[0].mxu0
        %7064 = vmatprep.mubr.bf16.mxu0 0
        %7065 = vmatmul.mubr.bf16.gmra.mrb[0].mxu0 %v7008
        %v7066 = vpop.f32.mrb[0].mxu0
        %v7067 = vadd.f32 0.0, %v7066
        %v7068 = vpop.f32.mrb[0].mxu0
        %v7069 = vpop.f32.mrb[0].mxu0
        %v7070 = vadd.f32 0.0, %v7069
        %v7071 = vpop.f32.mrb[0].mxu0
        %7072 = vmatprep.mubr.bf16.mxu0 0
        %7073 = vmatmul.mubr.bf16.gmra.mrb[0].mxu0 %v7011
        %v7074 = vpop.f32.mrb[0].mxu0
        %v7075 = vadd.f32 0.0, %v7074
        %v7076 = vpop.f32.mrb[0].mxu0
        %v7077 = vpop.f32.mrb[0].mxu0
        %v7078 = vadd.f32 0.0, %v7077
        %v7079 = vpop.f32.mrb[0].mxu0
        %7080 = vdwg.mxu0
        %v7081 = vadd.f32 %v6967, %v7051
        %v7082 = vadd.f32 %v6968, %v7054
        %v7083 = vadd.f32 %v6969, %v7059
        %v7084 = vadd.f32 %v6970, %v7062
        %v7085 = vadd.f32 %v6971, %v7067
        %v7086 = vadd.f32 %v6972, %v7070
        %v7087 = vadd.f32 %v6973, %v7075
        %v7088 = vadd.f32 %v6974, %v7078
        %v7089 = vld [vmem:[%s6975 + $0x1] sm:$0xff]
        %v7090 = vld [vmem:[%s6975 + $0x11] sm:$0xff]
        %v7091 = vld [vmem:[%s6975 + $0x21] sm:$0xff]
        %v7092 = vld [vmem:[%s6975 + $0x31] sm:$0xff]
        %v7093 = vld [vmem:[%s6975 + $0x41] sm:$0xff]
        %v7094 = vld [vmem:[%s6975 + $0x51] sm:$0xff]
        %v7095 = vld [vmem:[%s6975 + $0x61] sm:$0xff]
        %v7096 = vld [vmem:[%s6975 + $0x71] sm:$0xff]
        %v7097 = vpack.c.bf16 %v7090, %v7089
        %v7098 = vpack.c.bf16 %v7092, %v7091
        %v7099 = vpack.c.bf16 %v7094, %v7093
        %v7100 = vpack.c.bf16 %v7096, %v7095
        %s7101 = scalar_lea.vmem %s5, 84
        %v7102 = vld [vmem:[%s7101] sm:$0xf]
        %v7103 = vld [vmem:[%s7101 + $0x4] sm:$0xf]
        %v7104 = vld [vmem:[%s7101 + $0x8] sm:$0xf]
        %v7108 = vunpack.c.l.b16 %v7102
        %v7109 = vunpack.c.l.b16 %v7103
        %v7110 = vunpack.c.l.b16 %v7104
        %v7111 = vpack.c.b16 %v7109, %v7108
        %v7112 = vpack.c.b16 %v7110, %v7110
        %v7115 = vsel %vm6158, %v7097, 0
        %v7118 = vsel %vm6158, %v7098, 0
        %v7121 = vsel %vm6158, %v7099, 0
        %v7124 = vsel %vm6158, %v7100, 0
        %v7127 = vsel %vm6365, %v7112, 0
        %7129 = vmatprep.subr.bf16.mxu0 0
        %7130 = vmatpush1.bf16.msra.mxu0 %v7111
        %7131 = vmatprep.subr.bf16.mxu0 0
        %7132 = vmatpush1.bf16.msra.mxu0 %v7127
        %7133 = vmatprep.subr.bf16.mxu0 0
        %7134 = vmatpush1.bf16.msra.mxu0 0
        %7135 = vmatprep.subr.bf16.mxu0 0
        %7136 = vmatpush1.bf16.msra.mxu0 0
        %7137 = vmatprep.subr.bf16.mxu0 0
        %7138 = vmatpush1.bf16.msra.mxu0 0
        %7139 = vmatprep.subr.bf16.mxu0 0
        %7140 = vmatpush1.bf16.msra.mxu0 0
        %7141 = vmatprep.subr.bf16.mxu0 0
        %7142 = vmatpush1.bf16.msra.mxu0 0
        %7143 = vmatprep.subr.bf16.mxu0 0
        %7144 = vmatpush1.bf16.msra.mxu0 0
        %7145 = vmatprep.subr.bf16.mxu0 0
        %7146 = vmatpush1.bf16.msra.mxu0 0
        %7147 = vmatprep.subr.bf16.mxu0 0
        %7148 = vmatpush1.bf16.msra.mxu0 0
        %7149 = vmatprep.subr.bf16.mxu0 0
        %7150 = vmatpush1.bf16.msra.mxu0 0
        %7151 = vmatprep.subr.bf16.mxu0 0
        %7152 = vmatpush1.bf16.msra.mxu0 0
        %7153 = vmatprep.subr.bf16.mxu0 0
        %7154 = vmatpush1.bf16.msra.mxu0 0
        %7155 = vmatprep.subr.bf16.mxu0 0
        %7156 = vmatpush1.bf16.msra.mxu0 0
        %7157 = vmatprep.subr.bf16.mxu0 0
        %7158 = vmatpush1.bf16.msra.mxu0 0
        %7159 = vmatprep.subr.bf16.mxu0 0
        %7160 = vmatpush1.bf16.msra.mxu0 0
        %7161 = vmatprep.mubr.bf16.mxu0 0
        %7162 = vmatmul.mubr.bf16.gmra.mrb[0].mxu0 %v7115
        %v7163 = vpop.f32.mrb[0].mxu0
        %v7164 = vadd.f32 0.0, %v7163
        %v7165 = vpop.f32.mrb[0].mxu0
        %v7166 = vpop.f32.mrb[0].mxu0
        %v7167 = vadd.f32 0.0, %v7166
        %v7168 = vpop.f32.mrb[0].mxu0
        %7169 = vmatprep.mubr.bf16.mxu0 0
        %7170 = vmatmul.mubr.bf16.gmra.mrb[0].mxu0 %v7118
        %v7171 = vpop.f32.mrb[0].mxu0
        %v7172 = vadd.f32 0.0, %v7171
        %v7173 = vpop.f32.mrb[0].mxu0
        %v7174 = vpop.f32.mrb[0].mxu0
        %v7175 = vadd.f32 0.0, %v7174
        %v7176 = vpop.f32.mrb[0].mxu0
        %7177 = vmatprep.mubr.bf16.mxu0 0
        %7178 = vmatmul.mubr.bf16.gmra.mrb[0].mxu0 %v7121
        %v7179 = vpop.f32.mrb[0].mxu0
        %v7180 = vadd.f32 0.0, %v7179
        %v7181 = vpop.f32.mrb[0].mxu0
        %v7182 = vpop.f32.mrb[0].mxu0
        %v7183 = vadd.f32 0.0, %v7182
        %v7184 = vpop.f32.mrb[0].mxu0
        %7185 = vmatprep.mubr.bf16.mxu0 0
        %7186 = vmatmul.mubr.bf16.gmra.mrb[0].mxu0 %v7124
        %v7187 = vpop.f32.mrb[0].mxu0
        %v7188 = vadd.f32 0.0, %v7187
        %v7189 = vpop.f32.mrb[0].mxu0
        %v7190 = vpop.f32.mrb[0].mxu0
        %v7191 = vadd.f32 0.0, %v7190
        %v7192 = vpop.f32.mrb[0].mxu0
        %7193 = vdwg.mxu0
        %v7194 = vadd.f32 %v7081, %v7164
        %v7195 = vadd.f32 %v7082, %v7167
        %v7196 = vadd.f32 %v7083, %v7172
        %v7197 = vadd.f32 %v7084, %v7175
        %v7198 = vadd.f32 %v7085, %v7180
        %v7199 = vadd.f32 %v7086, %v7183
        %v7200 = vadd.f32 %v7087, %v7188
        %v7201 = vadd.f32 %v7088, %v7191
        %v7202 = vld [vmem:[%s6975 + $0x2] sm:$0xff]
        %v7203 = vld [vmem:[%s6975 + $0x12] sm:$0xff]
        %v7204 = vld [vmem:[%s6975 + $0x22] sm:$0xff]
        %v7205 = vld [vmem:[%s6975 + $0x32] sm:$0xff]
        %v7206 = vld [vmem:[%s6975 + $0x42] sm:$0xff]
        %v7207 = vld [vmem:[%s6975 + $0x52] sm:$0xff]
        %v7208 = vld [vmem:[%s6975 + $0x62] sm:$0xff]
        %v7209 = vld [vmem:[%s6975 + $0x72] sm:$0xff]
        %v7210 = vpack.c.bf16 %v7203, %v7202
        %v7211 = vpack.c.bf16 %v7205, %v7204
        %v7212 = vpack.c.bf16 %v7207, %v7206
        %v7213 = vpack.c.bf16 %v7209, %v7208
        %s7214 = scalar_lea.vmem %s5, 96
        %v7215 = vld [vmem:[%s7214] sm:$0xf]
        %v7216 = vld [vmem:[%s7214 + $0x4] sm:$0xf]
        %v7217 = vld [vmem:[%s7214 + $0x8] sm:$0xf]
        %v7221 = vunpack.c.l.b16 %v7215
        %v7222 = vunpack.c.l.b16 %v7216
        %v7223 = vunpack.c.l.b16 %v7217
        %v7224 = vpack.c.b16 %v7222, %v7221
        %v7225 = vpack.c.b16 %v7223, %v7223
        %v7228 = vsel %vm6158, %v7210, 0
        %v7231 = vsel %vm6158, %v7211, 0
        %v7234 = vsel %vm6158, %v7212, 0
        %v7237 = vsel %vm6158, %v7213, 0
        %v7240 = vsel %vm6365, %v7225, 0
        %7242 = vmatprep.subr.bf16.mxu0 0
        %7243 = vmatpush1.bf16.msra.mxu0 %v7224
        %7244 = vmatprep.subr.bf16.mxu0 0
        %7245 = vmatpush1.bf16.msra.mxu0 %v7240
        %7246 = vmatprep.subr.bf16.mxu0 0
        %7247 = vmatpush1.bf16.msra.mxu0 0
        %7248 = vmatprep.subr.bf16.mxu0 0
        %7249 = vmatpush1.bf16.msra.mxu0 0
        %7250 = vmatprep.subr.bf16.mxu0 0
        %7251 = vmatpush1.bf16.msra.mxu0 0
        %7252 = vmatprep.subr.bf16.mxu0 0
        %7253 = vmatpush1.bf16.msra.mxu0 0
        %7254 = vmatprep.subr.bf16.mxu0 0
        %7255 = vmatpush1.bf16.msra.mxu0 0
        %7256 = vmatprep.subr.bf16.mxu0 0
        %7257 = vmatpush1.bf16.msra.mxu0 0
        %7258 = vmatprep.subr.bf16.mxu0 0
        %7259 = vmatpush1.bf16.msra.mxu0 0
        %7260 = vmatprep.subr.bf16.mxu0 0
        %7261 = vmatpush1.bf16.msra.mxu0 0
        %7262 = vmatprep.subr.bf16.mxu0 0
        %7263 = vmatpush1.bf16.msra.mxu0 0
        %7264 = vmatprep.subr.bf16.mxu0 0
        %7265 = vmatpush1.bf16.msra.mxu0 0
        %7266 = vmatprep.subr.bf16.mxu0 0
        %7267 = vmatpush1.bf16.msra.mxu0 0
        %7268 = vmatprep.subr.bf16.mxu0 0
        %7269 = vmatpush1.bf16.msra.mxu0 0
        %7270 = vmatprep.subr.bf16.mxu0 0
        %7271 = vmatpush1.bf16.msra.mxu0 0
        %7272 = vmatprep.subr.bf16.mxu0 0
        %7273 = vmatpush1.bf16.msra.mxu0 0
        %7274 = vmatprep.mubr.bf16.mxu0 0
        %7275 = vmatmul.mubr.bf16.gmra.mrb[0].mxu0 %v7228
        %v7276 = vpop.f32.mrb[0].mxu0
        %v7277 = vadd.f32 0.0, %v7276
        %v7278 = vpop.f32.mrb[0].mxu0
        %v7279 = vpop.f32.mrb[0].mxu0
        %v7280 = vadd.f32 0.0, %v7279
        %v7281 = vpop.f32.mrb[0].mxu0
        %7282 = vmatprep.mubr.bf16.mxu0 0
        %7283 = vmatmul.mubr.bf16.gmra.mrb[0].mxu0 %v7231
        %v7284 = vpop.f32.mrb[0].mxu0
        %v7285 = vadd.f32 0.0, %v7284
        %v7286 = vpop.f32.mrb[0].mxu0
        %v7287 = vpop.f32.mrb[0].mxu0
        %v7288 = vadd.f32 0.0, %v7287
        %v7289 = vpop.f32.mrb[0].mxu0
        %7290 = vmatprep.mubr.bf16.mxu0 0
        %7291 = vmatmul.mubr.bf16.gmra.mrb[0].mxu0 %v7234
        %v7292 = vpop.f32.mrb[0].mxu0
        %v7293 = vadd.f32 0.0, %v7292
        %v7294 = vpop.f32.mrb[0].mxu0
        %v7295 = vpop.f32.mrb[0].mxu0
        %v7296 = vadd.f32 0.0, %v7295
        %v7297 = vpop.f32.mrb[0].mxu0
        %7298 = vmatprep.mubr.bf16.mxu0 0
        %7299 = vmatmul.mubr.bf16.gmra.mrb[0].mxu0 %v7237
        %v7300 = vpop.f32.mrb[0].mxu0
        %v7301 = vadd.f32 0.0, %v7300
        %v7302 = vpop.f32.mrb[0].mxu0
        %v7303 = vpop.f32.mrb[0].mxu0
        %v7304 = vadd.f32 0.0, %v7303
        %v7305 = vpop.f32.mrb[0].mxu0
        %7306 = vdwg.mxu0
        %v7307 = vadd.f32 %v7194, %v7277
        %v7308 = vadd.f32 %v7195, %v7280
        %v7309 = vadd.f32 %v7196, %v7285
        %v7310 = vadd.f32 %v7197, %v7288
        %v7311 = vadd.f32 %v7198, %v7293
        %v7312 = vadd.f32 %v7199, %v7296
        %v7313 = vadd.f32 %v7200, %v7301
        %v7314 = vadd.f32 %v7201, %v7304
        %v7315 = vld [vmem:[%s6] sm:$0x1]
        %v7317 = vlaneseq
        %v7318 = vshrl.u32 %v7317, 7
        %v7319 = vsub.s32 0, %v7318
        %v7320 = vrot.slane %v7315, %v7319
        %v7322 = vadd.f32 %v7307, %v7320
        %v7323 = vadd.f32 %v7308, %v7320
        %v7324 = vadd.f32 %v7309, %v7320
        %v7325 = vadd.f32 %v7310, %v7320
        %v7326 = vadd.f32 %v7311, %v7320
        %v7327 = vadd.f32 %v7312, %v7320
        %v7328 = vadd.f32 %v7313, %v7320
        %v7329 = vadd.f32 %v7314, %v7320
        %vm7330 = vcmp.ge.f32.partialorder %v7322, 0.0
        %vm7331 = vcmp.ge.f32.partialorder %v7323, 0.0
        %vm7332 = vcmp.ge.f32.partialorder %v7324, 0.0
        %vm7333 = vcmp.ge.f32.partialorder %v7325, 0.0
        %vm7334 = vcmp.ge.f32.partialorder %v7326, 0.0
        %vm7335 = vcmp.ge.f32.partialorder %v7327, 0.0
        %vm7336 = vcmp.ge.f32.partialorder %v7328, 0.0
        %vm7337 = vcmp.ge.f32.partialorder %v7329, 0.0
        %v7338 = vmul.f32 %v7322, 0.01
        %v7339 = vmul.f32 %v7323, 0.01
        %v7340 = vmul.f32 %v7324, 0.01
        %v7341 = vmul.f32 %v7325, 0.01
        %v7342 = vmul.f32 %v7326, 0.01
        %v7343 = vmul.f32 %v7327, 0.01
        %v7344 = vmul.f32 %v7328, 0.01
        %v7345 = vmul.f32 %v7329, 0.01
        %v7346 = vsel %vm7330, %v7322, %v7338
        %v7347 = vsel %vm7331, %v7323, %v7339
        %v7348 = vsel %vm7332, %v7324, %v7340
        %v7349 = vsel %vm7333, %v7325, %v7341
        %v7350 = vsel %vm7334, %v7326, %v7342
        %v7351 = vsel %vm7335, %v7327, %v7343
        %v7352 = vsel %vm7336, %v7328, %v7344
        %v7353 = vsel %vm7337, %v7329, %v7345
        %v7354 = vmax.f32 %v7346, %v7347
        %v7355 = vmax.f32 %v7348, %v7349
        %v7356 = vmax.f32 %v7350, %v7351
        %v7357 = vmax.f32 %v7352, %v7353
        %v7359 = vrot.slane %v7354, 1
        %v7361 = vmax.f32 %v7354, %v7359
        %v7362 = vpack.c.bf16 %v7361, %v7361
        %v7363 = vld [vmem:[%s7] sm:$0xf]
        %v7364 = vld [vmem:[%s7 + $0x4] sm:$0xf]
        %v7365 = vld [vmem:[%s7 + $0x8] sm:$0xf]
        %v7366 = vld [vmem:[%s7 + $0xc] sm:$0xf]
        %v7367 = vld [vmem:[%s7 + $0x10] sm:$0xf]
        %v7368 = vld [vmem:[%s7 + $0x14] sm:$0xf]
        %v7369 = vld [vmem:[%s7 + $0x18] sm:$0xf]
        %v7370 = vld [vmem:[%s7 + $0x1c] sm:$0xf]
        %v7371 = vld [vmem:[%s7 + $0x20] sm:$0xf]
        %v7372 = vld [vmem:[%s7 + $0x24] sm:$0xf]
        %v7373 = vld [vmem:[%s7 + $0x28] sm:$0xf]
        %v7374 = vld [vmem:[%s7 + $0x2c] sm:$0xf]
        %v7375 = vld [vmem:[%s7 + $0x30] sm:$0xf]
        %v7376 = vld [vmem:[%s7 + $0x34] sm:$0xf]
        %v7377 = vld [vmem:[%s7 + $0x38] sm:$0xf]
        %v7378 = vld [vmem:[%s7 + $0x3c] sm:$0xf]
        %s7379 = scalar_lea.vmem %s7, 64
        %v7380 = vld [vmem:[%s7379] sm:$0xf]
        %v7381 = vld [vmem:[%s7379 + $0x4] sm:$0xf]
        %v7382 = vld [vmem:[%s7379 + $0x8] sm:$0xf]
        %v7383 = vld [vmem:[%s7379 + $0xc] sm:$0xf]
        %v7384 = vld [vmem:[%s7379 + $0x10] sm:$0xf]
        %v7385 = vld [vmem:[%s7379 + $0x14] sm:$0xf]
        %v7386 = vld [vmem:[%s7379 + $0x18] sm:$0xf]
        %v7387 = vld [vmem:[%s7379 + $0x1c] sm:$0xf]
        %v7388 = vld [vmem:[%s7379 + $0x20] sm:$0xf]
        %v7389 = vld [vmem:[%s7379 + $0x24] sm:$0xf]
        %v7390 = vld [vmem:[%s7379 + $0x28] sm:$0xf]
        %v7391 = vld [vmem:[%s7379 + $0x2c] sm:$0xf]
        %v7392 = vld [vmem:[%s7379 + $0x30] sm:$0xf]
        %v7393 = vld [vmem:[%s7379 + $0x34] sm:$0xf]
        %v7394 = vld [vmem:[%s7379 + $0x38] sm:$0xf]
        %v7395 = vld [vmem:[%s7379 + $0x3c] sm:$0xf]
        %v7397 = vrot.slane %v7362, 1
        %v7415 = vunpack.c.l.b16 %v7380
        %v7416 = vunpack.c.l.b16 %v7381
        %v7417 = vunpack.c.l.b16 %v7382
        %v7418 = vunpack.c.l.b16 %v7383
        %v7419 = vunpack.c.l.b16 %v7384
        %v7420 = vunpack.c.l.b16 %v7385
        %v7421 = vunpack.c.l.b16 %v7386
        %v7422 = vunpack.c.l.b16 %v7387
        %v7423 = vunpack.c.l.b16 %v7388
        %v7424 = vunpack.c.l.b16 %v7389
        %v7425 = vunpack.c.l.b16 %v7390
        %v7426 = vunpack.c.l.b16 %v7391
        %v7427 = vunpack.c.l.b16 %v7392
        %v7428 = vunpack.c.l.b16 %v7393
        %v7429 = vunpack.c.l.b16 %v7394
        %v7430 = vunpack.c.l.b16 %v7395
        %v7431 = vpack.c.b16 %v7416, %v7415
        %v7432 = vpack.c.b16 %v7418, %v7417
        %v7433 = vpack.c.b16 %v7420, %v7419
        %v7434 = vpack.c.b16 %v7422, %v7421
        %v7435 = vpack.c.b16 %v7424, %v7423
        %v7436 = vpack.c.b16 %v7426, %v7425
        %v7437 = vpack.c.b16 %v7428, %v7427
        %v7438 = vpack.c.b16 %v7430, %v7429
        %7447 = vmatprep.subr.bf16.mxu0 0
        %7448 = vmatpush1.bf16.msra.mxu0 %v7431
        %7449 = vmatprep.subr.bf16.mxu0 0
        %7450 = vmatpush1.bf16.msra.mxu0 %v7432
        %7451 = vmatprep.subr.bf16.mxu0 0
        %7452 = vmatpush1.bf16.msra.mxu0 %v7433
        %7453 = vmatprep.subr.bf16.mxu0 0
        %7454 = vmatpush1.bf16.msra.mxu0 %v7434
        %7455 = vmatprep.subr.bf16.mxu0 0
        %7456 = vmatpush1.bf16.msra.mxu0 %v7435
        %7457 = vmatprep.subr.bf16.mxu0 0
        %7458 = vmatpush1.bf16.msra.mxu0 %v7436
        %7459 = vmatprep.subr.bf16.mxu0 0
        %7460 = vmatpush1.bf16.msra.mxu0 %v7437
        %7461 = vmatprep.subr.bf16.mxu0 0
        %7462 = vmatpush1.bf16.msra.mxu0 %v7438
        %7463 = vmatprep.subr.bf16.mxu0 0
        %7464 = vmatpush1.bf16.msra.mxu0 0
        %7465 = vmatprep.subr.bf16.mxu0 0
        %7466 = vmatpush1.bf16.msra.mxu0 0
        %7467 = vmatprep.subr.bf16.mxu0 0
        %7468 = vmatpush1.bf16.msra.mxu0 0
        %7469 = vmatprep.subr.bf16.mxu0 0
        %7470 = vmatpush1.bf16.msra.mxu0 0
        %7471 = vmatprep.subr.bf16.mxu0 0
        %7472 = vmatpush1.bf16.msra.mxu0 0
        %7473 = vmatprep.subr.bf16.mxu0 0
        %7474 = vmatpush1.bf16.msra.mxu0 0
        %7475 = vmatprep.subr.bf16.mxu0 0
        %7476 = vmatpush1.bf16.msra.mxu0 0
        %7477 = vmatprep.subr.bf16.mxu0 0
        %7478 = vmatpush1.bf16.msra.mxu0 0
        %7479 = vmatprep.mubr.bf16.mxu0 0
        %7480 = vmatmul.mubr.bf16.gmra.mrb[0].mxu0 %v7397
        %v7481 = vpop.f32.mrb[0].mxu0
        %v7482 = vadd.f32 0.0, %v7481
        %v7483 = vpop.f32.mrb[0].mxu0
        %v7484 = vpop.f32.mrb[0].mxu0
        %v7485 = vpop.f32.mrb[0].mxu0
        %7486 = vdwg.mxu0
        %v7503 = vunpack.c.l.b16 %v7363
        %v7504 = vunpack.c.l.b16 %v7364
        %v7505 = vunpack.c.l.b16 %v7365
        %v7506 = vunpack.c.l.b16 %v7366
        %v7507 = vunpack.c.l.b16 %v7367
        %v7508 = vunpack.c.l.b16 %v7368
        %v7509 = vunpack.c.l.b16 %v7369
        %v7510 = vunpack.c.l.b16 %v7370
        %v7511 = vunpack.c.l.b16 %v7371
        %v7512 = vunpack.c.l.b16 %v7372
        %v7513 = vunpack.c.l.b16 %v7373
        %v7514 = vunpack.c.l.b16 %v7374
        %v7515 = vunpack.c.l.b16 %v7375
        %v7516 = vunpack.c.l.b16 %v7376
        %v7517 = vunpack.c.l.b16 %v7377
        %v7518 = vunpack.c.l.b16 %v7378
        %v7519 = vpack.c.b16 %v7504, %v7503
        %v7520 = vpack.c.b16 %v7506, %v7505
        %v7521 = vpack.c.b16 %v7508, %v7507
        %v7522 = vpack.c.b16 %v7510, %v7509
        %v7523 = vpack.c.b16 %v7512, %v7511
        %v7524 = vpack.c.b16 %v7514, %v7513
        %v7525 = vpack.c.b16 %v7516, %v7515
        %v7526 = vpack.c.b16 %v7518, %v7517
        %7535 = vmatprep.subr.bf16.mxu0 0
        %7536 = vmatpush1.bf16.msra.mxu0 %v7519
        %7537 = vmatprep.subr.bf16.mxu0 0
        %7538 = vmatpush1.bf16.msra.mxu0 %v7520
        %7539 = vmatprep.subr.bf16.mxu0 0
        %7540 = vmatpush1.bf16.msra.mxu0 %v7521
        %7541 = vmatprep.subr.bf16.mxu0 0
        %7542 = vmatpush1.bf16.msra.mxu0 %v7522
        %7543 = vmatprep.subr.bf16.mxu0 0
        %7544 = vmatpush1.bf16.msra.mxu0 %v7523
        %7545 = vmatprep.subr.bf16.mxu0 0
        %7546 = vmatpush1.bf16.msra.mxu0 %v7524
        %7547 = vmatprep.subr.bf16.mxu0 0
        %7548 = vmatpush1.bf16.msra.mxu0 %v7525
        %7549 = vmatprep.subr.bf16.mxu0 0
        %7550 = vmatpush1.bf16.msra.mxu0 %v7526
        %7551 = vmatprep.subr.bf16.mxu0 0
        %7552 = vmatpush1.bf16.msra.mxu0 0
        %7553 = vmatprep.subr.bf16.mxu0 0
        %7554 = vmatpush1.bf16.msra.mxu0 0
        %7555 = vmatprep.subr.bf16.mxu0 0
        %7556 = vmatpush1.bf16.msra.mxu0 0
        %7557 = vmatprep.subr.bf16.mxu0 0
        %7558 = vmatpush1.bf16.msra.mxu0 0
        %7559 = vmatprep.subr.bf16.mxu0 0
        %7560 = vmatpush1.bf16.msra.mxu0 0
        %7561 = vmatprep.subr.bf16.mxu0 0
        %7562 = vmatpush1.bf16.msra.mxu0 0
        %7563 = vmatprep.subr.bf16.mxu0 0
        %7564 = vmatpush1.bf16.msra.mxu0 0
        %7565 = vmatprep.subr.bf16.mxu0 0
        %7566 = vmatpush1.bf16.msra.mxu0 0
        %7567 = vmatprep.mubr.bf16.mxu0 0
        %7568 = vmatmul.mubr.bf16.gmra.mrb[0].mxu0 %v7362
        %v7569 = vpop.f32.mrb[0].mxu0
        %v7570 = vadd.f32 %v7482, %v7569
        %v7571 = vpop.f32.mrb[0].mxu0
        %v7572 = vpop.f32.mrb[0].mxu0
        %v7573 = vpop.f32.mrb[0].mxu0
        %7574 = vdwg.mxu0
        %s7575 = scalar_lea.vmem %s7, 128
        %v7576 = vld [vmem:[%s7575] sm:$0xf]
        %v7577 = vld [vmem:[%s7575 + $0x4] sm:$0xf]
        %v7578 = vld [vmem:[%s7575 + $0x8] sm:$0xf]
        %v7579 = vld [vmem:[%s7575 + $0xc] sm:$0xf]
        %v7580 = vld [vmem:[%s7575 + $0x10] sm:$0xf]
        %v7581 = vld [vmem:[%s7575 + $0x14] sm:$0xf]
        %v7582 = vld [vmem:[%s7575 + $0x18] sm:$0xf]
        %v7583 = vld [vmem:[%s7575 + $0x1c] sm:$0xf]
        %v7584 = vld [vmem:[%s7575 + $0x20] sm:$0xf]
        %v7585 = vld [vmem:[%s7575 + $0x24] sm:$0xf]
        %v7586 = vld [vmem:[%s7575 + $0x28] sm:$0xf]
        %v7587 = vld [vmem:[%s7575 + $0x2c] sm:$0xf]
        %v7588 = vld [vmem:[%s7575 + $0x30] sm:$0xf]
        %v7589 = vld [vmem:[%s7575 + $0x34] sm:$0xf]
        %v7590 = vld [vmem:[%s7575 + $0x38] sm:$0xf]
        %v7591 = vld [vmem:[%s7575 + $0x3c] sm:$0xf]
        %v7592 = vrot.slane %v7362, 2
        %v7610 = vunpack.c.l.b16 %v7576
        %v7611 = vunpack.c.l.b16 %v7577
        %v7612 = vunpack.c.l.b16 %v7578
        %v7613 = vunpack.c.l.b16 %v7579
        %v7614 = vunpack.c.l.b16 %v7580
        %v7615 = vunpack.c.l.b16 %v7581
        %v7616 = vunpack.c.l.b16 %v7582
        %v7617 = vunpack.c.l.b16 %v7583
        %v7618 = vunpack.c.l.b16 %v7584
        %v7619 = vunpack.c.l.b16 %v7585
        %v7620 = vunpack.c.l.b16 %v7586
        %v7621 = vunpack.c.l.b16 %v7587
        %v7622 = vunpack.c.l.b16 %v7588
        %v7623 = vunpack.c.l.b16 %v7589
        %v7624 = vunpack.c.l.b16 %v7590
        %v7625 = vunpack.c.l.b16 %v7591
        %v7626 = vpack.c.b16 %v7611, %v7610
        %v7627 = vpack.c.b16 %v7613, %v7612
        %v7628 = vpack.c.b16 %v7615, %v7614
        %v7629 = vpack.c.b16 %v7617, %v7616
        %v7630 = vpack.c.b16 %v7619, %v7618
        %v7631 = vpack.c.b16 %v7621, %v7620
        %v7632 = vpack.c.b16 %v7623, %v7622
        %v7633 = vpack.c.b16 %v7625, %v7624
        %7642 = vmatprep.subr.bf16.mxu0 0
        %7643 = vmatpush1.bf16.msra.mxu0 %v7626
        %7644 = vmatprep.subr.bf16.mxu0 0
        %7645 = vmatpush1.bf16.msra.mxu0 %v7627
        %7646 = vmatprep.subr.bf16.mxu0 0
        %7647 = vmatpush1.bf16.msra.mxu0 %v7628
        %7648 = vmatprep.subr.bf16.mxu0 0
        %7649 = vmatpush1.bf16.msra.mxu0 %v7629
        %7650 = vmatprep.subr.bf16.mxu0 0
        %7651 = vmatpush1.bf16.msra.mxu0 %v7630
        %7652 = vmatprep.subr.bf16.mxu0 0
        %7653 = vmatpush1.bf16.msra.mxu0 %v7631
        %7654 = vmatprep.subr.bf16.mxu0 0
        %7655 = vmatpush1.bf16.msra.mxu0 %v7632
        %7656 = vmatprep.subr.bf16.mxu0 0
        %7657 = vmatpush1.bf16.msra.mxu0 %v7633
        %7658 = vmatprep.subr.bf16.mxu0 0
        %7659 = vmatpush1.bf16.msra.mxu0 0
        %7660 = vmatprep.subr.bf16.mxu0 0
        %7661 = vmatpush1.bf16.msra.mxu0 0
        %7662 = vmatprep.subr.bf16.mxu0 0
        %7663 = vmatpush1.bf16.msra.mxu0 0
        %7664 = vmatprep.subr.bf16.mxu0 0
        %7665 = vmatpush1.bf16.msra.mxu0 0
        %7666 = vmatprep.subr.bf16.mxu0 0
        %7667 = vmatpush1.bf16.msra.mxu0 0
        %7668 = vmatprep.subr.bf16.mxu0 0
        %7669 = vmatpush1.bf16.msra.mxu0 0
        %7670 = vmatprep.subr.bf16.mxu0 0
        %7671 = vmatpush1.bf16.msra.mxu0 0
        %7672 = vmatprep.subr.bf16.mxu0 0
        %7673 = vmatpush1.bf16.msra.mxu0 0
        %7674 = vmatprep.mubr.bf16.mxu0 0
        %7675 = vmatmul.mubr.bf16.gmra.mrb[0].mxu0 %v7592
        %v7676 = vpop.f32.mrb[0].mxu0
        %v7677 = vadd.f32 0.0, %v7676
        %v7678 = vpop.f32.mrb[0].mxu0
        %v7679 = vpop.f32.mrb[0].mxu0
        %v7680 = vpop.f32.mrb[0].mxu0
        %7681 = vdwg.mxu0
        %v7682 = vadd.f32 %v7570, %v7677
        %s7683 = scalar_lea.vmem %s7, 192
        %v7684 = vld [vmem:[%s7683] sm:$0xf]
        %v7685 = vld [vmem:[%s7683 + $0x4] sm:$0xf]
        %v7686 = vld [vmem:[%s7683 + $0x8] sm:$0xf]
        %v7687 = vld [vmem:[%s7683 + $0xc] sm:$0xf]
        %v7688 = vld [vmem:[%s7683 + $0x10] sm:$0xf]
        %v7689 = vld [vmem:[%s7683 + $0x14] sm:$0xf]
        %v7690 = vld [vmem:[%s7683 + $0x18] sm:$0xf]
        %v7691 = vld [vmem:[%s7683 + $0x1c] sm:$0xf]
        %v7692 = vld [vmem:[%s7683 + $0x20] sm:$0xf]
        %v7693 = vld [vmem:[%s7683 + $0x24] sm:$0xf]
        %v7694 = vld [vmem:[%s7683 + $0x28] sm:$0xf]
        %v7695 = vld [vmem:[%s7683 + $0x2c] sm:$0xf]
        %v7696 = vld [vmem:[%s7683 + $0x30] sm:$0xf]
        %v7697 = vld [vmem:[%s7683 + $0x34] sm:$0xf]
        %v7698 = vld [vmem:[%s7683 + $0x38] sm:$0xf]
        %v7699 = vld [vmem:[%s7683 + $0x3c] sm:$0xf]
        %v7700 = vrot.slane %v7362, 3
        %v7718 = vunpack.c.l.b16 %v7684
        %v7719 = vunpack.c.l.b16 %v7685
        %v7720 = vunpack.c.l.b16 %v7686
        %v7721 = vunpack.c.l.b16 %v7687
        %v7722 = vunpack.c.l.b16 %v7688
        %v7723 = vunpack.c.l.b16 %v7689
        %v7724 = vunpack.c.l.b16 %v7690
        %v7725 = vunpack.c.l.b16 %v7691
        %v7726 = vunpack.c.l.b16 %v7692
        %v7727 = vunpack.c.l.b16 %v7693
        %v7728 = vunpack.c.l.b16 %v7694
        %v7729 = vunpack.c.l.b16 %v7695
        %v7730 = vunpack.c.l.b16 %v7696
        %v7731 = vunpack.c.l.b16 %v7697
        %v7732 = vunpack.c.l.b16 %v7698
        %v7733 = vunpack.c.l.b16 %v7699
        %v7734 = vpack.c.b16 %v7719, %v7718
        %v7735 = vpack.c.b16 %v7721, %v7720
        %v7736 = vpack.c.b16 %v7723, %v7722
        %v7737 = vpack.c.b16 %v7725, %v7724
        %v7738 = vpack.c.b16 %v7727, %v7726
        %v7739 = vpack.c.b16 %v7729, %v7728
        %v7740 = vpack.c.b16 %v7731, %v7730
        %v7741 = vpack.c.b16 %v7733, %v7732
        %7750 = vmatprep.subr.bf16.mxu0 0
        %7751 = vmatpush1.bf16.msra.mxu0 %v7734
        %7752 = vmatprep.subr.bf16.mxu0 0
        %7753 = vmatpush1.bf16.msra.mxu0 %v7735
        %7754 = vmatprep.subr.bf16.mxu0 0
        %7755 = vmatpush1.bf16.msra.mxu0 %v7736
        %7756 = vmatprep.subr.bf16.mxu0 0
        %7757 = vmatpush1.bf16.msra.mxu0 %v7737
        %7758 = vmatprep.subr.bf16.mxu0 0
        %7759 = vmatpush1.bf16.msra.mxu0 %v7738
        %7760 = vmatprep.subr.bf16.mxu0 0
        %7761 = vmatpush1.bf16.msra.mxu0 %v7739
        %7762 = vmatprep.subr.bf16.mxu0 0
        %7763 = vmatpush1.bf16.msra.mxu0 %v7740
        %7764 = vmatprep.subr.bf16.mxu0 0
        %7765 = vmatpush1.bf16.msra.mxu0 %v7741
        %7766 = vmatprep.subr.bf16.mxu0 0
        %7767 = vmatpush1.bf16.msra.mxu0 0
        %7768 = vmatprep.subr.bf16.mxu0 0
        %7769 = vmatpush1.bf16.msra.mxu0 0
        %7770 = vmatprep.subr.bf16.mxu0 0
        %7771 = vmatpush1.bf16.msra.mxu0 0
        %7772 = vmatprep.subr.bf16.mxu0 0
        %7773 = vmatpush1.bf16.msra.mxu0 0
        %7774 = vmatprep.subr.bf16.mxu0 0
        %7775 = vmatpush1.bf16.msra.mxu0 0
        %7776 = vmatprep.subr.bf16.mxu0 0
        %7777 = vmatpush1.bf16.msra.mxu0 0
        %7778 = vmatprep.subr.bf16.mxu0 0
        %7779 = vmatpush1.bf16.msra.mxu0 0
        %7780 = vmatprep.subr.bf16.mxu0 0
        %7781 = vmatpush1.bf16.msra.mxu0 0
        %7782 = vmatprep.mubr.bf16.mxu0 0
        %7783 = vmatmul.mubr.bf16.gmra.mrb[0].mxu0 %v7700
        %v7784 = vpop.f32.mrb[0].mxu0
        %v7785 = vadd.f32 0.0, %v7784
        %v7786 = vpop.f32.mrb[0].mxu0
        %v7787 = vpop.f32.mrb[0].mxu0
        %v7788 = vpop.f32.mrb[0].mxu0
        %7789 = vdwg.mxu0
        %v7790 = vadd.f32 %v7682, %v7785
        %v7792 = vrot.slane %v7355, 1
        %v7794 = vmax.f32 %v7355, %v7792
        %v7795 = vpack.c.bf16 %v7794, %v7794
        %s7796 = scalar_lea.vmem %s7, 256
        %v7797 = vld [vmem:[%s7796] sm:$0xf]
        %v7798 = vld [vmem:[%s7796 + $0x4] sm:$0xf]
        %v7799 = vld [vmem:[%s7796 + $0x8] sm:$0xf]
        %v7800 = vld [vmem:[%s7796 + $0xc] sm:$0xf]
        %v7801 = vld [vmem:[%s7796 + $0x10] sm:$0xf]
        %v7802 = vld [vmem:[%s7796 + $0x14] sm:$0xf]
        %v7803 = vld [vmem:[%s7796 + $0x18] sm:$0xf]
        %v7804 = vld [vmem:[%s7796 + $0x1c] sm:$0xf]
        %v7805 = vld [vmem:[%s7796 + $0x20] sm:$0xf]
        %v7806 = vld [vmem:[%s7796 + $0x24] sm:$0xf]
        %v7807 = vld [vmem:[%s7796 + $0x28] sm:$0xf]
        %v7808 = vld [vmem:[%s7796 + $0x2c] sm:$0xf]
        %v7809 = vld [vmem:[%s7796 + $0x30] sm:$0xf]
        %v7810 = vld [vmem:[%s7796 + $0x34] sm:$0xf]
        %v7811 = vld [vmem:[%s7796 + $0x38] sm:$0xf]
        %v7812 = vld [vmem:[%s7796 + $0x3c] sm:$0xf]
        %v7829 = vunpack.c.l.b16 %v7797
        %v7830 = vunpack.c.l.b16 %v7798
        %v7831 = vunpack.c.l.b16 %v7799
        %v7832 = vunpack.c.l.b16 %v7800
        %v7833 = vunpack.c.l.b16 %v7801
        %v7834 = vunpack.c.l.b16 %v7802
        %v7835 = vunpack.c.l.b16 %v7803
        %v7836 = vunpack.c.l.b16 %v7804
        %v7837 = vunpack.c.l.b16 %v7805
        %v7838 = vunpack.c.l.b16 %v7806
        %v7839 = vunpack.c.l.b16 %v7807
        %v7840 = vunpack.c.l.b16 %v7808
        %v7841 = vunpack.c.l.b16 %v7809
        %v7842 = vunpack.c.l.b16 %v7810
        %v7843 = vunpack.c.l.b16 %v7811
        %v7844 = vunpack.c.l.b16 %v7812
        %v7845 = vpack.c.b16 %v7830, %v7829
        %v7846 = vpack.c.b16 %v7832, %v7831
        %v7847 = vpack.c.b16 %v7834, %v7833
        %v7848 = vpack.c.b16 %v7836, %v7835
        %v7849 = vpack.c.b16 %v7838, %v7837
        %v7850 = vpack.c.b16 %v7840, %v7839
        %v7851 = vpack.c.b16 %v7842, %v7841
        %v7852 = vpack.c.b16 %v7844, %v7843
        %7861 = vmatprep.subr.bf16.mxu0 0
        %7862 = vmatpush1.bf16.msra.mxu0 %v7845
        %7863 = vmatprep.subr.bf16.mxu0 0
        %7864 = vmatpush1.bf16.msra.mxu0 %v7846
        %7865 = vmatprep.subr.bf16.mxu0 0
        %7866 = vmatpush1.bf16.msra.mxu0 %v7847
        %7867 = vmatprep.subr.bf16.mxu0 0
        %7868 = vmatpush1.bf16.msra.mxu0 %v7848
        %7869 = vmatprep.subr.bf16.mxu0 0
        %7870 = vmatpush1.bf16.msra.mxu0 %v7849
        %7871 = vmatprep.subr.bf16.mxu0 0
        %7872 = vmatpush1.bf16.msra.mxu0 %v7850
        %7873 = vmatprep.subr.bf16.mxu0 0
        %7874 = vmatpush1.bf16.msra.mxu0 %v7851
        %7875 = vmatprep.subr.bf16.mxu0 0
        %7876 = vmatpush1.bf16.msra.mxu0 %v7852
        %7877 = vmatprep.subr.bf16.mxu0 0
        %7878 = vmatpush1.bf16.msra.mxu0 0
        %7879 = vmatprep.subr.bf16.mxu0 0
        %7880 = vmatpush1.bf16.msra.mxu0 0
        %7881 = vmatprep.subr.bf16.mxu0 0
        %7882 = vmatpush1.bf16.msra.mxu0 0
        %7883 = vmatprep.subr.bf16.mxu0 0
        %7884 = vmatpush1.bf16.msra.mxu0 0
        %7885 = vmatprep.subr.bf16.mxu0 0
        %7886 = vmatpush1.bf16.msra.mxu0 0
        %7887 = vmatprep.subr.bf16.mxu0 0
        %7888 = vmatpush1.bf16.msra.mxu0 0
        %7889 = vmatprep.subr.bf16.mxu0 0
        %7890 = vmatpush1.bf16.msra.mxu0 0
        %7891 = vmatprep.subr.bf16.mxu0 0
        %7892 = vmatpush1.bf16.msra.mxu0 0
        %7893 = vmatprep.mubr.bf16.mxu0 0
        %7894 = vmatmul.mubr.bf16.gmra.mrb[0].mxu0 %v7795
        %v7895 = vpop.f32.mrb[0].mxu0
        %v7896 = vadd.f32 0.0, %v7895
        %v7897 = vpop.f32.mrb[0].mxu0
        %v7898 = vpop.f32.mrb[0].mxu0
        %v7899 = vpop.f32.mrb[0].mxu0
        %7900 = vdwg.mxu0
        %v7901 = vadd.f32 %v7790, %v7896
        %s7902 = scalar_lea.vmem %s7, 320
        %v7903 = vld [vmem:[%s7902] sm:$0xf]
        %v7904 = vld [vmem:[%s7902 + $0x4] sm:$0xf]
        %v7905 = vld [vmem:[%s7902 + $0x8] sm:$0xf]
        %v7906 = vld [vmem:[%s7902 + $0xc] sm:$0xf]
        %v7907 = vld [vmem:[%s7902 + $0x10] sm:$0xf]
        %v7908 = vld [vmem:[%s7902 + $0x14] sm:$0xf]
        %v7909 = vld [vmem:[%s7902 + $0x18] sm:$0xf]
        %v7910 = vld [vmem:[%s7902 + $0x1c] sm:$0xf]
        %v7911 = vld [vmem:[%s7902 + $0x20] sm:$0xf]
        %v7912 = vld [vmem:[%s7902 + $0x24] sm:$0xf]
        %v7913 = vld [vmem:[%s7902 + $0x28] sm:$0xf]
        %v7914 = vld [vmem:[%s7902 + $0x2c] sm:$0xf]
        %v7915 = vld [vmem:[%s7902 + $0x30] sm:$0xf]
        %v7916 = vld [vmem:[%s7902 + $0x34] sm:$0xf]
        %v7917 = vld [vmem:[%s7902 + $0x38] sm:$0xf]
        %v7918 = vld [vmem:[%s7902 + $0x3c] sm:$0xf]
        %v7920 = vrot.slane %v7795, 1
        %v7938 = vunpack.c.l.b16 %v7903
        %v7939 = vunpack.c.l.b16 %v7904
        %v7940 = vunpack.c.l.b16 %v7905
        %v7941 = vunpack.c.l.b16 %v7906
        %v7942 = vunpack.c.l.b16 %v7907
        %v7943 = vunpack.c.l.b16 %v7908
        %v7944 = vunpack.c.l.b16 %v7909
        %v7945 = vunpack.c.l.b16 %v7910
        %v7946 = vunpack.c.l.b16 %v7911
        %v7947 = vunpack.c.l.b16 %v7912
        %v7948 = vunpack.c.l.b16 %v7913
        %v7949 = vunpack.c.l.b16 %v7914
        %v7950 = vunpack.c.l.b16 %v7915
        %v7951 = vunpack.c.l.b16 %v7916
        %v7952 = vunpack.c.l.b16 %v7917
        %v7953 = vunpack.c.l.b16 %v7918
        %v7954 = vpack.c.b16 %v7939, %v7938
        %v7955 = vpack.c.b16 %v7941, %v7940
        %v7956 = vpack.c.b16 %v7943, %v7942
        %v7957 = vpack.c.b16 %v7945, %v7944
        %v7958 = vpack.c.b16 %v7947, %v7946
        %v7959 = vpack.c.b16 %v7949, %v7948
        %v7960 = vpack.c.b16 %v7951, %v7950
        %v7961 = vpack.c.b16 %v7953, %v7952
        %7970 = vmatprep.subr.bf16.mxu0 0
        %7971 = vmatpush1.bf16.msra.mxu0 %v7954
        %7972 = vmatprep.subr.bf16.mxu0 0
        %7973 = vmatpush1.bf16.msra.mxu0 %v7955
        %7974 = vmatprep.subr.bf16.mxu0 0
        %7975 = vmatpush1.bf16.msra.mxu0 %v7956
        %7976 = vmatprep.subr.bf16.mxu0 0
        %7977 = vmatpush1.bf16.msra.mxu0 %v7957
        %7978 = vmatprep.subr.bf16.mxu0 0
        %7979 = vmatpush1.bf16.msra.mxu0 %v7958
        %7980 = vmatprep.subr.bf16.mxu0 0
        %7981 = vmatpush1.bf16.msra.mxu0 %v7959
        %7982 = vmatprep.subr.bf16.mxu0 0
        %7983 = vmatpush1.bf16.msra.mxu0 %v7960
        %7984 = vmatprep.subr.bf16.mxu0 0
        %7985 = vmatpush1.bf16.msra.mxu0 %v7961
        %7986 = vmatprep.subr.bf16.mxu0 0
        %7987 = vmatpush1.bf16.msra.mxu0 0
        %7988 = vmatprep.subr.bf16.mxu0 0
        %7989 = vmatpush1.bf16.msra.mxu0 0
        %7990 = vmatprep.subr.bf16.mxu0 0
        %7991 = vmatpush1.bf16.msra.mxu0 0
        %7992 = vmatprep.subr.bf16.mxu0 0
        %7993 = vmatpush1.bf16.msra.mxu0 0
        %7994 = vmatprep.subr.bf16.mxu0 0
        %7995 = vmatpush1.bf16.msra.mxu0 0
        %7996 = vmatprep.subr.bf16.mxu0 0
        %7997 = vmatpush1.bf16.msra.mxu0 0
        %7998 = vmatprep.subr.bf16.mxu0 0
        %7999 = vmatpush1.bf16.msra.mxu0 0
        %8000 = vmatprep.subr.bf16.mxu0 0
        %8001 = vmatpush1.bf16.msra.mxu0 0
        %8002 = vmatprep.mubr.bf16.mxu0 0
        %8003 = vmatmul.mubr.bf16.gmra.mrb[0].mxu0 %v7920
        %v8004 = vpop.f32.mrb[0].mxu0
        %v8005 = vadd.f32 0.0, %v8004
        %v8006 = vpop.f32.mrb[0].mxu0
        %v8007 = vpop.f32.mrb[0].mxu0
        %v8008 = vpop.f32.mrb[0].mxu0
        %8009 = vdwg.mxu0
        %v8010 = vadd.f32 %v7901, %v8005
        %s8011 = scalar_lea.vmem %s7, 384
        %v8012 = vld [vmem:[%s8011] sm:$0xf]
        %v8013 = vld [vmem:[%s8011 + $0x4] sm:$0xf]
        %v8014 = vld [vmem:[%s8011 + $0x8] sm:$0xf]
        %v8015 = vld [vmem:[%s8011 + $0xc] sm:$0xf]
        %v8016 = vld [vmem:[%s8011 + $0x10] sm:$0xf]
        %v8017 = vld [vmem:[%s8011 + $0x14] sm:$0xf]
        %v8018 = vld [vmem:[%s8011 + $0x18] sm:$0xf]
        %v8019 = vld [vmem:[%s8011 + $0x1c] sm:$0xf]
        %v8020 = vld [vmem:[%s8011 + $0x20] sm:$0xf]
        %v8021 = vld [vmem:[%s8011 + $0x24] sm:$0xf]
        %v8022 = vld [vmem:[%s8011 + $0x28] sm:$0xf]
        %v8023 = vld [vmem:[%s8011 + $0x2c] sm:$0xf]
        %v8024 = vld [vmem:[%s8011 + $0x30] sm:$0xf]
        %v8025 = vld [vmem:[%s8011 + $0x34] sm:$0xf]
        %v8026 = vld [vmem:[%s8011 + $0x38] sm:$0xf]
        %v8027 = vld [vmem:[%s8011 + $0x3c] sm:$0xf]
        %v8028 = vrot.slane %v7795, 2
        %v8046 = vunpack.c.l.b16 %v8012
        %v8047 = vunpack.c.l.b16 %v8013
        %v8048 = vunpack.c.l.b16 %v8014
        %v8049 = vunpack.c.l.b16 %v8015
        %v8050 = vunpack.c.l.b16 %v8016
        %v8051 = vunpack.c.l.b16 %v8017
        %v8052 = vunpack.c.l.b16 %v8018
        %v8053 = vunpack.c.l.b16 %v8019
        %v8054 = vunpack.c.l.b16 %v8020
        %v8055 = vunpack.c.l.b16 %v8021
        %v8056 = vunpack.c.l.b16 %v8022
        %v8057 = vunpack.c.l.b16 %v8023
        %v8058 = vunpack.c.l.b16 %v8024
        %v8059 = vunpack.c.l.b16 %v8025
        %v8060 = vunpack.c.l.b16 %v8026
        %v8061 = vunpack.c.l.b16 %v8027
        %v8062 = vpack.c.b16 %v8047, %v8046
        %v8063 = vpack.c.b16 %v8049, %v8048
        %v8064 = vpack.c.b16 %v8051, %v8050
        %v8065 = vpack.c.b16 %v8053, %v8052
        %v8066 = vpack.c.b16 %v8055, %v8054
        %v8067 = vpack.c.b16 %v8057, %v8056
        %v8068 = vpack.c.b16 %v8059, %v8058
        %v8069 = vpack.c.b16 %v8061, %v8060
        %8078 = vmatprep.subr.bf16.mxu0 0
        %8079 = vmatpush1.bf16.msra.mxu0 %v8062
        %8080 = vmatprep.subr.bf16.mxu0 0
        %8081 = vmatpush1.bf16.msra.mxu0 %v8063
        %8082 = vmatprep.subr.bf16.mxu0 0
        %8083 = vmatpush1.bf16.msra.mxu0 %v8064
        %8084 = vmatprep.subr.bf16.mxu0 0
        %8085 = vmatpush1.bf16.msra.mxu0 %v8065
        %8086 = vmatprep.subr.bf16.mxu0 0
        %8087 = vmatpush1.bf16.msra.mxu0 %v8066
        %8088 = vmatprep.subr.bf16.mxu0 0
        %8089 = vmatpush1.bf16.msra.mxu0 %v8067
        %8090 = vmatprep.subr.bf16.mxu0 0
        %8091 = vmatpush1.bf16.msra.mxu0 %v8068
        %8092 = vmatprep.subr.bf16.mxu0 0
        %8093 = vmatpush1.bf16.msra.mxu0 %v8069
        %8094 = vmatprep.subr.bf16.mxu0 0
        %8095 = vmatpush1.bf16.msra.mxu0 0
        %8096 = vmatprep.subr.bf16.mxu0 0
        %8097 = vmatpush1.bf16.msra.mxu0 0
        %8098 = vmatprep.subr.bf16.mxu0 0
        %8099 = vmatpush1.bf16.msra.mxu0 0
        %8100 = vmatprep.subr.bf16.mxu0 0
        %8101 = vmatpush1.bf16.msra.mxu0 0
        %8102 = vmatprep.subr.bf16.mxu0 0
        %8103 = vmatpush1.bf16.msra.mxu0 0
        %8104 = vmatprep.subr.bf16.mxu0 0
        %8105 = vmatpush1.bf16.msra.mxu0 0
        %8106 = vmatprep.subr.bf16.mxu0 0
        %8107 = vmatpush1.bf16.msra.mxu0 0
        %8108 = vmatprep.subr.bf16.mxu0 0
        %8109 = vmatpush1.bf16.msra.mxu0 0
        %8110 = vmatprep.mubr.bf16.mxu0 0
        %8111 = vmatmul.mubr.bf16.gmra.mrb[0].mxu0 %v8028
        %v8112 = vpop.f32.mrb[0].mxu0
        %v8113 = vadd.f32 0.0, %v8112
        %v8114 = vpop.f32.mrb[0].mxu0
        %v8115 = vpop.f32.mrb[0].mxu0
        %v8116 = vpop.f32.mrb[0].mxu0
        %8117 = vdwg.mxu0
        %v8118 = vadd.f32 %v8010, %v8113
        %s8119 = scalar_lea.vmem %s7, 448
        %v8120 = vld [vmem:[%s8119] sm:$0xf]
        %v8121 = vld [vmem:[%s8119 + $0x4] sm:$0xf]
        %v8122 = vld [vmem:[%s8119 + $0x8] sm:$0xf]
        %v8123 = vld [vmem:[%s8119 + $0xc] sm:$0xf]
        %v8124 = vld [vmem:[%s8119 + $0x10] sm:$0xf]
        %v8125 = vld [vmem:[%s8119 + $0x14] sm:$0xf]
        %v8126 = vld [vmem:[%s8119 + $0x18] sm:$0xf]
        %v8127 = vld [vmem:[%s8119 + $0x1c] sm:$0xf]
        %v8128 = vld [vmem:[%s8119 + $0x20] sm:$0xf]
        %v8129 = vld [vmem:[%s8119 + $0x24] sm:$0xf]
        %v8130 = vld [vmem:[%s8119 + $0x28] sm:$0xf]
        %v8131 = vld [vmem:[%s8119 + $0x2c] sm:$0xf]
        %v8132 = vld [vmem:[%s8119 + $0x30] sm:$0xf]
        %v8133 = vld [vmem:[%s8119 + $0x34] sm:$0xf]
        %v8134 = vld [vmem:[%s8119 + $0x38] sm:$0xf]
        %v8135 = vld [vmem:[%s8119 + $0x3c] sm:$0xf]
        %v8136 = vrot.slane %v7795, 3
        %v8154 = vunpack.c.l.b16 %v8120
        %v8155 = vunpack.c.l.b16 %v8121
        %v8156 = vunpack.c.l.b16 %v8122
        %v8157 = vunpack.c.l.b16 %v8123
        %v8158 = vunpack.c.l.b16 %v8124
        %v8159 = vunpack.c.l.b16 %v8125
        %v8160 = vunpack.c.l.b16 %v8126
        %v8161 = vunpack.c.l.b16 %v8127
        %v8162 = vunpack.c.l.b16 %v8128
        %v8163 = vunpack.c.l.b16 %v8129
        %v8164 = vunpack.c.l.b16 %v8130
        %v8165 = vunpack.c.l.b16 %v8131
        %v8166 = vunpack.c.l.b16 %v8132
        %v8167 = vunpack.c.l.b16 %v8133
        %v8168 = vunpack.c.l.b16 %v8134
        %v8169 = vunpack.c.l.b16 %v8135
        %v8170 = vpack.c.b16 %v8155, %v8154
        %v8171 = vpack.c.b16 %v8157, %v8156
        %v8172 = vpack.c.b16 %v8159, %v8158
        %v8173 = vpack.c.b16 %v8161, %v8160
        %v8174 = vpack.c.b16 %v8163, %v8162
        %v8175 = vpack.c.b16 %v8165, %v8164
        %v8176 = vpack.c.b16 %v8167, %v8166
        %v8177 = vpack.c.b16 %v8169, %v8168
        %8186 = vmatprep.subr.bf16.mxu0 0
        %8187 = vmatpush1.bf16.msra.mxu0 %v8170
        %8188 = vmatprep.subr.bf16.mxu0 0
        %8189 = vmatpush1.bf16.msra.mxu0 %v8171
        %8190 = vmatprep.subr.bf16.mxu0 0
        %8191 = vmatpush1.bf16.msra.mxu0 %v8172
        %8192 = vmatprep.subr.bf16.mxu0 0
        %8193 = vmatpush1.bf16.msra.mxu0 %v8173
        %8194 = vmatprep.subr.bf16.mxu0 0
        %8195 = vmatpush1.bf16.msra.mxu0 %v8174
        %8196 = vmatprep.subr.bf16.mxu0 0
        %8197 = vmatpush1.bf16.msra.mxu0 %v8175
        %8198 = vmatprep.subr.bf16.mxu0 0
        %8199 = vmatpush1.bf16.msra.mxu0 %v8176
        %8200 = vmatprep.subr.bf16.mxu0 0
        %8201 = vmatpush1.bf16.msra.mxu0 %v8177
        %8202 = vmatprep.subr.bf16.mxu0 0
        %8203 = vmatpush1.bf16.msra.mxu0 0
        %8204 = vmatprep.subr.bf16.mxu0 0
        %8205 = vmatpush1.bf16.msra.mxu0 0
        %8206 = vmatprep.subr.bf16.mxu0 0
        %8207 = vmatpush1.bf16.msra.mxu0 0
        %8208 = vmatprep.subr.bf16.mxu0 0
        %8209 = vmatpush1.bf16.msra.mxu0 0
        %8210 = vmatprep.subr.bf16.mxu0 0
        %8211 = vmatpush1.bf16.msra.mxu0 0
        %8212 = vmatprep.subr.bf16.mxu0 0
        %8213 = vmatpush1.bf16.msra.mxu0 0
        %8214 = vmatprep.subr.bf16.mxu0 0
        %8215 = vmatpush1.bf16.msra.mxu0 0
        %8216 = vmatprep.subr.bf16.mxu0 0
        %8217 = vmatpush1.bf16.msra.mxu0 0
        %8218 = vmatprep.mubr.bf16.mxu0 0
        %8219 = vmatmul.mubr.bf16.gmra.mrb[0].mxu0 %v8136
        %v8220 = vpop.f32.mrb[0].mxu0
        %v8221 = vadd.f32 0.0, %v8220
        %v8222 = vpop.f32.mrb[0].mxu0
        %v8223 = vpop.f32.mrb[0].mxu0
        %v8224 = vpop.f32.mrb[0].mxu0
        %8225 = vdwg.mxu0
        %v8226 = vadd.f32 %v8118, %v8221
        %v8228 = vrot.slane %v7356, 1
        %v8230 = vmax.f32 %v7356, %v8228
        %v8231 = vpack.c.bf16 %v8230, %v8230
        %s8232 = scalar_lea.vmem %s7, 512
        %v8233 = vld [vmem:[%s8232] sm:$0xf]
        %v8234 = vld [vmem:[%s8232 + $0x4] sm:$0xf]
        %v8235 = vld [vmem:[%s8232 + $0x8] sm:$0xf]
        %v8236 = vld [vmem:[%s8232 + $0xc] sm:$0xf]
        %v8237 = vld [vmem:[%s8232 + $0x10] sm:$0xf]
        %v8238 = vld [vmem:[%s8232 + $0x14] sm:$0xf]
        %v8239 = vld [vmem:[%s8232 + $0x18] sm:$0xf]
        %v8240 = vld [vmem:[%s8232 + $0x1c] sm:$0xf]
        %v8241 = vld [vmem:[%s8232 + $0x20] sm:$0xf]
        %v8242 = vld [vmem:[%s8232 + $0x24] sm:$0xf]
        %v8243 = vld [vmem:[%s8232 + $0x28] sm:$0xf]
        %v8244 = vld [vmem:[%s8232 + $0x2c] sm:$0xf]
        %v8245 = vld [vmem:[%s8232 + $0x30] sm:$0xf]
        %v8246 = vld [vmem:[%s8232 + $0x34] sm:$0xf]
        %v8247 = vld [vmem:[%s8232 + $0x38] sm:$0xf]
        %v8248 = vld [vmem:[%s8232 + $0x3c] sm:$0xf]
        %v8265 = vunpack.c.l.b16 %v8233
        %v8266 = vunpack.c.l.b16 %v8234
        %v8267 = vunpack.c.l.b16 %v8235
        %v8268 = vunpack.c.l.b16 %v8236
        %v8269 = vunpack.c.l.b16 %v8237
        %v8270 = vunpack.c.l.b16 %v8238
        %v8271 = vunpack.c.l.b16 %v8239
        %v8272 = vunpack.c.l.b16 %v8240
        %v8273 = vunpack.c.l.b16 %v8241
        %v8274 = vunpack.c.l.b16 %v8242
        %v8275 = vunpack.c.l.b16 %v8243
        %v8276 = vunpack.c.l.b16 %v8244
        %v8277 = vunpack.c.l.b16 %v8245
        %v8278 = vunpack.c.l.b16 %v8246
        %v8279 = vunpack.c.l.b16 %v8247
        %v8280 = vunpack.c.l.b16 %v8248
        %v8281 = vpack.c.b16 %v8266, %v8265
        %v8282 = vpack.c.b16 %v8268, %v8267
        %v8283 = vpack.c.b16 %v8270, %v8269
        %v8284 = vpack.c.b16 %v8272, %v8271
        %v8285 = vpack.c.b16 %v8274, %v8273
        %v8286 = vpack.c.b16 %v8276, %v8275
        %v8287 = vpack.c.b16 %v8278, %v8277
        %v8288 = vpack.c.b16 %v8280, %v8279
        %8297 = vmatprep.subr.bf16.mxu0 0
        %8298 = vmatpush1.bf16.msra.mxu0 %v8281
        %8299 = vmatprep.subr.bf16.mxu0 0
        %8300 = vmatpush1.bf16.msra.mxu0 %v8282
        %8301 = vmatprep.subr.bf16.mxu0 0
        %8302 = vmatpush1.bf16.msra.mxu0 %v8283
        %8303 = vmatprep.subr.bf16.mxu0 0
        %8304 = vmatpush1.bf16.msra.mxu0 %v8284
        %8305 = vmatprep.subr.bf16.mxu0 0
        %8306 = vmatpush1.bf16.msra.mxu0 %v8285
        %8307 = vmatprep.subr.bf16.mxu0 0
        %8308 = vmatpush1.bf16.msra.mxu0 %v8286
        %8309 = vmatprep.subr.bf16.mxu0 0
        %8310 = vmatpush1.bf16.msra.mxu0 %v8287
        %8311 = vmatprep.subr.bf16.mxu0 0
        %8312 = vmatpush1.bf16.msra.mxu0 %v8288
        %8313 = vmatprep.subr.bf16.mxu0 0
        %8314 = vmatpush1.bf16.msra.mxu0 0
        %8315 = vmatprep.subr.bf16.mxu0 0
        %8316 = vmatpush1.bf16.msra.mxu0 0
        %8317 = vmatprep.subr.bf16.mxu0 0
        %8318 = vmatpush1.bf16.msra.mxu0 0
        %8319 = vmatprep.subr.bf16.mxu0 0
        %8320 = vmatpush1.bf16.msra.mxu0 0
        %8321 = vmatprep.subr.bf16.mxu0 0
        %8322 = vmatpush1.bf16.msra.mxu0 0
        %8323 = vmatprep.subr.bf16.mxu0 0
        %8324 = vmatpush1.bf16.msra.mxu0 0
        %8325 = vmatprep.subr.bf16.mxu0 0
        %8326 = vmatpush1.bf16.msra.mxu0 0
        %8327 = vmatprep.subr.bf16.mxu0 0
        %8328 = vmatpush1.bf16.msra.mxu0 0
        %8329 = vmatprep.mubr.bf16.mxu0 0
        %8330 = vmatmul.mubr.bf16.gmra.mrb[0].mxu0 %v8231
        %v8331 = vpop.f32.mrb[0].mxu0
        %v8332 = vadd.f32 0.0, %v8331
        %v8333 = vpop.f32.mrb[0].mxu0
        %v8334 = vpop.f32.mrb[0].mxu0
        %v8335 = vpop.f32.mrb[0].mxu0
        %8336 = vdwg.mxu0
        %v8337 = vadd.f32 %v8226, %v8332
        %s8338 = scalar_lea.vmem %s7, 576
        %v8339 = vld [vmem:[%s8338] sm:$0xf]
        %v8340 = vld [vmem:[%s8338 + $0x4] sm:$0xf]
        %v8341 = vld [vmem:[%s8338 + $0x8] sm:$0xf]
        %v8342 = vld [vmem:[%s8338 + $0xc] sm:$0xf]
        %v8343 = vld [vmem:[%s8338 + $0x10] sm:$0xf]
        %v8344 = vld [vmem:[%s8338 + $0x14] sm:$0xf]
        %v8345 = vld [vmem:[%s8338 + $0x18] sm:$0xf]
        %v8346 = vld [vmem:[%s8338 + $0x1c] sm:$0xf]
        %v8347 = vld [vmem:[%s8338 + $0x20] sm:$0xf]
        %v8348 = vld [vmem:[%s8338 + $0x24] sm:$0xf]
        %v8349 = vld [vmem:[%s8338 + $0x28] sm:$0xf]
        %v8350 = vld [vmem:[%s8338 + $0x2c] sm:$0xf]
        %v8351 = vld [vmem:[%s8338 + $0x30] sm:$0xf]
        %v8352 = vld [vmem:[%s8338 + $0x34] sm:$0xf]
        %v8353 = vld [vmem:[%s8338 + $0x38] sm:$0xf]
        %v8354 = vld [vmem:[%s8338 + $0x3c] sm:$0xf]
        %v8356 = vrot.slane %v8231, 1
        %v8374 = vunpack.c.l.b16 %v8339
        %v8375 = vunpack.c.l.b16 %v8340
        %v8376 = vunpack.c.l.b16 %v8341
        %v8377 = vunpack.c.l.b16 %v8342
        %v8378 = vunpack.c.l.b16 %v8343
        %v8379 = vunpack.c.l.b16 %v8344
        %v8380 = vunpack.c.l.b16 %v8345
        %v8381 = vunpack.c.l.b16 %v8346
        %v8382 = vunpack.c.l.b16 %v8347
        %v8383 = vunpack.c.l.b16 %v8348
        %v8384 = vunpack.c.l.b16 %v8349
        %v8385 = vunpack.c.l.b16 %v8350
        %v8386 = vunpack.c.l.b16 %v8351
        %v8387 = vunpack.c.l.b16 %v8352
        %v8388 = vunpack.c.l.b16 %v8353
        %v8389 = vunpack.c.l.b16 %v8354
        %v8390 = vpack.c.b16 %v8375, %v8374
        %v8391 = vpack.c.b16 %v8377, %v8376
        %v8392 = vpack.c.b16 %v8379, %v8378
        %v8393 = vpack.c.b16 %v8381, %v8380
        %v8394 = vpack.c.b16 %v8383, %v8382
        %v8395 = vpack.c.b16 %v8385, %v8384
        %v8396 = vpack.c.b16 %v8387, %v8386
        %v8397 = vpack.c.b16 %v8389, %v8388
        %8406 = vmatprep.subr.bf16.mxu0 0
        %8407 = vmatpush1.bf16.msra.mxu0 %v8390
        %8408 = vmatprep.subr.bf16.mxu0 0
        %8409 = vmatpush1.bf16.msra.mxu0 %v8391
        %8410 = vmatprep.subr.bf16.mxu0 0
        %8411 = vmatpush1.bf16.msra.mxu0 %v8392
        %8412 = vmatprep.subr.bf16.mxu0 0
        %8413 = vmatpush1.bf16.msra.mxu0 %v8393
        %8414 = vmatprep.subr.bf16.mxu0 0
        %8415 = vmatpush1.bf16.msra.mxu0 %v8394
        %8416 = vmatprep.subr.bf16.mxu0 0
        %8417 = vmatpush1.bf16.msra.mxu0 %v8395
        %8418 = vmatprep.subr.bf16.mxu0 0
        %8419 = vmatpush1.bf16.msra.mxu0 %v8396
        %8420 = vmatprep.subr.bf16.mxu0 0
        %8421 = vmatpush1.bf16.msra.mxu0 %v8397
        %8422 = vmatprep.subr.bf16.mxu0 0
        %8423 = vmatpush1.bf16.msra.mxu0 0
        %8424 = vmatprep.subr.bf16.mxu0 0
        %8425 = vmatpush1.bf16.msra.mxu0 0
        %8426 = vmatprep.subr.bf16.mxu0 0
        %8427 = vmatpush1.bf16.msra.mxu0 0
        %8428 = vmatprep.subr.bf16.mxu0 0
        %8429 = vmatpush1.bf16.msra.mxu0 0
        %8430 = vmatprep.subr.bf16.mxu0 0
        %8431 = vmatpush1.bf16.msra.mxu0 0
        %8432 = vmatprep.subr.bf16.mxu0 0
        %8433 = vmatpush1.bf16.msra.mxu0 0
        %8434 = vmatprep.subr.bf16.mxu0 0
        %8435 = vmatpush1.bf16.msra.mxu0 0
        %8436 = vmatprep.subr.bf16.mxu0 0
        %8437 = vmatpush1.bf16.msra.mxu0 0
        %8438 = vmatprep.mubr.bf16.mxu0 0
        %8439 = vmatmul.mubr.bf16.gmra.mrb[0].mxu0 %v8356
        %v8440 = vpop.f32.mrb[0].mxu0
        %v8441 = vadd.f32 0.0, %v8440
        %v8442 = vpop.f32.mrb[0].mxu0
        %v8443 = vpop.f32.mrb[0].mxu0
        %v8444 = vpop.f32.mrb[0].mxu0
        %8445 = vdwg.mxu0
        %v8446 = vadd.f32 %v8337, %v8441
        %s8447 = scalar_lea.vmem %s7, 640
        %v8448 = vld [vmem:[%s8447] sm:$0xf]
        %v8449 = vld [vmem:[%s8447 + $0x4] sm:$0xf]
        %v8450 = vld [vmem:[%s8447 + $0x8] sm:$0xf]
        %v8451 = vld [vmem:[%s8447 + $0xc] sm:$0xf]
        %v8452 = vld [vmem:[%s8447 + $0x10] sm:$0xf]
        %v8453 = vld [vmem:[%s8447 + $0x14] sm:$0xf]
        %v8454 = vld [vmem:[%s8447 + $0x18] sm:$0xf]
        %v8455 = vld [vmem:[%s8447 + $0x1c] sm:$0xf]
        %v8456 = vld [vmem:[%s8447 + $0x20] sm:$0xf]
        %v8457 = vld [vmem:[%s8447 + $0x24] sm:$0xf]
        %v8458 = vld [vmem:[%s8447 + $0x28] sm:$0xf]
        %v8459 = vld [vmem:[%s8447 + $0x2c] sm:$0xf]
        %v8460 = vld [vmem:[%s8447 + $0x30] sm:$0xf]
        %v8461 = vld [vmem:[%s8447 + $0x34] sm:$0xf]
        %v8462 = vld [vmem:[%s8447 + $0x38] sm:$0xf]
        %v8463 = vld [vmem:[%s8447 + $0x3c] sm:$0xf]
        %v8464 = vrot.slane %v8231, 2
        %v8482 = vunpack.c.l.b16 %v8448
        %v8483 = vunpack.c.l.b16 %v8449
        %v8484 = vunpack.c.l.b16 %v8450
        %v8485 = vunpack.c.l.b16 %v8451
        %v8486 = vunpack.c.l.b16 %v8452
        %v8487 = vunpack.c.l.b16 %v8453
        %v8488 = vunpack.c.l.b16 %v8454
        %v8489 = vunpack.c.l.b16 %v8455
        %v8490 = vunpack.c.l.b16 %v8456
        %v8491 = vunpack.c.l.b16 %v8457
        %v8492 = vunpack.c.l.b16 %v8458
        %v8493 = vunpack.c.l.b16 %v8459
        %v8494 = vunpack.c.l.b16 %v8460
        %v8495 = vunpack.c.l.b16 %v8461
        %v8496 = vunpack.c.l.b16 %v8462
        %v8497 = vunpack.c.l.b16 %v8463
        %v8498 = vpack.c.b16 %v8483, %v8482
        %v8499 = vpack.c.b16 %v8485, %v8484
        %v8500 = vpack.c.b16 %v8487, %v8486
        %v8501 = vpack.c.b16 %v8489, %v8488
        %v8502 = vpack.c.b16 %v8491, %v8490
        %v8503 = vpack.c.b16 %v8493, %v8492
        %v8504 = vpack.c.b16 %v8495, %v8494
        %v8505 = vpack.c.b16 %v8497, %v8496
        %8514 = vmatprep.subr.bf16.mxu0 0
        %8515 = vmatpush1.bf16.msra.mxu0 %v8498
        %8516 = vmatprep.subr.bf16.mxu0 0
        %8517 = vmatpush1.bf16.msra.mxu0 %v8499
        %8518 = vmatprep.subr.bf16.mxu0 0
        %8519 = vmatpush1.bf16.msra.mxu0 %v8500
        %8520 = vmatprep.subr.bf16.mxu0 0
        %8521 = vmatpush1.bf16.msra.mxu0 %v8501
        %8522 = vmatprep.subr.bf16.mxu0 0
        %8523 = vmatpush1.bf16.msra.mxu0 %v8502
        %8524 = vmatprep.subr.bf16.mxu0 0
        %8525 = vmatpush1.bf16.msra.mxu0 %v8503
        %8526 = vmatprep.subr.bf16.mxu0 0
        %8527 = vmatpush1.bf16.msra.mxu0 %v8504
        %8528 = vmatprep.subr.bf16.mxu0 0
        %8529 = vmatpush1.bf16.msra.mxu0 %v8505
        %8530 = vmatprep.subr.bf16.mxu0 0
        %8531 = vmatpush1.bf16.msra.mxu0 0
        %8532 = vmatprep.subr.bf16.mxu0 0
        %8533 = vmatpush1.bf16.msra.mxu0 0
        %8534 = vmatprep.subr.bf16.mxu0 0
        %8535 = vmatpush1.bf16.msra.mxu0 0
        %8536 = vmatprep.subr.bf16.mxu0 0
        %8537 = vmatpush1.bf16.msra.mxu0 0
        %8538 = vmatprep.subr.bf16.mxu0 0
        %8539 = vmatpush1.bf16.msra.mxu0 0
        %8540 = vmatprep.subr.bf16.mxu0 0
        %8541 = vmatpush1.bf16.msra.mxu0 0
        %8542 = vmatprep.subr.bf16.mxu0 0
        %8543 = vmatpush1.bf16.msra.mxu0 0
        %8544 = vmatprep.subr.bf16.mxu0 0
        %8545 = vmatpush1.bf16.msra.mxu0 0
        %8546 = vmatprep.mubr.bf16.mxu0 0
        %8547 = vmatmul.mubr.bf16.gmra.mrb[0].mxu0 %v8464
        %v8548 = vpop.f32.mrb[0].mxu0
        %v8549 = vadd.f32 0.0, %v8548
        %v8550 = vpop.f32.mrb[0].mxu0
        %v8551 = vpop.f32.mrb[0].mxu0
        %v8552 = vpop.f32.mrb[0].mxu0
        %8553 = vdwg.mxu0
        %v8554 = vadd.f32 %v8446, %v8549
        %s8555 = scalar_lea.vmem %s7, 704
        %v8556 = vld [vmem:[%s8555] sm:$0xf]
        %v8557 = vld [vmem:[%s8555 + $0x4] sm:$0xf]
        %v8558 = vld [vmem:[%s8555 + $0x8] sm:$0xf]
        %v8559 = vld [vmem:[%s8555 + $0xc] sm:$0xf]
        %v8560 = vld [vmem:[%s8555 + $0x10] sm:$0xf]
        %v8561 = vld [vmem:[%s8555 + $0x14] sm:$0xf]
        %v8562 = vld [vmem:[%s8555 + $0x18] sm:$0xf]
        %v8563 = vld [vmem:[%s8555 + $0x1c] sm:$0xf]
        %v8564 = vld [vmem:[%s8555 + $0x20] sm:$0xf]
        %v8565 = vld [vmem:[%s8555 + $0x24] sm:$0xf]
        %v8566 = vld [vmem:[%s8555 + $0x28] sm:$0xf]
        %v8567 = vld [vmem:[%s8555 + $0x2c] sm:$0xf]
        %v8568 = vld [vmem:[%s8555 + $0x30] sm:$0xf]
        %v8569 = vld [vmem:[%s8555 + $0x34] sm:$0xf]
        %v8570 = vld [vmem:[%s8555 + $0x38] sm:$0xf]
        %v8571 = vld [vmem:[%s8555 + $0x3c] sm:$0xf]
        %v8572 = vrot.slane %v8231, 3
        %v8590 = vunpack.c.l.b16 %v8556
        %v8591 = vunpack.c.l.b16 %v8557
        %v8592 = vunpack.c.l.b16 %v8558
        %v8593 = vunpack.c.l.b16 %v8559
        %v8594 = vunpack.c.l.b16 %v8560
        %v8595 = vunpack.c.l.b16 %v8561
        %v8596 = vunpack.c.l.b16 %v8562
        %v8597 = vunpack.c.l.b16 %v8563
        %v8598 = vunpack.c.l.b16 %v8564
        %v8599 = vunpack.c.l.b16 %v8565
        %v8600 = vunpack.c.l.b16 %v8566
        %v8601 = vunpack.c.l.b16 %v8567
        %v8602 = vunpack.c.l.b16 %v8568
        %v8603 = vunpack.c.l.b16 %v8569
        %v8604 = vunpack.c.l.b16 %v8570
        %v8605 = vunpack.c.l.b16 %v8571
        %v8606 = vpack.c.b16 %v8591, %v8590
        %v8607 = vpack.c.b16 %v8593, %v8592
        %v8608 = vpack.c.b16 %v8595, %v8594
        %v8609 = vpack.c.b16 %v8597, %v8596
        %v8610 = vpack.c.b16 %v8599, %v8598
        %v8611 = vpack.c.b16 %v8601, %v8600
        %v8612 = vpack.c.b16 %v8603, %v8602
        %v8613 = vpack.c.b16 %v8605, %v8604
        %8622 = vmatprep.subr.bf16.mxu0 0
        %8623 = vmatpush1.bf16.msra.mxu0 %v8606
        %8624 = vmatprep.subr.bf16.mxu0 0
        %8625 = vmatpush1.bf16.msra.mxu0 %v8607
        %8626 = vmatprep.subr.bf16.mxu0 0
        %8627 = vmatpush1.bf16.msra.mxu0 %v8608
        %8628 = vmatprep.subr.bf16.mxu0 0
        %8629 = vmatpush1.bf16.msra.mxu0 %v8609
        %8630 = vmatprep.subr.bf16.mxu0 0
        %8631 = vmatpush1.bf16.msra.mxu0 %v8610
        %8632 = vmatprep.subr.bf16.mxu0 0
        %8633 = vmatpush1.bf16.msra.mxu0 %v8611
        %8634 = vmatprep.subr.bf16.mxu0 0
        %8635 = vmatpush1.bf16.msra.mxu0 %v8612
        %8636 = vmatprep.subr.bf16.mxu0 0
        %8637 = vmatpush1.bf16.msra.mxu0 %v8613
        %8638 = vmatprep.subr.bf16.mxu0 0
        %8639 = vmatpush1.bf16.msra.mxu0 0
        %8640 = vmatprep.subr.bf16.mxu0 0
        %8641 = vmatpush1.bf16.msra.mxu0 0
        %8642 = vmatprep.subr.bf16.mxu0 0
        %8643 = vmatpush1.bf16.msra.mxu0 0
        %8644 = vmatprep.subr.bf16.mxu0 0
        %8645 = vmatpush1.bf16.msra.mxu0 0
        %8646 = vmatprep.subr.bf16.mxu0 0
        %8647 = vmatpush1.bf16.msra.mxu0 0
        %8648 = vmatprep.subr.bf16.mxu0 0
        %8649 = vmatpush1.bf16.msra.mxu0 0
        %8650 = vmatprep.subr.bf16.mxu0 0
        %8651 = vmatpush1.bf16.msra.mxu0 0
        %8652 = vmatprep.subr.bf16.mxu0 0
        %8653 = vmatpush1.bf16.msra.mxu0 0
        %8654 = vmatprep.mubr.bf16.mxu0 0
        %8655 = vmatmul.mubr.bf16.gmra.mrb[0].mxu0 %v8572
        %v8656 = vpop.f32.mrb[0].mxu0
        %v8657 = vadd.f32 0.0, %v8656
        %v8658 = vpop.f32.mrb[0].mxu0
        %v8659 = vpop.f32.mrb[0].mxu0
        %v8660 = vpop.f32.mrb[0].mxu0
        %8661 = vdwg.mxu0
        %v8662 = vadd.f32 %v8554, %v8657
        %v8664 = vrot.slane %v7357, 1
        %v8666 = vmax.f32 %v7357, %v8664
        %v8667 = vpack.c.bf16 %v8666, %v8666
        %s8668 = scalar_lea.vmem %s7, 768
        %v8669 = vld [vmem:[%s8668] sm:$0xf]
        %v8670 = vld [vmem:[%s8668 + $0x4] sm:$0xf]
        %v8671 = vld [vmem:[%s8668 + $0x8] sm:$0xf]
        %v8672 = vld [vmem:[%s8668 + $0xc] sm:$0xf]
        %v8673 = vld [vmem:[%s8668 + $0x10] sm:$0xf]
        %v8674 = vld [vmem:[%s8668 + $0x14] sm:$0xf]
        %v8675 = vld [vmem:[%s8668 + $0x18] sm:$0xf]
        %v8676 = vld [vmem:[%s8668 + $0x1c] sm:$0xf]
        %v8677 = vld [vmem:[%s8668 + $0x20] sm:$0xf]
        %v8678 = vld [vmem:[%s8668 + $0x24] sm:$0xf]
        %v8679 = vld [vmem:[%s8668 + $0x28] sm:$0xf]
        %v8680 = vld [vmem:[%s8668 + $0x2c] sm:$0xf]
        %v8681 = vld [vmem:[%s8668 + $0x30] sm:$0xf]
        %v8682 = vld [vmem:[%s8668 + $0x34] sm:$0xf]
        %v8683 = vld [vmem:[%s8668 + $0x38] sm:$0xf]
        %v8684 = vld [vmem:[%s8668 + $0x3c] sm:$0xf]
        %v8701 = vunpack.c.l.b16 %v8669
        %v8702 = vunpack.c.l.b16 %v8670
        %v8703 = vunpack.c.l.b16 %v8671
        %v8704 = vunpack.c.l.b16 %v8672
        %v8705 = vunpack.c.l.b16 %v8673
        %v8706 = vunpack.c.l.b16 %v8674
        %v8707 = vunpack.c.l.b16 %v8675
        %v8708 = vunpack.c.l.b16 %v8676
        %v8709 = vunpack.c.l.b16 %v8677
        %v8710 = vunpack.c.l.b16 %v8678
        %v8711 = vunpack.c.l.b16 %v8679
        %v8712 = vunpack.c.l.b16 %v8680
        %v8713 = vunpack.c.l.b16 %v8681
        %v8714 = vunpack.c.l.b16 %v8682
        %v8715 = vunpack.c.l.b16 %v8683
        %v8716 = vunpack.c.l.b16 %v8684
        %v8717 = vpack.c.b16 %v8702, %v8701
        %v8718 = vpack.c.b16 %v8704, %v8703
        %v8719 = vpack.c.b16 %v8706, %v8705
        %v8720 = vpack.c.b16 %v8708, %v8707
        %v8721 = vpack.c.b16 %v8710, %v8709
        %v8722 = vpack.c.b16 %v8712, %v8711
        %v8723 = vpack.c.b16 %v8714, %v8713
        %v8724 = vpack.c.b16 %v8716, %v8715
        %8733 = vmatprep.subr.bf16.mxu0 0
        %8734 = vmatpush1.bf16.msra.mxu0 %v8717
        %8735 = vmatprep.subr.bf16.mxu0 0
        %8736 = vmatpush1.bf16.msra.mxu0 %v8718
        %8737 = vmatprep.subr.bf16.mxu0 0
        %8738 = vmatpush1.bf16.msra.mxu0 %v8719
        %8739 = vmatprep.subr.bf16.mxu0 0
        %8740 = vmatpush1.bf16.msra.mxu0 %v8720
        %8741 = vmatprep.subr.bf16.mxu0 0
        %8742 = vmatpush1.bf16.msra.mxu0 %v8721
        %8743 = vmatprep.subr.bf16.mxu0 0
        %8744 = vmatpush1.bf16.msra.mxu0 %v8722
        %8745 = vmatprep.subr.bf16.mxu0 0
        %8746 = vmatpush1.bf16.msra.mxu0 %v8723
        %8747 = vmatprep.subr.bf16.mxu0 0
        %8748 = vmatpush1.bf16.msra.mxu0 %v8724
        %8749 = vmatprep.subr.bf16.mxu0 0
        %8750 = vmatpush1.bf16.msra.mxu0 0
        %8751 = vmatprep.subr.bf16.mxu0 0
        %8752 = vmatpush1.bf16.msra.mxu0 0
        %8753 = vmatprep.subr.bf16.mxu0 0
        %8754 = vmatpush1.bf16.msra.mxu0 0
        %8755 = vmatprep.subr.bf16.mxu0 0
        %8756 = vmatpush1.bf16.msra.mxu0 0
        %8757 = vmatprep.subr.bf16.mxu0 0
        %8758 = vmatpush1.bf16.msra.mxu0 0
        %8759 = vmatprep.subr.bf16.mxu0 0
        %8760 = vmatpush1.bf16.msra.mxu0 0
        %8761 = vmatprep.subr.bf16.mxu0 0
        %8762 = vmatpush1.bf16.msra.mxu0 0
        %8763 = vmatprep.subr.bf16.mxu0 0
        %8764 = vmatpush1.bf16.msra.mxu0 0
        %8765 = vmatprep.mubr.bf16.mxu0 0
        %8766 = vmatmul.mubr.bf16.gmra.mrb[0].mxu0 %v8667
        %v8767 = vpop.f32.mrb[0].mxu0
        %v8768 = vadd.f32 0.0, %v8767
        %v8769 = vpop.f32.mrb[0].mxu0
        %v8770 = vpop.f32.mrb[0].mxu0
        %v8771 = vpop.f32.mrb[0].mxu0
        %8772 = vdwg.mxu0
        %v8773 = vadd.f32 %v8662, %v8768
        %s8774 = scalar_lea.vmem %s7, 832
        %v8775 = vld [vmem:[%s8774] sm:$0xf]
        %v8776 = vld [vmem:[%s8774 + $0x4] sm:$0xf]
        %v8777 = vld [vmem:[%s8774 + $0x8] sm:$0xf]
        %v8778 = vld [vmem:[%s8774 + $0xc] sm:$0xf]
        %v8779 = vld [vmem:[%s8774 + $0x10] sm:$0xf]
        %v8780 = vld [vmem:[%s8774 + $0x14] sm:$0xf]
        %v8781 = vld [vmem:[%s8774 + $0x18] sm:$0xf]
        %v8782 = vld [vmem:[%s8774 + $0x1c] sm:$0xf]
        %v8783 = vld [vmem:[%s8774 + $0x20] sm:$0xf]
        %v8784 = vld [vmem:[%s8774 + $0x24] sm:$0xf]
        %v8785 = vld [vmem:[%s8774 + $0x28] sm:$0xf]
        %v8786 = vld [vmem:[%s8774 + $0x2c] sm:$0xf]
        %v8787 = vld [vmem:[%s8774 + $0x30] sm:$0xf]
        %v8788 = vld [vmem:[%s8774 + $0x34] sm:$0xf]
        %v8789 = vld [vmem:[%s8774 + $0x38] sm:$0xf]
        %v8790 = vld [vmem:[%s8774 + $0x3c] sm:$0xf]
        %v8792 = vrot.slane %v8667, 1
        %v8810 = vunpack.c.l.b16 %v8775
        %v8811 = vunpack.c.l.b16 %v8776
        %v8812 = vunpack.c.l.b16 %v8777
        %v8813 = vunpack.c.l.b16 %v8778
        %v8814 = vunpack.c.l.b16 %v8779
        %v8815 = vunpack.c.l.b16 %v8780
        %v8816 = vunpack.c.l.b16 %v8781
        %v8817 = vunpack.c.l.b16 %v8782
        %v8818 = vunpack.c.l.b16 %v8783
        %v8819 = vunpack.c.l.b16 %v8784
        %v8820 = vunpack.c.l.b16 %v8785
        %v8821 = vunpack.c.l.b16 %v8786
        %v8822 = vunpack.c.l.b16 %v8787
        %v8823 = vunpack.c.l.b16 %v8788
        %v8824 = vunpack.c.l.b16 %v8789
        %v8825 = vunpack.c.l.b16 %v8790
        %v8826 = vpack.c.b16 %v8811, %v8810
        %v8827 = vpack.c.b16 %v8813, %v8812
        %v8828 = vpack.c.b16 %v8815, %v8814
        %v8829 = vpack.c.b16 %v8817, %v8816
        %v8830 = vpack.c.b16 %v8819, %v8818
        %v8831 = vpack.c.b16 %v8821, %v8820
        %v8832 = vpack.c.b16 %v8823, %v8822
        %v8833 = vpack.c.b16 %v8825, %v8824
        %8842 = vmatprep.subr.bf16.mxu0 0
        %8843 = vmatpush1.bf16.msra.mxu0 %v8826
        %8844 = vmatprep.subr.bf16.mxu0 0
        %8845 = vmatpush1.bf16.msra.mxu0 %v8827
        %8846 = vmatprep.subr.bf16.mxu0 0
        %8847 = vmatpush1.bf16.msra.mxu0 %v8828
        %8848 = vmatprep.subr.bf16.mxu0 0
        %8849 = vmatpush1.bf16.msra.mxu0 %v8829
        %8850 = vmatprep.subr.bf16.mxu0 0
        %8851 = vmatpush1.bf16.msra.mxu0 %v8830
        %8852 = vmatprep.subr.bf16.mxu0 0
        %8853 = vmatpush1.bf16.msra.mxu0 %v8831
        %8854 = vmatprep.subr.bf16.mxu0 0
        %8855 = vmatpush1.bf16.msra.mxu0 %v8832
        %8856 = vmatprep.subr.bf16.mxu0 0
        %8857 = vmatpush1.bf16.msra.mxu0 %v8833
        %8858 = vmatprep.subr.bf16.mxu0 0
        %8859 = vmatpush1.bf16.msra.mxu0 0
        %8860 = vmatprep.subr.bf16.mxu0 0
        %8861 = vmatpush1.bf16.msra.mxu0 0
        %8862 = vmatprep.subr.bf16.mxu0 0
        %8863 = vmatpush1.bf16.msra.mxu0 0
        %8864 = vmatprep.subr.bf16.mxu0 0
        %8865 = vmatpush1.bf16.msra.mxu0 0
        %8866 = vmatprep.subr.bf16.mxu0 0
        %8867 = vmatpush1.bf16.msra.mxu0 0
        %8868 = vmatprep.subr.bf16.mxu0 0
        %8869 = vmatpush1.bf16.msra.mxu0 0
        %8870 = vmatprep.subr.bf16.mxu0 0
        %8871 = vmatpush1.bf16.msra.mxu0 0
        %8872 = vmatprep.subr.bf16.mxu0 0
        %8873 = vmatpush1.bf16.msra.mxu0 0
        %8874 = vmatprep.mubr.bf16.mxu0 0
        %8875 = vmatmul.mubr.bf16.gmra.mrb[0].mxu0 %v8792
        %v8876 = vpop.f32.mrb[0].mxu0
        %v8877 = vadd.f32 0.0, %v8876
        %v8878 = vpop.f32.mrb[0].mxu0
        %v8879 = vpop.f32.mrb[0].mxu0
        %v8880 = vpop.f32.mrb[0].mxu0
        %8881 = vdwg.mxu0
        %v8882 = vadd.f32 %v8773, %v8877
        %s8883 = scalar_lea.vmem %s7, 896
        %v8884 = vld [vmem:[%s8883] sm:$0xf]
        %v8885 = vld [vmem:[%s8883 + $0x4] sm:$0xf]
        %v8886 = vld [vmem:[%s8883 + $0x8] sm:$0xf]
        %v8887 = vld [vmem:[%s8883 + $0xc] sm:$0xf]
        %v8888 = vld [vmem:[%s8883 + $0x10] sm:$0xf]
        %v8889 = vld [vmem:[%s8883 + $0x14] sm:$0xf]
        %v8890 = vld [vmem:[%s8883 + $0x18] sm:$0xf]
        %v8891 = vld [vmem:[%s8883 + $0x1c] sm:$0xf]
        %v8892 = vld [vmem:[%s8883 + $0x20] sm:$0xf]
        %v8893 = vld [vmem:[%s8883 + $0x24] sm:$0xf]
        %v8894 = vld [vmem:[%s8883 + $0x28] sm:$0xf]
        %v8895 = vld [vmem:[%s8883 + $0x2c] sm:$0xf]
        %v8896 = vld [vmem:[%s8883 + $0x30] sm:$0xf]
        %v8897 = vld [vmem:[%s8883 + $0x34] sm:$0xf]
        %v8898 = vld [vmem:[%s8883 + $0x38] sm:$0xf]
        %v8899 = vld [vmem:[%s8883 + $0x3c] sm:$0xf]
        %v8900 = vrot.slane %v8667, 2
        %v8918 = vunpack.c.l.b16 %v8884
        %v8919 = vunpack.c.l.b16 %v8885
        %v8920 = vunpack.c.l.b16 %v8886
        %v8921 = vunpack.c.l.b16 %v8887
        %v8922 = vunpack.c.l.b16 %v8888
        %v8923 = vunpack.c.l.b16 %v8889
        %v8924 = vunpack.c.l.b16 %v8890
        %v8925 = vunpack.c.l.b16 %v8891
        %v8926 = vunpack.c.l.b16 %v8892
        %v8927 = vunpack.c.l.b16 %v8893
        %v8928 = vunpack.c.l.b16 %v8894
        %v8929 = vunpack.c.l.b16 %v8895
        %v8930 = vunpack.c.l.b16 %v8896
        %v8931 = vunpack.c.l.b16 %v8897
        %v8932 = vunpack.c.l.b16 %v8898
        %v8933 = vunpack.c.l.b16 %v8899
        %v8934 = vpack.c.b16 %v8919, %v8918
        %v8935 = vpack.c.b16 %v8921, %v8920
        %v8936 = vpack.c.b16 %v8923, %v8922
        %v8937 = vpack.c.b16 %v8925, %v8924
        %v8938 = vpack.c.b16 %v8927, %v8926
        %v8939 = vpack.c.b16 %v8929, %v8928
        %v8940 = vpack.c.b16 %v8931, %v8930
        %v8941 = vpack.c.b16 %v8933, %v8932
        %8950 = vmatprep.subr.bf16.mxu0 0
        %8951 = vmatpush1.bf16.msra.mxu0 %v8934
        %8952 = vmatprep.subr.bf16.mxu0 0
        %8953 = vmatpush1.bf16.msra.mxu0 %v8935
        %8954 = vmatprep.subr.bf16.mxu0 0
        %8955 = vmatpush1.bf16.msra.mxu0 %v8936
        %8956 = vmatprep.subr.bf16.mxu0 0
        %8957 = vmatpush1.bf16.msra.mxu0 %v8937
        %8958 = vmatprep.subr.bf16.mxu0 0
        %8959 = vmatpush1.bf16.msra.mxu0 %v8938
        %8960 = vmatprep.subr.bf16.mxu0 0
        %8961 = vmatpush1.bf16.msra.mxu0 %v8939
        %8962 = vmatprep.subr.bf16.mxu0 0
        %8963 = vmatpush1.bf16.msra.mxu0 %v8940
        %8964 = vmatprep.subr.bf16.mxu0 0
        %8965 = vmatpush1.bf16.msra.mxu0 %v8941
        %8966 = vmatprep.subr.bf16.mxu0 0
        %8967 = vmatpush1.bf16.msra.mxu0 0
        %8968 = vmatprep.subr.bf16.mxu0 0
        %8969 = vmatpush1.bf16.msra.mxu0 0
        %8970 = vmatprep.subr.bf16.mxu0 0
        %8971 = vmatpush1.bf16.msra.mxu0 0
        %8972 = vmatprep.subr.bf16.mxu0 0
        %8973 = vmatpush1.bf16.msra.mxu0 0
        %8974 = vmatprep.subr.bf16.mxu0 0
        %8975 = vmatpush1.bf16.msra.mxu0 0
        %8976 = vmatprep.subr.bf16.mxu0 0
        %8977 = vmatpush1.bf16.msra.mxu0 0
        %8978 = vmatprep.subr.bf16.mxu0 0
        %8979 = vmatpush1.bf16.msra.mxu0 0
        %8980 = vmatprep.subr.bf16.mxu0 0
        %8981 = vmatpush1.bf16.msra.mxu0 0
        %8982 = vmatprep.mubr.bf16.mxu0 0
        %8983 = vmatmul.mubr.bf16.gmra.mrb[0].mxu0 %v8900
        %v8984 = vpop.f32.mrb[0].mxu0
        %v8985 = vadd.f32 0.0, %v8984
        %v8986 = vpop.f32.mrb[0].mxu0
        %v8987 = vpop.f32.mrb[0].mxu0
        %v8988 = vpop.f32.mrb[0].mxu0
        %8989 = vdwg.mxu0
        %v8990 = vadd.f32 %v8882, %v8985
        %s8991 = scalar_lea.vmem %s7, 960
        %v8992 = vld [vmem:[%s8991] sm:$0xf]
        %v8993 = vld [vmem:[%s8991 + $0x4] sm:$0xf]
        %v8994 = vld [vmem:[%s8991 + $0x8] sm:$0xf]
        %v8995 = vld [vmem:[%s8991 + $0xc] sm:$0xf]
        %v8996 = vld [vmem:[%s8991 + $0x10] sm:$0xf]
        %v8997 = vld [vmem:[%s8991 + $0x14] sm:$0xf]
        %v8998 = vld [vmem:[%s8991 + $0x18] sm:$0xf]
        %v8999 = vld [vmem:[%s8991 + $0x1c] sm:$0xf]
        %v9000 = vld [vmem:[%s8991 + $0x20] sm:$0xf]
        %v9001 = vld [vmem:[%s8991 + $0x24] sm:$0xf]
        %v9002 = vld [vmem:[%s8991 + $0x28] sm:$0xf]
        %v9003 = vld [vmem:[%s8991 + $0x2c] sm:$0xf]
        %v9004 = vld [vmem:[%s8991 + $0x30] sm:$0xf]
        %v9005 = vld [vmem:[%s8991 + $0x34] sm:$0xf]
        %v9006 = vld [vmem:[%s8991 + $0x38] sm:$0xf]
        %v9007 = vld [vmem:[%s8991 + $0x3c] sm:$0xf]
        %v9008 = vrot.slane %v8667, 3
        %v9026 = vunpack.c.l.b16 %v8992
        %v9027 = vunpack.c.l.b16 %v8993
        %v9028 = vunpack.c.l.b16 %v8994
        %v9029 = vunpack.c.l.b16 %v8995
        %v9030 = vunpack.c.l.b16 %v8996
        %v9031 = vunpack.c.l.b16 %v8997
        %v9032 = vunpack.c.l.b16 %v8998
        %v9033 = vunpack.c.l.b16 %v8999
        %v9034 = vunpack.c.l.b16 %v9000
        %v9035 = vunpack.c.l.b16 %v9001
        %v9036 = vunpack.c.l.b16 %v9002
        %v9037 = vunpack.c.l.b16 %v9003
        %v9038 = vunpack.c.l.b16 %v9004
        %v9039 = vunpack.c.l.b16 %v9005
        %v9040 = vunpack.c.l.b16 %v9006
        %v9041 = vunpack.c.l.b16 %v9007
        %v9042 = vpack.c.b16 %v9027, %v9026
        %v9043 = vpack.c.b16 %v9029, %v9028
        %v9044 = vpack.c.b16 %v9031, %v9030
        %v9045 = vpack.c.b16 %v9033, %v9032
        %v9046 = vpack.c.b16 %v9035, %v9034
        %v9047 = vpack.c.b16 %v9037, %v9036
        %v9048 = vpack.c.b16 %v9039, %v9038
        %v9049 = vpack.c.b16 %v9041, %v9040
        %9058 = vmatprep.subr.bf16.mxu0 0
        %9059 = vmatpush1.bf16.msra.mxu0 %v9042
        %9060 = vmatprep.subr.bf16.mxu0 0
        %9061 = vmatpush1.bf16.msra.mxu0 %v9043
        %9062 = vmatprep.subr.bf16.mxu0 0
        %9063 = vmatpush1.bf16.msra.mxu0 %v9044
        %9064 = vmatprep.subr.bf16.mxu0 0
        %9065 = vmatpush1.bf16.msra.mxu0 %v9045
        %9066 = vmatprep.subr.bf16.mxu0 0
        %9067 = vmatpush1.bf16.msra.mxu0 %v9046
        %9068 = vmatprep.subr.bf16.mxu0 0
        %9069 = vmatpush1.bf16.msra.mxu0 %v9047
        %9070 = vmatprep.subr.bf16.mxu0 0
        %9071 = vmatpush1.bf16.msra.mxu0 %v9048
        %9072 = vmatprep.subr.bf16.mxu0 0
        %9073 = vmatpush1.bf16.msra.mxu0 %v9049
        %9074 = vmatprep.subr.bf16.mxu0 0
        %9075 = vmatpush1.bf16.msra.mxu0 0
        %9076 = vmatprep.subr.bf16.mxu0 0
        %9077 = vmatpush1.bf16.msra.mxu0 0
        %9078 = vmatprep.subr.bf16.mxu0 0
        %9079 = vmatpush1.bf16.msra.mxu0 0
        %9080 = vmatprep.subr.bf16.mxu0 0
        %9081 = vmatpush1.bf16.msra.mxu0 0
        %9082 = vmatprep.subr.bf16.mxu0 0
        %9083 = vmatpush1.bf16.msra.mxu0 0
        %9084 = vmatprep.subr.bf16.mxu0 0
        %9085 = vmatpush1.bf16.msra.mxu0 0
        %9086 = vmatprep.subr.bf16.mxu0 0
        %9087 = vmatpush1.bf16.msra.mxu0 0
        %9088 = vmatprep.subr.bf16.mxu0 0
        %9089 = vmatpush1.bf16.msra.mxu0 0
        %9090 = vmatprep.mubr.bf16.mxu0 0
        %9091 = vmatmul.mubr.bf16.gmra.mrb[0].mxu0 %v9008
        %v9092 = vpop.f32.mrb[0].mxu0
        %v9093 = vadd.f32 0.0, %v9092
        %v9094 = vpop.f32.mrb[0].mxu0
        %v9095 = vpop.f32.mrb[0].mxu0
        %v9096 = vpop.f32.mrb[0].mxu0
        %9097 = vdwg.mxu0
        %v9098 = vadd.f32 %v8990, %v9093
        %v9099 = vld [vmem:[%s8] sm:$0x1]
        %v9100 = vadd.f32 %v9098, %v9099
        %vm9101 = vcmp.ge.f32.partialorder %v9100, 0.0
        %v9102 = vmul.f32 %v9100, 0.01
        %v9103 = vsel %vm9101, %v9100, %v9102
        %v9104 = vpack.c.bf16 %v9103, %v9103
        %v9105 = vld [vmem:[%s9] sm:$0xf]
        %v9106 = vld [vmem:[%s9 + $0x4] sm:$0xf]
        %v9107 = vld [vmem:[%s9 + $0x8] sm:$0xf]
        %v9108 = vld [vmem:[%s9 + $0xc] sm:$0xf]
        %v9109 = vld [vmem:[%s9 + $0x10] sm:$0xf]
        %v9110 = vld [vmem:[%s9 + $0x14] sm:$0xf]
        %v9111 = vld [vmem:[%s9 + $0x18] sm:$0xf]
        %v9112 = vld [vmem:[%s9 + $0x1c] sm:$0xf]
        %v9113 = vld [vmem:[%s9 + $0x20] sm:$0xf]
        %v9114 = vld [vmem:[%s9 + $0x24] sm:$0xf]
        %v9115 = vld [vmem:[%s9 + $0x28] sm:$0x3]
        %v9116 = vld [vmem:[%s10] sm:$0x1]
        %v9128 = vunpack.c.l.b16 %v9105
        %v9129 = vunpack.c.l.b16 %v9106
        %v9130 = vunpack.c.l.b16 %v9107
        %v9131 = vunpack.c.l.b16 %v9108
        %v9132 = vunpack.c.l.b16 %v9109
        %v9133 = vunpack.c.l.b16 %v9110
        %v9134 = vunpack.c.l.b16 %v9111
        %v9135 = vunpack.c.l.b16 %v9112
        %v9136 = vunpack.c.l.b16 %v9113
        %v9137 = vunpack.c.l.b16 %v9114
        %v9138 = vunpack.c.l.b16 %v9115
        %v9139 = vpack.c.b16 %v9129, %v9128
        %v9140 = vpack.c.b16 %v9131, %v9130
        %v9141 = vpack.c.b16 %v9133, %v9132
        %v9142 = vpack.c.b16 %v9135, %v9134
        %v9143 = vpack.c.b16 %v9137, %v9136
        %v9144 = vpack.c.b16 %v9138, %v9138
        %vm9150 = vcmask 687104
        %v9152 = vsel %vm9150, %v9104, 0
        %v9155 = vsel %vm708, %v9144, 0
        %9157 = vmatprep.subr.bf16.mxu0 0
        %9158 = vmatpush1.bf16.msra.mxu0 %v9139
        %9159 = vmatprep.subr.bf16.mxu0 0
        %9160 = vmatpush1.bf16.msra.mxu0 %v9140
        %9161 = vmatprep.subr.bf16.mxu0 0
        %9162 = vmatpush1.bf16.msra.mxu0 %v9141
        %9163 = vmatprep.subr.bf16.mxu0 0
        %9164 = vmatpush1.bf16.msra.mxu0 %v9142
        %9165 = vmatprep.subr.bf16.mxu0 0
        %9166 = vmatpush1.bf16.msra.mxu0 %v9143
        %9167 = vmatprep.subr.bf16.mxu0 0
        %9168 = vmatpush1.bf16.msra.mxu0 %v9155
        %9169 = vmatprep.subr.bf16.mxu0 0
        %9170 = vmatpush1.bf16.msra.mxu0 0
        %9171 = vmatprep.subr.bf16.mxu0 0
        %9172 = vmatpush1.bf16.msra.mxu0 0
        %9173 = vmatprep.subr.bf16.mxu0 0
        %9174 = vmatpush1.bf16.msra.mxu0 0
        %9175 = vmatprep.subr.bf16.mxu0 0
        %9176 = vmatpush1.bf16.msra.mxu0 0
        %9177 = vmatprep.subr.bf16.mxu0 0
        %9178 = vmatpush1.bf16.msra.mxu0 0
        %9179 = vmatprep.subr.bf16.mxu0 0
        %9180 = vmatpush1.bf16.msra.mxu0 0
        %9181 = vmatprep.subr.bf16.mxu0 0
        %9182 = vmatpush1.bf16.msra.mxu0 0
        %9183 = vmatprep.subr.bf16.mxu0 0
        %9184 = vmatpush1.bf16.msra.mxu0 0
        %9185 = vmatprep.subr.bf16.mxu0 0
        %9186 = vmatpush1.bf16.msra.mxu0 0
        %9187 = vmatprep.subr.bf16.mxu0 0
        %9188 = vmatpush1.bf16.msra.mxu0 0
        %9189 = vmatprep.mubr.bf16.mxu0 0
        %9190 = vmatmul.mubr.bf16.gmra.mrb[0].mxu0 %v9152
        %v9191 = vpop.f32.mrb[0].mxu0
        %v9192 = vadd.f32 %v9116, %v9191
        %v9193 = vpop.f32.mrb[0].mxu0
        %v9194 = vpop.f32.mrb[0].mxu0
        %v9195 = vpop.f32.mrb[0].mxu0
        %9196 = vdwg.mxu0
        %vm9197 = vcmp.ge.f32.partialorder %v9192, 0.0
        %v9198 = vmul.f32 %v9192, 0.01
        %v9199 = vsel %vm9197, %v9192, %v9198
        %v9200 = vpack.c.bf16 %v9199, %v9199
        %v9201 = vld [vmem:[%s11] sm:$0xf]
        %v9202 = vld [vmem:[%s11 + $0x4] sm:$0xf]
        %v9203 = vld [vmem:[%s11 + $0x8] sm:$0xf]
        %v9204 = vld [vmem:[%s12] sm:$0x1]
        %v9208 = vunpack.c.l.b16 %v9201
        %v9209 = vunpack.c.l.b16 %v9202
        %v9210 = vunpack.c.l.b16 %v9203
        %v9211 = vpack.c.b16 %v9209, %v9208
        %v9212 = vpack.c.b16 %v9210, %v9210
        %v9215 = vsel %vm6158, %v9200, 0
        %v9218 = vsel %vm6365, %v9212, 0
        %9220 = vmatprep.subr.bf16.mxu0 0
        %9221 = vmatpush1.bf16.msra.mxu0 %v9211
        %9222 = vmatprep.subr.bf16.mxu0 0
        %9223 = vmatpush1.bf16.msra.mxu0 %v9218
        %9224 = vmatprep.subr.bf16.mxu0 0
        %9225 = vmatpush1.bf16.msra.mxu0 0
        %9226 = vmatprep.subr.bf16.mxu0 0
        %9227 = vmatpush1.bf16.msra.mxu0 0
        %9228 = vmatprep.subr.bf16.mxu0 0
        %9229 = vmatpush1.bf16.msra.mxu0 0
        %9230 = vmatprep.subr.bf16.mxu0 0
        %9231 = vmatpush1.bf16.msra.mxu0 0
        %9232 = vmatprep.subr.bf16.mxu0 0
        %9233 = vmatpush1.bf16.msra.mxu0 0
        %9234 = vmatprep.subr.bf16.mxu0 0
        %9235 = vmatpush1.bf16.msra.mxu0 0
        %9236 = vmatprep.subr.bf16.mxu0 0
        %9237 = vmatpush1.bf16.msra.mxu0 0
        %9238 = vmatprep.subr.bf16.mxu0 0
        %9239 = vmatpush1.bf16.msra.mxu0 0
        %9240 = vmatprep.subr.bf16.mxu0 0
        %9241 = vmatpush1.bf16.msra.mxu0 0
        %9242 = vmatprep.subr.bf16.mxu0 0
        %9243 = vmatpush1.bf16.msra.mxu0 0
        %9244 = vmatprep.subr.bf16.mxu0 0
        %9245 = vmatpush1.bf16.msra.mxu0 0
        %9246 = vmatprep.subr.bf16.mxu0 0
        %9247 = vmatpush1.bf16.msra.mxu0 0
        %9248 = vmatprep.subr.bf16.mxu0 0
        %9249 = vmatpush1.bf16.msra.mxu0 0
        %9250 = vmatprep.subr.bf16.mxu0 0
        %9251 = vmatpush1.bf16.msra.mxu0 0
        %9252 = vmatprep.mubr.bf16.mxu0 0
        %9253 = vmatmul.mubr.bf16.gmra.mrb[0].mxu0 %v9215
        %v9254 = vpop.f32.mrb[0].mxu0
        %v9255 = vadd.f32 %v9204, %v9254
        %v9256 = vpop.f32.mrb[0].mxu0
        %v9257 = vpop.f32.mrb[0].mxu0
        %v9258 = vpop.f32.mrb[0].mxu0
        %9259 = vdwg.mxu0
        %vm9260 = vcmask 24576
        %9261 = vst.msk [vmem:[%s432] sm:$0x1] %vm9260, %v9255
        %s9262 = sand.u32 %s313, 1
        %s9263 = scalar_lea.sflag [#allocation6], %s9262
        %s9264 = sand.u32 %s313, 1
        %s9265 = scalar_lea.vmem [#allocation5], %s9264
        // Predicated region
        $region73: #{simplenet_forward_pallas.1} parent=71 // pred_check
          %p9266 = pneg %p323
        $region74: #{simplenet_forward_pallas.1} parent=71 // pred_check_branch
          %9268 = sbr.rel (%p9266) target = $region76
        $region75: #{simplenet_forward_pallas.1} parent=71 // pred_region
          %s9270 = ssub.s32 16, 16
          %9271 = vsyncadd %s9263, %s9270
          %s9272 = smul.addr %s27, 16
          %s9273 = scalar_lea.hbm %s13, %s9272
          %s9275 = sshll.u32 %s9265, 4
          %s9276 = int_to_ptr.vmem [resolvable:$true] %s9275
          %9278 = dma.vmem_to_hbm [thread:$0]  %s9276, 16, %s9273, %s9263
        $region76: #{simplenet_forward_pallas.1} parent=71 // pred_fallthru
          _
      $region72: #{simplenet_forward_pallas.1} parent=5 // pred_fallthru
        _
      %p9279 = scmp.le.s32.totalorder 2, %s22
      // Predicated region
      $region77: #{simplenet_forward_pallas.1} parent=5 // pred_check
        %p9280 = pneg %p9279
      $region78: #{simplenet_forward_pallas.1} parent=5 // pred_check_branch
        %9282 = sbr.rel (%p9280) target = $region80
      $region79: #{simplenet_forward_pallas.1} parent=5 // pred_region
        %s9283 = ssub.s32 %s22, 2
        // Predicated region
        $region81: #{simplenet_forward_pallas.1} parent=79 // pred_check
          %p9284 = pneg %p329
        $region82: #{simplenet_forward_pallas.1} parent=79 // pred_check_branch
          %9286 = sbr.rel (%p9284) target = $region84
        $region83: #{simplenet_forward_pallas.1} parent=79 // pred_region
          %s9287 = sand.u32 %s314, 1
          %s9288 = scalar_lea.sflag [#allocation6], %s9287
          %s9289 = sand.u32 %s314, 1
          %s9290 = scalar_lea.vmem [#allocation5], %s9289
          %9291 = dma.done %s9288, 16
        $region84: #{simplenet_forward_pallas.1} parent=79 // pred_fallthru
          _
      $region80: #{simplenet_forward_pallas.1} parent=5 // pred_fallthru
        _
    $region6: #{simplenet_forward_pallas.1} parent=1 // loop_footer
      %s26 = sadd.s32 1, %s22
    $region7: #{simplenet_forward_pallas.1} parent=1 // loop_footer_branch
      %21 = sbr.rel target = $region3
    $region8: #{simplenet_forward_pallas.1} parent=1 // loop_exit
      _
    %9292 = vsyncpa [#allocation6], 1
    %s9293 = scalar_lea.sflag [#allocation6], 1
    %9294 = vsyncpa %s9293, 1

</llo_original>
